<compile_context>
chip_gen: v7x
topology: tpu7x:2x2x1
jax: 0.10.0
libtpu: 0.0.40
codegen_flags: <defaults>
</compile_context>

<pallas_src>
import functools
import math

import jax
import jax.numpy as jnp
from jax.experimental import pallas as pl
from jax.experimental.pallas import tpu as pltpu

# ----------------------------- KAN constants --------------------------------
GRID_SIZE = 5
SPLINE_ORDER = 3
GRID_RANGE = (-1.0, 1.0)
K_BASES = GRID_SIZE + SPLINE_ORDER                 # 8 spline basis functions
N_FEATS = K_BASES + 1                              # + the silu "base" path
_H = (GRID_RANGE[1] - GRID_RANGE[0]) / GRID_SIZE
# uniform knot vector (identical to the registered `grid` buffer)
KNOTS = [GRID_RANGE[0] + _H * j for j in range(-SPLINE_ORDER,
                                               GRID_SIZE + SPLINE_ORDER + 1)]
LN_EPS = 1e-5


# --------------------------- math helpers (traced) --------------------------
def _layernorm(h, g, b):
    mu = jnp.mean(h, axis=-1, keepdims=True)
    var = jnp.mean(jnp.square(h - mu), axis=-1, keepdims=True)
    return (h - mu) * jax.lax.rsqrt(var + LN_EPS) * g + b


def _silu(h):
    return h * jax.nn.sigmoid(h)


def _b_spline_list(h):
    """Cox-de Boor recursion on a uniform knot grid.  h: (n, chunk).

    Degree-0 bases via step-function differences (fewer VALU ops than
    compare&compare&and&cast); higher degrees use multiplications with the
    precomputed reciprocal knot spacing (g[j+k]-g[j] == k*_H) and hoisted
    (h - g[j]) terms, so the recursion is pure VALU mul/add.
    Returns K_BASES arrays of shape (n, chunk)."""
    g = KNOTS
    dt = h.dtype
    steps = [(h >= g[j]).astype(dt) for j in range(len(g))]
    bases = [steps[j] - steps[j + 1] for j in range(len(g) - 1)]
    u = [h - g[j] for j in range(len(g) - 1)]
    for k in range(1, SPLINE_ORDER + 1):
        inv = 1.0 / (k * _H)
        s = [u[j] * inv for j in range(len(bases))]
        bases = [s[j] * bases[j] + (1.0 - s[j + 1]) * bases[j + 1]
                 for j in range(len(bases) - 1)]
    return bases


def _pow2_divisor(n, cap=256):
    p = 1
    while p < cap and n % (p * 2) == 0:
        p *= 2
    return p


# ------------------------ chunked KANLinear (in-kernel) ----------------------
def _kan_linear_chunked(src_ref, w_ref, feat_ref, acc_ref, *, chunk, n_chunks,
                        spline_dtype, pre_act=None):
    """One KANLinear layer, chunked over the input-feature axis.

    src_ref : (tm, in)            f32 VMEM input activations
    w_ref   : (N_FEATS*in, out)   bf16 VMEM, chunk-interleaved row layout
    feat_ref: (tm, N_FEATS*chunk) bf16 VMEM feature staging slab
    acc_ref : (tm, out)           f32 VMEM accumulator (overwritten)
    """
    wrows = N_FEATS * chunk

    def chunk_out(c):
        col0, row0 = c * chunk, c * wrows
        if not isinstance(c, int):                 # dynamic index -> align hints
            col0 = pl.multiple_of(col0, _pow2_divisor(chunk))
            row0 = pl.multiple_of(row0, _pow2_divisor(wrows))
        hb = src_ref[:, pl.ds(col0, chunk)]
        if pre_act is not None:
            hb = pre_act(hb)
        hb = hb.astype(spline_dtype)
        # cast-first: each feature lands directly in the bf16 slab
        # (no (tm, 9*chunk) f32 concat buffer).
        for j, f in enumerate([_silu(hb)] + _b_spline_list(hb)):
            feat_ref[:, j * chunk:(j + 1) * chunk] = f.astype(feat_ref.dtype)
        w_blk = w_ref[pl.ds(row0, wrows), :]       # contiguous row block
        return jnp.dot(feat_ref[...], w_blk, preferred_element_type=jnp.float32)

    if n_chunks == 1:
        acc_ref[...] = chunk_out(0)
    else:
        acc_ref[...] = jnp.zeros_like(acc_ref)

        @pl.loop(0, n_chunks)
        def _(c):
            acc_ref[...] += chunk_out(c)


# --------------------------------- kernel -----------------------------------
def ffn_kernel(x_ref, ln1_g_ref, ln1_b_ref, w1_ref, w2_ref,
               ln2_g_ref, ln2_b_ref, o_ref,
               h1_ref, hid_ref, acc_ref, feat1_ref, feat2_ref,
               *, chunk1, n_chunks1, chunk2, n_chunks2, spline_dtype):
    x = x_ref[...].astype(jnp.float32)
    h1_ref[...] = _layernorm(x, ln1_g_ref[...], ln1_b_ref[...])

    # KANLinear 1: dim -> ffn_dim (hid_ref <- pre-GELU hidden)
    _kan_linear_chunked(h1_ref, w1_ref, feat1_ref, hid_ref,
                        chunk=chunk1, n_chunks=n_chunks1,
                        spline_dtype=spline_dtype)

    # KANLinear 2: ffn_dim -> dim.  GELU (tanh approx -> EUP slot) is applied
    # per chunk as the hidden block is read back: no extra full-F pass.
    _kan_linear_chunked(hid_ref, w2_ref, feat2_ref, acc_ref,
                        chunk=chunk2, n_chunks=n_chunks2,
                        spline_dtype=spline_dtype,
                        pre_act=lambda v: jax.nn.gelu(v, approximate=True))

    out = _layernorm(acc_ref[...], ln2_g_ref[...], ln2_b_ref[...])
    # nn.Dropout(0.1): identity in eval mode.
    # TODO(synk): training-mode dropout would need pltpu.prng_seed/random_bits.
    o_ref[...] = out.astype(o_ref.dtype)


# -------------------------------- wrapper ------------------------------------
def _pick_chunk(in_dim, target):
    """Largest chunk <= target dividing in_dim, preferring lane-aligned sizes."""
    if in_dim <= target:
        return in_dim
    for c in range(min(target, in_dim), 0, -1):
        if in_dim % c == 0 and c % 128 == 0:
            return c
    for c in range(min(target, in_dim), 7, -1):
        if in_dim % c == 0:
            return c
    return in_dim


def _fuse_kan_weights(base_w, spline_w, chunk, dtype):
    """base_w: (in, out); spline_w: (K_BASES, in, out) -> (N_FEATS*in, out).

    Chunk-interleaved layout: rows [c*9*chunk, (c+1)*9*chunk) hold
    [base | s0 | ... | s7] blocks of `chunk` rows each, covering input
    features [c*chunk, (c+1)*chunk) -- so each kernel chunk is one contiguous
    pl.ds row slice of the weight."""
    cat = jnp.concatenate([base_w[None], spline_w], axis=0)      # (N_FEATS,in,out)
    nf, din, dout = cat.shape
    cat = cat.reshape(nf, din // chunk, chunk, dout)
    cat = jnp.transpose(cat, (1, 0, 2, 3))                        # (nc,N_FEATS,chunk,out)
    return cat.reshape(nf * din, dout).astype(dtype)


def _chip_defaults():
    """(token tile, vmem limit) keyed on physical VMEM capacity."""
    cap = 128 * 1024 * 1024
    try:
        cap = int(getattr(pltpu.get_tpu_info(), "vmem_capacity_bytes", cap))
    except Exception:
        pass
    if cap >= 96 * 1024 * 1024:                 # v5e / v6e (128 MiB physical)
        return 512, 96 * 1024 * 1024
    # v7x (64 MiB physical): smaller tile, leave DMA headroom
    return 256, max(32 * 1024 * 1024, cap - 16 * 1024 * 1024)


def ffn_forward(x, params, *, tm=None, fc=512, matmul_dtype=jnp.bfloat16,
                spline_dtype=jnp.float32, single_buffer_weights=True,
                vmem_limit_bytes=None):
    """Fused FFN forward.  `fc` is the per-chunk input-feature width for each
    KANLinear (bounds the spline-recursion live set).  `spline_dtype` can be
    set to jnp.bfloat16 on v6e/v7x (keep f32 on v5e: no bf16 VPU/EUP)."""
    B, S, D = x.shape
    F = params["w1_base"].shape[1]
    N = B * S

    tm_default, vmem_default = _chip_defaults()
    if tm is None:
        tm = tm_default
    if vmem_limit_bytes is None:
        vmem_limit_bytes = vmem_default

    # Token tile: multiple of 16 (also covers bf16 (16,128) sublane tiles).
    tm = max(16, (min(tm, max(N, 16)) // 16) * 16)
    Np = pl.cdiv(N, tm) * tm
    xf = x.reshape(N, D)
    if Np != N:
        xf = jnp.pad(xf, ((0, Np - N), (0, 0)))

    chunk1 = _pick_chunk(D, fc)
    chunk2 = _pick_chunk(F, fc)
    w1 = _fuse_kan_weights(params["w1_base"], params["w1_spline"], chunk1, matmul_dtype)
    w2 = _fuse_kan_weights(params["w2_base"], params["w2_spline"], chunk2, matmul_dtype)

    kernel = functools.partial(
        ffn_kernel,
        chunk1=chunk1, n_chunks1=D // chunk1,
        chunk2=chunk2, n_chunks2=F // chunk2,
        spline_dtype=spline_dtype)

    scratch = [
        pltpu.VMEM((tm, D), jnp.float32),                   # LN1 output
        pltpu.VMEM((tm, F), jnp.float32),                   # hidden (pre-GELU)
        pltpu.VMEM((tm, D), jnp.float32),                   # layer-2 accumulator
        pltpu.VMEM((tm, N_FEATS * chunk1), matmul_dtype),   # feature slab, layer 1
        pltpu.VMEM((tm, N_FEATS * chunk2), matmul_dtype),   # feature slab, layer 2
    ]

    itemsize = jnp.dtype(x.dtype).itemsize
    cost = pl.CostEstimate(
        flops=int(2 * Np * N_FEATS * D * F * 2),            # both KAN layers
        transcendentals=int(Np * (D + 2 * F)),              # silu sigmoids + tanh GELU
        bytes_accessed=int(2 * Np * D * itemsize
                           + (w1.size + w2.size) * jnp.dtype(matmul_dtype).itemsize),
    )

    args = (xf, params["ln1_g"], params["ln1_b"], w1, w2,
            params["ln2_g"], params["ln2_b"])

    def call(single_buffer):
        # Constant-index weights / LN params: single-buffer to halve their
        # VMEM residency (critical on v7x).
        mode = dict(pipeline_mode=pl.Buffered(1)) if single_buffer else {}
        const = lambda a: pl.BlockSpec(a.shape, lambda i: (0,) * a.ndim, **mode)
        return pl.pallas_call(
            kernel,
            out_shape=jax.ShapeDtypeStruct((Np, D), x.dtype),
            grid=(Np // tm,),
            in_specs=[pl.BlockSpec((tm, D), lambda i: (i, 0)),   # activation tile
                      const(params["ln1_g"]), const(params["ln1_b"]),
                      const(w1), const(w2),
                      const(params["ln2_g"]), const(params["ln2_b"])],
            out_specs=pl.BlockSpec((tm, D), lambda i: (i, 0)),
            scratch_shapes=scratch,
            compiler_params=pltpu.CompilerParams(
                dimension_semantics=("parallel",),
                vmem_limit_bytes=vmem_limit_bytes),
            cost_estimate=cost,
        )(*args)

    if single_buffer_weights:
        try:
            out = call(True)
        except Exception:          # pipeline_mode unsupported -> default buffering
            out = call(False)
    else:
        out = call(False)
    return out[:N].reshape(B, S, D)


# ------------------------- plain-JAX reference (check) -----------------------
def _b_splines_ref(h):
    """PyTorch-faithful Cox-de Boor recursion (with divisions).
    h: (n, in) f32 -> (n, in, K_BASES)."""
    g = jnp.asarray(KNOTS, jnp.float32)
    x = h[..., None]
    bases = ((x >= g[:-1]) & (x < g[1:])).astype(h.dtype)
    for k in range(1, SPLINE_ORDER + 1):
        bases = ((x - g[:-(k + 1)]) / (g[k:-1] - g[:-(k + 1)]) * bases[..., :-1]
                 + (g[k + 1:] - x) / (g[k + 1:] - g[1:-k]) * bases[..., 1:])
    return bases


def _kan_linear_ref(h, base_w, spline_w):
    base_out = jnp.dot(_silu(h), base_w)
    spline_out = jnp.einsum("nik,kio->no", _b_splines_ref(h), spline_w)
    return base_out + spline_out


def ffn_reference(x, params):
    B, S, D = x.shape
    h = x.reshape(-1, D).astype(jnp.float32)
    h = _layernorm(h, params["ln1_g"], params["ln1_b"])
    h = _kan_linear_ref(h, params["w1_base"], params["w1_spline"])
    h = 0.5 * h * (1.0 + jax.lax.erf(h * (1.0 / math.sqrt(2.0))))   # exact GELU
    h = _kan_linear_ref(h, params["w2_base"], params["w2_spline"])
    h = _layernorm(h, params["ln2_g"], params["ln2_b"])
    return h.reshape(B, S, D)


# ---------------------------- parameter creation -----------------------------
def init_params(key, dim, ffn_dim):
    """Deterministic synthetic init.  Shapes follow KANLinear.__init__:
    base_weight (out, in), spline_weight (out, in, K), spline_scaler (out, in).
    spline_scaler is folded into the spline weight (scaled_spline_weight) and
    everything is pre-transposed to (in, out) / (K, in, out)."""
    ks = jax.random.split(key, 6)

    def kan(kb, ks_, ksc, in_f, out_f):
        bound = 1.0 / math.sqrt(in_f)
        base_w = jax.random.uniform(kb, (out_f, in_f), jnp.float32, -bound, bound)
        spline_w = jax.random.uniform(ks_, (out_f, in_f, K_BASES), jnp.float32,
                                      -0.02, 0.02)
        scaler = jax.random.uniform(ksc, (out_f, in_f), jnp.float32, -bound, bound)
        scaled_spline = spline_w * scaler[..., None]          # (out, in, K)
        return (jnp.transpose(base_w),                        # (in, out)
                jnp.transpose(scaled_spline, (2, 1, 0)))      # (K, in, out)

    w1_base, w1_spline = kan(ks[0], ks[1], ks[2], dim, ffn_dim)
    w2_base, w2_spline = kan(ks[3], ks[4], ks[5], ffn_dim, dim)
    return {
        # nn.LayerNorm default init: weight=1, bias=0 (deterministic)
        "ln1_g": jnp.ones((1, dim), jnp.float32),
        "ln1_b": jnp.zeros((1, dim), jnp.float32),
        "ln2_g": jnp.ones((1, dim), jnp.float32),
        "ln2_b": jnp.zeros((1, dim), jnp.float32),
        "w1_base": w1_base, "w1_spline": w1_spline,
        "w2_base": w2_base, "w2_spline": w2_spline,
    }


# ----------------------------------- main ------------------------------------
if __name__ == "__main__":
    # Small demo, lane-dense: last dim multiple of 128 so stores are unmasked.
    B, S, DIM, FFN_DIM = 2, 8, 128, 256
    key = jax.random.PRNGKey(0)
    kx, kp = jax.random.split(key)
    x = jax.random.normal(kx, (B, S, DIM), dtype=jnp.float32)
    params = init_params(kp, DIM, FFN_DIM)

    ref = ffn_reference(x, params)

    # 1) default config: single chunk per KANLinear at this size.
    out = ffn_forward(x, params)
    jax.block_until_ready(out)

    # 2) force the chunked path (ffn_dim split into 2 chunks of 128) to
    #    exercise the pl.loop / dynamic-slice accumulation code path.
    out_chunked = ffn_forward(x, params, fc=128)
    jax.block_until_ready(out_chunked)

    for o, name in ((out, "default"), (out_chunked, "chunked")):
        assert o.shape == (B, S, DIM)
        max_err = float(jnp.max(jnp.abs(o - ref)))
        # bf16 matmul inputs + tanh-GELU vs exact erf f32 reference.
        assert jnp.allclose(o, ref, atol=5e-2, rtol=5e-2), \
            f"{name}: mismatch vs reference (max abs err {max_err})"

    print("KERNEL_OK")
</pallas_src>

<mosaic_0001>
module attributes {stable_mosaic.version = 11 : i64} {
  func.func @ffn_kernel(%arg0: i32, %arg1: memref<16x128xf32, #tpu.memory_space<vmem>>, %arg2: memref<1x128xf32, #tpu.memory_space<vmem>>, %arg3: memref<1x128xf32, #tpu.memory_space<vmem>>, %arg4: memref<1152x256xbf16, #tpu.memory_space<vmem>>, %arg5: memref<2304x128xbf16, #tpu.memory_space<vmem>>, %arg6: memref<1x128xf32, #tpu.memory_space<vmem>>, %arg7: memref<1x128xf32, #tpu.memory_space<vmem>>, %arg8: memref<16x128xf32, #tpu.memory_space<vmem>>, %arg9: memref<16x128xf32, #tpu.memory_space<vmem>>, %arg10: memref<16x256xf32, #tpu.memory_space<vmem>>, %arg11: memref<16x128xf32, #tpu.memory_space<vmem>>, %arg12: memref<16x1152xbf16, #tpu.memory_space<vmem>>, %arg13: memref<16x2304xbf16, #tpu.memory_space<vmem>>) attributes {dimension_semantics = [#tpu.dimension_semantics<parallel>], iteration_bounds = array<i64: 1>, scalar_prefetch = 0 : i64, scratch_operands = 5 : i64, tpu.core_type = #tpu.core_type<tc>, window_params = [{transform_indices = @transform_0, window_bounds = array<i64: 16, 128>}, {pipeline_mode = #tpu.pipeline_mode<synchronous>, transform_indices = @transform_1, window_bounds = array<i64: 1, 128>}, {pipeline_mode = #tpu.pipeline_mode<synchronous>, transform_indices = @transform_2, window_bounds = array<i64: 1, 128>}, {pipeline_mode = #tpu.pipeline_mode<synchronous>, transform_indices = @transform_3, window_bounds = array<i64: 1152, 256>}, {pipeline_mode = #tpu.pipeline_mode<synchronous>, transform_indices = @transform_4, window_bounds = array<i64: 2304, 128>}, {pipeline_mode = #tpu.pipeline_mode<synchronous>, transform_indices = @transform_5, window_bounds = array<i64: 1, 128>}, {pipeline_mode = #tpu.pipeline_mode<synchronous>, transform_indices = @transform_6, window_bounds = array<i64: 1, 128>}, {transform_indices = @transform_7, window_bounds = array<i64: 16, 128>}]} {
    %c0 = arith.constant 0 : index
    %c0_0 = arith.constant 0 : index
    %0 = vector.load %arg1[%c0, %c0_0] : memref<16x128xf32, #tpu.memory_space<vmem>>, vector<16x128xf32>
    %c0_1 = arith.constant 0 : index
    %c0_2 = arith.constant 0 : index
    %1 = vector.load %arg2[%c0_1, %c0_2] : memref<1x128xf32, #tpu.memory_space<vmem>>, vector<1x128xf32>
    %c0_3 = arith.constant 0 : index
    %c0_4 = arith.constant 0 : index
    %2 = vector.load %arg3[%c0_3, %c0_4] : memref<1x128xf32, #tpu.memory_space<vmem>>, vector<1x128xf32>
    %cst = arith.constant dense<0.000000e+00> : vector<16xf32>
    %3 = vector.multi_reduction <add>, %0, %cst [1] : vector<16x128xf32> to vector<16xf32>
    %4 = vector.shape_cast %3 : vector<16xf32> to vector<16x1xf32>
    %cst_5 = arith.constant 1.280000e+02 : f32
    %5 = vector.broadcast %cst_5 : f32 to vector<16x1xf32>
    %6 = arith.divf %4, %5 : vector<16x1xf32>
    %7 = vector.broadcast %6 : vector<16x1xf32> to vector<16x128xf32>
    %8 = arith.subf %0, %7 : vector<16x128xf32>
    %9 = arith.mulf %8, %8 : vector<16x128xf32>
    %cst_6 = arith.constant dense<0.000000e+00> : vector<16xf32>
    %10 = vector.multi_reduction <add>, %9, %cst_6 [1] : vector<16x128xf32> to vector<16xf32>
    %11 = vector.shape_cast %10 : vector<16xf32> to vector<16x1xf32>
    %cst_7 = arith.constant 1.280000e+02 : f32
    %12 = vector.broadcast %cst_7 : f32 to vector<16x1xf32>
    %13 = arith.divf %11, %12 : vector<16x1xf32>
    %14 = vector.broadcast %6 : vector<16x1xf32> to vector<16x128xf32>
    %15 = arith.subf %0, %14 : vector<16x128xf32>
    %cst_8 = arith.constant 9.99999974E-6 : f32
    %16 = vector.broadcast %cst_8 : f32 to vector<16x1xf32>
    %17 = arith.addf %13, %16 : vector<16x1xf32>
    %18 = math.rsqrt %17 : vector<16x1xf32>
    %19 = vector.broadcast %18 : vector<16x1xf32> to vector<16x128xf32>
    %20 = arith.mulf %15, %19 : vector<16x128xf32>
    %21 = vector.broadcast %1 : vector<1x128xf32> to vector<16x128xf32>
    %22 = arith.mulf %20, %21 : vector<16x128xf32>
    %23 = vector.broadcast %2 : vector<1x128xf32> to vector<16x128xf32>
    %24 = arith.addf %22, %23 : vector<16x128xf32>
    %c0_9 = arith.constant 0 : index
    %c0_10 = arith.constant 0 : index
    %25 = vector.load %arg9[%c0_9, %c0_10] : memref<16x128xf32, #tpu.memory_space<vmem>>, vector<16x128xf32>
    tpu.vector_store %arg9[%c0_9, %c0_10], %24 {strides = array<i32>} : memref<16x128xf32, #tpu.memory_space<vmem>>, vector<16x128xf32>,
    %c0_11 = arith.constant 0 : index
    %c0_12 = arith.constant 0 : index
    %26 = vector.load %arg9[%c0_11, %c0_12] : memref<16x128xf32, #tpu.memory_space<vmem>>, vector<16x128xf32>
    %27 = arith.negf %26 : vector<16x128xf32>
    %28 = math.exp %27 : vector<16x128xf32>
    %cst_13 = arith.constant 1.000000e+00 : f32
    %29 = vector.broadcast %cst_13 : f32 to vector<16x128xf32>
    %30 = arith.addf %29, %28 : vector<16x128xf32>
    %31 = arith.divf %29, %30 : vector<16x128xf32>
    %32 = arith.mulf %26, %31 : vector<16x128xf32>
    %cst_14 = arith.constant -2.200000e+00 : f32
    %33 = vector.broadcast %cst_14 : f32 to vector<16x128xf32>
    %34 = arith.cmpf oge, %26, %33 : vector<16x128xf32>
    %35 = arith.extui %34 : vector<16x128xi1> to vector<16x128xi32>
    %36 = arith.sitofp %35 : vector<16x128xi32> to vector<16x128xf32>
    %cst_15 = arith.constant -1.800000e+00 : f32
    %37 = vector.broadcast %cst_15 : f32 to vector<16x128xf32>
    %38 = arith.cmpf oge, %26, %37 : vector<16x128xf32>
    %39 = arith.extui %38 : vector<16x128xi1> to vector<16x128xi32>
    %40 = arith.sitofp %39 : vector<16x128xi32> to vector<16x128xf32>
    %cst_16 = arith.constant -1.400000e+00 : f32
    %41 = vector.broadcast %cst_16 : f32 to vector<16x128xf32>
    %42 = arith.cmpf oge, %26, %41 : vector<16x128xf32>
    %43 = arith.extui %42 : vector<16x128xi1> to vector<16x128xi32>
    %44 = arith.sitofp %43 : vector<16x128xi32> to vector<16x128xf32>
    %cst_17 = arith.constant -1.000000e+00 : f32
    %45 = vector.broadcast %cst_17 : f32 to vector<16x128xf32>
    %46 = arith.cmpf oge, %26, %45 : vector<16x128xf32>
    %47 = arith.extui %46 : vector<16x128xi1> to vector<16x128xi32>
    %48 = arith.sitofp %47 : vector<16x128xi32> to vector<16x128xf32>
    %cst_18 = arith.constant -6.000000e-01 : f32
    %49 = vector.broadcast %cst_18 : f32 to vector<16x128xf32>
    %50 = arith.cmpf oge, %26, %49 : vector<16x128xf32>
    %51 = arith.extui %50 : vector<16x128xi1> to vector<16x128xi32>
    %52 = arith.sitofp %51 : vector<16x128xi32> to vector<16x128xf32>
    %cst_19 = arith.constant -2.000000e-01 : f32
    %53 = vector.broadcast %cst_19 : f32 to vector<16x128xf32>
    %54 = arith.cmpf oge, %26, %53 : vector<16x128xf32>
    %55 = arith.extui %54 : vector<16x128xi1> to vector<16x128xi32>
    %56 = arith.sitofp %55 : vector<16x128xi32> to vector<16x128xf32>
    %cst_20 = arith.constant 2.000000e-01 : f32
    %57 = vector.broadcast %cst_20 : f32 to vector<16x128xf32>
    %58 = arith.cmpf oge, %26, %57 : vector<16x128xf32>
    %59 = arith.extui %58 : vector<16x128xi1> to vector<16x128xi32>
    %60 = arith.sitofp %59 : vector<16x128xi32> to vector<16x128xf32>
    %cst_21 = arith.constant 6.000000e-01 : f32
    %61 = vector.broadcast %cst_21 : f32 to vector<16x128xf32>
    %62 = arith.cmpf oge, %26, %61 : vector<16x128xf32>
    %63 = arith.extui %62 : vector<16x128xi1> to vector<16x128xi32>
    %64 = arith.sitofp %63 : vector<16x128xi32> to vector<16x128xf32>
    %cst_22 = arith.constant 1.000000e+00 : f32
    %65 = vector.broadcast %cst_22 : f32 to vector<16x128xf32>
    %66 = arith.cmpf oge, %26, %65 : vector<16x128xf32>
    %67 = arith.extui %66 : vector<16x128xi1> to vector<16x128xi32>
    %68 = arith.sitofp %67 : vector<16x128xi32> to vector<16x128xf32>
    %cst_23 = arith.constant 1.400000e+00 : f32
    %69 = vector.broadcast %cst_23 : f32 to vector<16x128xf32>
    %70 = arith.cmpf oge, %26, %69 : vector<16x128xf32>
    %71 = arith.extui %70 : vector<16x128xi1> to vector<16x128xi32>
    %72 = arith.sitofp %71 : vector<16x128xi32> to vector<16x128xf32>
    %cst_24 = arith.constant 1.800000e+00 : f32
    %73 = vector.broadcast %cst_24 : f32 to vector<16x128xf32>
    %74 = arith.cmpf oge, %26, %73 : vector<16x128xf32>
    %75 = arith.extui %74 : vector<16x128xi1> to vector<16x128xi32>
    %76 = arith.sitofp %75 : vector<16x128xi32> to vector<16x128xf32>
    %cst_25 = arith.constant 2.200000e+00 : f32
    %77 = vector.broadcast %cst_25 : f32 to vector<16x128xf32>
    %78 = arith.cmpf oge, %26, %77 : vector<16x128xf32>
    %79 = arith.extui %78 : vector<16x128xi1> to vector<16x128xi32>
    %80 = arith.sitofp %79 : vector<16x128xi32> to vector<16x128xf32>
    %81 = arith.subf %36, %40 : vector<16x128xf32>
    %82 = arith.subf %40, %44 : vector<16x128xf32>
    %83 = arith.subf %44, %48 : vector<16x128xf32>
    %84 = arith.subf %48, %52 : vector<16x128xf32>
    %85 = arith.subf %52, %56 : vector<16x128xf32>
    %86 = arith.subf %56, %60 : vector<16x128xf32>
    %87 = arith.subf %60, %64 : vector<16x128xf32>
    %88 = arith.subf %64, %68 : vector<16x128xf32>
    %89 = arith.subf %68, %72 : vector<16x128xf32>
    %90 = arith.subf %72, %76 : vector<16x128xf32>
    %91 = arith.subf %76, %80 : vector<16x128xf32>
    %cst_26 = arith.constant -2.200000e+00 : f32
    %92 = vector.broadcast %cst_26 : f32 to vector<16x128xf32>
    %93 = arith.subf %26, %92 : vector<16x128xf32>
    %cst_27 = arith.constant -1.800000e+00 : f32
    %94 = vector.broadcast %cst_27 : f32 to vector<16x128xf32>
    %95 = arith.subf %26, %94 : vector<16x128xf32>
    %cst_28 = arith.constant -1.400000e+00 : f32
    %96 = vector.broadcast %cst_28 : f32 to vector<16x128xf32>
    %97 = arith.subf %26, %96 : vector<16x128xf32>
    %cst_29 = arith.constant -1.000000e+00 : f32
    %98 = vector.broadcast %cst_29 : f32 to vector<16x128xf32>
    %99 = arith.subf %26, %98 : vector<16x128xf32>
    %cst_30 = arith.constant -6.000000e-01 : f32
    %100 = vector.broadcast %cst_30 : f32 to vector<16x128xf32>
    %101 = arith.subf %26, %100 : vector<16x128xf32>
    %cst_31 = arith.constant -2.000000e-01 : f32
    %102 = vector.broadcast %cst_31 : f32 to vector<16x128xf32>
    %103 = arith.subf %26, %102 : vector<16x128xf32>
    %cst_32 = arith.constant 2.000000e-01 : f32
    %104 = vector.broadcast %cst_32 : f32 to vector<16x128xf32>
    %105 = arith.subf %26, %104 : vector<16x128xf32>
    %cst_33 = arith.constant 6.000000e-01 : f32
    %106 = vector.broadcast %cst_33 : f32 to vector<16x128xf32>
    %107 = arith.subf %26, %106 : vector<16x128xf32>
    %cst_34 = arith.constant 1.000000e+00 : f32
    %108 = vector.broadcast %cst_34 : f32 to vector<16x128xf32>
    %109 = arith.subf %26, %108 : vector<16x128xf32>
    %cst_35 = arith.constant 1.400000e+00 : f32
    %110 = vector.broadcast %cst_35 : f32 to vector<16x128xf32>
    %111 = arith.subf %26, %110 : vector<16x128xf32>
    %cst_36 = arith.constant 1.800000e+00 : f32
    %112 = vector.broadcast %cst_36 : f32 to vector<16x128xf32>
    %113 = arith.subf %26, %112 : vector<16x128xf32>
    %cst_37 = arith.constant 2.500000e+00 : f32
    %114 = vector.broadcast %cst_37 : f32 to vector<16x128xf32>
    %115 = arith.mulf %93, %114 : vector<16x128xf32>
    %cst_38 = arith.constant 2.500000e+00 : f32
    %116 = vector.broadcast %cst_38 : f32 to vector<16x128xf32>
    %117 = arith.mulf %95, %116 : vector<16x128xf32>
    %cst_39 = arith.constant 2.500000e+00 : f32
    %118 = vector.broadcast %cst_39 : f32 to vector<16x128xf32>
    %119 = arith.mulf %97, %118 : vector<16x128xf32>
    %cst_40 = arith.constant 2.500000e+00 : f32
    %120 = vector.broadcast %cst_40 : f32 to vector<16x128xf32>
    %121 = arith.mulf %99, %120 : vector<16x128xf32>
    %cst_41 = arith.constant 2.500000e+00 : f32
    %122 = vector.broadcast %cst_41 : f32 to vector<16x128xf32>
    %123 = arith.mulf %101, %122 : vector<16x128xf32>
    %cst_42 = arith.constant 2.500000e+00 : f32
    %124 = vector.broadcast %cst_42 : f32 to vector<16x128xf32>
    %125 = arith.mulf %103, %124 : vector<16x128xf32>
    %cst_43 = arith.constant 2.500000e+00 : f32
    %126 = vector.broadcast %cst_43 : f32 to vector<16x128xf32>
    %127 = arith.mulf %105, %126 : vector<16x128xf32>
    %cst_44 = arith.constant 2.500000e+00 : f32
    %128 = vector.broadcast %cst_44 : f32 to vector<16x128xf32>
    %129 = arith.mulf %107, %128 : vector<16x128xf32>
    %cst_45 = arith.constant 2.500000e+00 : f32
    %130 = vector.broadcast %cst_45 : f32 to vector<16x128xf32>
    %131 = arith.mulf %109, %130 : vector<16x128xf32>
    %cst_46 = arith.constant 2.500000e+00 : f32
    %132 = vector.broadcast %cst_46 : f32 to vector<16x128xf32>
    %133 = arith.mulf %111, %132 : vector<16x128xf32>
    %cst_47 = arith.constant 2.500000e+00 : f32
    %134 = vector.broadcast %cst_47 : f32 to vector<16x128xf32>
    %135 = arith.mulf %113, %134 : vector<16x128xf32>
    %136 = arith.mulf %115, %81 : vector<16x128xf32>
    %cst_48 = arith.constant 1.000000e+00 : f32
    %137 = vector.broadcast %cst_48 : f32 to vector<16x128xf32>
    %138 = arith.subf %137, %117 : vector<16x128xf32>
    %139 = arith.mulf %138, %82 : vector<16x128xf32>
    %140 = arith.addf %136, %139 : vector<16x128xf32>
    %141 = arith.mulf %117, %82 : vector<16x128xf32>
    %cst_49 = arith.constant 1.000000e+00 : f32
    %142 = vector.broadcast %cst_49 : f32 to vector<16x128xf32>
    %143 = arith.subf %142, %119 : vector<16x128xf32>
    %144 = arith.mulf %143, %83 : vector<16x128xf32>
    %145 = arith.addf %141, %144 : vector<16x128xf32>
    %146 = arith.mulf %119, %83 : vector<16x128xf32>
    %cst_50 = arith.constant 1.000000e+00 : f32
    %147 = vector.broadcast %cst_50 : f32 to vector<16x128xf32>
    %148 = arith.subf %147, %121 : vector<16x128xf32>
    %149 = arith.mulf %148, %84 : vector<16x128xf32>
    %150 = arith.addf %146, %149 : vector<16x128xf32>
    %151 = arith.mulf %121, %84 : vector<16x128xf32>
    %cst_51 = arith.constant 1.000000e+00 : f32
    %152 = vector.broadcast %cst_51 : f32 to vector<16x128xf32>
    %153 = arith.subf %152, %123 : vector<16x128xf32>
    %154 = arith.mulf %153, %85 : vector<16x128xf32>
    %155 = arith.addf %151, %154 : vector<16x128xf32>
    %156 = arith.mulf %123, %85 : vector<16x128xf32>
    %cst_52 = arith.constant 1.000000e+00 : f32
    %157 = vector.broadcast %cst_52 : f32 to vector<16x128xf32>
    %158 = arith.subf %157, %125 : vector<16x128xf32>
    %159 = arith.mulf %158, %86 : vector<16x128xf32>
    %160 = arith.addf %156, %159 : vector<16x128xf32>
    %161 = arith.mulf %125, %86 : vector<16x128xf32>
    %cst_53 = arith.constant 1.000000e+00 : f32
    %162 = vector.broadcast %cst_53 : f32 to vector<16x128xf32>
    %163 = arith.subf %162, %127 : vector<16x128xf32>
    %164 = arith.mulf %163, %87 : vector<16x128xf32>
    %165 = arith.addf %161, %164 : vector<16x128xf32>
    %166 = arith.mulf %127, %87 : vector<16x128xf32>
    %cst_54 = arith.constant 1.000000e+00 : f32
    %167 = vector.broadcast %cst_54 : f32 to vector<16x128xf32>
    %168 = arith.subf %167, %129 : vector<16x128xf32>
    %169 = arith.mulf %168, %88 : vector<16x128xf32>
    %170 = arith.addf %166, %169 : vector<16x128xf32>
    %171 = arith.mulf %129, %88 : vector<16x128xf32>
    %cst_55 = arith.constant 1.000000e+00 : f32
    %172 = vector.broadcast %cst_55 : f32 to vector<16x128xf32>
    %173 = arith.subf %172, %131 : vector<16x128xf32>
    %174 = arith.mulf %173, %89 : vector<16x128xf32>
    %175 = arith.addf %171, %174 : vector<16x128xf32>
    %176 = arith.mulf %131, %89 : vector<16x128xf32>
    %cst_56 = arith.constant 1.000000e+00 : f32
    %177 = vector.broadcast %cst_56 : f32 to vector<16x128xf32>
    %178 = arith.subf %177, %133 : vector<16x128xf32>
    %179 = arith.mulf %178, %90 : vector<16x128xf32>
    %180 = arith.addf %176, %179 : vector<16x128xf32>
    %181 = arith.mulf %133, %90 : vector<16x128xf32>
    %cst_57 = arith.constant 1.000000e+00 : f32
    %182 = vector.broadcast %cst_57 : f32 to vector<16x128xf32>
    %183 = arith.subf %182, %135 : vector<16x128xf32>
    %184 = arith.mulf %183, %91 : vector<16x128xf32>
    %185 = arith.addf %181, %184 : vector<16x128xf32>
    %cst_58 = arith.constant 1.250000e+00 : f32
    %186 = vector.broadcast %cst_58 : f32 to vector<16x128xf32>
    %187 = arith.mulf %93, %186 : vector<16x128xf32>
    %cst_59 = arith.constant 1.250000e+00 : f32
    %188 = vector.broadcast %cst_59 : f32 to vector<16x128xf32>
    %189 = arith.mulf %95, %188 : vector<16x128xf32>
    %cst_60 = arith.constant 1.250000e+00 : f32
    %190 = vector.broadcast %cst_60 : f32 to vector<16x128xf32>
    %191 = arith.mulf %97, %190 : vector<16x128xf32>
    %cst_61 = arith.constant 1.250000e+00 : f32
    %192 = vector.broadcast %cst_61 : f32 to vector<16x128xf32>
    %193 = arith.mulf %99, %192 : vector<16x128xf32>
    %cst_62 = arith.constant 1.250000e+00 : f32
    %194 = vector.broadcast %cst_62 : f32 to vector<16x128xf32>
    %195 = arith.mulf %101, %194 : vector<16x128xf32>
    %cst_63 = arith.constant 1.250000e+00 : f32
    %196 = vector.broadcast %cst_63 : f32 to vector<16x128xf32>
    %197 = arith.mulf %103, %196 : vector<16x128xf32>
    %cst_64 = arith.constant 1.250000e+00 : f32
    %198 = vector.broadcast %cst_64 : f32 to vector<16x128xf32>
    %199 = arith.mulf %105, %198 : vector<16x128xf32>
    %cst_65 = arith.constant 1.250000e+00 : f32
    %200 = vector.broadcast %cst_65 : f32 to vector<16x128xf32>
    %201 = arith.mulf %107, %200 : vector<16x128xf32>
    %cst_66 = arith.constant 1.250000e+00 : f32
    %202 = vector.broadcast %cst_66 : f32 to vector<16x128xf32>
    %203 = arith.mulf %109, %202 : vector<16x128xf32>
    %cst_67 = arith.constant 1.250000e+00 : f32
    %204 = vector.broadcast %cst_67 : f32 to vector<16x128xf32>
    %205 = arith.mulf %111, %204 : vector<16x128xf32>
    %206 = arith.mulf %187, %140 : vector<16x128xf32>
    %cst_68 = arith.constant 1.000000e+00 : f32
    %207 = vector.broadcast %cst_68 : f32 to vector<16x128xf32>
    %208 = arith.subf %207, %189 : vector<16x128xf32>
    %209 = arith.mulf %208, %145 : vector<16x128xf32>
    %210 = arith.addf %206, %209 : vector<16x128xf32>
    %211 = arith.mulf %189, %145 : vector<16x128xf32>
    %cst_69 = arith.constant 1.000000e+00 : f32
    %212 = vector.broadcast %cst_69 : f32 to vector<16x128xf32>
    %213 = arith.subf %212, %191 : vector<16x128xf32>
    %214 = arith.mulf %213, %150 : vector<16x128xf32>
    %215 = arith.addf %211, %214 : vector<16x128xf32>
    %216 = arith.mulf %191, %150 : vector<16x128xf32>
    %cst_70 = arith.constant 1.000000e+00 : f32
    %217 = vector.broadcast %cst_70 : f32 to vector<16x128xf32>
    %218 = arith.subf %217, %193 : vector<16x128xf32>
    %219 = arith.mulf %218, %155 : vector<16x128xf32>
    %220 = arith.addf %216, %219 : vector<16x128xf32>
    %221 = arith.mulf %193, %155 : vector<16x128xf32>
    %cst_71 = arith.constant 1.000000e+00 : f32
    %222 = vector.broadcast %cst_71 : f32 to vector<16x128xf32>
    %223 = arith.subf %222, %195 : vector<16x128xf32>
    %224 = arith.mulf %223, %160 : vector<16x128xf32>
    %225 = arith.addf %221, %224 : vector<16x128xf32>
    %226 = arith.mulf %195, %160 : vector<16x128xf32>
    %cst_72 = arith.constant 1.000000e+00 : f32
    %227 = vector.broadcast %cst_72 : f32 to vector<16x128xf32>
    %228 = arith.subf %227, %197 : vector<16x128xf32>
    %229 = arith.mulf %228, %165 : vector<16x128xf32>
    %230 = arith.addf %226, %229 : vector<16x128xf32>
    %231 = arith.mulf %197, %165 : vector<16x128xf32>
    %cst_73 = arith.constant 1.000000e+00 : f32
    %232 = vector.broadcast %cst_73 : f32 to vector<16x128xf32>
    %233 = arith.subf %232, %199 : vector<16x128xf32>
    %234 = arith.mulf %233, %170 : vector<16x128xf32>
    %235 = arith.addf %231, %234 : vector<16x128xf32>
    %236 = arith.mulf %199, %170 : vector<16x128xf32>
    %cst_74 = arith.constant 1.000000e+00 : f32
    %237 = vector.broadcast %cst_74 : f32 to vector<16x128xf32>
    %238 = arith.subf %237, %201 : vector<16x128xf32>
    %239 = arith.mulf %238, %175 : vector<16x128xf32>
    %240 = arith.addf %236, %239 : vector<16x128xf32>
    %241 = arith.mulf %201, %175 : vector<16x128xf32>
    %cst_75 = arith.constant 1.000000e+00 : f32
    %242 = vector.broadcast %cst_75 : f32 to vector<16x128xf32>
    %243 = arith.subf %242, %203 : vector<16x128xf32>
    %244 = arith.mulf %243, %180 : vector<16x128xf32>
    %245 = arith.addf %241, %244 : vector<16x128xf32>
    %246 = arith.mulf %203, %180 : vector<16x128xf32>
    %cst_76 = arith.constant 1.000000e+00 : f32
    %247 = vector.broadcast %cst_76 : f32 to vector<16x128xf32>
    %248 = arith.subf %247, %205 : vector<16x128xf32>
    %249 = arith.mulf %248, %185 : vector<16x128xf32>
    %250 = arith.addf %246, %249 : vector<16x128xf32>
    %cst_77 = arith.constant 0.833333313 : f32
    %251 = vector.broadcast %cst_77 : f32 to vector<16x128xf32>
    %252 = arith.mulf %93, %251 : vector<16x128xf32>
    %cst_78 = arith.constant 0.833333313 : f32
    %253 = vector.broadcast %cst_78 : f32 to vector<16x128xf32>
    %254 = arith.mulf %95, %253 : vector<16x128xf32>
    %cst_79 = arith.constant 0.833333313 : f32
    %255 = vector.broadcast %cst_79 : f32 to vector<16x128xf32>
    %256 = arith.mulf %97, %255 : vector<16x128xf32>
    %cst_80 = arith.constant 0.833333313 : f32
    %257 = vector.broadcast %cst_80 : f32 to vector<16x128xf32>
    %258 = arith.mulf %99, %257 : vector<16x128xf32>
    %cst_81 = arith.constant 0.833333313 : f32
    %259 = vector.broadcast %cst_81 : f32 to vector<16x128xf32>
    %260 = arith.mulf %101, %259 : vector<16x128xf32>
    %cst_82 = arith.constant 0.833333313 : f32
    %261 = vector.broadcast %cst_82 : f32 to vector<16x128xf32>
    %262 = arith.mulf %103, %261 : vector<16x128xf32>
    %cst_83 = arith.constant 0.833333313 : f32
    %263 = vector.broadcast %cst_83 : f32 to vector<16x128xf32>
    %264 = arith.mulf %105, %263 : vector<16x128xf32>
    %cst_84 = arith.constant 0.833333313 : f32
    %265 = vector.broadcast %cst_84 : f32 to vector<16x128xf32>
    %266 = arith.mulf %107, %265 : vector<16x128xf32>
    %cst_85 = arith.constant 0.833333313 : f32
    %267 = vector.broadcast %cst_85 : f32 to vector<16x128xf32>
    %268 = arith.mulf %109, %267 : vector<16x128xf32>
    %269 = arith.mulf %252, %210 : vector<16x128xf32>
    %cst_86 = arith.constant 1.000000e+00 : f32
    %270 = vector.broadcast %cst_86 : f32 to vector<16x128xf32>
    %271 = arith.subf %270, %254 : vector<16x128xf32>
    %272 = arith.mulf %271, %215 : vector<16x128xf32>
    %273 = arith.addf %269, %272 : vector<16x128xf32>
    %274 = arith.mulf %254, %215 : vector<16x128xf32>
    %cst_87 = arith.constant 1.000000e+00 : f32
    %275 = vector.broadcast %cst_87 : f32 to vector<16x128xf32>
    %276 = arith.subf %275, %256 : vector<16x128xf32>
    %277 = arith.mulf %276, %220 : vector<16x128xf32>
    %278 = arith.addf %274, %277 : vector<16x128xf32>
    %279 = arith.mulf %256, %220 : vector<16x128xf32>
    %cst_88 = arith.constant 1.000000e+00 : f32
    %280 = vector.broadcast %cst_88 : f32 to vector<16x128xf32>
    %281 = arith.subf %280, %258 : vector<16x128xf32>
    %282 = arith.mulf %281, %225 : vector<16x128xf32>
    %283 = arith.addf %279, %282 : vector<16x128xf32>
    %284 = arith.mulf %258, %225 : vector<16x128xf32>
    %cst_89 = arith.constant 1.000000e+00 : f32
    %285 = vector.broadcast %cst_89 : f32 to vector<16x128xf32>
    %286 = arith.subf %285, %260 : vector<16x128xf32>
    %287 = arith.mulf %286, %230 : vector<16x128xf32>
    %288 = arith.addf %284, %287 : vector<16x128xf32>
    %289 = arith.mulf %260, %230 : vector<16x128xf32>
    %cst_90 = arith.constant 1.000000e+00 : f32
    %290 = vector.broadcast %cst_90 : f32 to vector<16x128xf32>
    %291 = arith.subf %290, %262 : vector<16x128xf32>
    %292 = arith.mulf %291, %235 : vector<16x128xf32>
    %293 = arith.addf %289, %292 : vector<16x128xf32>
    %294 = arith.mulf %262, %235 : vector<16x128xf32>
    %cst_91 = arith.constant 1.000000e+00 : f32
    %295 = vector.broadcast %cst_91 : f32 to vector<16x128xf32>
    %296 = arith.subf %295, %264 : vector<16x128xf32>
    %297 = arith.mulf %296, %240 : vector<16x128xf32>
    %298 = arith.addf %294, %297 : vector<16x128xf32>
    %299 = arith.mulf %264, %240 : vector<16x128xf32>
    %cst_92 = arith.constant 1.000000e+00 : f32
    %300 = vector.broadcast %cst_92 : f32 to vector<16x128xf32>
    %301 = arith.subf %300, %266 : vector<16x128xf32>
    %302 = arith.mulf %301, %245 : vector<16x128xf32>
    %303 = arith.addf %299, %302 : vector<16x128xf32>
    %304 = arith.mulf %266, %245 : vector<16x128xf32>
    %cst_93 = arith.constant 1.000000e+00 : f32
    %305 = vector.broadcast %cst_93 : f32 to vector<16x128xf32>
    %306 = arith.subf %305, %268 : vector<16x128xf32>
    %307 = arith.mulf %306, %250 : vector<16x128xf32>
    %308 = arith.addf %304, %307 : vector<16x128xf32>
    %309 = arith.truncf %32 : vector<16x128xf32> to vector<16x128xbf16>
    %c0_94 = arith.constant 0 : index
    %c0_95 = arith.constant 0 : index
    %310 = vector.load %arg12[%c0_94, %c0_95] : memref<16x1152xbf16, #tpu.memory_space<vmem>>, vector<16x128xbf16>
    tpu.vector_store %arg12[%c0_94, %c0_95], %309 {strides = array<i32>} : memref<16x1152xbf16, #tpu.memory_space<vmem>>, vector<16x128xbf16>,
    %311 = arith.truncf %273 : vector<16x128xf32> to vector<16x128xbf16>
    %c0_96 = arith.constant 0 : index
    %c128 = arith.constant 128 : index
    %312 = vector.load %arg12[%c0_96, %c128] : memref<16x1152xbf16, #tpu.memory_space<vmem>>, vector<16x128xbf16>
    tpu.vector_store %arg12[%c0_96, %c128], %311 {strides = array<i32>} : memref<16x1152xbf16, #tpu.memory_space<vmem>>, vector<16x128xbf16>,
    %313 = arith.truncf %278 : vector<16x128xf32> to vector<16x128xbf16>
    %c0_97 = arith.constant 0 : index
    %c256 = arith.constant 256 : index
    %314 = vector.load %arg12[%c0_97, %c256] : memref<16x1152xbf16, #tpu.memory_space<vmem>>, vector<16x128xbf16>
    tpu.vector_store %arg12[%c0_97, %c256], %313 {strides = array<i32>} : memref<16x1152xbf16, #tpu.memory_space<vmem>>, vector<16x128xbf16>,
    %315 = arith.truncf %283 : vector<16x128xf32> to vector<16x128xbf16>
    %c0_98 = arith.constant 0 : index
    %c384 = arith.constant 384 : index
    %316 = vector.load %arg12[%c0_98, %c384] : memref<16x1152xbf16, #tpu.memory_space<vmem>>, vector<16x128xbf16>
    tpu.vector_store %arg12[%c0_98, %c384], %315 {strides = array<i32>} : memref<16x1152xbf16, #tpu.memory_space<vmem>>, vector<16x128xbf16>,
    %317 = arith.truncf %288 : vector<16x128xf32> to vector<16x128xbf16>
    %c0_99 = arith.constant 0 : index
    %c512 = arith.constant 512 : index
    %318 = vector.load %arg12[%c0_99, %c512] : memref<16x1152xbf16, #tpu.memory_space<vmem>>, vector<16x128xbf16>
    tpu.vector_store %arg12[%c0_99, %c512], %317 {strides = array<i32>} : memref<16x1152xbf16, #tpu.memory_space<vmem>>, vector<16x128xbf16>,
    %319 = arith.truncf %293 : vector<16x128xf32> to vector<16x128xbf16>
    %c0_100 = arith.constant 0 : index
    %c640 = arith.constant 640 : index
    %320 = vector.load %arg12[%c0_100, %c640] : memref<16x1152xbf16, #tpu.memory_space<vmem>>, vector<16x128xbf16>
    tpu.vector_store %arg12[%c0_100, %c640], %319 {strides = array<i32>} : memref<16x1152xbf16, #tpu.memory_space<vmem>>, vector<16x128xbf16>,
    %321 = arith.truncf %298 : vector<16x128xf32> to vector<16x128xbf16>
    %c0_101 = arith.constant 0 : index
    %c768 = arith.constant 768 : index
    %322 = vector.load %arg12[%c0_101, %c768] : memref<16x1152xbf16, #tpu.memory_space<vmem>>, vector<16x128xbf16>
    tpu.vector_store %arg12[%c0_101, %c768], %321 {strides = array<i32>} : memref<16x1152xbf16, #tpu.memory_space<vmem>>, vector<16x128xbf16>,
    %323 = arith.truncf %303 : vector<16x128xf32> to vector<16x128xbf16>
    %c0_102 = arith.constant 0 : index
    %c896 = arith.constant 896 : index
    %324 = vector.load %arg12[%c0_102, %c896] : memref<16x1152xbf16, #tpu.memory_space<vmem>>, vector<16x128xbf16>
    tpu.vector_store %arg12[%c0_102, %c896], %323 {strides = array<i32>} : memref<16x1152xbf16, #tpu.memory_space<vmem>>, vector<16x128xbf16>,
    %325 = arith.truncf %308 : vector<16x128xf32> to vector<16x128xbf16>
    %c0_103 = arith.constant 0 : index
    %c1024 = arith.constant 1024 : index
    %326 = vector.load %arg12[%c0_103, %c1024] : memref<16x1152xbf16, #tpu.memory_space<vmem>>, vector<16x128xbf16>
    tpu.vector_store %arg12[%c0_103, %c1024], %325 {strides = array<i32>} : memref<16x1152xbf16, #tpu.memory_space<vmem>>, vector<16x128xbf16>,
    %c0_104 = arith.constant 0 : index
    %c0_105 = arith.constant 0 : index
    %327 = vector.load %arg4[%c0_104, %c0_105] : memref<1152x256xbf16, #tpu.memory_space<vmem>>, vector<1152x256xbf16>
    %c0_106 = arith.constant 0 : index
    %c0_107 = arith.constant 0 : index
    %328 = vector.load %arg12[%c0_106, %c0_107] : memref<16x1152xbf16, #tpu.memory_space<vmem>>, vector<16x1152xbf16>
    %cst_108 = arith.constant dense<0.000000e+00> : vector<16x256xf32>
    %329 = tpu.matmul %328, %327, %cst_108 {dimension_numbers = #tpu.dot_dimension_numbers<[1], [0], [0], [1], [0, 0, 1, 1], [], []>} : vector<16x1152xbf16>, vector<1152x256xbf16>, vector<16x256xf32> -> vector<16x256xf32>
    %c0_109 = arith.constant 0 : index
    %c0_110 = arith.constant 0 : index
    %330 = vector.load %arg10[%c0_109, %c0_110] : memref<16x256xf32, #tpu.memory_space<vmem>>, vector<16x256xf32>
    tpu.vector_store %arg10[%c0_109, %c0_110], %329 {strides = array<i32>} : memref<16x256xf32, #tpu.memory_space<vmem>>, vector<16x256xf32>,
    %c0_111 = arith.constant 0 : index
    %c0_112 = arith.constant 0 : index
    %331 = vector.load %arg10[%c0_111, %c0_112] : memref<16x256xf32, #tpu.memory_space<vmem>>, vector<16x256xf32>
    %332 = arith.mulf %331, %331 : vector<16x256xf32>
    %333 = arith.mulf %331, %332 : vector<16x256xf32>
    %cst_113 = arith.constant 4.471500e-02 : f32
    %334 = vector.broadcast %cst_113 : f32 to vector<16x256xf32>
    %335 = arith.mulf %334, %333 : vector<16x256xf32>
    %336 = arith.addf %331, %335 : vector<16x256xf32>
    %cst_114 = arith.constant 0.797884583 : f32
    %337 = vector.broadcast %cst_114 : f32 to vector<16x256xf32>
    %338 = arith.mulf %337, %336 : vector<16x256xf32>
    %339 = math.tanh %338 : vector<16x256xf32>
    %cst_115 = arith.constant 1.000000e+00 : f32
    %340 = vector.broadcast %cst_115 : f32 to vector<16x256xf32>
    %341 = arith.addf %340, %339 : vector<16x256xf32>
    %cst_116 = arith.constant 5.000000e-01 : f32
    %342 = vector.broadcast %cst_116 : f32 to vector<16x256xf32>
    %343 = arith.mulf %342, %341 : vector<16x256xf32>
    %344 = arith.mulf %331, %343 : vector<16x256xf32>
    %345 = arith.negf %344 : vector<16x256xf32>
    %346 = math.exp %345 : vector<16x256xf32>
    %cst_117 = arith.constant 1.000000e+00 : f32
    %347 = vector.broadcast %cst_117 : f32 to vector<16x256xf32>
    %348 = arith.addf %347, %346 : vector<16x256xf32>
    %349 = arith.divf %347, %348 : vector<16x256xf32>
    %350 = arith.mulf %344, %349 : vector<16x256xf32>
    %cst_118 = arith.constant -2.200000e+00 : f32
    %351 = vector.broadcast %cst_118 : f32 to vector<16x256xf32>
    %352 = arith.cmpf oge, %344, %351 : vector<16x256xf32>
    %353 = arith.extui %352 : vector<16x256xi1> to vector<16x256xi32>
    %354 = arith.sitofp %353 : vector<16x256xi32> to vector<16x256xf32>
    %cst_119 = arith.constant -1.800000e+00 : f32
    %355 = vector.broadcast %cst_119 : f32 to vector<16x256xf32>
    %356 = arith.cmpf oge, %344, %355 : vector<16x256xf32>
    %357 = arith.extui %356 : vector<16x256xi1> to vector<16x256xi32>
    %358 = arith.sitofp %357 : vector<16x256xi32> to vector<16x256xf32>
    %cst_120 = arith.constant -1.400000e+00 : f32
    %359 = vector.broadcast %cst_120 : f32 to vector<16x256xf32>
    %360 = arith.cmpf oge, %344, %359 : vector<16x256xf32>
    %361 = arith.extui %360 : vector<16x256xi1> to vector<16x256xi32>
    %362 = arith.sitofp %361 : vector<16x256xi32> to vector<16x256xf32>
    %cst_121 = arith.constant -1.000000e+00 : f32
    %363 = vector.broadcast %cst_121 : f32 to vector<16x256xf32>
    %364 = arith.cmpf oge, %344, %363 : vector<16x256xf32>
    %365 = arith.extui %364 : vector<16x256xi1> to vector<16x256xi32>
    %366 = arith.sitofp %365 : vector<16x256xi32> to vector<16x256xf32>
    %cst_122 = arith.constant -6.000000e-01 : f32
    %367 = vector.broadcast %cst_122 : f32 to vector<16x256xf32>
    %368 = arith.cmpf oge, %344, %367 : vector<16x256xf32>
    %369 = arith.extui %368 : vector<16x256xi1> to vector<16x256xi32>
    %370 = arith.sitofp %369 : vector<16x256xi32> to vector<16x256xf32>
    %cst_123 = arith.constant -2.000000e-01 : f32
    %371 = vector.broadcast %cst_123 : f32 to vector<16x256xf32>
    %372 = arith.cmpf oge, %344, %371 : vector<16x256xf32>
    %373 = arith.extui %372 : vector<16x256xi1> to vector<16x256xi32>
    %374 = arith.sitofp %373 : vector<16x256xi32> to vector<16x256xf32>
    %cst_124 = arith.constant 2.000000e-01 : f32
    %375 = vector.broadcast %cst_124 : f32 to vector<16x256xf32>
    %376 = arith.cmpf oge, %344, %375 : vector<16x256xf32>
    %377 = arith.extui %376 : vector<16x256xi1> to vector<16x256xi32>
    %378 = arith.sitofp %377 : vector<16x256xi32> to vector<16x256xf32>
    %cst_125 = arith.constant 6.000000e-01 : f32
    %379 = vector.broadcast %cst_125 : f32 to vector<16x256xf32>
    %380 = arith.cmpf oge, %344, %379 : vector<16x256xf32>
    %381 = arith.extui %380 : vector<16x256xi1> to vector<16x256xi32>
    %382 = arith.sitofp %381 : vector<16x256xi32> to vector<16x256xf32>
    %cst_126 = arith.constant 1.000000e+00 : f32
    %383 = vector.broadcast %cst_126 : f32 to vector<16x256xf32>
    %384 = arith.cmpf oge, %344, %383 : vector<16x256xf32>
    %385 = arith.extui %384 : vector<16x256xi1> to vector<16x256xi32>
    %386 = arith.sitofp %385 : vector<16x256xi32> to vector<16x256xf32>
    %cst_127 = arith.constant 1.400000e+00 : f32
    %387 = vector.broadcast %cst_127 : f32 to vector<16x256xf32>
    %388 = arith.cmpf oge, %344, %387 : vector<16x256xf32>
    %389 = arith.extui %388 : vector<16x256xi1> to vector<16x256xi32>
    %390 = arith.sitofp %389 : vector<16x256xi32> to vector<16x256xf32>
    %cst_128 = arith.constant 1.800000e+00 : f32
    %391 = vector.broadcast %cst_128 : f32 to vector<16x256xf32>
    %392 = arith.cmpf oge, %344, %391 : vector<16x256xf32>
    %393 = arith.extui %392 : vector<16x256xi1> to vector<16x256xi32>
    %394 = arith.sitofp %393 : vector<16x256xi32> to vector<16x256xf32>
    %cst_129 = arith.constant 2.200000e+00 : f32
    %395 = vector.broadcast %cst_129 : f32 to vector<16x256xf32>
    %396 = arith.cmpf oge, %344, %395 : vector<16x256xf32>
    %397 = arith.extui %396 : vector<16x256xi1> to vector<16x256xi32>
    %398 = arith.sitofp %397 : vector<16x256xi32> to vector<16x256xf32>
    %399 = arith.subf %354, %358 : vector<16x256xf32>
    %400 = arith.subf %358, %362 : vector<16x256xf32>
    %401 = arith.subf %362, %366 : vector<16x256xf32>
    %402 = arith.subf %366, %370 : vector<16x256xf32>
    %403 = arith.subf %370, %374 : vector<16x256xf32>
    %404 = arith.subf %374, %378 : vector<16x256xf32>
    %405 = arith.subf %378, %382 : vector<16x256xf32>
    %406 = arith.subf %382, %386 : vector<16x256xf32>
    %407 = arith.subf %386, %390 : vector<16x256xf32>
    %408 = arith.subf %390, %394 : vector<16x256xf32>
    %409 = arith.subf %394, %398 : vector<16x256xf32>
    %cst_130 = arith.constant -2.200000e+00 : f32
    %410 = vector.broadcast %cst_130 : f32 to vector<16x256xf32>
    %411 = arith.subf %344, %410 : vector<16x256xf32>
    %cst_131 = arith.constant -1.800000e+00 : f32
    %412 = vector.broadcast %cst_131 : f32 to vector<16x256xf32>
    %413 = arith.subf %344, %412 : vector<16x256xf32>
    %cst_132 = arith.constant -1.400000e+00 : f32
    %414 = vector.broadcast %cst_132 : f32 to vector<16x256xf32>
    %415 = arith.subf %344, %414 : vector<16x256xf32>
    %cst_133 = arith.constant -1.000000e+00 : f32
    %416 = vector.broadcast %cst_133 : f32 to vector<16x256xf32>
    %417 = arith.subf %344, %416 : vector<16x256xf32>
    %cst_134 = arith.constant -6.000000e-01 : f32
    %418 = vector.broadcast %cst_134 : f32 to vector<16x256xf32>
    %419 = arith.subf %344, %418 : vector<16x256xf32>
    %cst_135 = arith.constant -2.000000e-01 : f32
    %420 = vector.broadcast %cst_135 : f32 to vector<16x256xf32>
    %421 = arith.subf %344, %420 : vector<16x256xf32>
    %cst_136 = arith.constant 2.000000e-01 : f32
    %422 = vector.broadcast %cst_136 : f32 to vector<16x256xf32>
    %423 = arith.subf %344, %422 : vector<16x256xf32>
    %cst_137 = arith.constant 6.000000e-01 : f32
    %424 = vector.broadcast %cst_137 : f32 to vector<16x256xf32>
    %425 = arith.subf %344, %424 : vector<16x256xf32>
    %cst_138 = arith.constant 1.000000e+00 : f32
    %426 = vector.broadcast %cst_138 : f32 to vector<16x256xf32>
    %427 = arith.subf %344, %426 : vector<16x256xf32>
    %cst_139 = arith.constant 1.400000e+00 : f32
    %428 = vector.broadcast %cst_139 : f32 to vector<16x256xf32>
    %429 = arith.subf %344, %428 : vector<16x256xf32>
    %cst_140 = arith.constant 1.800000e+00 : f32
    %430 = vector.broadcast %cst_140 : f32 to vector<16x256xf32>
    %431 = arith.subf %344, %430 : vector<16x256xf32>
    %cst_141 = arith.constant 2.500000e+00 : f32
    %432 = vector.broadcast %cst_141 : f32 to vector<16x256xf32>
    %433 = arith.mulf %411, %432 : vector<16x256xf32>
    %cst_142 = arith.constant 2.500000e+00 : f32
    %434 = vector.broadcast %cst_142 : f32 to vector<16x256xf32>
    %435 = arith.mulf %413, %434 : vector<16x256xf32>
    %cst_143 = arith.constant 2.500000e+00 : f32
    %436 = vector.broadcast %cst_143 : f32 to vector<16x256xf32>
    %437 = arith.mulf %415, %436 : vector<16x256xf32>
    %cst_144 = arith.constant 2.500000e+00 : f32
    %438 = vector.broadcast %cst_144 : f32 to vector<16x256xf32>
    %439 = arith.mulf %417, %438 : vector<16x256xf32>
    %cst_145 = arith.constant 2.500000e+00 : f32
    %440 = vector.broadcast %cst_145 : f32 to vector<16x256xf32>
    %441 = arith.mulf %419, %440 : vector<16x256xf32>
    %cst_146 = arith.constant 2.500000e+00 : f32
    %442 = vector.broadcast %cst_146 : f32 to vector<16x256xf32>
    %443 = arith.mulf %421, %442 : vector<16x256xf32>
    %cst_147 = arith.constant 2.500000e+00 : f32
    %444 = vector.broadcast %cst_147 : f32 to vector<16x256xf32>
    %445 = arith.mulf %423, %444 : vector<16x256xf32>
    %cst_148 = arith.constant 2.500000e+00 : f32
    %446 = vector.broadcast %cst_148 : f32 to vector<16x256xf32>
    %447 = arith.mulf %425, %446 : vector<16x256xf32>
    %cst_149 = arith.constant 2.500000e+00 : f32
    %448 = vector.broadcast %cst_149 : f32 to vector<16x256xf32>
    %449 = arith.mulf %427, %448 : vector<16x256xf32>
    %cst_150 = arith.constant 2.500000e+00 : f32
    %450 = vector.broadcast %cst_150 : f32 to vector<16x256xf32>
    %451 = arith.mulf %429, %450 : vector<16x256xf32>
    %cst_151 = arith.constant 2.500000e+00 : f32
    %452 = vector.broadcast %cst_151 : f32 to vector<16x256xf32>
    %453 = arith.mulf %431, %452 : vector<16x256xf32>
    %454 = arith.mulf %433, %399 : vector<16x256xf32>
    %cst_152 = arith.constant 1.000000e+00 : f32
    %455 = vector.broadcast %cst_152 : f32 to vector<16x256xf32>
    %456 = arith.subf %455, %435 : vector<16x256xf32>
    %457 = arith.mulf %456, %400 : vector<16x256xf32>
    %458 = arith.addf %454, %457 : vector<16x256xf32>
    %459 = arith.mulf %435, %400 : vector<16x256xf32>
    %cst_153 = arith.constant 1.000000e+00 : f32
    %460 = vector.broadcast %cst_153 : f32 to vector<16x256xf32>
    %461 = arith.subf %460, %437 : vector<16x256xf32>
    %462 = arith.mulf %461, %401 : vector<16x256xf32>
    %463 = arith.addf %459, %462 : vector<16x256xf32>
    %464 = arith.mulf %437, %401 : vector<16x256xf32>
    %cst_154 = arith.constant 1.000000e+00 : f32
    %465 = vector.broadcast %cst_154 : f32 to vector<16x256xf32>
    %466 = arith.subf %465, %439 : vector<16x256xf32>
    %467 = arith.mulf %466, %402 : vector<16x256xf32>
    %468 = arith.addf %464, %467 : vector<16x256xf32>
    %469 = arith.mulf %439, %402 : vector<16x256xf32>
    %cst_155 = arith.constant 1.000000e+00 : f32
    %470 = vector.broadcast %cst_155 : f32 to vector<16x256xf32>
    %471 = arith.subf %470, %441 : vector<16x256xf32>
    %472 = arith.mulf %471, %403 : vector<16x256xf32>
    %473 = arith.addf %469, %472 : vector<16x256xf32>
    %474 = arith.mulf %441, %403 : vector<16x256xf32>
    %cst_156 = arith.constant 1.000000e+00 : f32
    %475 = vector.broadcast %cst_156 : f32 to vector<16x256xf32>
    %476 = arith.subf %475, %443 : vector<16x256xf32>
    %477 = arith.mulf %476, %404 : vector<16x256xf32>
    %478 = arith.addf %474, %477 : vector<16x256xf32>
    %479 = arith.mulf %443, %404 : vector<16x256xf32>
    %cst_157 = arith.constant 1.000000e+00 : f32
    %480 = vector.broadcast %cst_157 : f32 to vector<16x256xf32>
    %481 = arith.subf %480, %445 : vector<16x256xf32>
    %482 = arith.mulf %481, %405 : vector<16x256xf32>
    %483 = arith.addf %479, %482 : vector<16x256xf32>
    %484 = arith.mulf %445, %405 : vector<16x256xf32>
    %cst_158 = arith.constant 1.000000e+00 : f32
    %485 = vector.broadcast %cst_158 : f32 to vector<16x256xf32>
    %486 = arith.subf %485, %447 : vector<16x256xf32>
    %487 = arith.mulf %486, %406 : vector<16x256xf32>
    %488 = arith.addf %484, %487 : vector<16x256xf32>
    %489 = arith.mulf %447, %406 : vector<16x256xf32>
    %cst_159 = arith.constant 1.000000e+00 : f32
    %490 = vector.broadcast %cst_159 : f32 to vector<16x256xf32>
    %491 = arith.subf %490, %449 : vector<16x256xf32>
    %492 = arith.mulf %491, %407 : vector<16x256xf32>
    %493 = arith.addf %489, %492 : vector<16x256xf32>
    %494 = arith.mulf %449, %407 : vector<16x256xf32>
    %cst_160 = arith.constant 1.000000e+00 : f32
    %495 = vector.broadcast %cst_160 : f32 to vector<16x256xf32>
    %496 = arith.subf %495, %451 : vector<16x256xf32>
    %497 = arith.mulf %496, %408 : vector<16x256xf32>
    %498 = arith.addf %494, %497 : vector<16x256xf32>
    %499 = arith.mulf %451, %408 : vector<16x256xf32>
    %cst_161 = arith.constant 1.000000e+00 : f32
    %500 = vector.broadcast %cst_161 : f32 to vector<16x256xf32>
    %501 = arith.subf %500, %453 : vector<16x256xf32>
    %502 = arith.mulf %501, %409 : vector<16x256xf32>
    %503 = arith.addf %499, %502 : vector<16x256xf32>
    %cst_162 = arith.constant 1.250000e+00 : f32
    %504 = vector.broadcast %cst_162 : f32 to vector<16x256xf32>
    %505 = arith.mulf %411, %504 : vector<16x256xf32>
    %cst_163 = arith.constant 1.250000e+00 : f32
    %506 = vector.broadcast %cst_163 : f32 to vector<16x256xf32>
    %507 = arith.mulf %413, %506 : vector<16x256xf32>
    %cst_164 = arith.constant 1.250000e+00 : f32
    %508 = vector.broadcast %cst_164 : f32 to vector<16x256xf32>
    %509 = arith.mulf %415, %508 : vector<16x256xf32>
    %cst_165 = arith.constant 1.250000e+00 : f32
    %510 = vector.broadcast %cst_165 : f32 to vector<16x256xf32>
    %511 = arith.mulf %417, %510 : vector<16x256xf32>
    %cst_166 = arith.constant 1.250000e+00 : f32
    %512 = vector.broadcast %cst_166 : f32 to vector<16x256xf32>
    %513 = arith.mulf %419, %512 : vector<16x256xf32>
    %cst_167 = arith.constant 1.250000e+00 : f32
    %514 = vector.broadcast %cst_167 : f32 to vector<16x256xf32>
    %515 = arith.mulf %421, %514 : vector<16x256xf32>
    %cst_168 = arith.constant 1.250000e+00 : f32
    %516 = vector.broadcast %cst_168 : f32 to vector<16x256xf32>
    %517 = arith.mulf %423, %516 : vector<16x256xf32>
    %cst_169 = arith.constant 1.250000e+00 : f32
    %518 = vector.broadcast %cst_169 : f32 to vector<16x256xf32>
    %519 = arith.mulf %425, %518 : vector<16x256xf32>
    %cst_170 = arith.constant 1.250000e+00 : f32
    %520 = vector.broadcast %cst_170 : f32 to vector<16x256xf32>
    %521 = arith.mulf %427, %520 : vector<16x256xf32>
    %cst_171 = arith.constant 1.250000e+00 : f32
    %522 = vector.broadcast %cst_171 : f32 to vector<16x256xf32>
    %523 = arith.mulf %429, %522 : vector<16x256xf32>
    %524 = arith.mulf %505, %458 : vector<16x256xf32>
    %cst_172 = arith.constant 1.000000e+00 : f32
    %525 = vector.broadcast %cst_172 : f32 to vector<16x256xf32>
    %526 = arith.subf %525, %507 : vector<16x256xf32>
    %527 = arith.mulf %526, %463 : vector<16x256xf32>
    %528 = arith.addf %524, %527 : vector<16x256xf32>
    %529 = arith.mulf %507, %463 : vector<16x256xf32>
    %cst_173 = arith.constant 1.000000e+00 : f32
    %530 = vector.broadcast %cst_173 : f32 to vector<16x256xf32>
    %531 = arith.subf %530, %509 : vector<16x256xf32>
    %532 = arith.mulf %531, %468 : vector<16x256xf32>
    %533 = arith.addf %529, %532 : vector<16x256xf32>
    %534 = arith.mulf %509, %468 : vector<16x256xf32>
    %cst_174 = arith.constant 1.000000e+00 : f32
    %535 = vector.broadcast %cst_174 : f32 to vector<16x256xf32>
    %536 = arith.subf %535, %511 : vector<16x256xf32>
    %537 = arith.mulf %536, %473 : vector<16x256xf32>
    %538 = arith.addf %534, %537 : vector<16x256xf32>
    %539 = arith.mulf %511, %473 : vector<16x256xf32>
    %cst_175 = arith.constant 1.000000e+00 : f32
    %540 = vector.broadcast %cst_175 : f32 to vector<16x256xf32>
    %541 = arith.subf %540, %513 : vector<16x256xf32>
    %542 = arith.mulf %541, %478 : vector<16x256xf32>
    %543 = arith.addf %539, %542 : vector<16x256xf32>
    %544 = arith.mulf %513, %478 : vector<16x256xf32>
    %cst_176 = arith.constant 1.000000e+00 : f32
    %545 = vector.broadcast %cst_176 : f32 to vector<16x256xf32>
    %546 = arith.subf %545, %515 : vector<16x256xf32>
    %547 = arith.mulf %546, %483 : vector<16x256xf32>
    %548 = arith.addf %544, %547 : vector<16x256xf32>
    %549 = arith.mulf %515, %483 : vector<16x256xf32>
    %cst_177 = arith.constant 1.000000e+00 : f32
    %550 = vector.broadcast %cst_177 : f32 to vector<16x256xf32>
    %551 = arith.subf %550, %517 : vector<16x256xf32>
    %552 = arith.mulf %551, %488 : vector<16x256xf32>
    %553 = arith.addf %549, %552 : vector<16x256xf32>
    %554 = arith.mulf %517, %488 : vector<16x256xf32>
    %cst_178 = arith.constant 1.000000e+00 : f32
    %555 = vector.broadcast %cst_178 : f32 to vector<16x256xf32>
    %556 = arith.subf %555, %519 : vector<16x256xf32>
    %557 = arith.mulf %556, %493 : vector<16x256xf32>
    %558 = arith.addf %554, %557 : vector<16x256xf32>
    %559 = arith.mulf %519, %493 : vector<16x256xf32>
    %cst_179 = arith.constant 1.000000e+00 : f32
    %560 = vector.broadcast %cst_179 : f32 to vector<16x256xf32>
    %561 = arith.subf %560, %521 : vector<16x256xf32>
    %562 = arith.mulf %561, %498 : vector<16x256xf32>
    %563 = arith.addf %559, %562 : vector<16x256xf32>
    %564 = arith.mulf %521, %498 : vector<16x256xf32>
    %cst_180 = arith.constant 1.000000e+00 : f32
    %565 = vector.broadcast %cst_180 : f32 to vector<16x256xf32>
    %566 = arith.subf %565, %523 : vector<16x256xf32>
    %567 = arith.mulf %566, %503 : vector<16x256xf32>
    %568 = arith.addf %564, %567 : vector<16x256xf32>
    %cst_181 = arith.constant 0.833333313 : f32
    %569 = vector.broadcast %cst_181 : f32 to vector<16x256xf32>
    %570 = arith.mulf %411, %569 : vector<16x256xf32>
    %cst_182 = arith.constant 0.833333313 : f32
    %571 = vector.broadcast %cst_182 : f32 to vector<16x256xf32>
    %572 = arith.mulf %413, %571 : vector<16x256xf32>
    %cst_183 = arith.constant 0.833333313 : f32
    %573 = vector.broadcast %cst_183 : f32 to vector<16x256xf32>
    %574 = arith.mulf %415, %573 : vector<16x256xf32>
    %cst_184 = arith.constant 0.833333313 : f32
    %575 = vector.broadcast %cst_184 : f32 to vector<16x256xf32>
    %576 = arith.mulf %417, %575 : vector<16x256xf32>
    %cst_185 = arith.constant 0.833333313 : f32
    %577 = vector.broadcast %cst_185 : f32 to vector<16x256xf32>
    %578 = arith.mulf %419, %577 : vector<16x256xf32>
    %cst_186 = arith.constant 0.833333313 : f32
    %579 = vector.broadcast %cst_186 : f32 to vector<16x256xf32>
    %580 = arith.mulf %421, %579 : vector<16x256xf32>
    %cst_187 = arith.constant 0.833333313 : f32
    %581 = vector.broadcast %cst_187 : f32 to vector<16x256xf32>
    %582 = arith.mulf %423, %581 : vector<16x256xf32>
    %cst_188 = arith.constant 0.833333313 : f32
    %583 = vector.broadcast %cst_188 : f32 to vector<16x256xf32>
    %584 = arith.mulf %425, %583 : vector<16x256xf32>
    %cst_189 = arith.constant 0.833333313 : f32
    %585 = vector.broadcast %cst_189 : f32 to vector<16x256xf32>
    %586 = arith.mulf %427, %585 : vector<16x256xf32>
    %587 = arith.mulf %570, %528 : vector<16x256xf32>
    %cst_190 = arith.constant 1.000000e+00 : f32
    %588 = vector.broadcast %cst_190 : f32 to vector<16x256xf32>
    %589 = arith.subf %588, %572 : vector<16x256xf32>
    %590 = arith.mulf %589, %533 : vector<16x256xf32>
    %591 = arith.addf %587, %590 : vector<16x256xf32>
    %592 = arith.mulf %572, %533 : vector<16x256xf32>
    %cst_191 = arith.constant 1.000000e+00 : f32
    %593 = vector.broadcast %cst_191 : f32 to vector<16x256xf32>
    %594 = arith.subf %593, %574 : vector<16x256xf32>
    %595 = arith.mulf %594, %538 : vector<16x256xf32>
    %596 = arith.addf %592, %595 : vector<16x256xf32>
    %597 = arith.mulf %574, %538 : vector<16x256xf32>
    %cst_192 = arith.constant 1.000000e+00 : f32
    %598 = vector.broadcast %cst_192 : f32 to vector<16x256xf32>
    %599 = arith.subf %598, %576 : vector<16x256xf32>
    %600 = arith.mulf %599, %543 : vector<16x256xf32>
    %601 = arith.addf %597, %600 : vector<16x256xf32>
    %602 = arith.mulf %576, %543 : vector<16x256xf32>
    %cst_193 = arith.constant 1.000000e+00 : f32
    %603 = vector.broadcast %cst_193 : f32 to vector<16x256xf32>
    %604 = arith.subf %603, %578 : vector<16x256xf32>
    %605 = arith.mulf %604, %548 : vector<16x256xf32>
    %606 = arith.addf %602, %605 : vector<16x256xf32>
    %607 = arith.mulf %578, %548 : vector<16x256xf32>
    %cst_194 = arith.constant 1.000000e+00 : f32
    %608 = vector.broadcast %cst_194 : f32 to vector<16x256xf32>
    %609 = arith.subf %608, %580 : vector<16x256xf32>
    %610 = arith.mulf %609, %553 : vector<16x256xf32>
    %611 = arith.addf %607, %610 : vector<16x256xf32>
    %612 = arith.mulf %580, %553 : vector<16x256xf32>
    %cst_195 = arith.constant 1.000000e+00 : f32
    %613 = vector.broadcast %cst_195 : f32 to vector<16x256xf32>
    %614 = arith.subf %613, %582 : vector<16x256xf32>
    %615 = arith.mulf %614, %558 : vector<16x256xf32>
    %616 = arith.addf %612, %615 : vector<16x256xf32>
    %617 = arith.mulf %582, %558 : vector<16x256xf32>
    %cst_196 = arith.constant 1.000000e+00 : f32
    %618 = vector.broadcast %cst_196 : f32 to vector<16x256xf32>
    %619 = arith.subf %618, %584 : vector<16x256xf32>
    %620 = arith.mulf %619, %563 : vector<16x256xf32>
    %621 = arith.addf %617, %620 : vector<16x256xf32>
    %622 = arith.mulf %584, %563 : vector<16x256xf32>
    %cst_197 = arith.constant 1.000000e+00 : f32
    %623 = vector.broadcast %cst_197 : f32 to vector<16x256xf32>
    %624 = arith.subf %623, %586 : vector<16x256xf32>
    %625 = arith.mulf %624, %568 : vector<16x256xf32>
    %626 = arith.addf %622, %625 : vector<16x256xf32>
    %627 = arith.truncf %350 : vector<16x256xf32> to vector<16x256xbf16>
    %c0_198 = arith.constant 0 : index
    %c0_199 = arith.constant 0 : index
    %628 = vector.load %arg13[%c0_198, %c0_199] : memref<16x2304xbf16, #tpu.memory_space<vmem>>, vector<16x256xbf16>
    tpu.vector_store %arg13[%c0_198, %c0_199], %627 {strides = array<i32>} : memref<16x2304xbf16, #tpu.memory_space<vmem>>, vector<16x256xbf16>,
    %629 = arith.truncf %591 : vector<16x256xf32> to vector<16x256xbf16>
    %c0_200 = arith.constant 0 : index
    %c256_201 = arith.constant 256 : index
    %630 = vector.load %arg13[%c0_200, %c256_201] : memref<16x2304xbf16, #tpu.memory_space<vmem>>, vector<16x256xbf16>
    tpu.vector_store %arg13[%c0_200, %c256_201], %629 {strides = array<i32>} : memref<16x2304xbf16, #tpu.memory_space<vmem>>, vector<16x256xbf16>,
    %631 = arith.truncf %596 : vector<16x256xf32> to vector<16x256xbf16>
    %c0_202 = arith.constant 0 : index
    %c512_203 = arith.constant 512 : index
    %632 = vector.load %arg13[%c0_202, %c512_203] : memref<16x2304xbf16, #tpu.memory_space<vmem>>, vector<16x256xbf16>
    tpu.vector_store %arg13[%c0_202, %c512_203], %631 {strides = array<i32>} : memref<16x2304xbf16, #tpu.memory_space<vmem>>, vector<16x256xbf16>,
    %633 = arith.truncf %601 : vector<16x256xf32> to vector<16x256xbf16>
    %c0_204 = arith.constant 0 : index
    %c768_205 = arith.constant 768 : index
    %634 = vector.load %arg13[%c0_204, %c768_205] : memref<16x2304xbf16, #tpu.memory_space<vmem>>, vector<16x256xbf16>
    tpu.vector_store %arg13[%c0_204, %c768_205], %633 {strides = array<i32>} : memref<16x2304xbf16, #tpu.memory_space<vmem>>, vector<16x256xbf16>,
    %635 = arith.truncf %606 : vector<16x256xf32> to vector<16x256xbf16>
    %c0_206 = arith.constant 0 : index
    %c1024_207 = arith.constant 1024 : index
    %636 = vector.load %arg13[%c0_206, %c1024_207] : memref<16x2304xbf16, #tpu.memory_space<vmem>>, vector<16x256xbf16>
    tpu.vector_store %arg13[%c0_206, %c1024_207], %635 {strides = array<i32>} : memref<16x2304xbf16, #tpu.memory_space<vmem>>, vector<16x256xbf16>,
    %637 = arith.truncf %611 : vector<16x256xf32> to vector<16x256xbf16>
    %c0_208 = arith.constant 0 : index
    %c1280 = arith.constant 1280 : index
    %638 = vector.load %arg13[%c0_208, %c1280] : memref<16x2304xbf16, #tpu.memory_space<vmem>>, vector<16x256xbf16>
    tpu.vector_store %arg13[%c0_208, %c1280], %637 {strides = array<i32>} : memref<16x2304xbf16, #tpu.memory_space<vmem>>, vector<16x256xbf16>,
    %639 = arith.truncf %616 : vector<16x256xf32> to vector<16x256xbf16>
    %c0_209 = arith.constant 0 : index
    %c1536 = arith.constant 1536 : index
    %640 = vector.load %arg13[%c0_209, %c1536] : memref<16x2304xbf16, #tpu.memory_space<vmem>>, vector<16x256xbf16>
    tpu.vector_store %arg13[%c0_209, %c1536], %639 {strides = array<i32>} : memref<16x2304xbf16, #tpu.memory_space<vmem>>, vector<16x256xbf16>,
    %641 = arith.truncf %621 : vector<16x256xf32> to vector<16x256xbf16>
    %c0_210 = arith.constant 0 : index
    %c1792 = arith.constant 1792 : index
    %642 = vector.load %arg13[%c0_210, %c1792] : memref<16x2304xbf16, #tpu.memory_space<vmem>>, vector<16x256xbf16>
    tpu.vector_store %arg13[%c0_210, %c1792], %641 {strides = array<i32>} : memref<16x2304xbf16, #tpu.memory_space<vmem>>, vector<16x256xbf16>,
    %643 = arith.truncf %626 : vector<16x256xf32> to vector<16x256xbf16>
    %c0_211 = arith.constant 0 : index
    %c2048 = arith.constant 2048 : index
    %644 = vector.load %arg13[%c0_211, %c2048] : memref<16x2304xbf16, #tpu.memory_space<vmem>>, vector<16x256xbf16>
    tpu.vector_store %arg13[%c0_211, %c2048], %643 {strides = array<i32>} : memref<16x2304xbf16, #tpu.memory_space<vmem>>, vector<16x256xbf16>,
    %c0_212 = arith.constant 0 : index
    %c0_213 = arith.constant 0 : index
    %645 = vector.load %arg5[%c0_212, %c0_213] : memref<2304x128xbf16, #tpu.memory_space<vmem>>, vector<2304x128xbf16>
    %c0_214 = arith.constant 0 : index
    %c0_215 = arith.constant 0 : index
    %646 = vector.load %arg13[%c0_214, %c0_215] : memref<16x2304xbf16, #tpu.memory_space<vmem>>, vector<16x2304xbf16>
    %cst_216 = arith.constant dense<0.000000e+00> : vector<16x128xf32>
    %647 = tpu.matmul %646, %645, %cst_216 {dimension_numbers = #tpu.dot_dimension_numbers<[1], [0], [0], [1], [0, 0, 1, 1], [], []>} : vector<16x2304xbf16>, vector<2304x128xbf16>, vector<16x128xf32> -> vector<16x128xf32>
    %c0_217 = arith.constant 0 : index
    %c0_218 = arith.constant 0 : index
    %648 = vector.load %arg11[%c0_217, %c0_218] : memref<16x128xf32, #tpu.memory_space<vmem>>, vector<16x128xf32>
    tpu.vector_store %arg11[%c0_217, %c0_218], %647 {strides = array<i32>} : memref<16x128xf32, #tpu.memory_space<vmem>>, vector<16x128xf32>,
    %c0_219 = arith.constant 0 : index
    %c0_220 = arith.constant 0 : index
    %649 = vector.load %arg11[%c0_219, %c0_220] : memref<16x128xf32, #tpu.memory_space<vmem>>, vector<16x128xf32>
    %c0_221 = arith.constant 0 : index
    %c0_222 = arith.constant 0 : index
    %650 = vector.load %arg6[%c0_221, %c0_222] : memref<1x128xf32, #tpu.memory_space<vmem>>, vector<1x128xf32>
    %c0_223 = arith.constant 0 : index
    %c0_224 = arith.constant 0 : index
    %651 = vector.load %arg7[%c0_223, %c0_224] : memref<1x128xf32, #tpu.memory_space<vmem>>, vector<1x128xf32>
    %cst_225 = arith.constant dense<0.000000e+00> : vector<16xf32>
    %652 = vector.multi_reduction <add>, %649, %cst_225 [1] : vector<16x128xf32> to vector<16xf32>
    %653 = vector.shape_cast %652 : vector<16xf32> to vector<16x1xf32>
    %cst_226 = arith.constant 1.280000e+02 : f32
    %654 = vector.broadcast %cst_226 : f32 to vector<16x1xf32>
    %655 = arith.divf %653, %654 : vector<16x1xf32>
    %656 = vector.broadcast %655 : vector<16x1xf32> to vector<16x128xf32>
    %657 = arith.subf %649, %656 : vector<16x128xf32>
    %658 = arith.mulf %657, %657 : vector<16x128xf32>
    %cst_227 = arith.constant dense<0.000000e+00> : vector<16xf32>
    %659 = vector.multi_reduction <add>, %658, %cst_227 [1] : vector<16x128xf32> to vector<16xf32>
    %660 = vector.shape_cast %659 : vector<16xf32> to vector<16x1xf32>
    %cst_228 = arith.constant 1.280000e+02 : f32
    %661 = vector.broadcast %cst_228 : f32 to vector<16x1xf32>
    %662 = arith.divf %660, %661 : vector<16x1xf32>
    %663 = vector.broadcast %655 : vector<16x1xf32> to vector<16x128xf32>
    %664 = arith.subf %649, %663 : vector<16x128xf32>
    %cst_229 = arith.constant 9.99999974E-6 : f32
    %665 = vector.broadcast %cst_229 : f32 to vector<16x1xf32>
    %666 = arith.addf %662, %665 : vector<16x1xf32>
    %667 = math.rsqrt %666 : vector<16x1xf32>
    %668 = vector.broadcast %667 : vector<16x1xf32> to vector<16x128xf32>
    %669 = arith.mulf %664, %668 : vector<16x128xf32>
    %670 = vector.broadcast %650 : vector<1x128xf32> to vector<16x128xf32>
    %671 = arith.mulf %669, %670 : vector<16x128xf32>
    %672 = vector.broadcast %651 : vector<1x128xf32> to vector<16x128xf32>
    %673 = arith.addf %671, %672 : vector<16x128xf32>
    %c0_230 = arith.constant 0 : index
    %c0_231 = arith.constant 0 : index
    %674 = vector.load %arg8[%c0_230, %c0_231] : memref<16x128xf32, #tpu.memory_space<vmem>>, vector<16x128xf32>
    tpu.vector_store %arg8[%c0_230, %c0_231], %673 {strides = array<i32>} : memref<16x128xf32, #tpu.memory_space<vmem>>, vector<16x128xf32>,
    return
  }
  func.func @transform_0(%arg0: i32) -> (i32, i32) {
    %c0_i32 = arith.constant 0 : i32
    %c0_i32_0 = arith.constant 0 : i32
    return %arg0, %c0_i32 : i32, i32
  }
  func.func @transform_1(%arg0: i32) -> (i32, i32) {
    %c0_i32 = arith.constant 0 : i32
    %c0_i32_0 = arith.constant 0 : i32
    %c0_i32_1 = arith.constant 0 : i32
    return %c0_i32, %c0_i32_0 : i32, i32
  }
  func.func @transform_2(%arg0: i32) -> (i32, i32) {
    %c0_i32 = arith.constant 0 : i32
    %c0_i32_0 = arith.constant 0 : i32
    %c0_i32_1 = arith.constant 0 : i32
    return %c0_i32, %c0_i32_0 : i32, i32
  }
  func.func @transform_3(%arg0: i32) -> (i32, i32) {
    %c0_i32 = arith.constant 0 : i32
    %c0_i32_0 = arith.constant 0 : i32
    %c0_i32_1 = arith.constant 0 : i32
    return %c0_i32, %c0_i32_0 : i32, i32
  }
  func.func @transform_4(%arg0: i32) -> (i32, i32) {
    %c0_i32 = arith.constant 0 : i32
    %c0_i32_0 = arith.constant 0 : i32
    %c0_i32_1 = arith.constant 0 : i32
    return %c0_i32, %c0_i32_0 : i32, i32
  }
  func.func @transform_5(%arg0: i32) -> (i32, i32) {
    %c0_i32 = arith.constant 0 : i32
    %c0_i32_0 = arith.constant 0 : i32
    %c0_i32_1 = arith.constant 0 : i32
    return %c0_i32, %c0_i32_0 : i32, i32
  }
  func.func @transform_6(%arg0: i32) -> (i32, i32) {
    %c0_i32 = arith.constant 0 : i32
    %c0_i32_0 = arith.constant 0 : i32
    %c0_i32_1 = arith.constant 0 : i32
    return %c0_i32, %c0_i32_0 : i32, i32
  }
  func.func @transform_7(%arg0: i32) -> (i32, i32) {
    %c0_i32 = arith.constant 0 : i32
    %c0_i32_0 = arith.constant 0 : i32
    return %arg0, %c0_i32 : i32, i32
  }
}

module attributes {stable_mosaic.version = 11 : i64} {
  func.func @ffn_kernel(%arg0: i32, %arg1: memref<16x128xf32, #tpu.memory_space<vmem>>, %arg2: memref<1x128xf32, #tpu.memory_space<vmem>>, %arg3: memref<1x128xf32, #tpu.memory_space<vmem>>, %arg4: memref<1152x256xbf16, #tpu.memory_space<vmem>>, %arg5: memref<2304x128xbf16, #tpu.memory_space<vmem>>, %arg6: memref<1x128xf32, #tpu.memory_space<vmem>>, %arg7: memref<1x128xf32, #tpu.memory_space<vmem>>, %arg8: memref<16x128xf32, #tpu.memory_space<vmem>>, %arg9: memref<16x128xf32, #tpu.memory_space<vmem>>, %arg10: memref<16x256xf32, #tpu.memory_space<vmem>>, %arg11: memref<16x128xf32, #tpu.memory_space<vmem>>, %arg12: memref<16x1152xbf16, #tpu.memory_space<vmem>>, %arg13: memref<16x2304xbf16, #tpu.memory_space<vmem>>) attributes {dimension_semantics = [#tpu.dimension_semantics<parallel>], iteration_bounds = array<i64: 1>, scalar_prefetch = 0 : i64, scratch_operands = 5 : i64, tpu.core_type = #tpu.core_type<tc>, window_params = [{transform_indices = @transform_0, window_bounds = array<i64: 16, 128>}, {pipeline_mode = #tpu.pipeline_mode<synchronous>, transform_indices = @transform_1, window_bounds = array<i64: 1, 128>}, {pipeline_mode = #tpu.pipeline_mode<synchronous>, transform_indices = @transform_2, window_bounds = array<i64: 1, 128>}, {pipeline_mode = #tpu.pipeline_mode<synchronous>, transform_indices = @transform_3, window_bounds = array<i64: 1152, 256>}, {pipeline_mode = #tpu.pipeline_mode<synchronous>, transform_indices = @transform_4, window_bounds = array<i64: 2304, 128>}, {pipeline_mode = #tpu.pipeline_mode<synchronous>, transform_indices = @transform_5, window_bounds = array<i64: 1, 128>}, {pipeline_mode = #tpu.pipeline_mode<synchronous>, transform_indices = @transform_6, window_bounds = array<i64: 1, 128>}, {transform_indices = @transform_7, window_bounds = array<i64: 16, 128>}]} {
    %c0 = arith.constant 0 : index
    %c0_0 = arith.constant 0 : index
    %0 = vector.load %arg1[%c0, %c0_0] : memref<16x128xf32, #tpu.memory_space<vmem>>, vector<16x128xf32>
    %c0_1 = arith.constant 0 : index
    %c0_2 = arith.constant 0 : index
    %1 = vector.load %arg2[%c0_1, %c0_2] : memref<1x128xf32, #tpu.memory_space<vmem>>, vector<1x128xf32>
    %c0_3 = arith.constant 0 : index
    %c0_4 = arith.constant 0 : index
    %2 = vector.load %arg3[%c0_3, %c0_4] : memref<1x128xf32, #tpu.memory_space<vmem>>, vector<1x128xf32>
    %cst = arith.constant dense<0.000000e+00> : vector<16xf32>
    %3 = vector.multi_reduction <add>, %0, %cst [1] : vector<16x128xf32> to vector<16xf32>
    %4 = vector.shape_cast %3 : vector<16xf32> to vector<16x1xf32>
    %cst_5 = arith.constant 1.280000e+02 : f32
    %5 = vector.broadcast %cst_5 : f32 to vector<16x1xf32>
    %6 = arith.divf %4, %5 : vector<16x1xf32>
    %7 = vector.broadcast %6 : vector<16x1xf32> to vector<16x128xf32>
    %8 = arith.subf %0, %7 : vector<16x128xf32>
    %9 = arith.mulf %8, %8 : vector<16x128xf32>
    %cst_6 = arith.constant dense<0.000000e+00> : vector<16xf32>
    %10 = vector.multi_reduction <add>, %9, %cst_6 [1] : vector<16x128xf32> to vector<16xf32>
    %11 = vector.shape_cast %10 : vector<16xf32> to vector<16x1xf32>
    %cst_7 = arith.constant 1.280000e+02 : f32
    %12 = vector.broadcast %cst_7 : f32 to vector<16x1xf32>
    %13 = arith.divf %11, %12 : vector<16x1xf32>
    %14 = vector.broadcast %6 : vector<16x1xf32> to vector<16x128xf32>
    %15 = arith.subf %0, %14 : vector<16x128xf32>
    %cst_8 = arith.constant 9.99999974E-6 : f32
    %16 = vector.broadcast %cst_8 : f32 to vector<16x1xf32>
    %17 = arith.addf %13, %16 : vector<16x1xf32>
    %18 = math.rsqrt %17 : vector<16x1xf32>
    %19 = vector.broadcast %18 : vector<16x1xf32> to vector<16x128xf32>
    %20 = arith.mulf %15, %19 : vector<16x128xf32>
    %21 = vector.broadcast %1 : vector<1x128xf32> to vector<16x128xf32>
    %22 = arith.mulf %20, %21 : vector<16x128xf32>
    %23 = vector.broadcast %2 : vector<1x128xf32> to vector<16x128xf32>
    %24 = arith.addf %22, %23 : vector<16x128xf32>
    %c0_9 = arith.constant 0 : index
    %c0_10 = arith.constant 0 : index
    %25 = vector.load %arg9[%c0_9, %c0_10] : memref<16x128xf32, #tpu.memory_space<vmem>>, vector<16x128xf32>
    tpu.vector_store %arg9[%c0_9, %c0_10], %24 {strides = array<i32>} : memref<16x128xf32, #tpu.memory_space<vmem>>, vector<16x128xf32>,
    %c0_11 = arith.constant 0 : index
    %c0_12 = arith.constant 0 : index
    %26 = vector.load %arg9[%c0_11, %c0_12] : memref<16x128xf32, #tpu.memory_space<vmem>>, vector<16x128xf32>
    %27 = arith.negf %26 : vector<16x128xf32>
    %28 = math.exp %27 : vector<16x128xf32>
    %cst_13 = arith.constant 1.000000e+00 : f32
    %29 = vector.broadcast %cst_13 : f32 to vector<16x128xf32>
    %30 = arith.addf %29, %28 : vector<16x128xf32>
    %31 = arith.divf %29, %30 : vector<16x128xf32>
    %32 = arith.mulf %26, %31 : vector<16x128xf32>
    %cst_14 = arith.constant -2.200000e+00 : f32
    %33 = vector.broadcast %cst_14 : f32 to vector<16x128xf32>
    %34 = arith.cmpf oge, %26, %33 : vector<16x128xf32>
    %35 = arith.extui %34 : vector<16x128xi1> to vector<16x128xi32>
    %36 = arith.sitofp %35 : vector<16x128xi32> to vector<16x128xf32>
    %cst_15 = arith.constant -1.800000e+00 : f32
    %37 = vector.broadcast %cst_15 : f32 to vector<16x128xf32>
    %38 = arith.cmpf oge, %26, %37 : vector<16x128xf32>
    %39 = arith.extui %38 : vector<16x128xi1> to vector<16x128xi32>
    %40 = arith.sitofp %39 : vector<16x128xi32> to vector<16x128xf32>
    %cst_16 = arith.constant -1.400000e+00 : f32
    %41 = vector.broadcast %cst_16 : f32 to vector<16x128xf32>
    %42 = arith.cmpf oge, %26, %41 : vector<16x128xf32>
    %43 = arith.extui %42 : vector<16x128xi1> to vector<16x128xi32>
    %44 = arith.sitofp %43 : vector<16x128xi32> to vector<16x128xf32>
    %cst_17 = arith.constant -1.000000e+00 : f32
    %45 = vector.broadcast %cst_17 : f32 to vector<16x128xf32>
    %46 = arith.cmpf oge, %26, %45 : vector<16x128xf32>
    %47 = arith.extui %46 : vector<16x128xi1> to vector<16x128xi32>
    %48 = arith.sitofp %47 : vector<16x128xi32> to vector<16x128xf32>
    %cst_18 = arith.constant -6.000000e-01 : f32
    %49 = vector.broadcast %cst_18 : f32 to vector<16x128xf32>
    %50 = arith.cmpf oge, %26, %49 : vector<16x128xf32>
    %51 = arith.extui %50 : vector<16x128xi1> to vector<16x128xi32>
    %52 = arith.sitofp %51 : vector<16x128xi32> to vector<16x128xf32>
    %cst_19 = arith.constant -2.000000e-01 : f32
    %53 = vector.broadcast %cst_19 : f32 to vector<16x128xf32>
    %54 = arith.cmpf oge, %26, %53 : vector<16x128xf32>
    %55 = arith.extui %54 : vector<16x128xi1> to vector<16x128xi32>
    %56 = arith.sitofp %55 : vector<16x128xi32> to vector<16x128xf32>
    %cst_20 = arith.constant 2.000000e-01 : f32
    %57 = vector.broadcast %cst_20 : f32 to vector<16x128xf32>
    %58 = arith.cmpf oge, %26, %57 : vector<16x128xf32>
    %59 = arith.extui %58 : vector<16x128xi1> to vector<16x128xi32>
    %60 = arith.sitofp %59 : vector<16x128xi32> to vector<16x128xf32>
    %cst_21 = arith.constant 6.000000e-01 : f32
    %61 = vector.broadcast %cst_21 : f32 to vector<16x128xf32>
    %62 = arith.cmpf oge, %26, %61 : vector<16x128xf32>
    %63 = arith.extui %62 : vector<16x128xi1> to vector<16x128xi32>
    %64 = arith.sitofp %63 : vector<16x128xi32> to vector<16x128xf32>
    %cst_22 = arith.constant 1.000000e+00 : f32
    %65 = vector.broadcast %cst_22 : f32 to vector<16x128xf32>
    %66 = arith.cmpf oge, %26, %65 : vector<16x128xf32>
    %67 = arith.extui %66 : vector<16x128xi1> to vector<16x128xi32>
    %68 = arith.sitofp %67 : vector<16x128xi32> to vector<16x128xf32>
    %cst_23 = arith.constant 1.400000e+00 : f32
    %69 = vector.broadcast %cst_23 : f32 to vector<16x128xf32>
    %70 = arith.cmpf oge, %26, %69 : vector<16x128xf32>
    %71 = arith.extui %70 : vector<16x128xi1> to vector<16x128xi32>
    %72 = arith.sitofp %71 : vector<16x128xi32> to vector<16x128xf32>
    %cst_24 = arith.constant 1.800000e+00 : f32
    %73 = vector.broadcast %cst_24 : f32 to vector<16x128xf32>
    %74 = arith.cmpf oge, %26, %73 : vector<16x128xf32>
    %75 = arith.extui %74 : vector<16x128xi1> to vector<16x128xi32>
    %76 = arith.sitofp %75 : vector<16x128xi32> to vector<16x128xf32>
    %cst_25 = arith.constant 2.200000e+00 : f32
    %77 = vector.broadcast %cst_25 : f32 to vector<16x128xf32>
    %78 = arith.cmpf oge, %26, %77 : vector<16x128xf32>
    %79 = arith.extui %78 : vector<16x128xi1> to vector<16x128xi32>
    %80 = arith.sitofp %79 : vector<16x128xi32> to vector<16x128xf32>
    %81 = arith.subf %36, %40 : vector<16x128xf32>
    %82 = arith.subf %40, %44 : vector<16x128xf32>
    %83 = arith.subf %44, %48 : vector<16x128xf32>
    %84 = arith.subf %48, %52 : vector<16x128xf32>
    %85 = arith.subf %52, %56 : vector<16x128xf32>
    %86 = arith.subf %56, %60 : vector<16x128xf32>
    %87 = arith.subf %60, %64 : vector<16x128xf32>
    %88 = arith.subf %64, %68 : vector<16x128xf32>
    %89 = arith.subf %68, %72 : vector<16x128xf32>
    %90 = arith.subf %72, %76 : vector<16x128xf32>
    %91 = arith.subf %76, %80 : vector<16x128xf32>
    %cst_26 = arith.constant -2.200000e+00 : f32
    %92 = vector.broadcast %cst_26 : f32 to vector<16x128xf32>
    %93 = arith.subf %26, %92 : vector<16x128xf32>
    %cst_27 = arith.constant -1.800000e+00 : f32
    %94 = vector.broadcast %cst_27 : f32 to vector<16x128xf32>
    %95 = arith.subf %26, %94 : vector<16x128xf32>
    %cst_28 = arith.constant -1.400000e+00 : f32
    %96 = vector.broadcast %cst_28 : f32 to vector<16x128xf32>
    %97 = arith.subf %26, %96 : vector<16x128xf32>
    %cst_29 = arith.constant -1.000000e+00 : f32
    %98 = vector.broadcast %cst_29 : f32 to vector<16x128xf32>
    %99 = arith.subf %26, %98 : vector<16x128xf32>
    %cst_30 = arith.constant -6.000000e-01 : f32
    %100 = vector.broadcast %cst_30 : f32 to vector<16x128xf32>
    %101 = arith.subf %26, %100 : vector<16x128xf32>
    %cst_31 = arith.constant -2.000000e-01 : f32
    %102 = vector.broadcast %cst_31 : f32 to vector<16x128xf32>
    %103 = arith.subf %26, %102 : vector<16x128xf32>
    %cst_32 = arith.constant 2.000000e-01 : f32
    %104 = vector.broadcast %cst_32 : f32 to vector<16x128xf32>
    %105 = arith.subf %26, %104 : vector<16x128xf32>
    %cst_33 = arith.constant 6.000000e-01 : f32
    %106 = vector.broadcast %cst_33 : f32 to vector<16x128xf32>
    %107 = arith.subf %26, %106 : vector<16x128xf32>
    %cst_34 = arith.constant 1.000000e+00 : f32
    %108 = vector.broadcast %cst_34 : f32 to vector<16x128xf32>
    %109 = arith.subf %26, %108 : vector<16x128xf32>
    %cst_35 = arith.constant 1.400000e+00 : f32
    %110 = vector.broadcast %cst_35 : f32 to vector<16x128xf32>
    %111 = arith.subf %26, %110 : vector<16x128xf32>
    %cst_36 = arith.constant 1.800000e+00 : f32
    %112 = vector.broadcast %cst_36 : f32 to vector<16x128xf32>
    %113 = arith.subf %26, %112 : vector<16x128xf32>
    %cst_37 = arith.constant 2.500000e+00 : f32
    %114 = vector.broadcast %cst_37 : f32 to vector<16x128xf32>
    %115 = arith.mulf %93, %114 : vector<16x128xf32>
    %cst_38 = arith.constant 2.500000e+00 : f32
    %116 = vector.broadcast %cst_38 : f32 to vector<16x128xf32>
    %117 = arith.mulf %95, %116 : vector<16x128xf32>
    %cst_39 = arith.constant 2.500000e+00 : f32
    %118 = vector.broadcast %cst_39 : f32 to vector<16x128xf32>
    %119 = arith.mulf %97, %118 : vector<16x128xf32>
    %cst_40 = arith.constant 2.500000e+00 : f32
    %120 = vector.broadcast %cst_40 : f32 to vector<16x128xf32>
    %121 = arith.mulf %99, %120 : vector<16x128xf32>
    %cst_41 = arith.constant 2.500000e+00 : f32
    %122 = vector.broadcast %cst_41 : f32 to vector<16x128xf32>
    %123 = arith.mulf %101, %122 : vector<16x128xf32>
    %cst_42 = arith.constant 2.500000e+00 : f32
    %124 = vector.broadcast %cst_42 : f32 to vector<16x128xf32>
    %125 = arith.mulf %103, %124 : vector<16x128xf32>
    %cst_43 = arith.constant 2.500000e+00 : f32
    %126 = vector.broadcast %cst_43 : f32 to vector<16x128xf32>
    %127 = arith.mulf %105, %126 : vector<16x128xf32>
    %cst_44 = arith.constant 2.500000e+00 : f32
    %128 = vector.broadcast %cst_44 : f32 to vector<16x128xf32>
    %129 = arith.mulf %107, %128 : vector<16x128xf32>
    %cst_45 = arith.constant 2.500000e+00 : f32
    %130 = vector.broadcast %cst_45 : f32 to vector<16x128xf32>
    %131 = arith.mulf %109, %130 : vector<16x128xf32>
    %cst_46 = arith.constant 2.500000e+00 : f32
    %132 = vector.broadcast %cst_46 : f32 to vector<16x128xf32>
    %133 = arith.mulf %111, %132 : vector<16x128xf32>
    %cst_47 = arith.constant 2.500000e+00 : f32
    %134 = vector.broadcast %cst_47 : f32 to vector<16x128xf32>
    %135 = arith.mulf %113, %134 : vector<16x128xf32>
    %136 = arith.mulf %115, %81 : vector<16x128xf32>
    %cst_48 = arith.constant 1.000000e+00 : f32
    %137 = vector.broadcast %cst_48 : f32 to vector<16x128xf32>
    %138 = arith.subf %137, %117 : vector<16x128xf32>
    %139 = arith.mulf %138, %82 : vector<16x128xf32>
    %140 = arith.addf %136, %139 : vector<16x128xf32>
    %141 = arith.mulf %117, %82 : vector<16x128xf32>
    %cst_49 = arith.constant 1.000000e+00 : f32
    %142 = vector.broadcast %cst_49 : f32 to vector<16x128xf32>
    %143 = arith.subf %142, %119 : vector<16x128xf32>
    %144 = arith.mulf %143, %83 : vector<16x128xf32>
    %145 = arith.addf %141, %144 : vector<16x128xf32>
    %146 = arith.mulf %119, %83 : vector<16x128xf32>
    %cst_50 = arith.constant 1.000000e+00 : f32
    %147 = vector.broadcast %cst_50 : f32 to vector<16x128xf32>
    %148 = arith.subf %147, %121 : vector<16x128xf32>
    %149 = arith.mulf %148, %84 : vector<16x128xf32>
    %150 = arith.addf %146, %149 : vector<16x128xf32>
    %151 = arith.mulf %121, %84 : vector<16x128xf32>
    %cst_51 = arith.constant 1.000000e+00 : f32
    %152 = vector.broadcast %cst_51 : f32 to vector<16x128xf32>
    %153 = arith.subf %152, %123 : vector<16x128xf32>
    %154 = arith.mulf %153, %85 : vector<16x128xf32>
    %155 = arith.addf %151, %154 : vector<16x128xf32>
    %156 = arith.mulf %123, %85 : vector<16x128xf32>
    %cst_52 = arith.constant 1.000000e+00 : f32
    %157 = vector.broadcast %cst_52 : f32 to vector<16x128xf32>
    %158 = arith.subf %157, %125 : vector<16x128xf32>
    %159 = arith.mulf %158, %86 : vector<16x128xf32>
    %160 = arith.addf %156, %159 : vector<16x128xf32>
    %161 = arith.mulf %125, %86 : vector<16x128xf32>
    %cst_53 = arith.constant 1.000000e+00 : f32
    %162 = vector.broadcast %cst_53 : f32 to vector<16x128xf32>
    %163 = arith.subf %162, %127 : vector<16x128xf32>
    %164 = arith.mulf %163, %87 : vector<16x128xf32>
    %165 = arith.addf %161, %164 : vector<16x128xf32>
    %166 = arith.mulf %127, %87 : vector<16x128xf32>
    %cst_54 = arith.constant 1.000000e+00 : f32
    %167 = vector.broadcast %cst_54 : f32 to vector<16x128xf32>
    %168 = arith.subf %167, %129 : vector<16x128xf32>
    %169 = arith.mulf %168, %88 : vector<16x128xf32>
    %170 = arith.addf %166, %169 : vector<16x128xf32>
    %171 = arith.mulf %129, %88 : vector<16x128xf32>
    %cst_55 = arith.constant 1.000000e+00 : f32
    %172 = vector.broadcast %cst_55 : f32 to vector<16x128xf32>
    %173 = arith.subf %172, %131 : vector<16x128xf32>
    %174 = arith.mulf %173, %89 : vector<16x128xf32>
    %175 = arith.addf %171, %174 : vector<16x128xf32>
    %176 = arith.mulf %131, %89 : vector<16x128xf32>
    %cst_56 = arith.constant 1.000000e+00 : f32
    %177 = vector.broadcast %cst_56 : f32 to vector<16x128xf32>
    %178 = arith.subf %177, %133 : vector<16x128xf32>
    %179 = arith.mulf %178, %90 : vector<16x128xf32>
    %180 = arith.addf %176, %179 : vector<16x128xf32>
    %181 = arith.mulf %133, %90 : vector<16x128xf32>
    %cst_57 = arith.constant 1.000000e+00 : f32
    %182 = vector.broadcast %cst_57 : f32 to vector<16x128xf32>
    %183 = arith.subf %182, %135 : vector<16x128xf32>
    %184 = arith.mulf %183, %91 : vector<16x128xf32>
    %185 = arith.addf %181, %184 : vector<16x128xf32>
    %cst_58 = arith.constant 1.250000e+00 : f32
    %186 = vector.broadcast %cst_58 : f32 to vector<16x128xf32>
    %187 = arith.mulf %93, %186 : vector<16x128xf32>
    %cst_59 = arith.constant 1.250000e+00 : f32
    %188 = vector.broadcast %cst_59 : f32 to vector<16x128xf32>
    %189 = arith.mulf %95, %188 : vector<16x128xf32>
    %cst_60 = arith.constant 1.250000e+00 : f32
    %190 = vector.broadcast %cst_60 : f32 to vector<16x128xf32>
    %191 = arith.mulf %97, %190 : vector<16x128xf32>
    %cst_61 = arith.constant 1.250000e+00 : f32
    %192 = vector.broadcast %cst_61 : f32 to vector<16x128xf32>
    %193 = arith.mulf %99, %192 : vector<16x128xf32>
    %cst_62 = arith.constant 1.250000e+00 : f32
    %194 = vector.broadcast %cst_62 : f32 to vector<16x128xf32>
    %195 = arith.mulf %101, %194 : vector<16x128xf32>
    %cst_63 = arith.constant 1.250000e+00 : f32
    %196 = vector.broadcast %cst_63 : f32 to vector<16x128xf32>
    %197 = arith.mulf %103, %196 : vector<16x128xf32>
    %cst_64 = arith.constant 1.250000e+00 : f32
    %198 = vector.broadcast %cst_64 : f32 to vector<16x128xf32>
    %199 = arith.mulf %105, %198 : vector<16x128xf32>
    %cst_65 = arith.constant 1.250000e+00 : f32
    %200 = vector.broadcast %cst_65 : f32 to vector<16x128xf32>
    %201 = arith.mulf %107, %200 : vector<16x128xf32>
    %cst_66 = arith.constant 1.250000e+00 : f32
    %202 = vector.broadcast %cst_66 : f32 to vector<16x128xf32>
    %203 = arith.mulf %109, %202 : vector<16x128xf32>
    %cst_67 = arith.constant 1.250000e+00 : f32
    %204 = vector.broadcast %cst_67 : f32 to vector<16x128xf32>
    %205 = arith.mulf %111, %204 : vector<16x128xf32>
    %206 = arith.mulf %187, %140 : vector<16x128xf32>
    %cst_68 = arith.constant 1.000000e+00 : f32
    %207 = vector.broadcast %cst_68 : f32 to vector<16x128xf32>
    %208 = arith.subf %207, %189 : vector<16x128xf32>
    %209 = arith.mulf %208, %145 : vector<16x128xf32>
    %210 = arith.addf %206, %209 : vector<16x128xf32>
    %211 = arith.mulf %189, %145 : vector<16x128xf32>
    %cst_69 = arith.constant 1.000000e+00 : f32
    %212 = vector.broadcast %cst_69 : f32 to vector<16x128xf32>
    %213 = arith.subf %212, %191 : vector<16x128xf32>
    %214 = arith.mulf %213, %150 : vector<16x128xf32>
    %215 = arith.addf %211, %214 : vector<16x128xf32>
    %216 = arith.mulf %191, %150 : vector<16x128xf32>
    %cst_70 = arith.constant 1.000000e+00 : f32
    %217 = vector.broadcast %cst_70 : f32 to vector<16x128xf32>
    %218 = arith.subf %217, %193 : vector<16x128xf32>
    %219 = arith.mulf %218, %155 : vector<16x128xf32>
    %220 = arith.addf %216, %219 : vector<16x128xf32>
    %221 = arith.mulf %193, %155 : vector<16x128xf32>
    %cst_71 = arith.constant 1.000000e+00 : f32
    %222 = vector.broadcast %cst_71 : f32 to vector<16x128xf32>
    %223 = arith.subf %222, %195 : vector<16x128xf32>
    %224 = arith.mulf %223, %160 : vector<16x128xf32>
    %225 = arith.addf %221, %224 : vector<16x128xf32>
    %226 = arith.mulf %195, %160 : vector<16x128xf32>
    %cst_72 = arith.constant 1.000000e+00 : f32
    %227 = vector.broadcast %cst_72 : f32 to vector<16x128xf32>
    %228 = arith.subf %227, %197 : vector<16x128xf32>
    %229 = arith.mulf %228, %165 : vector<16x128xf32>
    %230 = arith.addf %226, %229 : vector<16x128xf32>
    %231 = arith.mulf %197, %165 : vector<16x128xf32>
    %cst_73 = arith.constant 1.000000e+00 : f32
    %232 = vector.broadcast %cst_73 : f32 to vector<16x128xf32>
    %233 = arith.subf %232, %199 : vector<16x128xf32>
    %234 = arith.mulf %233, %170 : vector<16x128xf32>
    %235 = arith.addf %231, %234 : vector<16x128xf32>
    %236 = arith.mulf %199, %170 : vector<16x128xf32>
    %cst_74 = arith.constant 1.000000e+00 : f32
    %237 = vector.broadcast %cst_74 : f32 to vector<16x128xf32>
    %238 = arith.subf %237, %201 : vector<16x128xf32>
    %239 = arith.mulf %238, %175 : vector<16x128xf32>
    %240 = arith.addf %236, %239 : vector<16x128xf32>
    %241 = arith.mulf %201, %175 : vector<16x128xf32>
    %cst_75 = arith.constant 1.000000e+00 : f32
    %242 = vector.broadcast %cst_75 : f32 to vector<16x128xf32>
    %243 = arith.subf %242, %203 : vector<16x128xf32>
    %244 = arith.mulf %243, %180 : vector<16x128xf32>
    %245 = arith.addf %241, %244 : vector<16x128xf32>
    %246 = arith.mulf %203, %180 : vector<16x128xf32>
    %cst_76 = arith.constant 1.000000e+00 : f32
    %247 = vector.broadcast %cst_76 : f32 to vector<16x128xf32>
    %248 = arith.subf %247, %205 : vector<16x128xf32>
    %249 = arith.mulf %248, %185 : vector<16x128xf32>
    %250 = arith.addf %246, %249 : vector<16x128xf32>
    %cst_77 = arith.constant 0.833333313 : f32
    %251 = vector.broadcast %cst_77 : f32 to vector<16x128xf32>
    %252 = arith.mulf %93, %251 : vector<16x128xf32>
    %cst_78 = arith.constant 0.833333313 : f32
    %253 = vector.broadcast %cst_78 : f32 to vector<16x128xf32>
    %254 = arith.mulf %95, %253 : vector<16x128xf32>
    %cst_79 = arith.constant 0.833333313 : f32
    %255 = vector.broadcast %cst_79 : f32 to vector<16x128xf32>
    %256 = arith.mulf %97, %255 : vector<16x128xf32>
    %cst_80 = arith.constant 0.833333313 : f32
    %257 = vector.broadcast %cst_80 : f32 to vector<16x128xf32>
    %258 = arith.mulf %99, %257 : vector<16x128xf32>
    %cst_81 = arith.constant 0.833333313 : f32
    %259 = vector.broadcast %cst_81 : f32 to vector<16x128xf32>
    %260 = arith.mulf %101, %259 : vector<16x128xf32>
    %cst_82 = arith.constant 0.833333313 : f32
    %261 = vector.broadcast %cst_82 : f32 to vector<16x128xf32>
    %262 = arith.mulf %103, %261 : vector<16x128xf32>
    %cst_83 = arith.constant 0.833333313 : f32
    %263 = vector.broadcast %cst_83 : f32 to vector<16x128xf32>
    %264 = arith.mulf %105, %263 : vector<16x128xf32>
    %cst_84 = arith.constant 0.833333313 : f32
    %265 = vector.broadcast %cst_84 : f32 to vector<16x128xf32>
    %266 = arith.mulf %107, %265 : vector<16x128xf32>
    %cst_85 = arith.constant 0.833333313 : f32
    %267 = vector.broadcast %cst_85 : f32 to vector<16x128xf32>
    %268 = arith.mulf %109, %267 : vector<16x128xf32>
    %269 = arith.mulf %252, %210 : vector<16x128xf32>
    %cst_86 = arith.constant 1.000000e+00 : f32
    %270 = vector.broadcast %cst_86 : f32 to vector<16x128xf32>
    %271 = arith.subf %270, %254 : vector<16x128xf32>
    %272 = arith.mulf %271, %215 : vector<16x128xf32>
    %273 = arith.addf %269, %272 : vector<16x128xf32>
    %274 = arith.mulf %254, %215 : vector<16x128xf32>
    %cst_87 = arith.constant 1.000000e+00 : f32
    %275 = vector.broadcast %cst_87 : f32 to vector<16x128xf32>
    %276 = arith.subf %275, %256 : vector<16x128xf32>
    %277 = arith.mulf %276, %220 : vector<16x128xf32>
    %278 = arith.addf %274, %277 : vector<16x128xf32>
    %279 = arith.mulf %256, %220 : vector<16x128xf32>
    %cst_88 = arith.constant 1.000000e+00 : f32
    %280 = vector.broadcast %cst_88 : f32 to vector<16x128xf32>
    %281 = arith.subf %280, %258 : vector<16x128xf32>
    %282 = arith.mulf %281, %225 : vector<16x128xf32>
    %283 = arith.addf %279, %282 : vector<16x128xf32>
    %284 = arith.mulf %258, %225 : vector<16x128xf32>
    %cst_89 = arith.constant 1.000000e+00 : f32
    %285 = vector.broadcast %cst_89 : f32 to vector<16x128xf32>
    %286 = arith.subf %285, %260 : vector<16x128xf32>
    %287 = arith.mulf %286, %230 : vector<16x128xf32>
    %288 = arith.addf %284, %287 : vector<16x128xf32>
    %289 = arith.mulf %260, %230 : vector<16x128xf32>
    %cst_90 = arith.constant 1.000000e+00 : f32
    %290 = vector.broadcast %cst_90 : f32 to vector<16x128xf32>
    %291 = arith.subf %290, %262 : vector<16x128xf32>
    %292 = arith.mulf %291, %235 : vector<16x128xf32>
    %293 = arith.addf %289, %292 : vector<16x128xf32>
    %294 = arith.mulf %262, %235 : vector<16x128xf32>
    %cst_91 = arith.constant 1.000000e+00 : f32
    %295 = vector.broadcast %cst_91 : f32 to vector<16x128xf32>
    %296 = arith.subf %295, %264 : vector<16x128xf32>
    %297 = arith.mulf %296, %240 : vector<16x128xf32>
    %298 = arith.addf %294, %297 : vector<16x128xf32>
    %299 = arith.mulf %264, %240 : vector<16x128xf32>
    %cst_92 = arith.constant 1.000000e+00 : f32
    %300 = vector.broadcast %cst_92 : f32 to vector<16x128xf32>
    %301 = arith.subf %300, %266 : vector<16x128xf32>
    %302 = arith.mulf %301, %245 : vector<16x128xf32>
    %303 = arith.addf %299, %302 : vector<16x128xf32>
    %304 = arith.mulf %266, %245 : vector<16x128xf32>
    %cst_93 = arith.constant 1.000000e+00 : f32
    %305 = vector.broadcast %cst_93 : f32 to vector<16x128xf32>
    %306 = arith.subf %305, %268 : vector<16x128xf32>
    %307 = arith.mulf %306, %250 : vector<16x128xf32>
    %308 = arith.addf %304, %307 : vector<16x128xf32>
    %309 = arith.truncf %32 : vector<16x128xf32> to vector<16x128xbf16>
    %c0_94 = arith.constant 0 : index
    %c0_95 = arith.constant 0 : index
    %310 = vector.load %arg12[%c0_94, %c0_95] : memref<16x1152xbf16, #tpu.memory_space<vmem>>, vector<16x128xbf16>
    tpu.vector_store %arg12[%c0_94, %c0_95], %309 {strides = array<i32>} : memref<16x1152xbf16, #tpu.memory_space<vmem>>, vector<16x128xbf16>,
    %311 = arith.truncf %273 : vector<16x128xf32> to vector<16x128xbf16>
    %c0_96 = arith.constant 0 : index
    %c128 = arith.constant 128 : index
    %312 = vector.load %arg12[%c0_96, %c128] : memref<16x1152xbf16, #tpu.memory_space<vmem>>, vector<16x128xbf16>
    tpu.vector_store %arg12[%c0_96, %c128], %311 {strides = array<i32>} : memref<16x1152xbf16, #tpu.memory_space<vmem>>, vector<16x128xbf16>,
    %313 = arith.truncf %278 : vector<16x128xf32> to vector<16x128xbf16>
    %c0_97 = arith.constant 0 : index
    %c256 = arith.constant 256 : index
    %314 = vector.load %arg12[%c0_97, %c256] : memref<16x1152xbf16, #tpu.memory_space<vmem>>, vector<16x128xbf16>
    tpu.vector_store %arg12[%c0_97, %c256], %313 {strides = array<i32>} : memref<16x1152xbf16, #tpu.memory_space<vmem>>, vector<16x128xbf16>,
    %315 = arith.truncf %283 : vector<16x128xf32> to vector<16x128xbf16>
    %c0_98 = arith.constant 0 : index
    %c384 = arith.constant 384 : index
    %316 = vector.load %arg12[%c0_98, %c384] : memref<16x1152xbf16, #tpu.memory_space<vmem>>, vector<16x128xbf16>
    tpu.vector_store %arg12[%c0_98, %c384], %315 {strides = array<i32>} : memref<16x1152xbf16, #tpu.memory_space<vmem>>, vector<16x128xbf16>,
    %317 = arith.truncf %288 : vector<16x128xf32> to vector<16x128xbf16>
    %c0_99 = arith.constant 0 : index
    %c512 = arith.constant 512 : index
    %318 = vector.load %arg12[%c0_99, %c512] : memref<16x1152xbf16, #tpu.memory_space<vmem>>, vector<16x128xbf16>
    tpu.vector_store %arg12[%c0_99, %c512], %317 {strides = array<i32>} : memref<16x1152xbf16, #tpu.memory_space<vmem>>, vector<16x128xbf16>,
    %319 = arith.truncf %293 : vector<16x128xf32> to vector<16x128xbf16>
    %c0_100 = arith.constant 0 : index
    %c640 = arith.constant 640 : index
    %320 = vector.load %arg12[%c0_100, %c640] : memref<16x1152xbf16, #tpu.memory_space<vmem>>, vector<16x128xbf16>
    tpu.vector_store %arg12[%c0_100, %c640], %319 {strides = array<i32>} : memref<16x1152xbf16, #tpu.memory_space<vmem>>, vector<16x128xbf16>,
    %321 = arith.truncf %298 : vector<16x128xf32> to vector<16x128xbf16>
    %c0_101 = arith.constant 0 : index
    %c768 = arith.constant 768 : index
    %322 = vector.load %arg12[%c0_101, %c768] : memref<16x1152xbf16, #tpu.memory_space<vmem>>, vector<16x128xbf16>
    tpu.vector_store %arg12[%c0_101, %c768], %321 {strides = array<i32>} : memref<16x1152xbf16, #tpu.memory_space<vmem>>, vector<16x128xbf16>,
    %323 = arith.truncf %303 : vector<16x128xf32> to vector<16x128xbf16>
    %c0_102 = arith.constant 0 : index
    %c896 = arith.constant 896 : index
    %324 = vector.load %arg12[%c0_102, %c896] : memref<16x1152xbf16, #tpu.memory_space<vmem>>, vector<16x128xbf16>
    tpu.vector_store %arg12[%c0_102, %c896], %323 {strides = array<i32>} : memref<16x1152xbf16, #tpu.memory_space<vmem>>, vector<16x128xbf16>,
    %325 = arith.truncf %308 : vector<16x128xf32> to vector<16x128xbf16>
    %c0_103 = arith.constant 0 : index
    %c1024 = arith.constant 1024 : index
    %326 = vector.load %arg12[%c0_103, %c1024] : memref<16x1152xbf16, #tpu.memory_space<vmem>>, vector<16x128xbf16>
    tpu.vector_store %arg12[%c0_103, %c1024], %325 {strides = array<i32>} : memref<16x1152xbf16, #tpu.memory_space<vmem>>, vector<16x128xbf16>,
    %c0_104 = arith.constant 0 : index
    %c0_105 = arith.constant 0 : index
    %327 = vector.load %arg4[%c0_104, %c0_105] : memref<1152x256xbf16, #tpu.memory_space<vmem>>, vector<1152x256xbf16>
    %c0_106 = arith.constant 0 : index
    %c0_107 = arith.constant 0 : index
    %328 = vector.load %arg12[%c0_106, %c0_107] : memref<16x1152xbf16, #tpu.memory_space<vmem>>, vector<16x1152xbf16>
    %cst_108 = arith.constant dense<0.000000e+00> : vector<16x256xf32>
    %329 = tpu.matmul %328, %327, %cst_108 {dimension_numbers = #tpu.dot_dimension_numbers<[1], [0], [0], [1], [0, 0, 1, 1], [], []>} : vector<16x1152xbf16>, vector<1152x256xbf16>, vector<16x256xf32> -> vector<16x256xf32>
    %c0_109 = arith.constant 0 : index
    %c0_110 = arith.constant 0 : index
    %330 = vector.load %arg10[%c0_109, %c0_110] : memref<16x256xf32, #tpu.memory_space<vmem>>, vector<16x256xf32>
    tpu.vector_store %arg10[%c0_109, %c0_110], %329 {strides = array<i32>} : memref<16x256xf32, #tpu.memory_space<vmem>>, vector<16x256xf32>,
    %c0_111 = arith.constant 0 : index
    %c0_112 = arith.constant 0 : index
    %331 = vector.load %arg10[%c0_111, %c0_112] : memref<16x256xf32, #tpu.memory_space<vmem>>, vector<16x256xf32>
    %332 = arith.mulf %331, %331 : vector<16x256xf32>
    %333 = arith.mulf %331, %332 : vector<16x256xf32>
    %cst_113 = arith.constant 4.471500e-02 : f32
    %334 = vector.broadcast %cst_113 : f32 to vector<16x256xf32>
    %335 = arith.mulf %334, %333 : vector<16x256xf32>
    %336 = arith.addf %331, %335 : vector<16x256xf32>
    %cst_114 = arith.constant 0.797884583 : f32
    %337 = vector.broadcast %cst_114 : f32 to vector<16x256xf32>
    %338 = arith.mulf %337, %336 : vector<16x256xf32>
    %339 = math.tanh %338 : vector<16x256xf32>
    %cst_115 = arith.constant 1.000000e+00 : f32
    %340 = vector.broadcast %cst_115 : f32 to vector<16x256xf32>
    %341 = arith.addf %340, %339 : vector<16x256xf32>
    %cst_116 = arith.constant 5.000000e-01 : f32
    %342 = vector.broadcast %cst_116 : f32 to vector<16x256xf32>
    %343 = arith.mulf %342, %341 : vector<16x256xf32>
    %344 = arith.mulf %331, %343 : vector<16x256xf32>
    %345 = arith.negf %344 : vector<16x256xf32>
    %346 = math.exp %345 : vector<16x256xf32>
    %cst_117 = arith.constant 1.000000e+00 : f32
    %347 = vector.broadcast %cst_117 : f32 to vector<16x256xf32>
    %348 = arith.addf %347, %346 : vector<16x256xf32>
    %349 = arith.divf %347, %348 : vector<16x256xf32>
    %350 = arith.mulf %344, %349 : vector<16x256xf32>
    %cst_118 = arith.constant -2.200000e+00 : f32
    %351 = vector.broadcast %cst_118 : f32 to vector<16x256xf32>
    %352 = arith.cmpf oge, %344, %351 : vector<16x256xf32>
    %353 = arith.extui %352 : vector<16x256xi1> to vector<16x256xi32>
    %354 = arith.sitofp %353 : vector<16x256xi32> to vector<16x256xf32>
    %cst_119 = arith.constant -1.800000e+00 : f32
    %355 = vector.broadcast %cst_119 : f32 to vector<16x256xf32>
    %356 = arith.cmpf oge, %344, %355 : vector<16x256xf32>
    %357 = arith.extui %356 : vector<16x256xi1> to vector<16x256xi32>
    %358 = arith.sitofp %357 : vector<16x256xi32> to vector<16x256xf32>
    %cst_120 = arith.constant -1.400000e+00 : f32
    %359 = vector.broadcast %cst_120 : f32 to vector<16x256xf32>
    %360 = arith.cmpf oge, %344, %359 : vector<16x256xf32>
    %361 = arith.extui %360 : vector<16x256xi1> to vector<16x256xi32>
    %362 = arith.sitofp %361 : vector<16x256xi32> to vector<16x256xf32>
    %cst_121 = arith.constant -1.000000e+00 : f32
    %363 = vector.broadcast %cst_121 : f32 to vector<16x256xf32>
    %364 = arith.cmpf oge, %344, %363 : vector<16x256xf32>
    %365 = arith.extui %364 : vector<16x256xi1> to vector<16x256xi32>
    %366 = arith.sitofp %365 : vector<16x256xi32> to vector<16x256xf32>
    %cst_122 = arith.constant -6.000000e-01 : f32
    %367 = vector.broadcast %cst_122 : f32 to vector<16x256xf32>
    %368 = arith.cmpf oge, %344, %367 : vector<16x256xf32>
    %369 = arith.extui %368 : vector<16x256xi1> to vector<16x256xi32>
    %370 = arith.sitofp %369 : vector<16x256xi32> to vector<16x256xf32>
    %cst_123 = arith.constant -2.000000e-01 : f32
    %371 = vector.broadcast %cst_123 : f32 to vector<16x256xf32>
    %372 = arith.cmpf oge, %344, %371 : vector<16x256xf32>
    %373 = arith.extui %372 : vector<16x256xi1> to vector<16x256xi32>
    %374 = arith.sitofp %373 : vector<16x256xi32> to vector<16x256xf32>
    %cst_124 = arith.constant 2.000000e-01 : f32
    %375 = vector.broadcast %cst_124 : f32 to vector<16x256xf32>
    %376 = arith.cmpf oge, %344, %375 : vector<16x256xf32>
    %377 = arith.extui %376 : vector<16x256xi1> to vector<16x256xi32>
    %378 = arith.sitofp %377 : vector<16x256xi32> to vector<16x256xf32>
    %cst_125 = arith.constant 6.000000e-01 : f32
    %379 = vector.broadcast %cst_125 : f32 to vector<16x256xf32>
    %380 = arith.cmpf oge, %344, %379 : vector<16x256xf32>
    %381 = arith.extui %380 : vector<16x256xi1> to vector<16x256xi32>
    %382 = arith.sitofp %381 : vector<16x256xi32> to vector<16x256xf32>
    %cst_126 = arith.constant 1.000000e+00 : f32
    %383 = vector.broadcast %cst_126 : f32 to vector<16x256xf32>
    %384 = arith.cmpf oge, %344, %383 : vector<16x256xf32>
    %385 = arith.extui %384 : vector<16x256xi1> to vector<16x256xi32>
    %386 = arith.sitofp %385 : vector<16x256xi32> to vector<16x256xf32>
    %cst_127 = arith.constant 1.400000e+00 : f32
    %387 = vector.broadcast %cst_127 : f32 to vector<16x256xf32>
    %388 = arith.cmpf oge, %344, %387 : vector<16x256xf32>
    %389 = arith.extui %388 : vector<16x256xi1> to vector<16x256xi32>
    %390 = arith.sitofp %389 : vector<16x256xi32> to vector<16x256xf32>
    %cst_128 = arith.constant 1.800000e+00 : f32
    %391 = vector.broadcast %cst_128 : f32 to vector<16x256xf32>
    %392 = arith.cmpf oge, %344, %391 : vector<16x256xf32>
    %393 = arith.extui %392 : vector<16x256xi1> to vector<16x256xi32>
    %394 = arith.sitofp %393 : vector<16x256xi32> to vector<16x256xf32>
    %cst_129 = arith.constant 2.200000e+00 : f32
    %395 = vector.broadcast %cst_129 : f32 to vector<16x256xf32>
    %396 = arith.cmpf oge, %344, %395 : vector<16x256xf32>
    %397 = arith.extui %396 : vector<16x256xi1> to vector<16x256xi32>
    %398 = arith.sitofp %397 : vector<16x256xi32> to vector<16x256xf32>
    %399 = arith.subf %354, %358 : vector<16x256xf32>
    %400 = arith.subf %358, %362 : vector<16x256xf32>
    %401 = arith.subf %362, %366 : vector<16x256xf32>
    %402 = arith.subf %366, %370 : vector<16x256xf32>
    %403 = arith.subf %370, %374 : vector<16x256xf32>
    %404 = arith.subf %374, %378 : vector<16x256xf32>
    %405 = arith.subf %378, %382 : vector<16x256xf32>
    %406 = arith.subf %382, %386 : vector<16x256xf32>
    %407 = arith.subf %386, %390 : vector<16x256xf32>
    %408 = arith.subf %390, %394 : vector<16x256xf32>
    %409 = arith.subf %394, %398 : vector<16x256xf32>
    %cst_130 = arith.constant -2.200000e+00 : f32
    %410 = vector.broadcast %cst_130 : f32 to vector<16x256xf32>
    %411 = arith.subf %344, %410 : vector<16x256xf32>
    %cst_131 = arith.constant -1.800000e+00 : f32
    %412 = vector.broadcast %cst_131 : f32 to vector<16x256xf32>
    %413 = arith.subf %344, %412 : vector<16x256xf32>
    %cst_132 = arith.constant -1.400000e+00 : f32
    %414 = vector.broadcast %cst_132 : f32 to vector<16x256xf32>
    %415 = arith.subf %344, %414 : vector<16x256xf32>
    %cst_133 = arith.constant -1.000000e+00 : f32
    %416 = vector.broadcast %cst_133 : f32 to vector<16x256xf32>
    %417 = arith.subf %344, %416 : vector<16x256xf32>
    %cst_134 = arith.constant -6.000000e-01 : f32
    %418 = vector.broadcast %cst_134 : f32 to vector<16x256xf32>
    %419 = arith.subf %344, %418 : vector<16x256xf32>
    %cst_135 = arith.constant -2.000000e-01 : f32
    %420 = vector.broadcast %cst_135 : f32 to vector<16x256xf32>
    %421 = arith.subf %344, %420 : vector<16x256xf32>
    %cst_136 = arith.constant 2.000000e-01 : f32
    %422 = vector.broadcast %cst_136 : f32 to vector<16x256xf32>
    %423 = arith.subf %344, %422 : vector<16x256xf32>
    %cst_137 = arith.constant 6.000000e-01 : f32
    %424 = vector.broadcast %cst_137 : f32 to vector<16x256xf32>
    %425 = arith.subf %344, %424 : vector<16x256xf32>
    %cst_138 = arith.constant 1.000000e+00 : f32
    %426 = vector.broadcast %cst_138 : f32 to vector<16x256xf32>
    %427 = arith.subf %344, %426 : vector<16x256xf32>
    %cst_139 = arith.constant 1.400000e+00 : f32
    %428 = vector.broadcast %cst_139 : f32 to vector<16x256xf32>
    %429 = arith.subf %344, %428 : vector<16x256xf32>
    %cst_140 = arith.constant 1.800000e+00 : f32
    %430 = vector.broadcast %cst_140 : f32 to vector<16x256xf32>
    %431 = arith.subf %344, %430 : vector<16x256xf32>
    %cst_141 = arith.constant 2.500000e+00 : f32
    %432 = vector.broadcast %cst_141 : f32 to vector<16x256xf32>
    %433 = arith.mulf %411, %432 : vector<16x256xf32>
    %cst_142 = arith.constant 2.500000e+00 : f32
    %434 = vector.broadcast %cst_142 : f32 to vector<16x256xf32>
    %435 = arith.mulf %413, %434 : vector<16x256xf32>
    %cst_143 = arith.constant 2.500000e+00 : f32
    %436 = vector.broadcast %cst_143 : f32 to vector<16x256xf32>
    %437 = arith.mulf %415, %436 : vector<16x256xf32>
    %cst_144 = arith.constant 2.500000e+00 : f32
    %438 = vector.broadcast %cst_144 : f32 to vector<16x256xf32>
    %439 = arith.mulf %417, %438 : vector<16x256xf32>
    %cst_145 = arith.constant 2.500000e+00 : f32
    %440 = vector.broadcast %cst_145 : f32 to vector<16x256xf32>
    %441 = arith.mulf %419, %440 : vector<16x256xf32>
    %cst_146 = arith.constant 2.500000e+00 : f32
    %442 = vector.broadcast %cst_146 : f32 to vector<16x256xf32>
    %443 = arith.mulf %421, %442 : vector<16x256xf32>
    %cst_147 = arith.constant 2.500000e+00 : f32
    %444 = vector.broadcast %cst_147 : f32 to vector<16x256xf32>
    %445 = arith.mulf %423, %444 : vector<16x256xf32>
    %cst_148 = arith.constant 2.500000e+00 : f32
    %446 = vector.broadcast %cst_148 : f32 to vector<16x256xf32>
    %447 = arith.mulf %425, %446 : vector<16x256xf32>
    %cst_149 = arith.constant 2.500000e+00 : f32
    %448 = vector.broadcast %cst_149 : f32 to vector<16x256xf32>
    %449 = arith.mulf %427, %448 : vector<16x256xf32>
    %cst_150 = arith.constant 2.500000e+00 : f32
    %450 = vector.broadcast %cst_150 : f32 to vector<16x256xf32>
    %451 = arith.mulf %429, %450 : vector<16x256xf32>
    %cst_151 = arith.constant 2.500000e+00 : f32
    %452 = vector.broadcast %cst_151 : f32 to vector<16x256xf32>
    %453 = arith.mulf %431, %452 : vector<16x256xf32>
    %454 = arith.mulf %433, %399 : vector<16x256xf32>
    %cst_152 = arith.constant 1.000000e+00 : f32
    %455 = vector.broadcast %cst_152 : f32 to vector<16x256xf32>
    %456 = arith.subf %455, %435 : vector<16x256xf32>
    %457 = arith.mulf %456, %400 : vector<16x256xf32>
    %458 = arith.addf %454, %457 : vector<16x256xf32>
    %459 = arith.mulf %435, %400 : vector<16x256xf32>
    %cst_153 = arith.constant 1.000000e+00 : f32
    %460 = vector.broadcast %cst_153 : f32 to vector<16x256xf32>
    %461 = arith.subf %460, %437 : vector<16x256xf32>
    %462 = arith.mulf %461, %401 : vector<16x256xf32>
    %463 = arith.addf %459, %462 : vector<16x256xf32>
    %464 = arith.mulf %437, %401 : vector<16x256xf32>
    %cst_154 = arith.constant 1.000000e+00 : f32
    %465 = vector.broadcast %cst_154 : f32 to vector<16x256xf32>
    %466 = arith.subf %465, %439 : vector<16x256xf32>
    %467 = arith.mulf %466, %402 : vector<16x256xf32>
    %468 = arith.addf %464, %467 : vector<16x256xf32>
    %469 = arith.mulf %439, %402 : vector<16x256xf32>
    %cst_155 = arith.constant 1.000000e+00 : f32
    %470 = vector.broadcast %cst_155 : f32 to vector<16x256xf32>
    %471 = arith.subf %470, %441 : vector<16x256xf32>
    %472 = arith.mulf %471, %403 : vector<16x256xf32>
    %473 = arith.addf %469, %472 : vector<16x256xf32>
    %474 = arith.mulf %441, %403 : vector<16x256xf32>
    %cst_156 = arith.constant 1.000000e+00 : f32
    %475 = vector.broadcast %cst_156 : f32 to vector<16x256xf32>
    %476 = arith.subf %475, %443 : vector<16x256xf32>
    %477 = arith.mulf %476, %404 : vector<16x256xf32>
    %478 = arith.addf %474, %477 : vector<16x256xf32>
    %479 = arith.mulf %443, %404 : vector<16x256xf32>
    %cst_157 = arith.constant 1.000000e+00 : f32
    %480 = vector.broadcast %cst_157 : f32 to vector<16x256xf32>
    %481 = arith.subf %480, %445 : vector<16x256xf32>
    %482 = arith.mulf %481, %405 : vector<16x256xf32>
    %483 = arith.addf %479, %482 : vector<16x256xf32>
    %484 = arith.mulf %445, %405 : vector<16x256xf32>
    %cst_158 = arith.constant 1.000000e+00 : f32
    %485 = vector.broadcast %cst_158 : f32 to vector<16x256xf32>
    %486 = arith.subf %485, %447 : vector<16x256xf32>
    %487 = arith.mulf %486, %406 : vector<16x256xf32>
    %488 = arith.addf %484, %487 : vector<16x256xf32>
    %489 = arith.mulf %447, %406 : vector<16x256xf32>
    %cst_159 = arith.constant 1.000000e+00 : f32
    %490 = vector.broadcast %cst_159 : f32 to vector<16x256xf32>
    %491 = arith.subf %490, %449 : vector<16x256xf32>
    %492 = arith.mulf %491, %407 : vector<16x256xf32>
    %493 = arith.addf %489, %492 : vector<16x256xf32>
    %494 = arith.mulf %449, %407 : vector<16x256xf32>
    %cst_160 = arith.constant 1.000000e+00 : f32
    %495 = vector.broadcast %cst_160 : f32 to vector<16x256xf32>
    %496 = arith.subf %495, %451 : vector<16x256xf32>
    %497 = arith.mulf %496, %408 : vector<16x256xf32>
    %498 = arith.addf %494, %497 : vector<16x256xf32>
    %499 = arith.mulf %451, %408 : vector<16x256xf32>
    %cst_161 = arith.constant 1.000000e+00 : f32
    %500 = vector.broadcast %cst_161 : f32 to vector<16x256xf32>
    %501 = arith.subf %500, %453 : vector<16x256xf32>
    %502 = arith.mulf %501, %409 : vector<16x256xf32>
    %503 = arith.addf %499, %502 : vector<16x256xf32>
    %cst_162 = arith.constant 1.250000e+00 : f32
    %504 = vector.broadcast %cst_162 : f32 to vector<16x256xf32>
    %505 = arith.mulf %411, %504 : vector<16x256xf32>
    %cst_163 = arith.constant 1.250000e+00 : f32
    %506 = vector.broadcast %cst_163 : f32 to vector<16x256xf32>
    %507 = arith.mulf %413, %506 : vector<16x256xf32>
    %cst_164 = arith.constant 1.250000e+00 : f32
    %508 = vector.broadcast %cst_164 : f32 to vector<16x256xf32>
    %509 = arith.mulf %415, %508 : vector<16x256xf32>
    %cst_165 = arith.constant 1.250000e+00 : f32
    %510 = vector.broadcast %cst_165 : f32 to vector<16x256xf32>
    %511 = arith.mulf %417, %510 : vector<16x256xf32>
    %cst_166 = arith.constant 1.250000e+00 : f32
    %512 = vector.broadcast %cst_166 : f32 to vector<16x256xf32>
    %513 = arith.mulf %419, %512 : vector<16x256xf32>
    %cst_167 = arith.constant 1.250000e+00 : f32
    %514 = vector.broadcast %cst_167 : f32 to vector<16x256xf32>
    %515 = arith.mulf %421, %514 : vector<16x256xf32>
    %cst_168 = arith.constant 1.250000e+00 : f32
    %516 = vector.broadcast %cst_168 : f32 to vector<16x256xf32>
    %517 = arith.mulf %423, %516 : vector<16x256xf32>
    %cst_169 = arith.constant 1.250000e+00 : f32
    %518 = vector.broadcast %cst_169 : f32 to vector<16x256xf32>
    %519 = arith.mulf %425, %518 : vector<16x256xf32>
    %cst_170 = arith.constant 1.250000e+00 : f32
    %520 = vector.broadcast %cst_170 : f32 to vector<16x256xf32>
    %521 = arith.mulf %427, %520 : vector<16x256xf32>
    %cst_171 = arith.constant 1.250000e+00 : f32
    %522 = vector.broadcast %cst_171 : f32 to vector<16x256xf32>
    %523 = arith.mulf %429, %522 : vector<16x256xf32>
    %524 = arith.mulf %505, %458 : vector<16x256xf32>
    %cst_172 = arith.constant 1.000000e+00 : f32
    %525 = vector.broadcast %cst_172 : f32 to vector<16x256xf32>
    %526 = arith.subf %525, %507 : vector<16x256xf32>
    %527 = arith.mulf %526, %463 : vector<16x256xf32>
    %528 = arith.addf %524, %527 : vector<16x256xf32>
    %529 = arith.mulf %507, %463 : vector<16x256xf32>
    %cst_173 = arith.constant 1.000000e+00 : f32
    %530 = vector.broadcast %cst_173 : f32 to vector<16x256xf32>
    %531 = arith.subf %530, %509 : vector<16x256xf32>
    %532 = arith.mulf %531, %468 : vector<16x256xf32>
    %533 = arith.addf %529, %532 : vector<16x256xf32>
    %534 = arith.mulf %509, %468 : vector<16x256xf32>
    %cst_174 = arith.constant 1.000000e+00 : f32
    %535 = vector.broadcast %cst_174 : f32 to vector<16x256xf32>
    %536 = arith.subf %535, %511 : vector<16x256xf32>
    %537 = arith.mulf %536, %473 : vector<16x256xf32>
    %538 = arith.addf %534, %537 : vector<16x256xf32>
    %539 = arith.mulf %511, %473 : vector<16x256xf32>
    %cst_175 = arith.constant 1.000000e+00 : f32
    %540 = vector.broadcast %cst_175 : f32 to vector<16x256xf32>
    %541 = arith.subf %540, %513 : vector<16x256xf32>
    %542 = arith.mulf %541, %478 : vector<16x256xf32>
    %543 = arith.addf %539, %542 : vector<16x256xf32>
    %544 = arith.mulf %513, %478 : vector<16x256xf32>
    %cst_176 = arith.constant 1.000000e+00 : f32
    %545 = vector.broadcast %cst_176 : f32 to vector<16x256xf32>
    %546 = arith.subf %545, %515 : vector<16x256xf32>
    %547 = arith.mulf %546, %483 : vector<16x256xf32>
    %548 = arith.addf %544, %547 : vector<16x256xf32>
    %549 = arith.mulf %515, %483 : vector<16x256xf32>
    %cst_177 = arith.constant 1.000000e+00 : f32
    %550 = vector.broadcast %cst_177 : f32 to vector<16x256xf32>
    %551 = arith.subf %550, %517 : vector<16x256xf32>
    %552 = arith.mulf %551, %488 : vector<16x256xf32>
    %553 = arith.addf %549, %552 : vector<16x256xf32>
    %554 = arith.mulf %517, %488 : vector<16x256xf32>
    %cst_178 = arith.constant 1.000000e+00 : f32
    %555 = vector.broadcast %cst_178 : f32 to vector<16x256xf32>
    %556 = arith.subf %555, %519 : vector<16x256xf32>
    %557 = arith.mulf %556, %493 : vector<16x256xf32>
    %558 = arith.addf %554, %557 : vector<16x256xf32>
    %559 = arith.mulf %519, %493 : vector<16x256xf32>
    %cst_179 = arith.constant 1.000000e+00 : f32
    %560 = vector.broadcast %cst_179 : f32 to vector<16x256xf32>
    %561 = arith.subf %560, %521 : vector<16x256xf32>
    %562 = arith.mulf %561, %498 : vector<16x256xf32>
    %563 = arith.addf %559, %562 : vector<16x256xf32>
    %564 = arith.mulf %521, %498 : vector<16x256xf32>
    %cst_180 = arith.constant 1.000000e+00 : f32
    %565 = vector.broadcast %cst_180 : f32 to vector<16x256xf32>
    %566 = arith.subf %565, %523 : vector<16x256xf32>
    %567 = arith.mulf %566, %503 : vector<16x256xf32>
    %568 = arith.addf %564, %567 : vector<16x256xf32>
    %cst_181 = arith.constant 0.833333313 : f32
    %569 = vector.broadcast %cst_181 : f32 to vector<16x256xf32>
    %570 = arith.mulf %411, %569 : vector<16x256xf32>
    %cst_182 = arith.constant 0.833333313 : f32
    %571 = vector.broadcast %cst_182 : f32 to vector<16x256xf32>
    %572 = arith.mulf %413, %571 : vector<16x256xf32>
    %cst_183 = arith.constant 0.833333313 : f32
    %573 = vector.broadcast %cst_183 : f32 to vector<16x256xf32>
    %574 = arith.mulf %415, %573 : vector<16x256xf32>
    %cst_184 = arith.constant 0.833333313 : f32
    %575 = vector.broadcast %cst_184 : f32 to vector<16x256xf32>
    %576 = arith.mulf %417, %575 : vector<16x256xf32>
    %cst_185 = arith.constant 0.833333313 : f32
    %577 = vector.broadcast %cst_185 : f32 to vector<16x256xf32>
    %578 = arith.mulf %419, %577 : vector<16x256xf32>
    %cst_186 = arith.constant 0.833333313 : f32
    %579 = vector.broadcast %cst_186 : f32 to vector<16x256xf32>
    %580 = arith.mulf %421, %579 : vector<16x256xf32>
    %cst_187 = arith.constant 0.833333313 : f32
    %581 = vector.broadcast %cst_187 : f32 to vector<16x256xf32>
    %582 = arith.mulf %423, %581 : vector<16x256xf32>
    %cst_188 = arith.constant 0.833333313 : f32
    %583 = vector.broadcast %cst_188 : f32 to vector<16x256xf32>
    %584 = arith.mulf %425, %583 : vector<16x256xf32>
    %cst_189 = arith.constant 0.833333313 : f32
    %585 = vector.broadcast %cst_189 : f32 to vector<16x256xf32>
    %586 = arith.mulf %427, %585 : vector<16x256xf32>
    %587 = arith.mulf %570, %528 : vector<16x256xf32>
    %cst_190 = arith.constant 1.000000e+00 : f32
    %588 = vector.broadcast %cst_190 : f32 to vector<16x256xf32>
    %589 = arith.subf %588, %572 : vector<16x256xf32>
    %590 = arith.mulf %589, %533 : vector<16x256xf32>
    %591 = arith.addf %587, %590 : vector<16x256xf32>
    %592 = arith.mulf %572, %533 : vector<16x256xf32>
    %cst_191 = arith.constant 1.000000e+00 : f32
    %593 = vector.broadcast %cst_191 : f32 to vector<16x256xf32>
    %594 = arith.subf %593, %574 : vector<16x256xf32>
    %595 = arith.mulf %594, %538 : vector<16x256xf32>
    %596 = arith.addf %592, %595 : vector<16x256xf32>
    %597 = arith.mulf %574, %538 : vector<16x256xf32>
    %cst_192 = arith.constant 1.000000e+00 : f32
    %598 = vector.broadcast %cst_192 : f32 to vector<16x256xf32>
    %599 = arith.subf %598, %576 : vector<16x256xf32>
    %600 = arith.mulf %599, %543 : vector<16x256xf32>
    %601 = arith.addf %597, %600 : vector<16x256xf32>
    %602 = arith.mulf %576, %543 : vector<16x256xf32>
    %cst_193 = arith.constant 1.000000e+00 : f32
    %603 = vector.broadcast %cst_193 : f32 to vector<16x256xf32>
    %604 = arith.subf %603, %578 : vector<16x256xf32>
    %605 = arith.mulf %604, %548 : vector<16x256xf32>
    %606 = arith.addf %602, %605 : vector<16x256xf32>
    %607 = arith.mulf %578, %548 : vector<16x256xf32>
    %cst_194 = arith.constant 1.000000e+00 : f32
    %608 = vector.broadcast %cst_194 : f32 to vector<16x256xf32>
    %609 = arith.subf %608, %580 : vector<16x256xf32>
    %610 = arith.mulf %609, %553 : vector<16x256xf32>
    %611 = arith.addf %607, %610 : vector<16x256xf32>
    %612 = arith.mulf %580, %553 : vector<16x256xf32>
    %cst_195 = arith.constant 1.000000e+00 : f32
    %613 = vector.broadcast %cst_195 : f32 to vector<16x256xf32>
    %614 = arith.subf %613, %582 : vector<16x256xf32>
    %615 = arith.mulf %614, %558 : vector<16x256xf32>
    %616 = arith.addf %612, %615 : vector<16x256xf32>
    %617 = arith.mulf %582, %558 : vector<16x256xf32>
    %cst_196 = arith.constant 1.000000e+00 : f32
    %618 = vector.broadcast %cst_196 : f32 to vector<16x256xf32>
    %619 = arith.subf %618, %584 : vector<16x256xf32>
    %620 = arith.mulf %619, %563 : vector<16x256xf32>
    %621 = arith.addf %617, %620 : vector<16x256xf32>
    %622 = arith.mulf %584, %563 : vector<16x256xf32>
    %cst_197 = arith.constant 1.000000e+00 : f32
    %623 = vector.broadcast %cst_197 : f32 to vector<16x256xf32>
    %624 = arith.subf %623, %586 : vector<16x256xf32>
    %625 = arith.mulf %624, %568 : vector<16x256xf32>
    %626 = arith.addf %622, %625 : vector<16x256xf32>
    %627 = arith.truncf %350 : vector<16x256xf32> to vector<16x256xbf16>
    %c0_198 = arith.constant 0 : index
    %c0_199 = arith.constant 0 : index
    %628 = vector.load %arg13[%c0_198, %c0_199] : memref<16x2304xbf16, #tpu.memory_space<vmem>>, vector<16x256xbf16>
    tpu.vector_store %arg13[%c0_198, %c0_199], %627 {strides = array<i32>} : memref<16x2304xbf16, #tpu.memory_space<vmem>>, vector<16x256xbf16>,
    %629 = arith.truncf %591 : vector<16x256xf32> to vector<16x256xbf16>
    %c0_200 = arith.constant 0 : index
    %c256_201 = arith.constant 256 : index
    %630 = vector.load %arg13[%c0_200, %c256_201] : memref<16x2304xbf16, #tpu.memory_space<vmem>>, vector<16x256xbf16>
    tpu.vector_store %arg13[%c0_200, %c256_201], %629 {strides = array<i32>} : memref<16x2304xbf16, #tpu.memory_space<vmem>>, vector<16x256xbf16>,
    %631 = arith.truncf %596 : vector<16x256xf32> to vector<16x256xbf16>
    %c0_202 = arith.constant 0 : index
    %c512_203 = arith.constant 512 : index
    %632 = vector.load %arg13[%c0_202, %c512_203] : memref<16x2304xbf16, #tpu.memory_space<vmem>>, vector<16x256xbf16>
    tpu.vector_store %arg13[%c0_202, %c512_203], %631 {strides = array<i32>} : memref<16x2304xbf16, #tpu.memory_space<vmem>>, vector<16x256xbf16>,
    %633 = arith.truncf %601 : vector<16x256xf32> to vector<16x256xbf16>
    %c0_204 = arith.constant 0 : index
    %c768_205 = arith.constant 768 : index
    %634 = vector.load %arg13[%c0_204, %c768_205] : memref<16x2304xbf16, #tpu.memory_space<vmem>>, vector<16x256xbf16>
    tpu.vector_store %arg13[%c0_204, %c768_205], %633 {strides = array<i32>} : memref<16x2304xbf16, #tpu.memory_space<vmem>>, vector<16x256xbf16>,
    %635 = arith.truncf %606 : vector<16x256xf32> to vector<16x256xbf16>
    %c0_206 = arith.constant 0 : index
    %c1024_207 = arith.constant 1024 : index
    %636 = vector.load %arg13[%c0_206, %c1024_207] : memref<16x2304xbf16, #tpu.memory_space<vmem>>, vector<16x256xbf16>
    tpu.vector_store %arg13[%c0_206, %c1024_207], %635 {strides = array<i32>} : memref<16x2304xbf16, #tpu.memory_space<vmem>>, vector<16x256xbf16>,
    %637 = arith.truncf %611 : vector<16x256xf32> to vector<16x256xbf16>
    %c0_208 = arith.constant 0 : index
    %c1280 = arith.constant 1280 : index
    %638 = vector.load %arg13[%c0_208, %c1280] : memref<16x2304xbf16, #tpu.memory_space<vmem>>, vector<16x256xbf16>
    tpu.vector_store %arg13[%c0_208, %c1280], %637 {strides = array<i32>} : memref<16x2304xbf16, #tpu.memory_space<vmem>>, vector<16x256xbf16>,
    %639 = arith.truncf %616 : vector<16x256xf32> to vector<16x256xbf16>
    %c0_209 = arith.constant 0 : index
    %c1536 = arith.constant 1536 : index
    %640 = vector.load %arg13[%c0_209, %c1536] : memref<16x2304xbf16, #tpu.memory_space<vmem>>, vector<16x256xbf16>
    tpu.vector_store %arg13[%c0_209, %c1536], %639 {strides = array<i32>} : memref<16x2304xbf16, #tpu.memory_space<vmem>>, vector<16x256xbf16>,
    %641 = arith.truncf %621 : vector<16x256xf32> to vector<16x256xbf16>
    %c0_210 = arith.constant 0 : index
    %c1792 = arith.constant 1792 : index
    %642 = vector.load %arg13[%c0_210, %c1792] : memref<16x2304xbf16, #tpu.memory_space<vmem>>, vector<16x256xbf16>
    tpu.vector_store %arg13[%c0_210, %c1792], %641 {strides = array<i32>} : memref<16x2304xbf16, #tpu.memory_space<vmem>>, vector<16x256xbf16>,
    %643 = arith.truncf %626 : vector<16x256xf32> to vector<16x256xbf16>
    %c0_211 = arith.constant 0 : index
    %c2048 = arith.constant 2048 : index
    %644 = vector.load %arg13[%c0_211, %c2048] : memref<16x2304xbf16, #tpu.memory_space<vmem>>, vector<16x256xbf16>
    tpu.vector_store %arg13[%c0_211, %c2048], %643 {strides = array<i32>} : memref<16x2304xbf16, #tpu.memory_space<vmem>>, vector<16x256xbf16>,
    %c0_212 = arith.constant 0 : index
    %c0_213 = arith.constant 0 : index
    %645 = vector.load %arg5[%c0_212, %c0_213] : memref<2304x128xbf16, #tpu.memory_space<vmem>>, vector<2304x128xbf16>
    %c0_214 = arith.constant 0 : index
    %c0_215 = arith.constant 0 : index
    %646 = vector.load %arg13[%c0_214, %c0_215] : memref<16x2304xbf16, #tpu.memory_space<vmem>>, vector<16x2304xbf16>
    %cst_216 = arith.constant dense<0.000000e+00> : vector<16x128xf32>
    %647 = tpu.matmul %646, %645, %cst_216 {dimension_numbers = #tpu.dot_dimension_numbers<[1], [0], [0], [1], [0, 0, 1, 1], [], []>} : vector<16x2304xbf16>, vector<2304x128xbf16>, vector<16x128xf32> -> vector<16x128xf32>
    %c0_217 = arith.constant 0 : index
    %c0_218 = arith.constant 0 : index
    %648 = vector.load %arg11[%c0_217, %c0_218] : memref<16x128xf32, #tpu.memory_space<vmem>>, vector<16x128xf32>
    tpu.vector_store %arg11[%c0_217, %c0_218], %647 {strides = array<i32>} : memref<16x128xf32, #tpu.memory_space<vmem>>, vector<16x128xf32>,
    %c0_219 = arith.constant 0 : index
    %c0_220 = arith.constant 0 : index
    %649 = vector.load %arg11[%c0_219, %c0_220] : memref<16x128xf32, #tpu.memory_space<vmem>>, vector<16x128xf32>
    %c0_221 = arith.constant 0 : index
    %c0_222 = arith.constant 0 : index
    %650 = vector.load %arg6[%c0_221, %c0_222] : memref<1x128xf32, #tpu.memory_space<vmem>>, vector<1x128xf32>
    %c0_223 = arith.constant 0 : index
    %c0_224 = arith.constant 0 : index
    %651 = vector.load %arg7[%c0_223, %c0_224] : memref<1x128xf32, #tpu.memory_space<vmem>>, vector<1x128xf32>
    %cst_225 = arith.constant dense<0.000000e+00> : vector<16xf32>
    %652 = vector.multi_reduction <add>, %649, %cst_225 [1] : vector<16x128xf32> to vector<16xf32>
    %653 = vector.shape_cast %652 : vector<16xf32> to vector<16x1xf32>
    %cst_226 = arith.constant 1.280000e+02 : f32
    %654 = vector.broadcast %cst_226 : f32 to vector<16x1xf32>
    %655 = arith.divf %653, %654 : vector<16x1xf32>
    %656 = vector.broadcast %655 : vector<16x1xf32> to vector<16x128xf32>
    %657 = arith.subf %649, %656 : vector<16x128xf32>
    %658 = arith.mulf %657, %657 : vector<16x128xf32>
    %cst_227 = arith.constant dense<0.000000e+00> : vector<16xf32>
    %659 = vector.multi_reduction <add>, %658, %cst_227 [1] : vector<16x128xf32> to vector<16xf32>
    %660 = vector.shape_cast %659 : vector<16xf32> to vector<16x1xf32>
    %cst_228 = arith.constant 1.280000e+02 : f32
    %661 = vector.broadcast %cst_228 : f32 to vector<16x1xf32>
    %662 = arith.divf %660, %661 : vector<16x1xf32>
    %663 = vector.broadcast %655 : vector<16x1xf32> to vector<16x128xf32>
    %664 = arith.subf %649, %663 : vector<16x128xf32>
    %cst_229 = arith.constant 9.99999974E-6 : f32
    %665 = vector.broadcast %cst_229 : f32 to vector<16x1xf32>
    %666 = arith.addf %662, %665 : vector<16x1xf32>
    %667 = math.rsqrt %666 : vector<16x1xf32>
    %668 = vector.broadcast %667 : vector<16x1xf32> to vector<16x128xf32>
    %669 = arith.mulf %664, %668 : vector<16x128xf32>
    %670 = vector.broadcast %650 : vector<1x128xf32> to vector<16x128xf32>
    %671 = arith.mulf %669, %670 : vector<16x128xf32>
    %672 = vector.broadcast %651 : vector<1x128xf32> to vector<16x128xf32>
    %673 = arith.addf %671, %672 : vector<16x128xf32>
    %c0_230 = arith.constant 0 : index
    %c0_231 = arith.constant 0 : index
    %674 = vector.load %arg8[%c0_230, %c0_231] : memref<16x128xf32, #tpu.memory_space<vmem>>, vector<16x128xf32>
    tpu.vector_store %arg8[%c0_230, %c0_231], %673 {strides = array<i32>} : memref<16x128xf32, #tpu.memory_space<vmem>>, vector<16x128xf32>,
    return
  }
  func.func @transform_0(%arg0: i32) -> (i32, i32) {
    %c0_i32 = arith.constant 0 : i32
    %c0_i32_0 = arith.constant 0 : i32
    return %arg0, %c0_i32 : i32, i32
  }
  func.func @transform_1(%arg0: i32) -> (i32, i32) {
    %c0_i32 = arith.constant 0 : i32
    %c0_i32_0 = arith.constant 0 : i32
    %c0_i32_1 = arith.constant 0 : i32
    return %c0_i32, %c0_i32_0 : i32, i32
  }
  func.func @transform_2(%arg0: i32) -> (i32, i32) {
    %c0_i32 = arith.constant 0 : i32
    %c0_i32_0 = arith.constant 0 : i32
    %c0_i32_1 = arith.constant 0 : i32
    return %c0_i32, %c0_i32_0 : i32, i32
  }
  func.func @transform_3(%arg0: i32) -> (i32, i32) {
    %c0_i32 = arith.constant 0 : i32
    %c0_i32_0 = arith.constant 0 : i32
    %c0_i32_1 = arith.constant 0 : i32
    return %c0_i32, %c0_i32_0 : i32, i32
  }
  func.func @transform_4(%arg0: i32) -> (i32, i32) {
    %c0_i32 = arith.constant 0 : i32
    %c0_i32_0 = arith.constant 0 : i32
    %c0_i32_1 = arith.constant 0 : i32
    return %c0_i32, %c0_i32_0 : i32, i32
  }
  func.func @transform_5(%arg0: i32) -> (i32, i32) {
    %c0_i32 = arith.constant 0 : i32
    %c0_i32_0 = arith.constant 0 : i32
    %c0_i32_1 = arith.constant 0 : i32
    return %c0_i32, %c0_i32_0 : i32, i32
  }
  func.func @transform_6(%arg0: i32) -> (i32, i32) {
    %c0_i32 = arith.constant 0 : i32
    %c0_i32_0 = arith.constant 0 : i32
    %c0_i32_1 = arith.constant 0 : i32
    return %c0_i32, %c0_i32_0 : i32, i32
  }
  func.func @transform_7(%arg0: i32) -> (i32, i32) {
    %c0_i32 = arith.constant 0 : i32
    %c0_i32_0 = arith.constant 0 : i32
    return %arg0, %c0_i32 : i32, i32
  }
}

</mosaic_0001>

<llo_original>
// kernel: tpu_custom_call.1
$region0: #{tpu_custom_call.1}
  #allocation0 [shape = 'u32[]', space=smem, size = 0x4, offset = 0x4, fixed_abs, tag = 'smem constant byte address 0x4 - core index']
  #allocation1 [shape = 'u32[144,128]{1,0:T(1,128)}', space=vmem, size = 0x12000, scoped, tag = 'internal scratch']
  #allocation2 [shape = 'f32[16,128]{1,0:T(8,128)}', space=vmem, size = 0x2000, scoped, tag = 'scratch operand']
  #allocation3 [shape = 'f32[16,256]{1,0:T(8,128)}', space=vmem, size = 0x4000, scoped, tag = 'scratch operand']
  #allocation4 [shape = 'f32[16,128]{1,0:T(8,128)}', space=vmem, size = 0x2000, scoped, tag = 'scratch operand']
  #allocation5 [shape = 'bf16[16,1152]{1,0:T(16,128)(2,1)}', space=vmem, size = 0x9000, scoped, tag = 'scratch operand']
  #allocation6 [shape = 'bf16[16,2304]{1,0:T(16,128)(2,1)}', space=vmem, size = 0x12000, scoped, tag = 'scratch operand']
  %s0 = inlined_call_operand.hbm [shape: f32[16,128], index: 0, kind: input, shape index: {}]
  %s1 = inlined_call_operand.hbm [shape: f32[1,128], index: 1, kind: input, shape index: {}]
  %s2 = inlined_call_operand.hbm [shape: f32[1,128], index: 2, kind: input, shape index: {}]
  %s3 = inlined_call_operand.hbm [shape: bf16[1152,256], index: 3, kind: input, shape index: {}]
  %s4 = inlined_call_operand.hbm [shape: bf16[2304,128], index: 4, kind: input, shape index: {}]
  %s5 = inlined_call_operand.hbm [shape: f32[1,128], index: 5, kind: input, shape index: {}]
  %s6 = inlined_call_operand.hbm [shape: f32[1,128], index: 6, kind: input, shape index: {}]
  %s7 = inlined_call_operand.hbm [shape: f32[16,128], index: 7, kind: output, shape index: {}]
  %s8 = sld [smem:[#allocation0]]
  $region66: #{tpu_custom_call.1} parent=0
    _
  %s10 = ssub.s32 1, %s8
  %s11 = scalar_select 0, %s10, %s8
  $region1: #{tpu_custom_call.1} parent=0
    #allocation7 [shape = 'u8[8192]{0}', space=vmem, size = 0x2000, scoped, tag = 'input window, operand 0, single buffered']
    #allocation8 [shape = 's32[1]{0}', space=sflag, size = 0x4, scoped, tag = 'scoped memory for tpu_custom_call.1']
    #allocation9 [shape = 's32[1]{0}', space=sflag, size = 0x4, scoped, tag = 'scoped memory for tpu_custom_call.1']
    #allocation10 [shape = 'u8[512]{0}', space=vmem, size = 0x400, scoped, tag = 'input window, operand 1, single buffered']
    #allocation11 [shape = 's32[1]{0}', space=sflag, size = 0x4, scoped, tag = 'scoped memory for tpu_custom_call.1']
    #allocation12 [shape = 'u8[512]{0}', space=vmem, size = 0x400, scoped, tag = 'input window, operand 2, single buffered']
    #allocation13 [shape = 'u8[589824]{0}', space=vmem, size = 0x90000, scoped, tag = 'input window, operand 3, single buffered']
    #allocation14 [shape = 's32[1]{0}', space=sflag, size = 0x4, scoped, tag = 'scoped memory for tpu_custom_call.1']
    #allocation15 [shape = 'u8[589824]{0}', space=vmem, size = 0x90000, scoped, tag = 'input window, operand 4, single buffered']
    #allocation16 [shape = 'u8[512]{0}', space=vmem, size = 0x400, scoped, tag = 'input window, operand 5, single buffered']
    #allocation17 [shape = 's32[1]{0}', space=sflag, size = 0x4, scoped, tag = 'scoped memory for tpu_custom_call.1']
    #allocation18 [shape = 'u8[512]{0}', space=vmem, size = 0x400, scoped, tag = 'input window, operand 6, single buffered']
    #allocation19 [shape = 'u8[8192]{0}', space=vmem, size = 0x2000, scoped, tag = 'output window, operand 0, single buffered']
    %12 = vsyncpa [#allocation8], 0
    %13 = vsyncpa [#allocation11], 0
    %14 = vsyncpa [#allocation14], 0
    %15 = vsyncpa [#allocation17], 0
    %16 = vsyncpa [#allocation9], 0
    // Predicated region
    $region2: #{tpu_custom_call.1} parent=1 // pred_check
      _
    $region3: #{tpu_custom_call.1} parent=1 // pred_check_branch
      %18 = sbr.rel (0) target = $region5
    $region4: #{tpu_custom_call.1} parent=1 // pred_region
      %s20 = ssub.s32 256, 256
      %21 = vsyncadd [#allocation8], %s20
      %s22 = sshll.u32 [#allocation7], 4
      %s23 = int_to_ptr.vmem [resolvable:$true] %s22
      %28 = dma.hbm_to_vmem [thread:$0]  %s0, 256, %s23, [#allocation8], 128, 128, 8
    $region5: #{tpu_custom_call.1} parent=1 // pred_fallthru
      _
    // Predicated region
    $region6: #{tpu_custom_call.1} parent=1 // pred_check
      _
    $region7: #{tpu_custom_call.1} parent=1 // pred_check_branch
      %30 = sbr.rel (0) target = $region9
    $region8: #{tpu_custom_call.1} parent=1 // pred_region
      %s32 = ssub.s32 16, 16
      %33 = vsyncadd [#allocation11], %s32
      %s35 = sshll.u32 [#allocation10], 4
      %s36 = int_to_ptr.vmem [resolvable:$true] %s35
      %38 = dma.hbm_to_vmem [thread:$0]  %s1, 16, %s36, [#allocation11]
    $region9: #{tpu_custom_call.1} parent=1 // pred_fallthru
      _
    // Predicated region
    $region10: #{tpu_custom_call.1} parent=1 // pred_check
      _
    $region11: #{tpu_custom_call.1} parent=1 // pred_check_branch
      %40 = sbr.rel (0) target = $region13
    $region12: #{tpu_custom_call.1} parent=1 // pred_region
      %s42 = ssub.s32 16, 16
      %43 = vsyncadd [#allocation11], %s42
      %s45 = sshll.u32 [#allocation12], 4
      %s46 = int_to_ptr.vmem [resolvable:$true] %s45
      %48 = dma.hbm_to_vmem [thread:$0]  %s2, 16, %s46, [#allocation11]
    $region13: #{tpu_custom_call.1} parent=1 // pred_fallthru
      _
    // Predicated region
    $region14: #{tpu_custom_call.1} parent=1 // pred_check
      _
    $region15: #{tpu_custom_call.1} parent=1 // pred_check_branch
      %50 = sbr.rel (0) target = $region17
    $region16: #{tpu_custom_call.1} parent=1 // pred_region
      %s52 = ssub.s32 18432, 18432
      %53 = vsyncadd [#allocation14], %s52
      %s54 = sshll.u32 [#allocation13], 4
      %s55 = int_to_ptr.vmem [resolvable:$true] %s54
      %60 = dma.hbm_to_vmem [thread:$0]  %s3, 18432, %s55, [#allocation14], 128, 128, 8
    $region17: #{tpu_custom_call.1} parent=1 // pred_fallthru
      _
    // Predicated region
    $region18: #{tpu_custom_call.1} parent=1 // pred_check
      _
    $region19: #{tpu_custom_call.1} parent=1 // pred_check_branch
      %62 = sbr.rel (0) target = $region21
    $region20: #{tpu_custom_call.1} parent=1 // pred_region
      %s64 = ssub.s32 18432, 18432
      %65 = vsyncadd [#allocation14], %s64
      %s66 = sshll.u32 [#allocation15], 4
      %s67 = int_to_ptr.vmem [resolvable:$true] %s66
      %72 = dma.hbm_to_vmem [thread:$0]  %s4, 18432, %s67, [#allocation14], 64, 64, 4
    $region21: #{tpu_custom_call.1} parent=1 // pred_fallthru
      _
    // Predicated region
    $region22: #{tpu_custom_call.1} parent=1 // pred_check
      _
    $region23: #{tpu_custom_call.1} parent=1 // pred_check_branch
      %74 = sbr.rel (0) target = $region25
    $region24: #{tpu_custom_call.1} parent=1 // pred_region
      %s76 = ssub.s32 16, 16
      %77 = vsyncadd [#allocation17], %s76
      %s79 = sshll.u32 [#allocation16], 4
      %s80 = int_to_ptr.vmem [resolvable:$true] %s79
      %82 = dma.hbm_to_vmem [thread:$0]  %s5, 16, %s80, [#allocation17]
    $region25: #{tpu_custom_call.1} parent=1 // pred_fallthru
      _
    // Predicated region
    $region26: #{tpu_custom_call.1} parent=1 // pred_check
      _
    $region27: #{tpu_custom_call.1} parent=1 // pred_check_branch
      %84 = sbr.rel (0) target = $region29
    $region28: #{tpu_custom_call.1} parent=1 // pred_region
      %s86 = ssub.s32 16, 16
      %87 = vsyncadd [#allocation17], %s86
      %s89 = sshll.u32 [#allocation18], 4
      %s90 = int_to_ptr.vmem [resolvable:$true] %s89
      %92 = dma.hbm_to_vmem [thread:$0]  %s6, 16, %s90, [#allocation17]
    $region29: #{tpu_custom_call.1} parent=1 // pred_fallthru
      _
    // Predicated region
    $region30: #{tpu_custom_call.1} parent=1 // pred_check
      _
    $region31: #{tpu_custom_call.1} parent=1 // pred_check_branch
      %94 = sbr.rel (0) target = $region33
    $region32: #{tpu_custom_call.1} parent=1 // pred_region
      %95 = dma.done [#allocation8], 256
    $region33: #{tpu_custom_call.1} parent=1 // pred_fallthru
      _
    // Predicated region
    $region34: #{tpu_custom_call.1} parent=1 // pred_check
      _
    $region35: #{tpu_custom_call.1} parent=1 // pred_check_branch
      %97 = sbr.rel (0) target = $region37
    $region36: #{tpu_custom_call.1} parent=1 // pred_region
      %98 = dma.done [#allocation11], 16
    $region37: #{tpu_custom_call.1} parent=1 // pred_fallthru
      _
    // Predicated region
    $region38: #{tpu_custom_call.1} parent=1 // pred_check
      _
    $region39: #{tpu_custom_call.1} parent=1 // pred_check_branch
      %100 = sbr.rel (0) target = $region41
    $region40: #{tpu_custom_call.1} parent=1 // pred_region
      %101 = dma.done [#allocation11], 16
    $region41: #{tpu_custom_call.1} parent=1 // pred_fallthru
      _
    // Predicated region
    $region42: #{tpu_custom_call.1} parent=1 // pred_check
      _
    $region43: #{tpu_custom_call.1} parent=1 // pred_check_branch
      %103 = sbr.rel (0) target = $region45
    $region44: #{tpu_custom_call.1} parent=1 // pred_region
      %104 = dma.done [#allocation14], 18432
    $region45: #{tpu_custom_call.1} parent=1 // pred_fallthru
      _
    // Predicated region
    $region46: #{tpu_custom_call.1} parent=1 // pred_check
      _
    $region47: #{tpu_custom_call.1} parent=1 // pred_check_branch
      %106 = sbr.rel (0) target = $region49
    $region48: #{tpu_custom_call.1} parent=1 // pred_region
      %107 = dma.done [#allocation14], 18432
    $region49: #{tpu_custom_call.1} parent=1 // pred_fallthru
      _
    // Predicated region
    $region50: #{tpu_custom_call.1} parent=1 // pred_check
      _
    $region51: #{tpu_custom_call.1} parent=1 // pred_check_branch
      %109 = sbr.rel (0) target = $region53
    $region52: #{tpu_custom_call.1} parent=1 // pred_region
      %110 = dma.done [#allocation17], 16
    $region53: #{tpu_custom_call.1} parent=1 // pred_fallthru
      _
    // Predicated region
    $region54: #{tpu_custom_call.1} parent=1 // pred_check
      _
    $region55: #{tpu_custom_call.1} parent=1 // pred_check_branch
      %112 = sbr.rel (0) target = $region57
    $region56: #{tpu_custom_call.1} parent=1 // pred_region
      %113 = dma.done [#allocation17], 16
    $region57: #{tpu_custom_call.1} parent=1 // pred_fallthru
      _
    %v115 = vld [vmem:[#allocation7] sm:$0xff]
    %v116 = vld [vmem:[#allocation7 + $0x8] sm:$0xff]
    %v117 = vld [vmem:[#allocation10] sm:$0x1]
    %v118 = vld [vmem:[#allocation12] sm:$0x1]
    %119 = vadd.xlane.f32.xlu0 %v115
    %v120 = vpop.xlane.xlu0 %119
    %121 = vadd.xlane.f32.xlu0 %v116
    %v122 = vpop.xlane.xlu0 %121
    %v123 = vrcp.pop 128.0
    %v124 = vmul.f32 %v120, %v123
    %v125 = vmul.f32 %v122, %v123
    %v126 = vsub.f32 %v115, %v124
    %v127 = vsub.f32 %v116, %v125
    %v128 = vmul.f32 %v126, %v126
    %v129 = vmul.f32 %v127, %v127
    %130 = vadd.xlane.f32.xlu0 %v128
    %v131 = vpop.xlane.xlu0 %130
    %132 = vadd.xlane.f32.xlu0 %v129
    %v133 = vpop.xlane.xlu0 %132
    %v134 = vmul.f32 %v131, %v123
    %v135 = vmul.f32 %v133, %v123
    %v136 = vadd.f32 %v134, 1e-05
    %v137 = vadd.f32 %v135, 1e-05
    %v138 = vrsqrt.pop %v136
    %v139 = vrsqrt.pop %v137
    %v140 = vmul.f32 %v126, %v138
    %v141 = vmul.f32 %v127, %v139
    %v143 = vlaneseq
    %v144 = vshrl.u32 %v143, 7
    %v145 = vsub.s32 0, %v144
    %v146 = vrot.slane %v117, %v145
    %v148 = vmul.f32 %v140, %v146
    %v149 = vmul.f32 %v141, %v146
    %v151 = vlaneseq
    %v152 = vshrl.u32 %v151, 7
    %v153 = vsub.s32 0, %v152
    %v154 = vrot.slane %v118, %v153
    %v156 = vadd.f32 %v148, %v154
    %v157 = vadd.f32 %v149, %v154
    %158 = vst [vmem:[#allocation2] sm:$0xff] %v156
    %159 = vst [vmem:[#allocation2 + $0x8] sm:$0xff] %v157
    %v160 = vld [vmem:[#allocation2] sm:$0xff]
    %v161 = vld [vmem:[#allocation2 + $0x8] sm:$0xff]
    %v162 = vxor.u32 %v160, 2147483648
    %v163 = vxor.u32 %v161, 2147483648
    %v164 = vmul.f32 %v162, 1.442695
    %v165 = vpow.pop %v164
    %v166 = vmul.f32 %v163, 1.442695
    %v167 = vpow.pop %v166
    %v168 = vadd.f32 %v165, 1.0
    %v169 = vadd.f32 %v167, 1.0
    %v170 = vrcp.pop %v168
    %v171 = vmul.f32 1.0, %v170
    %v172 = vrcp.pop %v169
    %v173 = vmul.f32 1.0, %v172
    %v174 = vmul.f32 %v160, %v171
    %v175 = vmul.f32 %v161, %v173
    %vm176 = vcmp.ge.f32.partialorder %v160, -2.2
    %vm177 = vcmp.ge.f32.partialorder %v161, -2.2
    %v178 = vsel %vm176, 1, 0
    %v179 = vsel %vm177, 1, 0
    %v180 = vcvt.s32.f32 %v178
    %v181 = vcvt.s32.f32 %v179
    %vm182 = vcmp.ge.f32.partialorder %v160, -1.8
    %vm183 = vcmp.ge.f32.partialorder %v161, -1.8
    %v184 = vsel %vm182, 1, 0
    %v185 = vsel %vm183, 1, 0
    %v186 = vcvt.s32.f32 %v184
    %v187 = vcvt.s32.f32 %v185
    %vm188 = vcmp.ge.f32.partialorder %v160, -1.4
    %vm189 = vcmp.ge.f32.partialorder %v161, -1.4
    %v190 = vsel %vm188, 1, 0
    %v191 = vsel %vm189, 1, 0
    %v192 = vcvt.s32.f32 %v190
    %v193 = vcvt.s32.f32 %v191
    %vm194 = vcmp.ge.f32.partialorder %v160, -1.0
    %vm195 = vcmp.ge.f32.partialorder %v161, -1.0
    %v196 = vsel %vm194, 1, 0
    %v197 = vsel %vm195, 1, 0
    %v198 = vcvt.s32.f32 %v196
    %v199 = vcvt.s32.f32 %v197
    %vm200 = vcmp.ge.f32.partialorder %v160, -0.6
    %vm201 = vcmp.ge.f32.partialorder %v161, -0.6
    %v202 = vsel %vm200, 1, 0
    %v203 = vsel %vm201, 1, 0
    %v204 = vcvt.s32.f32 %v202
    %v205 = vcvt.s32.f32 %v203
    %vm206 = vcmp.ge.f32.partialorder %v160, -0.2
    %vm207 = vcmp.ge.f32.partialorder %v161, -0.2
    %v208 = vsel %vm206, 1, 0
    %v209 = vsel %vm207, 1, 0
    %v210 = vcvt.s32.f32 %v208
    %v211 = vcvt.s32.f32 %v209
    %vm212 = vcmp.ge.f32.partialorder %v160, 0.2
    %vm213 = vcmp.ge.f32.partialorder %v161, 0.2
    %v214 = vsel %vm212, 1, 0
    %v215 = vsel %vm213, 1, 0
    %v216 = vcvt.s32.f32 %v214
    %v217 = vcvt.s32.f32 %v215
    %vm218 = vcmp.ge.f32.partialorder %v160, 0.6
    %vm219 = vcmp.ge.f32.partialorder %v161, 0.6
    %v220 = vsel %vm218, 1, 0
    %v221 = vsel %vm219, 1, 0
    %v222 = vcvt.s32.f32 %v220
    %v223 = vcvt.s32.f32 %v221
    %vm224 = vcmp.ge.f32.partialorder %v160, 1.0
    %vm225 = vcmp.ge.f32.partialorder %v161, 1.0
    %v226 = vsel %vm224, 1, 0
    %v227 = vsel %vm225, 1, 0
    %v228 = vcvt.s32.f32 %v226
    %v229 = vcvt.s32.f32 %v227
    %vm230 = vcmp.ge.f32.partialorder %v160, 1.4
    %vm231 = vcmp.ge.f32.partialorder %v161, 1.4
    %v232 = vsel %vm230, 1, 0
    %v233 = vsel %vm231, 1, 0
    %v234 = vcvt.s32.f32 %v232
    %v235 = vcvt.s32.f32 %v233
    %vm236 = vcmp.ge.f32.partialorder %v160, 1.8
    %vm237 = vcmp.ge.f32.partialorder %v161, 1.8
    %v238 = vsel %vm236, 1, 0
    %v239 = vsel %vm237, 1, 0
    %v240 = vcvt.s32.f32 %v238
    %v241 = vcvt.s32.f32 %v239
    %vm242 = vcmp.ge.f32.partialorder %v160, 2.2
    %vm243 = vcmp.ge.f32.partialorder %v161, 2.2
    %v244 = vsel %vm242, 1, 0
    %v245 = vsel %vm243, 1, 0
    %v246 = vcvt.s32.f32 %v244
    %v247 = vcvt.s32.f32 %v245
    %v248 = vsub.f32 %v180, %v186
    %v249 = vsub.f32 %v181, %v187
    %v250 = vsub.f32 %v186, %v192
    %v251 = vsub.f32 %v187, %v193
    %v252 = vsub.f32 %v192, %v198
    %v253 = vsub.f32 %v193, %v199
    %v254 = vsub.f32 %v198, %v204
    %v255 = vsub.f32 %v199, %v205
    %v256 = vsub.f32 %v204, %v210
    %v257 = vsub.f32 %v205, %v211
    %v258 = vsub.f32 %v210, %v216
    %v259 = vsub.f32 %v211, %v217
    %v260 = vsub.f32 %v216, %v222
    %v261 = vsub.f32 %v217, %v223
    %v262 = vsub.f32 %v222, %v228
    %v263 = vsub.f32 %v223, %v229
    %v264 = vsub.f32 %v228, %v234
    %v265 = vsub.f32 %v229, %v235
    %v266 = vsub.f32 %v234, %v240
    %v267 = vsub.f32 %v235, %v241
    %v268 = vsub.f32 %v240, %v246
    %v269 = vsub.f32 %v241, %v247
    %v270 = vsub.f32 %v160, -2.2
    %v271 = vsub.f32 %v161, -2.2
    %v272 = vsub.f32 %v160, -1.8
    %v273 = vsub.f32 %v161, -1.8
    %v274 = vsub.f32 %v160, -1.4
    %v275 = vsub.f32 %v161, -1.4
    %v276 = vsub.f32 %v160, -1.0
    %v277 = vsub.f32 %v161, -1.0
    %v278 = vsub.f32 %v160, -0.6
    %v279 = vsub.f32 %v161, -0.6
    %v280 = vsub.f32 %v160, -0.2
    %v281 = vsub.f32 %v161, -0.2
    %v282 = vsub.f32 %v160, 0.2
    %v283 = vsub.f32 %v161, 0.2
    %v284 = vsub.f32 %v160, 0.6
    %v285 = vsub.f32 %v161, 0.6
    %v286 = vsub.f32 %v160, 1.0
    %v287 = vsub.f32 %v161, 1.0
    %v288 = vsub.f32 %v160, 1.4
    %v289 = vsub.f32 %v161, 1.4
    %v290 = vsub.f32 %v160, 1.8
    %v291 = vsub.f32 %v161, 1.8
    %v292 = vmul.f32 %v270, 2.5
    %v293 = vmul.f32 %v271, 2.5
    %v294 = vmul.f32 %v272, 2.5
    %v295 = vmul.f32 %v273, 2.5
    %v296 = vmul.f32 %v274, 2.5
    %v297 = vmul.f32 %v275, 2.5
    %v298 = vmul.f32 %v276, 2.5
    %v299 = vmul.f32 %v277, 2.5
    %v300 = vmul.f32 %v278, 2.5
    %v301 = vmul.f32 %v279, 2.5
    %v302 = vmul.f32 %v280, 2.5
    %v303 = vmul.f32 %v281, 2.5
    %v304 = vmul.f32 %v282, 2.5
    %v305 = vmul.f32 %v283, 2.5
    %v306 = vmul.f32 %v284, 2.5
    %v307 = vmul.f32 %v285, 2.5
    %v308 = vmul.f32 %v286, 2.5
    %v309 = vmul.f32 %v287, 2.5
    %v310 = vmul.f32 %v288, 2.5
    %v311 = vmul.f32 %v289, 2.5
    %v312 = vmul.f32 %v290, 2.5
    %v313 = vmul.f32 %v291, 2.5
    %v314 = vmul.f32 %v292, %v248
    %v315 = vmul.f32 %v293, %v249
    %v316 = vsub.f32 1.0, %v294
    %v317 = vsub.f32 1.0, %v295
    %v318 = vmul.f32 %v316, %v250
    %v319 = vmul.f32 %v317, %v251
    %v320 = vadd.f32 %v314, %v318
    %v321 = vadd.f32 %v315, %v319
    %v322 = vmul.f32 %v294, %v250
    %v323 = vmul.f32 %v295, %v251
    %v324 = vsub.f32 1.0, %v296
    %v325 = vsub.f32 1.0, %v297
    %v326 = vmul.f32 %v324, %v252
    %v327 = vmul.f32 %v325, %v253
    %v328 = vadd.f32 %v322, %v326
    %v329 = vadd.f32 %v323, %v327
    %v330 = vmul.f32 %v296, %v252
    %v331 = vmul.f32 %v297, %v253
    %v332 = vsub.f32 1.0, %v298
    %v333 = vsub.f32 1.0, %v299
    %v334 = vmul.f32 %v332, %v254
    %v335 = vmul.f32 %v333, %v255
    %v336 = vadd.f32 %v330, %v334
    %v337 = vadd.f32 %v331, %v335
    %v338 = vmul.f32 %v298, %v254
    %v339 = vmul.f32 %v299, %v255
    %v340 = vsub.f32 1.0, %v300
    %v341 = vsub.f32 1.0, %v301
    %v342 = vmul.f32 %v340, %v256
    %v343 = vmul.f32 %v341, %v257
    %v344 = vadd.f32 %v338, %v342
    %v345 = vadd.f32 %v339, %v343
    %v346 = vmul.f32 %v300, %v256
    %v347 = vmul.f32 %v301, %v257
    %v348 = vsub.f32 1.0, %v302
    %v349 = vsub.f32 1.0, %v303
    %v350 = vmul.f32 %v348, %v258
    %v351 = vmul.f32 %v349, %v259
    %v352 = vadd.f32 %v346, %v350
    %v353 = vadd.f32 %v347, %v351
    %v354 = vmul.f32 %v302, %v258
    %v355 = vmul.f32 %v303, %v259
    %v356 = vsub.f32 1.0, %v304
    %v357 = vsub.f32 1.0, %v305
    %v358 = vmul.f32 %v356, %v260
    %v359 = vmul.f32 %v357, %v261
    %v360 = vadd.f32 %v354, %v358
    %v361 = vadd.f32 %v355, %v359
    %v362 = vmul.f32 %v304, %v260
    %v363 = vmul.f32 %v305, %v261
    %v364 = vsub.f32 1.0, %v306
    %v365 = vsub.f32 1.0, %v307
    %v366 = vmul.f32 %v364, %v262
    %v367 = vmul.f32 %v365, %v263
    %v368 = vadd.f32 %v362, %v366
    %v369 = vadd.f32 %v363, %v367
    %v370 = vmul.f32 %v306, %v262
    %v371 = vmul.f32 %v307, %v263
    %v372 = vsub.f32 1.0, %v308
    %v373 = vsub.f32 1.0, %v309
    %v374 = vmul.f32 %v372, %v264
    %v375 = vmul.f32 %v373, %v265
    %v376 = vadd.f32 %v370, %v374
    %v377 = vadd.f32 %v371, %v375
    %v378 = vmul.f32 %v308, %v264
    %v379 = vmul.f32 %v309, %v265
    %v380 = vsub.f32 1.0, %v310
    %v381 = vsub.f32 1.0, %v311
    %v382 = vmul.f32 %v380, %v266
    %v383 = vmul.f32 %v381, %v267
    %v384 = vadd.f32 %v378, %v382
    %v385 = vadd.f32 %v379, %v383
    %v386 = vmul.f32 %v310, %v266
    %v387 = vmul.f32 %v311, %v267
    %v388 = vsub.f32 1.0, %v312
    %v389 = vsub.f32 1.0, %v313
    %v390 = vmul.f32 %v388, %v268
    %v391 = vmul.f32 %v389, %v269
    %v392 = vadd.f32 %v386, %v390
    %v393 = vadd.f32 %v387, %v391
    %v394 = vmul.f32 %v270, 1.25
    %v395 = vmul.f32 %v271, 1.25
    %v396 = vmul.f32 %v272, 1.25
    %v397 = vmul.f32 %v273, 1.25
    %v398 = vmul.f32 %v274, 1.25
    %v399 = vmul.f32 %v275, 1.25
    %v400 = vmul.f32 %v276, 1.25
    %v401 = vmul.f32 %v277, 1.25
    %v402 = vmul.f32 %v278, 1.25
    %v403 = vmul.f32 %v279, 1.25
    %v404 = vmul.f32 %v280, 1.25
    %v405 = vmul.f32 %v281, 1.25
    %v406 = vmul.f32 %v282, 1.25
    %v407 = vmul.f32 %v283, 1.25
    %v408 = vmul.f32 %v284, 1.25
    %v409 = vmul.f32 %v285, 1.25
    %v410 = vmul.f32 %v286, 1.25
    %v411 = vmul.f32 %v287, 1.25
    %v412 = vmul.f32 %v288, 1.25
    %v413 = vmul.f32 %v289, 1.25
    %v414 = vmul.f32 %v394, %v320
    %v415 = vmul.f32 %v395, %v321
    %v416 = vsub.f32 1.0, %v396
    %v417 = vsub.f32 1.0, %v397
    %v418 = vmul.f32 %v416, %v328
    %v419 = vmul.f32 %v417, %v329
    %v420 = vadd.f32 %v414, %v418
    %v421 = vadd.f32 %v415, %v419
    %v422 = vmul.f32 %v396, %v328
    %v423 = vmul.f32 %v397, %v329
    %v424 = vsub.f32 1.0, %v398
    %v425 = vsub.f32 1.0, %v399
    %v426 = vmul.f32 %v424, %v336
    %v427 = vmul.f32 %v425, %v337
    %v428 = vadd.f32 %v422, %v426
    %v429 = vadd.f32 %v423, %v427
    %v430 = vmul.f32 %v398, %v336
    %v431 = vmul.f32 %v399, %v337
    %v432 = vsub.f32 1.0, %v400
    %v433 = vsub.f32 1.0, %v401
    %v434 = vmul.f32 %v432, %v344
    %v435 = vmul.f32 %v433, %v345
    %v436 = vadd.f32 %v430, %v434
    %v437 = vadd.f32 %v431, %v435
    %v438 = vmul.f32 %v400, %v344
    %v439 = vmul.f32 %v401, %v345
    %v440 = vsub.f32 1.0, %v402
    %v441 = vsub.f32 1.0, %v403
    %v442 = vmul.f32 %v440, %v352
    %v443 = vmul.f32 %v441, %v353
    %v444 = vadd.f32 %v438, %v442
    %v445 = vadd.f32 %v439, %v443
    %v446 = vmul.f32 %v402, %v352
    %v447 = vmul.f32 %v403, %v353
    %v448 = vsub.f32 1.0, %v404
    %v449 = vsub.f32 1.0, %v405
    %v450 = vmul.f32 %v448, %v360
    %v451 = vmul.f32 %v449, %v361
    %v452 = vadd.f32 %v446, %v450
    %v453 = vadd.f32 %v447, %v451
    %v454 = vmul.f32 %v404, %v360
    %v455 = vmul.f32 %v405, %v361
    %v456 = vsub.f32 1.0, %v406
    %v457 = vsub.f32 1.0, %v407
    %v458 = vmul.f32 %v456, %v368
    %v459 = vmul.f32 %v457, %v369
    %v460 = vadd.f32 %v454, %v458
    %v461 = vadd.f32 %v455, %v459
    %v462 = vmul.f32 %v406, %v368
    %v463 = vmul.f32 %v407, %v369
    %v464 = vsub.f32 1.0, %v408
    %v465 = vsub.f32 1.0, %v409
    %v466 = vmul.f32 %v464, %v376
    %v467 = vmul.f32 %v465, %v377
    %v468 = vadd.f32 %v462, %v466
    %v469 = vadd.f32 %v463, %v467
    %v470 = vmul.f32 %v408, %v376
    %v471 = vmul.f32 %v409, %v377
    %v472 = vsub.f32 1.0, %v410
    %v473 = vsub.f32 1.0, %v411
    %v474 = vmul.f32 %v472, %v384
    %v475 = vmul.f32 %v473, %v385
    %v476 = vadd.f32 %v470, %v474
    %v477 = vadd.f32 %v471, %v475
    %v478 = vmul.f32 %v410, %v384
    %v479 = vmul.f32 %v411, %v385
    %v480 = vsub.f32 1.0, %v412
    %v481 = vsub.f32 1.0, %v413
    %v482 = vmul.f32 %v480, %v392
    %v483 = vmul.f32 %v481, %v393
    %v484 = vadd.f32 %v478, %v482
    %v485 = vadd.f32 %v479, %v483
    %v486 = vmul.f32 %v270, 0.8333333
    %v487 = vmul.f32 %v271, 0.8333333
    %v488 = vmul.f32 %v272, 0.8333333
    %v489 = vmul.f32 %v273, 0.8333333
    %v490 = vmul.f32 %v274, 0.8333333
    %v491 = vmul.f32 %v275, 0.8333333
    %v492 = vmul.f32 %v276, 0.8333333
    %v493 = vmul.f32 %v277, 0.8333333
    %v494 = vmul.f32 %v278, 0.8333333
    %v495 = vmul.f32 %v279, 0.8333333
    %v496 = vmul.f32 %v280, 0.8333333
    %v497 = vmul.f32 %v281, 0.8333333
    %v498 = vmul.f32 %v282, 0.8333333
    %v499 = vmul.f32 %v283, 0.8333333
    %v500 = vmul.f32 %v284, 0.8333333
    %v501 = vmul.f32 %v285, 0.8333333
    %v502 = vmul.f32 %v286, 0.8333333
    %v503 = vmul.f32 %v287, 0.8333333
    %v504 = vmul.f32 %v486, %v420
    %v505 = vmul.f32 %v487, %v421
    %v506 = vsub.f32 1.0, %v488
    %v507 = vsub.f32 1.0, %v489
    %v508 = vmul.f32 %v506, %v428
    %v509 = vmul.f32 %v507, %v429
    %v510 = vadd.f32 %v504, %v508
    %v511 = vadd.f32 %v505, %v509
    %v512 = vmul.f32 %v488, %v428
    %v513 = vmul.f32 %v489, %v429
    %v514 = vsub.f32 1.0, %v490
    %v515 = vsub.f32 1.0, %v491
    %v516 = vmul.f32 %v514, %v436
    %v517 = vmul.f32 %v515, %v437
    %v518 = vadd.f32 %v512, %v516
    %v519 = vadd.f32 %v513, %v517
    %v520 = vmul.f32 %v490, %v436
    %v521 = vmul.f32 %v491, %v437
    %v522 = vsub.f32 1.0, %v492
    %v523 = vsub.f32 1.0, %v493
    %v524 = vmul.f32 %v522, %v444
    %v525 = vmul.f32 %v523, %v445
    %v526 = vadd.f32 %v520, %v524
    %v527 = vadd.f32 %v521, %v525
    %v528 = vmul.f32 %v492, %v444
    %v529 = vmul.f32 %v493, %v445
    %v530 = vsub.f32 1.0, %v494
    %v531 = vsub.f32 1.0, %v495
    %v532 = vmul.f32 %v530, %v452
    %v533 = vmul.f32 %v531, %v453
    %v534 = vadd.f32 %v528, %v532
    %v535 = vadd.f32 %v529, %v533
    %v536 = vmul.f32 %v494, %v452
    %v537 = vmul.f32 %v495, %v453
    %v538 = vsub.f32 1.0, %v496
    %v539 = vsub.f32 1.0, %v497
    %v540 = vmul.f32 %v538, %v460
    %v541 = vmul.f32 %v539, %v461
    %v542 = vadd.f32 %v536, %v540
    %v543 = vadd.f32 %v537, %v541
    %v544 = vmul.f32 %v496, %v460
    %v545 = vmul.f32 %v497, %v461
    %v546 = vsub.f32 1.0, %v498
    %v547 = vsub.f32 1.0, %v499
    %v548 = vmul.f32 %v546, %v468
    %v549 = vmul.f32 %v547, %v469
    %v550 = vadd.f32 %v544, %v548
    %v551 = vadd.f32 %v545, %v549
    %v552 = vmul.f32 %v498, %v468
    %v553 = vmul.f32 %v499, %v469
    %v554 = vsub.f32 1.0, %v500
    %v555 = vsub.f32 1.0, %v501
    %v556 = vmul.f32 %v554, %v476
    %v557 = vmul.f32 %v555, %v477
    %v558 = vadd.f32 %v552, %v556
    %v559 = vadd.f32 %v553, %v557
    %v560 = vmul.f32 %v500, %v476
    %v561 = vmul.f32 %v501, %v477
    %v562 = vsub.f32 1.0, %v502
    %v563 = vsub.f32 1.0, %v503
    %v564 = vmul.f32 %v562, %v484
    %v565 = vmul.f32 %v563, %v485
    %v566 = vadd.f32 %v560, %v564
    %v567 = vadd.f32 %v561, %v565
    %v568 = vpack.c.bf16 %v175, %v174
    %569 = vst [vmem:[#allocation5] sm:$0xff] %v568
    %v570 = vpack.c.bf16 %v511, %v510
    %571 = vst [vmem:[#allocation5 + $0x8] sm:$0xff] %v570
    %v572 = vpack.c.bf16 %v519, %v518
    %573 = vst [vmem:[#allocation5 + $0x10] sm:$0xff] %v572
    %v574 = vpack.c.bf16 %v527, %v526
    %575 = vst [vmem:[#allocation5 + $0x18] sm:$0xff] %v574
    %v576 = vpack.c.bf16 %v535, %v534
    %577 = vst [vmem:[#allocation5 + $0x20] sm:$0xff] %v576
    %v578 = vpack.c.bf16 %v543, %v542
    %579 = vst [vmem:[#allocation5 + $0x28] sm:$0xff] %v578
    %v580 = vpack.c.bf16 %v551, %v550
    %581 = vst [vmem:[#allocation5 + $0x30] sm:$0xff] %v580
    %v582 = vpack.c.bf16 %v559, %v558
    %583 = vst [vmem:[#allocation5 + $0x38] sm:$0xff] %v582
    %v584 = vpack.c.bf16 %v567, %v566
    %585 = vst [vmem:[#allocation5 + $0x40] sm:$0xff] %v584
    %v586 = vld [vmem:[#allocation13] sm:$0xff]
    %v587 = vld [vmem:[#allocation13 + $0x8] sm:$0xff]
    %v588 = vld [vmem:[#allocation13 + $0x10] sm:$0xff]
    %v589 = vld [vmem:[#allocation13 + $0x18] sm:$0xff]
    %v590 = vld [vmem:[#allocation13 + $0x20] sm:$0xff]
    %v591 = vld [vmem:[#allocation13 + $0x28] sm:$0xff]
    %v592 = vld [vmem:[#allocation13 + $0x30] sm:$0xff]
    %v593 = vld [vmem:[#allocation13 + $0x38] sm:$0xff]
    %v594 = vld [vmem:[#allocation13 + $0x40] sm:$0xff]
    %v595 = vld [vmem:[#allocation13 + $0x48] sm:$0xff]
    %v596 = vld [vmem:[#allocation13 + $0x50] sm:$0xff]
    %v597 = vld [vmem:[#allocation13 + $0x58] sm:$0xff]
    %v598 = vld [vmem:[#allocation13 + $0x60] sm:$0xff]
    %v599 = vld [vmem:[#allocation13 + $0x68] sm:$0xff]
    %v600 = vld [vmem:[#allocation13 + $0x70] sm:$0xff]
    %v601 = vld [vmem:[#allocation13 + $0x78] sm:$0xff]
    %v602 = vld [vmem:[#allocation13 + $0x80] sm:$0xff]
    %v603 = vld [vmem:[#allocation13 + $0x88] sm:$0xff]
    %v604 = vld [vmem:[#allocation13 + $0x90] sm:$0xff]
    %v605 = vld [vmem:[#allocation13 + $0x98] sm:$0xff]
    %v606 = vld [vmem:[#allocation13 + $0xa0] sm:$0xff]
    %v607 = vld [vmem:[#allocation13 + $0xa8] sm:$0xff]
    %v608 = vld [vmem:[#allocation13 + $0xb0] sm:$0xff]
    %v609 = vld [vmem:[#allocation13 + $0xb8] sm:$0xff]
    %v610 = vld [vmem:[#allocation13 + $0xc0] sm:$0xff]
    %v611 = vld [vmem:[#allocation13 + $0xc8] sm:$0xff]
    %v612 = vld [vmem:[#allocation13 + $0xd0] sm:$0xff]
    %v613 = vld [vmem:[#allocation13 + $0xd8] sm:$0xff]
    %v614 = vld [vmem:[#allocation13 + $0xe0] sm:$0xff]
    %v615 = vld [vmem:[#allocation13 + $0xe8] sm:$0xff]
    %v616 = vld [vmem:[#allocation13 + $0xf0] sm:$0xff]
    %v617 = vld [vmem:[#allocation13 + $0xf8] sm:$0xff]
    %v618 = vld [vmem:[#allocation13 + $0x100] sm:$0xff]
    %v619 = vld [vmem:[#allocation13 + $0x108] sm:$0xff]
    %v620 = vld [vmem:[#allocation13 + $0x110] sm:$0xff]
    %v621 = vld [vmem:[#allocation13 + $0x118] sm:$0xff]
    %v622 = vld [vmem:[#allocation13 + $0x120] sm:$0xff]
    %v623 = vld [vmem:[#allocation13 + $0x128] sm:$0xff]
    %v624 = vld [vmem:[#allocation13 + $0x130] sm:$0xff]
    %v625 = vld [vmem:[#allocation13 + $0x138] sm:$0xff]
    %v626 = vld [vmem:[#allocation13 + $0x140] sm:$0xff]
    %v627 = vld [vmem:[#allocation13 + $0x148] sm:$0xff]
    %v628 = vld [vmem:[#allocation13 + $0x150] sm:$0xff]
    %v629 = vld [vmem:[#allocation13 + $0x158] sm:$0xff]
    %v630 = vld [vmem:[#allocation13 + $0x160] sm:$0xff]
    %v631 = vld [vmem:[#allocation13 + $0x168] sm:$0xff]
    %v632 = vld [vmem:[#allocation13 + $0x170] sm:$0xff]
    %v633 = vld [vmem:[#allocation13 + $0x178] sm:$0xff]
    %v634 = vld [vmem:[#allocation13 + $0x180] sm:$0xff]
    %v635 = vld [vmem:[#allocation13 + $0x188] sm:$0xff]
    %v636 = vld [vmem:[#allocation13 + $0x190] sm:$0xff]
    %v637 = vld [vmem:[#allocation13 + $0x198] sm:$0xff]
    %v638 = vld [vmem:[#allocation13 + $0x1a0] sm:$0xff]
    %v639 = vld [vmem:[#allocation13 + $0x1a8] sm:$0xff]
    %v640 = vld [vmem:[#allocation13 + $0x1b0] sm:$0xff]
    %v641 = vld [vmem:[#allocation13 + $0x1b8] sm:$0xff]
    %v642 = vld [vmem:[#allocation13 + $0x1c0] sm:$0xff]
    %v643 = vld [vmem:[#allocation13 + $0x1c8] sm:$0xff]
    %v644 = vld [vmem:[#allocation13 + $0x1d0] sm:$0xff]
    %v645 = vld [vmem:[#allocation13 + $0x1d8] sm:$0xff]
    %v646 = vld [vmem:[#allocation13 + $0x1e0] sm:$0xff]
    %v647 = vld [vmem:[#allocation13 + $0x1e8] sm:$0xff]
    %v648 = vld [vmem:[#allocation13 + $0x1f0] sm:$0xff]
    %v649 = vld [vmem:[#allocation13 + $0x1f8] sm:$0xff]
    %v650 = vld [vmem:[#allocation13 + $0x200] sm:$0xff]
    %v651 = vld [vmem:[#allocation13 + $0x208] sm:$0xff]
    %v652 = vld [vmem:[#allocation13 + $0x210] sm:$0xff]
    %v653 = vld [vmem:[#allocation13 + $0x218] sm:$0xff]
    %v654 = vld [vmem:[#allocation13 + $0x220] sm:$0xff]
    %v655 = vld [vmem:[#allocation13 + $0x228] sm:$0xff]
    %v656 = vld [vmem:[#allocation13 + $0x230] sm:$0xff]
    %v657 = vld [vmem:[#allocation13 + $0x238] sm:$0xff]
    %v658 = vld [vmem:[#allocation13 + $0x240] sm:$0xff]
    %v659 = vld [vmem:[#allocation13 + $0x248] sm:$0xff]
    %v660 = vld [vmem:[#allocation13 + $0x250] sm:$0xff]
    %v661 = vld [vmem:[#allocation13 + $0x258] sm:$0xff]
    %v662 = vld [vmem:[#allocation13 + $0x260] sm:$0xff]
    %v663 = vld [vmem:[#allocation13 + $0x268] sm:$0xff]
    %v664 = vld [vmem:[#allocation13 + $0x270] sm:$0xff]
    %v665 = vld [vmem:[#allocation13 + $0x278] sm:$0xff]
    %v666 = vld [vmem:[#allocation13 + $0x280] sm:$0xff]
    %v667 = vld [vmem:[#allocation13 + $0x288] sm:$0xff]
    %v668 = vld [vmem:[#allocation13 + $0x290] sm:$0xff]
    %v669 = vld [vmem:[#allocation13 + $0x298] sm:$0xff]
    %v670 = vld [vmem:[#allocation13 + $0x2a0] sm:$0xff]
    %v671 = vld [vmem:[#allocation13 + $0x2a8] sm:$0xff]
    %v672 = vld [vmem:[#allocation13 + $0x2b0] sm:$0xff]
    %v673 = vld [vmem:[#allocation13 + $0x2b8] sm:$0xff]
    %v674 = vld [vmem:[#allocation13 + $0x2c0] sm:$0xff]
    %v675 = vld [vmem:[#allocation13 + $0x2c8] sm:$0xff]
    %v676 = vld [vmem:[#allocation13 + $0x2d0] sm:$0xff]
    %v677 = vld [vmem:[#allocation13 + $0x2d8] sm:$0xff]
    %v678 = vld [vmem:[#allocation13 + $0x2e0] sm:$0xff]
    %v679 = vld [vmem:[#allocation13 + $0x2e8] sm:$0xff]
    %v680 = vld [vmem:[#allocation13 + $0x2f0] sm:$0xff]
    %v681 = vld [vmem:[#allocation13 + $0x2f8] sm:$0xff]
    %v682 = vld [vmem:[#allocation13 + $0x300] sm:$0xff]
    %v683 = vld [vmem:[#allocation13 + $0x308] sm:$0xff]
    %v684 = vld [vmem:[#allocation13 + $0x310] sm:$0xff]
    %v685 = vld [vmem:[#allocation13 + $0x318] sm:$0xff]
    %v686 = vld [vmem:[#allocation13 + $0x320] sm:$0xff]
    %v687 = vld [vmem:[#allocation13 + $0x328] sm:$0xff]
    %v688 = vld [vmem:[#allocation13 + $0x330] sm:$0xff]
    %v689 = vld [vmem:[#allocation13 + $0x338] sm:$0xff]
    %v690 = vld [vmem:[#allocation13 + $0x340] sm:$0xff]
    %v691 = vld [vmem:[#allocation13 + $0x348] sm:$0xff]
    %v692 = vld [vmem:[#allocation13 + $0x350] sm:$0xff]
    %v693 = vld [vmem:[#allocation13 + $0x358] sm:$0xff]
    %v694 = vld [vmem:[#allocation13 + $0x360] sm:$0xff]
    %v695 = vld [vmem:[#allocation13 + $0x368] sm:$0xff]
    %v696 = vld [vmem:[#allocation13 + $0x370] sm:$0xff]
    %v697 = vld [vmem:[#allocation13 + $0x378] sm:$0xff]
    %v698 = vld [vmem:[#allocation13 + $0x380] sm:$0xff]
    %v699 = vld [vmem:[#allocation13 + $0x388] sm:$0xff]
    %v700 = vld [vmem:[#allocation13 + $0x390] sm:$0xff]
    %v701 = vld [vmem:[#allocation13 + $0x398] sm:$0xff]
    %v702 = vld [vmem:[#allocation13 + $0x3a0] sm:$0xff]
    %v703 = vld [vmem:[#allocation13 + $0x3a8] sm:$0xff]
    %v704 = vld [vmem:[#allocation13 + $0x3b0] sm:$0xff]
    %v705 = vld [vmem:[#allocation13 + $0x3b8] sm:$0xff]
    %v706 = vld [vmem:[#allocation13 + $0x3c0] sm:$0xff]
    %v707 = vld [vmem:[#allocation13 + $0x3c8] sm:$0xff]
    %v708 = vld [vmem:[#allocation13 + $0x3d0] sm:$0xff]
    %v709 = vld [vmem:[#allocation13 + $0x3d8] sm:$0xff]
    %v710 = vld [vmem:[#allocation13 + $0x3e0] sm:$0xff]
    %v711 = vld [vmem:[#allocation13 + $0x3e8] sm:$0xff]
    %v712 = vld [vmem:[#allocation13 + $0x3f0] sm:$0xff]
    %v713 = vld [vmem:[#allocation13 + $0x3f8] sm:$0xff]
    %v714 = vld [vmem:[#allocation13 + $0x400] sm:$0xff]
    %v715 = vld [vmem:[#allocation13 + $0x408] sm:$0xff]
    %v716 = vld [vmem:[#allocation13 + $0x410] sm:$0xff]
    %v717 = vld [vmem:[#allocation13 + $0x418] sm:$0xff]
    %v718 = vld [vmem:[#allocation13 + $0x420] sm:$0xff]
    %v719 = vld [vmem:[#allocation13 + $0x428] sm:$0xff]
    %v720 = vld [vmem:[#allocation13 + $0x430] sm:$0xff]
    %v721 = vld [vmem:[#allocation13 + $0x438] sm:$0xff]
    %v722 = vld [vmem:[#allocation13 + $0x440] sm:$0xff]
    %v723 = vld [vmem:[#allocation13 + $0x448] sm:$0xff]
    %v724 = vld [vmem:[#allocation13 + $0x450] sm:$0xff]
    %v725 = vld [vmem:[#allocation13 + $0x458] sm:$0xff]
    %v726 = vld [vmem:[#allocation13 + $0x460] sm:$0xff]
    %v727 = vld [vmem:[#allocation13 + $0x468] sm:$0xff]
    %v728 = vld [vmem:[#allocation13 + $0x470] sm:$0xff]
    %v729 = vld [vmem:[#allocation13 + $0x478] sm:$0xff]
    %v730 = vld [vmem:[#allocation5] sm:$0xff]
    %v731 = vld [vmem:[#allocation5 + $0x8] sm:$0xff]
    %v732 = vld [vmem:[#allocation5 + $0x10] sm:$0xff]
    %v733 = vld [vmem:[#allocation5 + $0x18] sm:$0xff]
    %v734 = vld [vmem:[#allocation5 + $0x20] sm:$0xff]
    %v735 = vld [vmem:[#allocation5 + $0x28] sm:$0xff]
    %v736 = vld [vmem:[#allocation5 + $0x30] sm:$0xff]
    %v737 = vld [vmem:[#allocation5 + $0x38] sm:$0xff]
    %v738 = vld [vmem:[#allocation5 + $0x40] sm:$0xff]
    %v883 = vunpack.c.l.b16 %v586
    %v884 = vunpack.c.h.b16 %v586
    %v885 = vunpack.c.l.b16 %v587
    %v886 = vunpack.c.h.b16 %v587
    %v887 = vunpack.c.l.b16 %v588
    %v888 = vunpack.c.h.b16 %v588
    %v889 = vunpack.c.l.b16 %v589
    %v890 = vunpack.c.h.b16 %v589
    %v891 = vunpack.c.l.b16 %v590
    %v892 = vunpack.c.h.b16 %v590
    %v893 = vunpack.c.l.b16 %v591
    %v894 = vunpack.c.h.b16 %v591
    %v895 = vunpack.c.l.b16 %v592
    %v896 = vunpack.c.h.b16 %v592
    %v897 = vunpack.c.l.b16 %v593
    %v898 = vunpack.c.h.b16 %v593
    %v899 = vunpack.c.l.b16 %v594
    %v900 = vunpack.c.h.b16 %v594
    %v901 = vunpack.c.l.b16 %v595
    %v902 = vunpack.c.h.b16 %v595
    %v903 = vunpack.c.l.b16 %v596
    %v904 = vunpack.c.h.b16 %v596
    %v905 = vunpack.c.l.b16 %v597
    %v906 = vunpack.c.h.b16 %v597
    %v907 = vunpack.c.l.b16 %v598
    %v908 = vunpack.c.h.b16 %v598
    %v909 = vunpack.c.l.b16 %v599
    %v910 = vunpack.c.h.b16 %v599
    %v911 = vunpack.c.l.b16 %v600
    %v912 = vunpack.c.h.b16 %v600
    %v913 = vunpack.c.l.b16 %v601
    %v914 = vunpack.c.h.b16 %v601
    %v915 = vunpack.c.l.b16 %v602
    %v916 = vunpack.c.h.b16 %v602
    %v917 = vunpack.c.l.b16 %v603
    %v918 = vunpack.c.h.b16 %v603
    %v919 = vunpack.c.l.b16 %v604
    %v920 = vunpack.c.h.b16 %v604
    %v921 = vunpack.c.l.b16 %v605
    %v922 = vunpack.c.h.b16 %v605
    %v923 = vunpack.c.l.b16 %v606
    %v924 = vunpack.c.h.b16 %v606
    %v925 = vunpack.c.l.b16 %v607
    %v926 = vunpack.c.h.b16 %v607
    %v927 = vunpack.c.l.b16 %v608
    %v928 = vunpack.c.h.b16 %v608
    %v929 = vunpack.c.l.b16 %v609
    %v930 = vunpack.c.h.b16 %v609
    %v931 = vunpack.c.l.b16 %v610
    %v932 = vunpack.c.h.b16 %v610
    %v933 = vunpack.c.l.b16 %v611
    %v934 = vunpack.c.h.b16 %v611
    %v935 = vunpack.c.l.b16 %v612
    %v936 = vunpack.c.h.b16 %v612
    %v937 = vunpack.c.l.b16 %v613
    %v938 = vunpack.c.h.b16 %v613
    %v939 = vunpack.c.l.b16 %v614
    %v940 = vunpack.c.h.b16 %v614
    %v941 = vunpack.c.l.b16 %v615
    %v942 = vunpack.c.h.b16 %v615
    %v943 = vunpack.c.l.b16 %v616
    %v944 = vunpack.c.h.b16 %v616
    %v945 = vunpack.c.l.b16 %v617
    %v946 = vunpack.c.h.b16 %v617
    %v947 = vunpack.c.l.b16 %v618
    %v948 = vunpack.c.h.b16 %v618
    %v949 = vunpack.c.l.b16 %v619
    %v950 = vunpack.c.h.b16 %v619
    %v951 = vunpack.c.l.b16 %v620
    %v952 = vunpack.c.h.b16 %v620
    %v953 = vunpack.c.l.b16 %v621
    %v954 = vunpack.c.h.b16 %v621
    %v955 = vunpack.c.l.b16 %v622
    %v956 = vunpack.c.h.b16 %v622
    %v957 = vunpack.c.l.b16 %v623
    %v958 = vunpack.c.h.b16 %v623
    %v959 = vunpack.c.l.b16 %v624
    %v960 = vunpack.c.h.b16 %v624
    %v961 = vunpack.c.l.b16 %v625
    %v962 = vunpack.c.h.b16 %v625
    %v963 = vunpack.c.l.b16 %v626
    %v964 = vunpack.c.h.b16 %v626
    %v965 = vunpack.c.l.b16 %v627
    %v966 = vunpack.c.h.b16 %v627
    %v967 = vunpack.c.l.b16 %v628
    %v968 = vunpack.c.h.b16 %v628
    %v969 = vunpack.c.l.b16 %v629
    %v970 = vunpack.c.h.b16 %v629
    %v971 = vunpack.c.l.b16 %v630
    %v972 = vunpack.c.h.b16 %v630
    %v973 = vunpack.c.l.b16 %v631
    %v974 = vunpack.c.h.b16 %v631
    %v975 = vunpack.c.l.b16 %v632
    %v976 = vunpack.c.h.b16 %v632
    %v977 = vunpack.c.l.b16 %v633
    %v978 = vunpack.c.h.b16 %v633
    %v979 = vunpack.c.l.b16 %v634
    %v980 = vunpack.c.h.b16 %v634
    %v981 = vunpack.c.l.b16 %v635
    %v982 = vunpack.c.h.b16 %v635
    %v983 = vunpack.c.l.b16 %v636
    %v984 = vunpack.c.h.b16 %v636
    %v985 = vunpack.c.l.b16 %v637
    %v986 = vunpack.c.h.b16 %v637
    %v987 = vunpack.c.l.b16 %v638
    %v988 = vunpack.c.h.b16 %v638
    %v989 = vunpack.c.l.b16 %v639
    %v990 = vunpack.c.h.b16 %v639
    %v991 = vunpack.c.l.b16 %v640
    %v992 = vunpack.c.h.b16 %v640
    %v993 = vunpack.c.l.b16 %v641
    %v994 = vunpack.c.h.b16 %v641
    %v995 = vunpack.c.l.b16 %v642
    %v996 = vunpack.c.h.b16 %v642
    %v997 = vunpack.c.l.b16 %v643
    %v998 = vunpack.c.h.b16 %v643
    %v999 = vunpack.c.l.b16 %v644
    %v1000 = vunpack.c.h.b16 %v644
    %v1001 = vunpack.c.l.b16 %v645
    %v1002 = vunpack.c.h.b16 %v645
    %v1003 = vunpack.c.l.b16 %v646
    %v1004 = vunpack.c.h.b16 %v646
    %v1005 = vunpack.c.l.b16 %v647
    %v1006 = vunpack.c.h.b16 %v647
    %v1007 = vunpack.c.l.b16 %v648
    %v1008 = vunpack.c.h.b16 %v648
    %v1009 = vunpack.c.l.b16 %v649
    %v1010 = vunpack.c.h.b16 %v649
    %v1011 = vunpack.c.l.b16 %v650
    %v1012 = vunpack.c.h.b16 %v650
    %v1013 = vunpack.c.l.b16 %v651
    %v1014 = vunpack.c.h.b16 %v651
    %v1015 = vunpack.c.l.b16 %v652
    %v1016 = vunpack.c.h.b16 %v652
    %v1017 = vunpack.c.l.b16 %v653
    %v1018 = vunpack.c.h.b16 %v653
    %v1019 = vunpack.c.l.b16 %v654
    %v1020 = vunpack.c.h.b16 %v654
    %v1021 = vunpack.c.l.b16 %v655
    %v1022 = vunpack.c.h.b16 %v655
    %v1023 = vunpack.c.l.b16 %v656
    %v1024 = vunpack.c.h.b16 %v656
    %v1025 = vunpack.c.l.b16 %v657
    %v1026 = vunpack.c.h.b16 %v657
    %v1027 = vunpack.c.l.b16 %v658
    %v1028 = vunpack.c.h.b16 %v658
    %v1029 = vunpack.c.l.b16 %v659
    %v1030 = vunpack.c.h.b16 %v659
    %v1031 = vunpack.c.l.b16 %v660
    %v1032 = vunpack.c.h.b16 %v660
    %v1033 = vunpack.c.l.b16 %v661
    %v1034 = vunpack.c.h.b16 %v661
    %v1035 = vunpack.c.l.b16 %v662
    %v1036 = vunpack.c.h.b16 %v662
    %v1037 = vunpack.c.l.b16 %v663
    %v1038 = vunpack.c.h.b16 %v663
    %v1039 = vunpack.c.l.b16 %v664
    %v1040 = vunpack.c.h.b16 %v664
    %v1041 = vunpack.c.l.b16 %v665
    %v1042 = vunpack.c.h.b16 %v665
    %v1043 = vunpack.c.l.b16 %v666
    %v1044 = vunpack.c.h.b16 %v666
    %v1045 = vunpack.c.l.b16 %v667
    %v1046 = vunpack.c.h.b16 %v667
    %v1047 = vunpack.c.l.b16 %v668
    %v1048 = vunpack.c.h.b16 %v668
    %v1049 = vunpack.c.l.b16 %v669
    %v1050 = vunpack.c.h.b16 %v669
    %v1051 = vunpack.c.l.b16 %v670
    %v1052 = vunpack.c.h.b16 %v670
    %v1053 = vunpack.c.l.b16 %v671
    %v1054 = vunpack.c.h.b16 %v671
    %v1055 = vunpack.c.l.b16 %v672
    %v1056 = vunpack.c.h.b16 %v672
    %v1057 = vunpack.c.l.b16 %v673
    %v1058 = vunpack.c.h.b16 %v673
    %v1059 = vunpack.c.l.b16 %v674
    %v1060 = vunpack.c.h.b16 %v674
    %v1061 = vunpack.c.l.b16 %v675
    %v1062 = vunpack.c.h.b16 %v675
    %v1063 = vunpack.c.l.b16 %v676
    %v1064 = vunpack.c.h.b16 %v676
    %v1065 = vunpack.c.l.b16 %v677
    %v1066 = vunpack.c.h.b16 %v677
    %v1067 = vunpack.c.l.b16 %v678
    %v1068 = vunpack.c.h.b16 %v678
    %v1069 = vunpack.c.l.b16 %v679
    %v1070 = vunpack.c.h.b16 %v679
    %v1071 = vunpack.c.l.b16 %v680
    %v1072 = vunpack.c.h.b16 %v680
    %v1073 = vunpack.c.l.b16 %v681
    %v1074 = vunpack.c.h.b16 %v681
    %v1075 = vunpack.c.l.b16 %v682
    %v1076 = vunpack.c.h.b16 %v682
    %v1077 = vunpack.c.l.b16 %v683
    %v1078 = vunpack.c.h.b16 %v683
    %v1079 = vunpack.c.l.b16 %v684
    %v1080 = vunpack.c.h.b16 %v684
    %v1081 = vunpack.c.l.b16 %v685
    %v1082 = vunpack.c.h.b16 %v685
    %v1083 = vunpack.c.l.b16 %v686
    %v1084 = vunpack.c.h.b16 %v686
    %v1085 = vunpack.c.l.b16 %v687
    %v1086 = vunpack.c.h.b16 %v687
    %v1087 = vunpack.c.l.b16 %v688
    %v1088 = vunpack.c.h.b16 %v688
    %v1089 = vunpack.c.l.b16 %v689
    %v1090 = vunpack.c.h.b16 %v689
    %v1091 = vunpack.c.l.b16 %v690
    %v1092 = vunpack.c.h.b16 %v690
    %v1093 = vunpack.c.l.b16 %v691
    %v1094 = vunpack.c.h.b16 %v691
    %v1095 = vunpack.c.l.b16 %v692
    %v1096 = vunpack.c.h.b16 %v692
    %v1097 = vunpack.c.l.b16 %v693
    %v1098 = vunpack.c.h.b16 %v693
    %v1099 = vunpack.c.l.b16 %v694
    %v1100 = vunpack.c.h.b16 %v694
    %v1101 = vunpack.c.l.b16 %v695
    %v1102 = vunpack.c.h.b16 %v695
    %v1103 = vunpack.c.l.b16 %v696
    %v1104 = vunpack.c.h.b16 %v696
    %v1105 = vunpack.c.l.b16 %v697
    %v1106 = vunpack.c.h.b16 %v697
    %v1107 = vunpack.c.l.b16 %v698
    %v1108 = vunpack.c.h.b16 %v698
    %v1109 = vunpack.c.l.b16 %v699
    %v1110 = vunpack.c.h.b16 %v699
    %v1111 = vunpack.c.l.b16 %v700
    %v1112 = vunpack.c.h.b16 %v700
    %v1113 = vunpack.c.l.b16 %v701
    %v1114 = vunpack.c.h.b16 %v701
    %v1115 = vunpack.c.l.b16 %v702
    %v1116 = vunpack.c.h.b16 %v702
    %v1117 = vunpack.c.l.b16 %v703
    %v1118 = vunpack.c.h.b16 %v703
    %v1119 = vunpack.c.l.b16 %v704
    %v1120 = vunpack.c.h.b16 %v704
    %v1121 = vunpack.c.l.b16 %v705
    %v1122 = vunpack.c.h.b16 %v705
    %v1123 = vunpack.c.l.b16 %v706
    %v1124 = vunpack.c.h.b16 %v706
    %v1125 = vunpack.c.l.b16 %v707
    %v1126 = vunpack.c.h.b16 %v707
    %v1127 = vunpack.c.l.b16 %v708
    %v1128 = vunpack.c.h.b16 %v708
    %v1129 = vunpack.c.l.b16 %v709
    %v1130 = vunpack.c.h.b16 %v709
    %v1131 = vunpack.c.l.b16 %v710
    %v1132 = vunpack.c.h.b16 %v710
    %v1133 = vunpack.c.l.b16 %v711
    %v1134 = vunpack.c.h.b16 %v711
    %v1135 = vunpack.c.l.b16 %v712
    %v1136 = vunpack.c.h.b16 %v712
    %v1137 = vunpack.c.l.b16 %v713
    %v1138 = vunpack.c.h.b16 %v713
    %v1139 = vunpack.c.l.b16 %v714
    %v1140 = vunpack.c.h.b16 %v714
    %v1141 = vunpack.c.l.b16 %v715
    %v1142 = vunpack.c.h.b16 %v715
    %v1143 = vunpack.c.l.b16 %v716
    %v1144 = vunpack.c.h.b16 %v716
    %v1145 = vunpack.c.l.b16 %v717
    %v1146 = vunpack.c.h.b16 %v717
    %v1147 = vunpack.c.l.b16 %v718
    %v1148 = vunpack.c.h.b16 %v718
    %v1149 = vunpack.c.l.b16 %v719
    %v1150 = vunpack.c.h.b16 %v719
    %v1151 = vunpack.c.l.b16 %v720
    %v1152 = vunpack.c.h.b16 %v720
    %v1153 = vunpack.c.l.b16 %v721
    %v1154 = vunpack.c.h.b16 %v721
    %v1155 = vunpack.c.l.b16 %v722
    %v1156 = vunpack.c.h.b16 %v722
    %v1157 = vunpack.c.l.b16 %v723
    %v1158 = vunpack.c.h.b16 %v723
    %v1159 = vunpack.c.l.b16 %v724
    %v1160 = vunpack.c.h.b16 %v724
    %v1161 = vunpack.c.l.b16 %v725
    %v1162 = vunpack.c.h.b16 %v725
    %v1163 = vunpack.c.l.b16 %v726
    %v1164 = vunpack.c.h.b16 %v726
    %v1165 = vunpack.c.l.b16 %v727
    %v1166 = vunpack.c.h.b16 %v727
    %v1167 = vunpack.c.l.b16 %v728
    %v1168 = vunpack.c.h.b16 %v728
    %v1169 = vunpack.c.l.b16 %v729
    %v1170 = vunpack.c.h.b16 %v729
    %v1171 = vpack.c.b16 %v885, %v883
    %v1172 = vpack.c.b16 %v886, %v884
    %v1173 = vpack.c.b16 %v889, %v887
    %v1174 = vpack.c.b16 %v890, %v888
    %v1175 = vpack.c.b16 %v893, %v891
    %v1176 = vpack.c.b16 %v894, %v892
    %v1177 = vpack.c.b16 %v897, %v895
    %v1178 = vpack.c.b16 %v898, %v896
    %v1179 = vpack.c.b16 %v901, %v899
    %v1180 = vpack.c.b16 %v902, %v900
    %v1181 = vpack.c.b16 %v905, %v903
    %v1182 = vpack.c.b16 %v906, %v904
    %v1183 = vpack.c.b16 %v909, %v907
    %v1184 = vpack.c.b16 %v910, %v908
    %v1185 = vpack.c.b16 %v913, %v911
    %v1186 = vpack.c.b16 %v914, %v912
    %v1187 = vpack.c.b16 %v917, %v915
    %v1188 = vpack.c.b16 %v918, %v916
    %v1189 = vpack.c.b16 %v921, %v919
    %v1190 = vpack.c.b16 %v922, %v920
    %v1191 = vpack.c.b16 %v925, %v923
    %v1192 = vpack.c.b16 %v926, %v924
    %v1193 = vpack.c.b16 %v929, %v927
    %v1194 = vpack.c.b16 %v930, %v928
    %v1195 = vpack.c.b16 %v933, %v931
    %v1196 = vpack.c.b16 %v934, %v932
    %v1197 = vpack.c.b16 %v937, %v935
    %v1198 = vpack.c.b16 %v938, %v936
    %v1199 = vpack.c.b16 %v941, %v939
    %v1200 = vpack.c.b16 %v942, %v940
    %v1201 = vpack.c.b16 %v945, %v943
    %v1202 = vpack.c.b16 %v946, %v944
    %v1203 = vpack.c.b16 %v949, %v947
    %v1204 = vpack.c.b16 %v950, %v948
    %v1205 = vpack.c.b16 %v953, %v951
    %v1206 = vpack.c.b16 %v954, %v952
    %v1207 = vpack.c.b16 %v957, %v955
    %v1208 = vpack.c.b16 %v958, %v956
    %v1209 = vpack.c.b16 %v961, %v959
    %v1210 = vpack.c.b16 %v962, %v960
    %v1211 = vpack.c.b16 %v965, %v963
    %v1212 = vpack.c.b16 %v966, %v964
    %v1213 = vpack.c.b16 %v969, %v967
    %v1214 = vpack.c.b16 %v970, %v968
    %v1215 = vpack.c.b16 %v973, %v971
    %v1216 = vpack.c.b16 %v974, %v972
    %v1217 = vpack.c.b16 %v977, %v975
    %v1218 = vpack.c.b16 %v978, %v976
    %v1219 = vpack.c.b16 %v981, %v979
    %v1220 = vpack.c.b16 %v982, %v980
    %v1221 = vpack.c.b16 %v985, %v983
    %v1222 = vpack.c.b16 %v986, %v984
    %v1223 = vpack.c.b16 %v989, %v987
    %v1224 = vpack.c.b16 %v990, %v988
    %v1225 = vpack.c.b16 %v993, %v991
    %v1226 = vpack.c.b16 %v994, %v992
    %v1227 = vpack.c.b16 %v997, %v995
    %v1228 = vpack.c.b16 %v998, %v996
    %v1229 = vpack.c.b16 %v1001, %v999
    %v1230 = vpack.c.b16 %v1002, %v1000
    %v1231 = vpack.c.b16 %v1005, %v1003
    %v1232 = vpack.c.b16 %v1006, %v1004
    %v1233 = vpack.c.b16 %v1009, %v1007
    %v1234 = vpack.c.b16 %v1010, %v1008
    %v1235 = vpack.c.b16 %v1013, %v1011
    %v1236 = vpack.c.b16 %v1014, %v1012
    %v1237 = vpack.c.b16 %v1017, %v1015
    %v1238 = vpack.c.b16 %v1018, %v1016
    %v1239 = vpack.c.b16 %v1021, %v1019
    %v1240 = vpack.c.b16 %v1022, %v1020
    %v1241 = vpack.c.b16 %v1025, %v1023
    %v1242 = vpack.c.b16 %v1026, %v1024
    %v1243 = vpack.c.b16 %v1029, %v1027
    %v1244 = vpack.c.b16 %v1030, %v1028
    %v1245 = vpack.c.b16 %v1033, %v1031
    %v1246 = vpack.c.b16 %v1034, %v1032
    %v1247 = vpack.c.b16 %v1037, %v1035
    %v1248 = vpack.c.b16 %v1038, %v1036
    %v1249 = vpack.c.b16 %v1041, %v1039
    %v1250 = vpack.c.b16 %v1042, %v1040
    %v1251 = vpack.c.b16 %v1045, %v1043
    %v1252 = vpack.c.b16 %v1046, %v1044
    %v1253 = vpack.c.b16 %v1049, %v1047
    %v1254 = vpack.c.b16 %v1050, %v1048
    %v1255 = vpack.c.b16 %v1053, %v1051
    %v1256 = vpack.c.b16 %v1054, %v1052
    %v1257 = vpack.c.b16 %v1057, %v1055
    %v1258 = vpack.c.b16 %v1058, %v1056
    %v1259 = vpack.c.b16 %v1061, %v1059
    %v1260 = vpack.c.b16 %v1062, %v1060
    %v1261 = vpack.c.b16 %v1065, %v1063
    %v1262 = vpack.c.b16 %v1066, %v1064
    %v1263 = vpack.c.b16 %v1069, %v1067
    %v1264 = vpack.c.b16 %v1070, %v1068
    %v1265 = vpack.c.b16 %v1073, %v1071
    %v1266 = vpack.c.b16 %v1074, %v1072
    %v1267 = vpack.c.b16 %v1077, %v1075
    %v1268 = vpack.c.b16 %v1078, %v1076
    %v1269 = vpack.c.b16 %v1081, %v1079
    %v1270 = vpack.c.b16 %v1082, %v1080
    %v1271 = vpack.c.b16 %v1085, %v1083
    %v1272 = vpack.c.b16 %v1086, %v1084
    %v1273 = vpack.c.b16 %v1089, %v1087
    %v1274 = vpack.c.b16 %v1090, %v1088
    %v1275 = vpack.c.b16 %v1093, %v1091
    %v1276 = vpack.c.b16 %v1094, %v1092
    %v1277 = vpack.c.b16 %v1097, %v1095
    %v1278 = vpack.c.b16 %v1098, %v1096
    %v1279 = vpack.c.b16 %v1101, %v1099
    %v1280 = vpack.c.b16 %v1102, %v1100
    %v1281 = vpack.c.b16 %v1105, %v1103
    %v1282 = vpack.c.b16 %v1106, %v1104
    %v1283 = vpack.c.b16 %v1109, %v1107
    %v1284 = vpack.c.b16 %v1110, %v1108
    %v1285 = vpack.c.b16 %v1113, %v1111
    %v1286 = vpack.c.b16 %v1114, %v1112
    %v1287 = vpack.c.b16 %v1117, %v1115
    %v1288 = vpack.c.b16 %v1118, %v1116
    %v1289 = vpack.c.b16 %v1121, %v1119
    %v1290 = vpack.c.b16 %v1122, %v1120
    %v1291 = vpack.c.b16 %v1125, %v1123
    %v1292 = vpack.c.b16 %v1126, %v1124
    %v1293 = vpack.c.b16 %v1129, %v1127
    %v1294 = vpack.c.b16 %v1130, %v1128
    %v1295 = vpack.c.b16 %v1133, %v1131
    %v1296 = vpack.c.b16 %v1134, %v1132
    %v1297 = vpack.c.b16 %v1137, %v1135
    %v1298 = vpack.c.b16 %v1138, %v1136
    %v1299 = vpack.c.b16 %v1141, %v1139
    %v1300 = vpack.c.b16 %v1142, %v1140
    %v1301 = vpack.c.b16 %v1145, %v1143
    %v1302 = vpack.c.b16 %v1146, %v1144
    %v1303 = vpack.c.b16 %v1149, %v1147
    %v1304 = vpack.c.b16 %v1150, %v1148
    %v1305 = vpack.c.b16 %v1153, %v1151
    %v1306 = vpack.c.b16 %v1154, %v1152
    %v1307 = vpack.c.b16 %v1157, %v1155
    %v1308 = vpack.c.b16 %v1158, %v1156
    %v1309 = vpack.c.b16 %v1161, %v1159
    %v1310 = vpack.c.b16 %v1162, %v1160
    %v1311 = vpack.c.b16 %v1165, %v1163
    %v1312 = vpack.c.b16 %v1166, %v1164
    %v1313 = vpack.c.b16 %v1169, %v1167
    %v1314 = vpack.c.b16 %v1170, %v1168
    %1459 = vmatprep.subr.bf16.mxu0 %v1172
    %1460 = vmatpush1.bf16.msra.mxu0 %v1171
    %1461 = vmatprep.subr.bf16.mxu0 %v1174
    %1462 = vmatpush1.bf16.msra.mxu0 %v1173
    %1463 = vmatprep.subr.bf16.mxu0 %v1176
    %1464 = vmatpush1.bf16.msra.mxu0 %v1175
    %1465 = vmatprep.subr.bf16.mxu0 %v1178
    %1466 = vmatpush1.bf16.msra.mxu0 %v1177
    %1467 = vmatprep.subr.bf16.mxu0 %v1180
    %1468 = vmatpush1.bf16.msra.mxu0 %v1179
    %1469 = vmatprep.subr.bf16.mxu0 %v1182
    %1470 = vmatpush1.bf16.msra.mxu0 %v1181
    %1471 = vmatprep.subr.bf16.mxu0 %v1184
    %1472 = vmatpush1.bf16.msra.mxu0 %v1183
    %1473 = vmatprep.subr.bf16.mxu0 %v1186
    %1474 = vmatpush1.bf16.msra.mxu0 %v1185
    %1475 = vmatprep.subr.bf16.mxu0 %v1188
    %1476 = vmatpush1.bf16.msra.mxu0 %v1187
    %1477 = vmatprep.subr.bf16.mxu0 %v1190
    %1478 = vmatpush1.bf16.msra.mxu0 %v1189
    %1479 = vmatprep.subr.bf16.mxu0 %v1192
    %1480 = vmatpush1.bf16.msra.mxu0 %v1191
    %1481 = vmatprep.subr.bf16.mxu0 %v1194
    %1482 = vmatpush1.bf16.msra.mxu0 %v1193
    %1483 = vmatprep.subr.bf16.mxu0 %v1196
    %1484 = vmatpush1.bf16.msra.mxu0 %v1195
    %1485 = vmatprep.subr.bf16.mxu0 %v1198
    %1486 = vmatpush1.bf16.msra.mxu0 %v1197
    %1487 = vmatprep.subr.bf16.mxu0 %v1200
    %1488 = vmatpush1.bf16.msra.mxu0 %v1199
    %1489 = vmatprep.subr.bf16.mxu0 %v1202
    %1490 = vmatpush1.bf16.msra.mxu0 %v1201
    %1491 = vmatprep.mubr.bf16.mxu0 %v731
    %1492 = vmatmul.mubr.bf16.gmra.mrb[0].mxu0 %v730
    %v1493 = vpop.f32.mrb[0].mxu0
    %v1494 = vadd.f32 0.0, %v1493
    %v1495 = vpop.f32.mrb[0].mxu0
    %v1496 = vadd.f32 0.0, %v1495
    %v1497 = vpop.f32.mrb[0].mxu0
    %v1498 = vadd.f32 0.0, %v1497
    %v1499 = vpop.f32.mrb[0].mxu0
    %v1500 = vadd.f32 0.0, %v1499
    %1501 = vdwg.mxu0
    %1502 = vmatprep.subr.bf16.mxu0 %v1204
    %1503 = vmatpush1.bf16.msra.mxu0 %v1203
    %1504 = vmatprep.subr.bf16.mxu0 %v1206
    %1505 = vmatpush1.bf16.msra.mxu0 %v1205
    %1506 = vmatprep.subr.bf16.mxu0 %v1208
    %1507 = vmatpush1.bf16.msra.mxu0 %v1207
    %1508 = vmatprep.subr.bf16.mxu0 %v1210
    %1509 = vmatpush1.bf16.msra.mxu0 %v1209
    %1510 = vmatprep.subr.bf16.mxu0 %v1212
    %1511 = vmatpush1.bf16.msra.mxu0 %v1211
    %1512 = vmatprep.subr.bf16.mxu0 %v1214
    %1513 = vmatpush1.bf16.msra.mxu0 %v1213
    %1514 = vmatprep.subr.bf16.mxu0 %v1216
    %1515 = vmatpush1.bf16.msra.mxu0 %v1215
    %1516 = vmatprep.subr.bf16.mxu0 %v1218
    %1517 = vmatpush1.bf16.msra.mxu0 %v1217
    %1518 = vmatprep.subr.bf16.mxu0 %v1220
    %1519 = vmatpush1.bf16.msra.mxu0 %v1219
    %1520 = vmatprep.subr.bf16.mxu0 %v1222
    %1521 = vmatpush1.bf16.msra.mxu0 %v1221
    %1522 = vmatprep.subr.bf16.mxu0 %v1224
    %1523 = vmatpush1.bf16.msra.mxu0 %v1223
    %1524 = vmatprep.subr.bf16.mxu0 %v1226
    %1525 = vmatpush1.bf16.msra.mxu0 %v1225
    %1526 = vmatprep.subr.bf16.mxu0 %v1228
    %1527 = vmatpush1.bf16.msra.mxu0 %v1227
    %1528 = vmatprep.subr.bf16.mxu0 %v1230
    %1529 = vmatpush1.bf16.msra.mxu0 %v1229
    %1530 = vmatprep.subr.bf16.mxu0 %v1232
    %1531 = vmatpush1.bf16.msra.mxu0 %v1231
    %1532 = vmatprep.subr.bf16.mxu0 %v1234
    %1533 = vmatpush1.bf16.msra.mxu0 %v1233
    %1534 = vmatprep.mubr.bf16.mxu0 %v733
    %1535 = vmatmul.mubr.bf16.gmra.mrb[0].mxu0 %v732
    %v1536 = vpop.f32.mrb[0].mxu0
    %v1537 = vadd.f32 %v1494, %v1536
    %v1538 = vpop.f32.mrb[0].mxu0
    %v1539 = vadd.f32 %v1496, %v1538
    %v1540 = vpop.f32.mrb[0].mxu0
    %v1541 = vadd.f32 %v1498, %v1540
    %v1542 = vpop.f32.mrb[0].mxu0
    %v1543 = vadd.f32 %v1500, %v1542
    %1544 = vdwg.mxu0
    %1545 = vmatprep.subr.bf16.mxu0 %v1236
    %1546 = vmatpush1.bf16.msra.mxu0 %v1235
    %1547 = vmatprep.subr.bf16.mxu0 %v1238
    %1548 = vmatpush1.bf16.msra.mxu0 %v1237
    %1549 = vmatprep.subr.bf16.mxu0 %v1240
    %1550 = vmatpush1.bf16.msra.mxu0 %v1239
    %1551 = vmatprep.subr.bf16.mxu0 %v1242
    %1552 = vmatpush1.bf16.msra.mxu0 %v1241
    %1553 = vmatprep.subr.bf16.mxu0 %v1244
    %1554 = vmatpush1.bf16.msra.mxu0 %v1243
    %1555 = vmatprep.subr.bf16.mxu0 %v1246
    %1556 = vmatpush1.bf16.msra.mxu0 %v1245
    %1557 = vmatprep.subr.bf16.mxu0 %v1248
    %1558 = vmatpush1.bf16.msra.mxu0 %v1247
    %1559 = vmatprep.subr.bf16.mxu0 %v1250
    %1560 = vmatpush1.bf16.msra.mxu0 %v1249
    %1561 = vmatprep.subr.bf16.mxu0 %v1252
    %1562 = vmatpush1.bf16.msra.mxu0 %v1251
    %1563 = vmatprep.subr.bf16.mxu0 %v1254
    %1564 = vmatpush1.bf16.msra.mxu0 %v1253
    %1565 = vmatprep.subr.bf16.mxu0 %v1256
    %1566 = vmatpush1.bf16.msra.mxu0 %v1255
    %1567 = vmatprep.subr.bf16.mxu0 %v1258
    %1568 = vmatpush1.bf16.msra.mxu0 %v1257
    %1569 = vmatprep.subr.bf16.mxu0 %v1260
    %1570 = vmatpush1.bf16.msra.mxu0 %v1259
    %1571 = vmatprep.subr.bf16.mxu0 %v1262
    %1572 = vmatpush1.bf16.msra.mxu0 %v1261
    %1573 = vmatprep.subr.bf16.mxu0 %v1264
    %1574 = vmatpush1.bf16.msra.mxu0 %v1263
    %1575 = vmatprep.subr.bf16.mxu0 %v1266
    %1576 = vmatpush1.bf16.msra.mxu0 %v1265
    %1577 = vmatprep.mubr.bf16.mxu0 %v735
    %1578 = vmatmul.mubr.bf16.gmra.mrb[0].mxu0 %v734
    %v1579 = vpop.f32.mrb[0].mxu0
    %v1580 = vadd.f32 %v1537, %v1579
    %v1581 = vpop.f32.mrb[0].mxu0
    %v1582 = vadd.f32 %v1539, %v1581
    %v1583 = vpop.f32.mrb[0].mxu0
    %v1584 = vadd.f32 %v1541, %v1583
    %v1585 = vpop.f32.mrb[0].mxu0
    %v1586 = vadd.f32 %v1543, %v1585
    %1587 = vdwg.mxu0
    %1588 = vmatprep.subr.bf16.mxu0 %v1268
    %1589 = vmatpush1.bf16.msra.mxu0 %v1267
    %1590 = vmatprep.subr.bf16.mxu0 %v1270
    %1591 = vmatpush1.bf16.msra.mxu0 %v1269
    %1592 = vmatprep.subr.bf16.mxu0 %v1272
    %1593 = vmatpush1.bf16.msra.mxu0 %v1271
    %1594 = vmatprep.subr.bf16.mxu0 %v1274
    %1595 = vmatpush1.bf16.msra.mxu0 %v1273
    %1596 = vmatprep.subr.bf16.mxu0 %v1276
    %1597 = vmatpush1.bf16.msra.mxu0 %v1275
    %1598 = vmatprep.subr.bf16.mxu0 %v1278
    %1599 = vmatpush1.bf16.msra.mxu0 %v1277
    %1600 = vmatprep.subr.bf16.mxu0 %v1280
    %1601 = vmatpush1.bf16.msra.mxu0 %v1279
    %1602 = vmatprep.subr.bf16.mxu0 %v1282
    %1603 = vmatpush1.bf16.msra.mxu0 %v1281
    %1604 = vmatprep.subr.bf16.mxu0 %v1284
    %1605 = vmatpush1.bf16.msra.mxu0 %v1283
    %1606 = vmatprep.subr.bf16.mxu0 %v1286
    %1607 = vmatpush1.bf16.msra.mxu0 %v1285
    %1608 = vmatprep.subr.bf16.mxu0 %v1288
    %1609 = vmatpush1.bf16.msra.mxu0 %v1287
    %1610 = vmatprep.subr.bf16.mxu0 %v1290
    %1611 = vmatpush1.bf16.msra.mxu0 %v1289
    %1612 = vmatprep.subr.bf16.mxu0 %v1292
    %1613 = vmatpush1.bf16.msra.mxu0 %v1291
    %1614 = vmatprep.subr.bf16.mxu0 %v1294
    %1615 = vmatpush1.bf16.msra.mxu0 %v1293
    %1616 = vmatprep.subr.bf16.mxu0 %v1296
    %1617 = vmatpush1.bf16.msra.mxu0 %v1295
    %1618 = vmatprep.subr.bf16.mxu0 %v1298
    %1619 = vmatpush1.bf16.msra.mxu0 %v1297
    %1620 = vmatprep.mubr.bf16.mxu0 %v737
    %1621 = vmatmul.mubr.bf16.gmra.mrb[0].mxu0 %v736
    %v1622 = vpop.f32.mrb[0].mxu0
    %v1623 = vadd.f32 %v1580, %v1622
    %v1624 = vpop.f32.mrb[0].mxu0
    %v1625 = vadd.f32 %v1582, %v1624
    %v1626 = vpop.f32.mrb[0].mxu0
    %v1627 = vadd.f32 %v1584, %v1626
    %v1628 = vpop.f32.mrb[0].mxu0
    %v1629 = vadd.f32 %v1586, %v1628
    %1630 = vdwg.mxu0
    %1631 = vmatprep.subr.bf16.mxu0 %v1300
    %1632 = vmatpush1.bf16.msra.mxu0 %v1299
    %1633 = vmatprep.subr.bf16.mxu0 %v1302
    %1634 = vmatpush1.bf16.msra.mxu0 %v1301
    %1635 = vmatprep.subr.bf16.mxu0 %v1304
    %1636 = vmatpush1.bf16.msra.mxu0 %v1303
    %1637 = vmatprep.subr.bf16.mxu0 %v1306
    %1638 = vmatpush1.bf16.msra.mxu0 %v1305
    %1639 = vmatprep.subr.bf16.mxu0 %v1308
    %1640 = vmatpush1.bf16.msra.mxu0 %v1307
    %1641 = vmatprep.subr.bf16.mxu0 %v1310
    %1642 = vmatpush1.bf16.msra.mxu0 %v1309
    %1643 = vmatprep.subr.bf16.mxu0 %v1312
    %1644 = vmatpush1.bf16.msra.mxu0 %v1311
    %1645 = vmatprep.subr.bf16.mxu0 %v1314
    %1646 = vmatpush1.bf16.msra.mxu0 %v1313
    %1647 = vmatprep.subr.bf16.mxu0 0
    %1648 = vmatpush1.bf16.msra.mxu0 0
    %1649 = vmatprep.subr.bf16.mxu0 0
    %1650 = vmatpush1.bf16.msra.mxu0 0
    %1651 = vmatprep.subr.bf16.mxu0 0
    %1652 = vmatpush1.bf16.msra.mxu0 0
    %1653 = vmatprep.subr.bf16.mxu0 0
    %1654 = vmatpush1.bf16.msra.mxu0 0
    %1655 = vmatprep.subr.bf16.mxu0 0
    %1656 = vmatpush1.bf16.msra.mxu0 0
    %1657 = vmatprep.subr.bf16.mxu0 0
    %1658 = vmatpush1.bf16.msra.mxu0 0
    %1659 = vmatprep.subr.bf16.mxu0 0
    %1660 = vmatpush1.bf16.msra.mxu0 0
    %1661 = vmatprep.subr.bf16.mxu0 0
    %1662 = vmatpush1.bf16.msra.mxu0 0
    %1663 = vmatprep.mubr.bf16.mxu0 0
    %1664 = vmatmul.mubr.bf16.gmra.mrb[0].mxu0 %v738
    %v1665 = vpop.f32.mrb[0].mxu0
    %v1666 = vadd.f32 %v1623, %v1665
    %v1667 = vpop.f32.mrb[0].mxu0
    %v1668 = vadd.f32 %v1625, %v1667
    %v1669 = vpop.f32.mrb[0].mxu0
    %v1670 = vadd.f32 %v1627, %v1669
    %v1671 = vpop.f32.mrb[0].mxu0
    %v1672 = vadd.f32 %v1629, %v1671
    %1673 = vdwg.mxu0
    %1674 = vst [vmem:[#allocation3] sm:$0xff] %v1666
    %1675 = vst [vmem:[#allocation3 + $0x8] sm:$0xff] %v1668
    %1676 = vst [vmem:[#allocation3 + $0x10] sm:$0xff] %v1670
    %1677 = vst [vmem:[#allocation3 + $0x18] sm:$0xff] %v1672
    %v1678 = vld [vmem:[#allocation3] sm:$0xff]
    %v1679 = vld [vmem:[#allocation3 + $0x8] sm:$0xff]
    %v1680 = vld [vmem:[#allocation3 + $0x10] sm:$0xff]
    %v1681 = vld [vmem:[#allocation3 + $0x18] sm:$0xff]
    %v1682 = vmul.f32 %v1678, %v1678
    %v1683 = vmul.f32 %v1679, %v1679
    %v1684 = vmul.f32 %v1680, %v1680
    %v1685 = vmul.f32 %v1681, %v1681
    %v1686 = vmul.f32 %v1678, %v1682
    %v1687 = vmul.f32 %v1679, %v1683
    %v1688 = vmul.f32 %v1680, %v1684
    %v1689 = vmul.f32 %v1681, %v1685
    %v1690 = vmul.f32 %v1686, 0.044715
    %v1691 = vmul.f32 %v1687, 0.044715
    %v1692 = vmul.f32 %v1688, 0.044715
    %v1693 = vmul.f32 %v1689, 0.044715
    %v1694 = vadd.f32 %v1678, %v1690
    %v1695 = vadd.f32 %v1679, %v1691
    %v1696 = vadd.f32 %v1680, %v1692
    %v1697 = vadd.f32 %v1681, %v1693
    %v1698 = vmul.f32 %v1694, 0.7978846
    %v1699 = vmul.f32 %v1695, 0.7978846
    %v1700 = vmul.f32 %v1696, 0.7978846
    %v1701 = vmul.f32 %v1697, 0.7978846
    %v1702 = vtanh.pop %v1698
    %v1703 = vtanh.pop %v1699
    %v1704 = vtanh.pop %v1700
    %v1705 = vtanh.pop %v1701
    %v1706 = vadd.f32 %v1702, 1.0
    %v1707 = vadd.f32 %v1703, 1.0
    %v1708 = vadd.f32 %v1704, 1.0
    %v1709 = vadd.f32 %v1705, 1.0
    %v1710 = vmul.f32 %v1706, 0.5
    %v1711 = vmul.f32 %v1707, 0.5
    %v1712 = vmul.f32 %v1708, 0.5
    %v1713 = vmul.f32 %v1709, 0.5
    %v1714 = vmul.f32 %v1678, %v1710
    %v1715 = vmul.f32 %v1679, %v1711
    %v1716 = vmul.f32 %v1680, %v1712
    %v1717 = vmul.f32 %v1681, %v1713
    %v1718 = vxor.u32 %v1714, 2147483648
    %v1719 = vxor.u32 %v1715, 2147483648
    %v1720 = vxor.u32 %v1716, 2147483648
    %v1721 = vxor.u32 %v1717, 2147483648
    %v1722 = vmul.f32 %v1718, 1.442695
    %v1723 = vpow.pop %v1722
    %v1724 = vmul.f32 %v1719, 1.442695
    %v1725 = vpow.pop %v1724
    %v1726 = vmul.f32 %v1720, 1.442695
    %v1727 = vpow.pop %v1726
    %v1728 = vmul.f32 %v1721, 1.442695
    %v1729 = vpow.pop %v1728
    %v1730 = vadd.f32 %v1723, 1.0
    %v1731 = vadd.f32 %v1725, 1.0
    %v1732 = vadd.f32 %v1727, 1.0
    %v1733 = vadd.f32 %v1729, 1.0
    %v1734 = vrcp.pop %v1730
    %v1735 = vmul.f32 1.0, %v1734
    %v1736 = vrcp.pop %v1731
    %v1737 = vmul.f32 1.0, %v1736
    %v1738 = vrcp.pop %v1732
    %v1739 = vmul.f32 1.0, %v1738
    %v1740 = vrcp.pop %v1733
    %v1741 = vmul.f32 1.0, %v1740
    %v1742 = vmul.f32 %v1714, %v1735
    %v1743 = vmul.f32 %v1715, %v1737
    %v1744 = vmul.f32 %v1716, %v1739
    %v1745 = vmul.f32 %v1717, %v1741
    %vm1746 = vcmp.ge.f32.partialorder %v1714, -2.2
    %vm1747 = vcmp.ge.f32.partialorder %v1715, -2.2
    %vm1748 = vcmp.ge.f32.partialorder %v1716, -2.2
    %vm1749 = vcmp.ge.f32.partialorder %v1717, -2.2
    %v1750 = vsel %vm1746, 1, 0
    %v1751 = vsel %vm1747, 1, 0
    %v1752 = vsel %vm1748, 1, 0
    %v1753 = vsel %vm1749, 1, 0
    %v1754 = vcvt.s32.f32 %v1750
    %v1755 = vcvt.s32.f32 %v1751
    %v1756 = vcvt.s32.f32 %v1752
    %v1757 = vcvt.s32.f32 %v1753
    %vm1758 = vcmp.ge.f32.partialorder %v1714, -1.8
    %vm1759 = vcmp.ge.f32.partialorder %v1715, -1.8
    %vm1760 = vcmp.ge.f32.partialorder %v1716, -1.8
    %vm1761 = vcmp.ge.f32.partialorder %v1717, -1.8
    %v1762 = vsel %vm1758, 1, 0
    %v1763 = vsel %vm1759, 1, 0
    %v1764 = vsel %vm1760, 1, 0
    %v1765 = vsel %vm1761, 1, 0
    %v1766 = vcvt.s32.f32 %v1762
    %v1767 = vcvt.s32.f32 %v1763
    %v1768 = vcvt.s32.f32 %v1764
    %v1769 = vcvt.s32.f32 %v1765
    %vm1770 = vcmp.ge.f32.partialorder %v1714, -1.4
    %vm1771 = vcmp.ge.f32.partialorder %v1715, -1.4
    %vm1772 = vcmp.ge.f32.partialorder %v1716, -1.4
    %vm1773 = vcmp.ge.f32.partialorder %v1717, -1.4
    %v1774 = vsel %vm1770, 1, 0
    %v1775 = vsel %vm1771, 1, 0
    %v1776 = vsel %vm1772, 1, 0
    %v1777 = vsel %vm1773, 1, 0
    %v1778 = vcvt.s32.f32 %v1774
    %v1779 = vcvt.s32.f32 %v1775
    %v1780 = vcvt.s32.f32 %v1776
    %v1781 = vcvt.s32.f32 %v1777
    %vm1782 = vcmp.ge.f32.partialorder %v1714, -1.0
    %vm1783 = vcmp.ge.f32.partialorder %v1715, -1.0
    %vm1784 = vcmp.ge.f32.partialorder %v1716, -1.0
    %vm1785 = vcmp.ge.f32.partialorder %v1717, -1.0
    %v1786 = vsel %vm1782, 1, 0
    %v1787 = vsel %vm1783, 1, 0
    %v1788 = vsel %vm1784, 1, 0
    %v1789 = vsel %vm1785, 1, 0
    %v1790 = vcvt.s32.f32 %v1786
    %v1791 = vcvt.s32.f32 %v1787
    %v1792 = vcvt.s32.f32 %v1788
    %v1793 = vcvt.s32.f32 %v1789
    %vm1794 = vcmp.ge.f32.partialorder %v1714, -0.6
    %vm1795 = vcmp.ge.f32.partialorder %v1715, -0.6
    %vm1796 = vcmp.ge.f32.partialorder %v1716, -0.6
    %vm1797 = vcmp.ge.f32.partialorder %v1717, -0.6
    %v1798 = vsel %vm1794, 1, 0
    %v1799 = vsel %vm1795, 1, 0
    %v1800 = vsel %vm1796, 1, 0
    %v1801 = vsel %vm1797, 1, 0
    %v1802 = vcvt.s32.f32 %v1798
    %v1803 = vcvt.s32.f32 %v1799
    %v1804 = vcvt.s32.f32 %v1800
    %v1805 = vcvt.s32.f32 %v1801
    %vm1806 = vcmp.ge.f32.partialorder %v1714, -0.2
    %vm1807 = vcmp.ge.f32.partialorder %v1715, -0.2
    %vm1808 = vcmp.ge.f32.partialorder %v1716, -0.2
    %vm1809 = vcmp.ge.f32.partialorder %v1717, -0.2
    %v1810 = vsel %vm1806, 1, 0
    %v1811 = vsel %vm1807, 1, 0
    %v1812 = vsel %vm1808, 1, 0
    %v1813 = vsel %vm1809, 1, 0
    %v1814 = vcvt.s32.f32 %v1810
    %v1815 = vcvt.s32.f32 %v1811
    %v1816 = vcvt.s32.f32 %v1812
    %v1817 = vcvt.s32.f32 %v1813
    %vm1818 = vcmp.ge.f32.partialorder %v1714, 0.2
    %vm1819 = vcmp.ge.f32.partialorder %v1715, 0.2
    %vm1820 = vcmp.ge.f32.partialorder %v1716, 0.2
    %vm1821 = vcmp.ge.f32.partialorder %v1717, 0.2
    %v1822 = vsel %vm1818, 1, 0
    %v1823 = vsel %vm1819, 1, 0
    %v1824 = vsel %vm1820, 1, 0
    %v1825 = vsel %vm1821, 1, 0
    %v1826 = vcvt.s32.f32 %v1822
    %v1827 = vcvt.s32.f32 %v1823
    %v1828 = vcvt.s32.f32 %v1824
    %v1829 = vcvt.s32.f32 %v1825
    %vm1830 = vcmp.ge.f32.partialorder %v1714, 0.6
    %vm1831 = vcmp.ge.f32.partialorder %v1715, 0.6
    %vm1832 = vcmp.ge.f32.partialorder %v1716, 0.6
    %vm1833 = vcmp.ge.f32.partialorder %v1717, 0.6
    %v1834 = vsel %vm1830, 1, 0
    %v1835 = vsel %vm1831, 1, 0
    %v1836 = vsel %vm1832, 1, 0
    %v1837 = vsel %vm1833, 1, 0
    %v1838 = vcvt.s32.f32 %v1834
    %v1839 = vcvt.s32.f32 %v1835
    %v1840 = vcvt.s32.f32 %v1836
    %v1841 = vcvt.s32.f32 %v1837
    %vm1842 = vcmp.ge.f32.partialorder %v1714, 1.0
    %vm1843 = vcmp.ge.f32.partialorder %v1715, 1.0
    %vm1844 = vcmp.ge.f32.partialorder %v1716, 1.0
    %vm1845 = vcmp.ge.f32.partialorder %v1717, 1.0
    %v1846 = vsel %vm1842, 1, 0
    %v1847 = vsel %vm1843, 1, 0
    %v1848 = vsel %vm1844, 1, 0
    %v1849 = vsel %vm1845, 1, 0
    %v1850 = vcvt.s32.f32 %v1846
    %v1851 = vcvt.s32.f32 %v1847
    %v1852 = vcvt.s32.f32 %v1848
    %v1853 = vcvt.s32.f32 %v1849
    %vm1854 = vcmp.ge.f32.partialorder %v1714, 1.4
    %vm1855 = vcmp.ge.f32.partialorder %v1715, 1.4
    %vm1856 = vcmp.ge.f32.partialorder %v1716, 1.4
    %vm1857 = vcmp.ge.f32.partialorder %v1717, 1.4
    %v1858 = vsel %vm1854, 1, 0
    %v1859 = vsel %vm1855, 1, 0
    %v1860 = vsel %vm1856, 1, 0
    %v1861 = vsel %vm1857, 1, 0
    %v1862 = vcvt.s32.f32 %v1858
    %v1863 = vcvt.s32.f32 %v1859
    %v1864 = vcvt.s32.f32 %v1860
    %v1865 = vcvt.s32.f32 %v1861
    %vm1866 = vcmp.ge.f32.partialorder %v1714, 1.8
    %vm1867 = vcmp.ge.f32.partialorder %v1715, 1.8
    %vm1868 = vcmp.ge.f32.partialorder %v1716, 1.8
    %vm1869 = vcmp.ge.f32.partialorder %v1717, 1.8
    %v1870 = vsel %vm1866, 1, 0
    %v1871 = vsel %vm1867, 1, 0
    %v1872 = vsel %vm1868, 1, 0
    %v1873 = vsel %vm1869, 1, 0
    %v1874 = vcvt.s32.f32 %v1870
    %v1875 = vcvt.s32.f32 %v1871
    %v1876 = vcvt.s32.f32 %v1872
    %v1877 = vcvt.s32.f32 %v1873
    %vm1878 = vcmp.ge.f32.partialorder %v1714, 2.2
    %vm1879 = vcmp.ge.f32.partialorder %v1715, 2.2
    %vm1880 = vcmp.ge.f32.partialorder %v1716, 2.2
    %vm1881 = vcmp.ge.f32.partialorder %v1717, 2.2
    %v1882 = vsel %vm1878, 1, 0
    %v1883 = vsel %vm1879, 1, 0
    %v1884 = vsel %vm1880, 1, 0
    %v1885 = vsel %vm1881, 1, 0
    %v1886 = vcvt.s32.f32 %v1882
    %v1887 = vcvt.s32.f32 %v1883
    %v1888 = vcvt.s32.f32 %v1884
    %v1889 = vcvt.s32.f32 %v1885
    %v1890 = vsub.f32 %v1754, %v1766
    %v1891 = vsub.f32 %v1755, %v1767
    %v1892 = vsub.f32 %v1756, %v1768
    %v1893 = vsub.f32 %v1757, %v1769
    %v1894 = vsub.f32 %v1766, %v1778
    %v1895 = vsub.f32 %v1767, %v1779
    %v1896 = vsub.f32 %v1768, %v1780
    %v1897 = vsub.f32 %v1769, %v1781
    %v1898 = vsub.f32 %v1778, %v1790
    %v1899 = vsub.f32 %v1779, %v1791
    %v1900 = vsub.f32 %v1780, %v1792
    %v1901 = vsub.f32 %v1781, %v1793
    %v1902 = vsub.f32 %v1790, %v1802
    %v1903 = vsub.f32 %v1791, %v1803
    %v1904 = vsub.f32 %v1792, %v1804
    %v1905 = vsub.f32 %v1793, %v1805
    %v1906 = vsub.f32 %v1802, %v1814
    %v1907 = vsub.f32 %v1803, %v1815
    %v1908 = vsub.f32 %v1804, %v1816
    %v1909 = vsub.f32 %v1805, %v1817
    %v1910 = vsub.f32 %v1814, %v1826
    %v1911 = vsub.f32 %v1815, %v1827
    %v1912 = vsub.f32 %v1816, %v1828
    %v1913 = vsub.f32 %v1817, %v1829
    %v1914 = vsub.f32 %v1826, %v1838
    %v1915 = vsub.f32 %v1827, %v1839
    %v1916 = vsub.f32 %v1828, %v1840
    %v1917 = vsub.f32 %v1829, %v1841
    %v1918 = vsub.f32 %v1838, %v1850
    %v1919 = vsub.f32 %v1839, %v1851
    %v1920 = vsub.f32 %v1840, %v1852
    %v1921 = vsub.f32 %v1841, %v1853
    %v1922 = vsub.f32 %v1850, %v1862
    %v1923 = vsub.f32 %v1851, %v1863
    %v1924 = vsub.f32 %v1852, %v1864
    %v1925 = vsub.f32 %v1853, %v1865
    %v1926 = vsub.f32 %v1862, %v1874
    %v1927 = vsub.f32 %v1863, %v1875
    %v1928 = vsub.f32 %v1864, %v1876
    %v1929 = vsub.f32 %v1865, %v1877
    %v1930 = vsub.f32 %v1874, %v1886
    %v1931 = vsub.f32 %v1875, %v1887
    %v1932 = vsub.f32 %v1876, %v1888
    %v1933 = vsub.f32 %v1877, %v1889
    %v1934 = vsub.f32 %v1714, -2.2
    %v1935 = vsub.f32 %v1715, -2.2
    %v1936 = vsub.f32 %v1716, -2.2
    %v1937 = vsub.f32 %v1717, -2.2
    %v1938 = vsub.f32 %v1714, -1.8
    %v1939 = vsub.f32 %v1715, -1.8
    %v1940 = vsub.f32 %v1716, -1.8
    %v1941 = vsub.f32 %v1717, -1.8
    %v1942 = vsub.f32 %v1714, -1.4
    %v1943 = vsub.f32 %v1715, -1.4
    %v1944 = vsub.f32 %v1716, -1.4
    %v1945 = vsub.f32 %v1717, -1.4
    %v1946 = vsub.f32 %v1714, -1.0
    %v1947 = vsub.f32 %v1715, -1.0
    %v1948 = vsub.f32 %v1716, -1.0
    %v1949 = vsub.f32 %v1717, -1.0
    %v1950 = vsub.f32 %v1714, -0.6
    %v1951 = vsub.f32 %v1715, -0.6
    %v1952 = vsub.f32 %v1716, -0.6
    %v1953 = vsub.f32 %v1717, -0.6
    %v1954 = vsub.f32 %v1714, -0.2
    %v1955 = vsub.f32 %v1715, -0.2
    %v1956 = vsub.f32 %v1716, -0.2
    %v1957 = vsub.f32 %v1717, -0.2
    %v1958 = vsub.f32 %v1714, 0.2
    %v1959 = vsub.f32 %v1715, 0.2
    %v1960 = vsub.f32 %v1716, 0.2
    %v1961 = vsub.f32 %v1717, 0.2
    %v1962 = vsub.f32 %v1714, 0.6
    %v1963 = vsub.f32 %v1715, 0.6
    %v1964 = vsub.f32 %v1716, 0.6
    %v1965 = vsub.f32 %v1717, 0.6
    %v1966 = vsub.f32 %v1714, 1.0
    %v1967 = vsub.f32 %v1715, 1.0
    %v1968 = vsub.f32 %v1716, 1.0
    %v1969 = vsub.f32 %v1717, 1.0
    %v1970 = vsub.f32 %v1714, 1.4
    %v1971 = vsub.f32 %v1715, 1.4
    %v1972 = vsub.f32 %v1716, 1.4
    %v1973 = vsub.f32 %v1717, 1.4
    %v1974 = vsub.f32 %v1714, 1.8
    %v1975 = vsub.f32 %v1715, 1.8
    %v1976 = vsub.f32 %v1716, 1.8
    %v1977 = vsub.f32 %v1717, 1.8
    %v1978 = vmul.f32 %v1934, 2.5
    %v1979 = vmul.f32 %v1935, 2.5
    %v1980 = vmul.f32 %v1936, 2.5
    %v1981 = vmul.f32 %v1937, 2.5
    %v1982 = vmul.f32 %v1938, 2.5
    %v1983 = vmul.f32 %v1939, 2.5
    %v1984 = vmul.f32 %v1940, 2.5
    %v1985 = vmul.f32 %v1941, 2.5
    %v1986 = vmul.f32 %v1942, 2.5
    %v1987 = vmul.f32 %v1943, 2.5
    %v1988 = vmul.f32 %v1944, 2.5
    %v1989 = vmul.f32 %v1945, 2.5
    %v1990 = vmul.f32 %v1946, 2.5
    %v1991 = vmul.f32 %v1947, 2.5
    %v1992 = vmul.f32 %v1948, 2.5
    %v1993 = vmul.f32 %v1949, 2.5
    %v1994 = vmul.f32 %v1950, 2.5
    %v1995 = vmul.f32 %v1951, 2.5
    %v1996 = vmul.f32 %v1952, 2.5
    %v1997 = vmul.f32 %v1953, 2.5
    %v1998 = vmul.f32 %v1954, 2.5
    %v1999 = vmul.f32 %v1955, 2.5
    %v2000 = vmul.f32 %v1956, 2.5
    %v2001 = vmul.f32 %v1957, 2.5
    %v2002 = vmul.f32 %v1958, 2.5
    %v2003 = vmul.f32 %v1959, 2.5
    %v2004 = vmul.f32 %v1960, 2.5
    %v2005 = vmul.f32 %v1961, 2.5
    %v2006 = vmul.f32 %v1962, 2.5
    %v2007 = vmul.f32 %v1963, 2.5
    %v2008 = vmul.f32 %v1964, 2.5
    %v2009 = vmul.f32 %v1965, 2.5
    %v2010 = vmul.f32 %v1966, 2.5
    %v2011 = vmul.f32 %v1967, 2.5
    %v2012 = vmul.f32 %v1968, 2.5
    %v2013 = vmul.f32 %v1969, 2.5
    %v2014 = vmul.f32 %v1970, 2.5
    %v2015 = vmul.f32 %v1971, 2.5
    %v2016 = vmul.f32 %v1972, 2.5
    %v2017 = vmul.f32 %v1973, 2.5
    %v2018 = vmul.f32 %v1974, 2.5
    %v2019 = vmul.f32 %v1975, 2.5
    %v2020 = vmul.f32 %v1976, 2.5
    %v2021 = vmul.f32 %v1977, 2.5
    %v2022 = vmul.f32 %v1978, %v1890
    %v2023 = vmul.f32 %v1979, %v1891
    %v2024 = vmul.f32 %v1980, %v1892
    %v2025 = vmul.f32 %v1981, %v1893
    %v2026 = vsub.f32 1.0, %v1982
    %v2027 = vsub.f32 1.0, %v1983
    %v2028 = vsub.f32 1.0, %v1984
    %v2029 = vsub.f32 1.0, %v1985
    %v2030 = vmul.f32 %v2026, %v1894
    %v2031 = vmul.f32 %v2027, %v1895
    %v2032 = vmul.f32 %v2028, %v1896
    %v2033 = vmul.f32 %v2029, %v1897
    %v2034 = vadd.f32 %v2022, %v2030
    %v2035 = vadd.f32 %v2023, %v2031
    %v2036 = vadd.f32 %v2024, %v2032
    %v2037 = vadd.f32 %v2025, %v2033
    %v2038 = vmul.f32 %v1982, %v1894
    %v2039 = vmul.f32 %v1983, %v1895
    %v2040 = vmul.f32 %v1984, %v1896
    %v2041 = vmul.f32 %v1985, %v1897
    %v2042 = vsub.f32 1.0, %v1986
    %v2043 = vsub.f32 1.0, %v1987
    %v2044 = vsub.f32 1.0, %v1988
    %v2045 = vsub.f32 1.0, %v1989
    %v2046 = vmul.f32 %v2042, %v1898
    %v2047 = vmul.f32 %v2043, %v1899
    %v2048 = vmul.f32 %v2044, %v1900
    %v2049 = vmul.f32 %v2045, %v1901
    %v2050 = vadd.f32 %v2038, %v2046
    %v2051 = vadd.f32 %v2039, %v2047
    %v2052 = vadd.f32 %v2040, %v2048
    %v2053 = vadd.f32 %v2041, %v2049
    %v2054 = vmul.f32 %v1986, %v1898
    %v2055 = vmul.f32 %v1987, %v1899
    %v2056 = vmul.f32 %v1988, %v1900
    %v2057 = vmul.f32 %v1989, %v1901
    %v2058 = vsub.f32 1.0, %v1990
    %v2059 = vsub.f32 1.0, %v1991
    %v2060 = vsub.f32 1.0, %v1992
    %v2061 = vsub.f32 1.0, %v1993
    %v2062 = vmul.f32 %v2058, %v1902
    %v2063 = vmul.f32 %v2059, %v1903
    %v2064 = vmul.f32 %v2060, %v1904
    %v2065 = vmul.f32 %v2061, %v1905
    %v2066 = vadd.f32 %v2054, %v2062
    %v2067 = vadd.f32 %v2055, %v2063
    %v2068 = vadd.f32 %v2056, %v2064
    %v2069 = vadd.f32 %v2057, %v2065
    %v2070 = vmul.f32 %v1990, %v1902
    %v2071 = vmul.f32 %v1991, %v1903
    %v2072 = vmul.f32 %v1992, %v1904
    %v2073 = vmul.f32 %v1993, %v1905
    %v2074 = vsub.f32 1.0, %v1994
    %v2075 = vsub.f32 1.0, %v1995
    %v2076 = vsub.f32 1.0, %v1996
    %v2077 = vsub.f32 1.0, %v1997
    %v2078 = vmul.f32 %v2074, %v1906
    %v2079 = vmul.f32 %v2075, %v1907
    %v2080 = vmul.f32 %v2076, %v1908
    %v2081 = vmul.f32 %v2077, %v1909
    %v2082 = vadd.f32 %v2070, %v2078
    %v2083 = vadd.f32 %v2071, %v2079
    %v2084 = vadd.f32 %v2072, %v2080
    %v2085 = vadd.f32 %v2073, %v2081
    %v2086 = vmul.f32 %v1994, %v1906
    %v2087 = vmul.f32 %v1995, %v1907
    %v2088 = vmul.f32 %v1996, %v1908
    %v2089 = vmul.f32 %v1997, %v1909
    %v2090 = vsub.f32 1.0, %v1998
    %v2091 = vsub.f32 1.0, %v1999
    %v2092 = vsub.f32 1.0, %v2000
    %v2093 = vsub.f32 1.0, %v2001
    %v2094 = vmul.f32 %v2090, %v1910
    %v2095 = vmul.f32 %v2091, %v1911
    %v2096 = vmul.f32 %v2092, %v1912
    %v2097 = vmul.f32 %v2093, %v1913
    %v2098 = vadd.f32 %v2086, %v2094
    %v2099 = vadd.f32 %v2087, %v2095
    %v2100 = vadd.f32 %v2088, %v2096
    %v2101 = vadd.f32 %v2089, %v2097
    %v2102 = vmul.f32 %v1998, %v1910
    %v2103 = vmul.f32 %v1999, %v1911
    %v2104 = vmul.f32 %v2000, %v1912
    %v2105 = vmul.f32 %v2001, %v1913
    %v2106 = vsub.f32 1.0, %v2002
    %v2107 = vsub.f32 1.0, %v2003
    %v2108 = vsub.f32 1.0, %v2004
    %v2109 = vsub.f32 1.0, %v2005
    %v2110 = vmul.f32 %v2106, %v1914
    %v2111 = vmul.f32 %v2107, %v1915
    %v2112 = vmul.f32 %v2108, %v1916
    %v2113 = vmul.f32 %v2109, %v1917
    %v2114 = vadd.f32 %v2102, %v2110
    %v2115 = vadd.f32 %v2103, %v2111
    %v2116 = vadd.f32 %v2104, %v2112
    %v2117 = vadd.f32 %v2105, %v2113
    %v2118 = vmul.f32 %v2002, %v1914
    %v2119 = vmul.f32 %v2003, %v1915
    %v2120 = vmul.f32 %v2004, %v1916
    %v2121 = vmul.f32 %v2005, %v1917
    %v2122 = vsub.f32 1.0, %v2006
    %v2123 = vsub.f32 1.0, %v2007
    %v2124 = vsub.f32 1.0, %v2008
    %v2125 = vsub.f32 1.0, %v2009
    %v2126 = vmul.f32 %v2122, %v1918
    %v2127 = vmul.f32 %v2123, %v1919
    %v2128 = vmul.f32 %v2124, %v1920
    %v2129 = vmul.f32 %v2125, %v1921
    %v2130 = vadd.f32 %v2118, %v2126
    %v2131 = vadd.f32 %v2119, %v2127
    %v2132 = vadd.f32 %v2120, %v2128
    %v2133 = vadd.f32 %v2121, %v2129
    %v2134 = vmul.f32 %v2006, %v1918
    %v2135 = vmul.f32 %v2007, %v1919
    %v2136 = vmul.f32 %v2008, %v1920
    %v2137 = vmul.f32 %v2009, %v1921
    %v2138 = vsub.f32 1.0, %v2010
    %v2139 = vsub.f32 1.0, %v2011
    %v2140 = vsub.f32 1.0, %v2012
    %v2141 = vsub.f32 1.0, %v2013
    %v2142 = vmul.f32 %v2138, %v1922
    %v2143 = vmul.f32 %v2139, %v1923
    %v2144 = vmul.f32 %v2140, %v1924
    %v2145 = vmul.f32 %v2141, %v1925
    %v2146 = vadd.f32 %v2134, %v2142
    %v2147 = vadd.f32 %v2135, %v2143
    %v2148 = vadd.f32 %v2136, %v2144
    %v2149 = vadd.f32 %v2137, %v2145
    %v2150 = vmul.f32 %v2010, %v1922
    %v2151 = vmul.f32 %v2011, %v1923
    %v2152 = vmul.f32 %v2012, %v1924
    %v2153 = vmul.f32 %v2013, %v1925
    %v2154 = vsub.f32 1.0, %v2014
    %v2155 = vsub.f32 1.0, %v2015
    %v2156 = vsub.f32 1.0, %v2016
    %v2157 = vsub.f32 1.0, %v2017
    %v2158 = vmul.f32 %v2154, %v1926
    %v2159 = vmul.f32 %v2155, %v1927
    %v2160 = vmul.f32 %v2156, %v1928
    %v2161 = vmul.f32 %v2157, %v1929
    %v2162 = vadd.f32 %v2150, %v2158
    %v2163 = vadd.f32 %v2151, %v2159
    %v2164 = vadd.f32 %v2152, %v2160
    %v2165 = vadd.f32 %v2153, %v2161
    %v2166 = vmul.f32 %v2014, %v1926
    %v2167 = vmul.f32 %v2015, %v1927
    %v2168 = vmul.f32 %v2016, %v1928
    %v2169 = vmul.f32 %v2017, %v1929
    %v2170 = vsub.f32 1.0, %v2018
    %v2171 = vsub.f32 1.0, %v2019
    %v2172 = vsub.f32 1.0, %v2020
    %v2173 = vsub.f32 1.0, %v2021
    %v2174 = vmul.f32 %v2170, %v1930
    %v2175 = vmul.f32 %v2171, %v1931
    %v2176 = vmul.f32 %v2172, %v1932
    %v2177 = vmul.f32 %v2173, %v1933
    %v2178 = vadd.f32 %v2166, %v2174
    %v2179 = vadd.f32 %v2167, %v2175
    %v2180 = vadd.f32 %v2168, %v2176
    %v2181 = vadd.f32 %v2169, %v2177
    %v2182 = vmul.f32 %v1934, 1.25
    %v2183 = vmul.f32 %v1935, 1.25
    %v2184 = vmul.f32 %v1936, 1.25
    %v2185 = vmul.f32 %v1937, 1.25
    %v2186 = vmul.f32 %v1938, 1.25
    %v2187 = vmul.f32 %v1939, 1.25
    %v2188 = vmul.f32 %v1940, 1.25
    %v2189 = vmul.f32 %v1941, 1.25
    %v2190 = vmul.f32 %v1942, 1.25
    %v2191 = vmul.f32 %v1943, 1.25
    %v2192 = vmul.f32 %v1944, 1.25
    %v2193 = vmul.f32 %v1945, 1.25
    %v2194 = vmul.f32 %v1946, 1.25
    %v2195 = vmul.f32 %v1947, 1.25
    %v2196 = vmul.f32 %v1948, 1.25
    %v2197 = vmul.f32 %v1949, 1.25
    %v2198 = vmul.f32 %v1950, 1.25
    %v2199 = vmul.f32 %v1951, 1.25
    %v2200 = vmul.f32 %v1952, 1.25
    %v2201 = vmul.f32 %v1953, 1.25
    %v2202 = vmul.f32 %v1954, 1.25
    %v2203 = vmul.f32 %v1955, 1.25
    %v2204 = vmul.f32 %v1956, 1.25
    %v2205 = vmul.f32 %v1957, 1.25
    %v2206 = vmul.f32 %v1958, 1.25
    %v2207 = vmul.f32 %v1959, 1.25
    %v2208 = vmul.f32 %v1960, 1.25
    %v2209 = vmul.f32 %v1961, 1.25
    %v2210 = vmul.f32 %v1962, 1.25
    %v2211 = vmul.f32 %v1963, 1.25
    %v2212 = vmul.f32 %v1964, 1.25
    %v2213 = vmul.f32 %v1965, 1.25
    %v2214 = vmul.f32 %v1966, 1.25
    %v2215 = vmul.f32 %v1967, 1.25
    %v2216 = vmul.f32 %v1968, 1.25
    %v2217 = vmul.f32 %v1969, 1.25
    %v2218 = vmul.f32 %v1970, 1.25
    %v2219 = vmul.f32 %v1971, 1.25
    %v2220 = vmul.f32 %v1972, 1.25
    %v2221 = vmul.f32 %v1973, 1.25
    %v2222 = vmul.f32 %v2182, %v2034
    %v2223 = vmul.f32 %v2183, %v2035
    %v2224 = vmul.f32 %v2184, %v2036
    %v2225 = vmul.f32 %v2185, %v2037
    %v2226 = vsub.f32 1.0, %v2186
    %v2227 = vsub.f32 1.0, %v2187
    %v2228 = vsub.f32 1.0, %v2188
    %v2229 = vsub.f32 1.0, %v2189
    %v2230 = vmul.f32 %v2226, %v2050
    %v2231 = vmul.f32 %v2227, %v2051
    %v2232 = vmul.f32 %v2228, %v2052
    %v2233 = vmul.f32 %v2229, %v2053
    %v2234 = vadd.f32 %v2222, %v2230
    %v2235 = vadd.f32 %v2223, %v2231
    %v2236 = vadd.f32 %v2224, %v2232
    %v2237 = vadd.f32 %v2225, %v2233
    %v2238 = vmul.f32 %v2186, %v2050
    %v2239 = vmul.f32 %v2187, %v2051
    %v2240 = vmul.f32 %v2188, %v2052
    %v2241 = vmul.f32 %v2189, %v2053
    %v2242 = vsub.f32 1.0, %v2190
    %v2243 = vsub.f32 1.0, %v2191
    %v2244 = vsub.f32 1.0, %v2192
    %v2245 = vsub.f32 1.0, %v2193
    %v2246 = vmul.f32 %v2242, %v2066
    %v2247 = vmul.f32 %v2243, %v2067
    %v2248 = vmul.f32 %v2244, %v2068
    %v2249 = vmul.f32 %v2245, %v2069
    %v2250 = vadd.f32 %v2238, %v2246
    %v2251 = vadd.f32 %v2239, %v2247
    %v2252 = vadd.f32 %v2240, %v2248
    %v2253 = vadd.f32 %v2241, %v2249
    %v2254 = vmul.f32 %v2190, %v2066
    %v2255 = vmul.f32 %v2191, %v2067
    %v2256 = vmul.f32 %v2192, %v2068
    %v2257 = vmul.f32 %v2193, %v2069
    %v2258 = vsub.f32 1.0, %v2194
    %v2259 = vsub.f32 1.0, %v2195
    %v2260 = vsub.f32 1.0, %v2196
    %v2261 = vsub.f32 1.0, %v2197
    %v2262 = vmul.f32 %v2258, %v2082
    %v2263 = vmul.f32 %v2259, %v2083
    %v2264 = vmul.f32 %v2260, %v2084
    %v2265 = vmul.f32 %v2261, %v2085
    %v2266 = vadd.f32 %v2254, %v2262
    %v2267 = vadd.f32 %v2255, %v2263
    %v2268 = vadd.f32 %v2256, %v2264
    %v2269 = vadd.f32 %v2257, %v2265
    %v2270 = vmul.f32 %v2194, %v2082
    %v2271 = vmul.f32 %v2195, %v2083
    %v2272 = vmul.f32 %v2196, %v2084
    %v2273 = vmul.f32 %v2197, %v2085
    %v2274 = vsub.f32 1.0, %v2198
    %v2275 = vsub.f32 1.0, %v2199
    %v2276 = vsub.f32 1.0, %v2200
    %v2277 = vsub.f32 1.0, %v2201
    %v2278 = vmul.f32 %v2274, %v2098
    %v2279 = vmul.f32 %v2275, %v2099
    %v2280 = vmul.f32 %v2276, %v2100
    %v2281 = vmul.f32 %v2277, %v2101
    %v2282 = vadd.f32 %v2270, %v2278
    %v2283 = vadd.f32 %v2271, %v2279
    %v2284 = vadd.f32 %v2272, %v2280
    %v2285 = vadd.f32 %v2273, %v2281
    %v2286 = vmul.f32 %v2198, %v2098
    %v2287 = vmul.f32 %v2199, %v2099
    %v2288 = vmul.f32 %v2200, %v2100
    %v2289 = vmul.f32 %v2201, %v2101
    %v2290 = vsub.f32 1.0, %v2202
    %v2291 = vsub.f32 1.0, %v2203
    %v2292 = vsub.f32 1.0, %v2204
    %v2293 = vsub.f32 1.0, %v2205
    %v2294 = vmul.f32 %v2290, %v2114
    %v2295 = vmul.f32 %v2291, %v2115
    %v2296 = vmul.f32 %v2292, %v2116
    %v2297 = vmul.f32 %v2293, %v2117
    %v2298 = vadd.f32 %v2286, %v2294
    %v2299 = vadd.f32 %v2287, %v2295
    %v2300 = vadd.f32 %v2288, %v2296
    %v2301 = vadd.f32 %v2289, %v2297
    %v2302 = vmul.f32 %v2202, %v2114
    %v2303 = vmul.f32 %v2203, %v2115
    %v2304 = vmul.f32 %v2204, %v2116
    %v2305 = vmul.f32 %v2205, %v2117
    %v2306 = vsub.f32 1.0, %v2206
    %v2307 = vsub.f32 1.0, %v2207
    %v2308 = vsub.f32 1.0, %v2208
    %v2309 = vsub.f32 1.0, %v2209
    %v2310 = vmul.f32 %v2306, %v2130
    %v2311 = vmul.f32 %v2307, %v2131
    %v2312 = vmul.f32 %v2308, %v2132
    %v2313 = vmul.f32 %v2309, %v2133
    %v2314 = vadd.f32 %v2302, %v2310
    %v2315 = vadd.f32 %v2303, %v2311
    %v2316 = vadd.f32 %v2304, %v2312
    %v2317 = vadd.f32 %v2305, %v2313
    %v2318 = vmul.f32 %v2206, %v2130
    %v2319 = vmul.f32 %v2207, %v2131
    %v2320 = vmul.f32 %v2208, %v2132
    %v2321 = vmul.f32 %v2209, %v2133
    %v2322 = vsub.f32 1.0, %v2210
    %v2323 = vsub.f32 1.0, %v2211
    %v2324 = vsub.f32 1.0, %v2212
    %v2325 = vsub.f32 1.0, %v2213
    %v2326 = vmul.f32 %v2322, %v2146
    %v2327 = vmul.f32 %v2323, %v2147
    %v2328 = vmul.f32 %v2324, %v2148
    %v2329 = vmul.f32 %v2325, %v2149
    %v2330 = vadd.f32 %v2318, %v2326
    %v2331 = vadd.f32 %v2319, %v2327
    %v2332 = vadd.f32 %v2320, %v2328
    %v2333 = vadd.f32 %v2321, %v2329
    %v2334 = vmul.f32 %v2210, %v2146
    %v2335 = vmul.f32 %v2211, %v2147
    %v2336 = vmul.f32 %v2212, %v2148
    %v2337 = vmul.f32 %v2213, %v2149
    %v2338 = vsub.f32 1.0, %v2214
    %v2339 = vsub.f32 1.0, %v2215
    %v2340 = vsub.f32 1.0, %v2216
    %v2341 = vsub.f32 1.0, %v2217
    %v2342 = vmul.f32 %v2338, %v2162
    %v2343 = vmul.f32 %v2339, %v2163
    %v2344 = vmul.f32 %v2340, %v2164
    %v2345 = vmul.f32 %v2341, %v2165
    %v2346 = vadd.f32 %v2334, %v2342
    %v2347 = vadd.f32 %v2335, %v2343
    %v2348 = vadd.f32 %v2336, %v2344
    %v2349 = vadd.f32 %v2337, %v2345
    %v2350 = vmul.f32 %v2214, %v2162
    %v2351 = vmul.f32 %v2215, %v2163
    %v2352 = vmul.f32 %v2216, %v2164
    %v2353 = vmul.f32 %v2217, %v2165
    %v2354 = vsub.f32 1.0, %v2218
    %v2355 = vsub.f32 1.0, %v2219
    %v2356 = vsub.f32 1.0, %v2220
    %v2357 = vsub.f32 1.0, %v2221
    %v2358 = vmul.f32 %v2354, %v2178
    %v2359 = vmul.f32 %v2355, %v2179
    %v2360 = vmul.f32 %v2356, %v2180
    %v2361 = vmul.f32 %v2357, %v2181
    %v2362 = vadd.f32 %v2350, %v2358
    %v2363 = vadd.f32 %v2351, %v2359
    %v2364 = vadd.f32 %v2352, %v2360
    %v2365 = vadd.f32 %v2353, %v2361
    %v2366 = vmul.f32 %v1934, 0.8333333
    %v2367 = vmul.f32 %v1935, 0.8333333
    %v2368 = vmul.f32 %v1936, 0.8333333
    %v2369 = vmul.f32 %v1937, 0.8333333
    %v2370 = vmul.f32 %v1938, 0.8333333
    %v2371 = vmul.f32 %v1939, 0.8333333
    %v2372 = vmul.f32 %v1940, 0.8333333
    %v2373 = vmul.f32 %v1941, 0.8333333
    %v2374 = vmul.f32 %v1942, 0.8333333
    %v2375 = vmul.f32 %v1943, 0.8333333
    %v2376 = vmul.f32 %v1944, 0.8333333
    %v2377 = vmul.f32 %v1945, 0.8333333
    %v2378 = vmul.f32 %v1946, 0.8333333
    %v2379 = vmul.f32 %v1947, 0.8333333
    %v2380 = vmul.f32 %v1948, 0.8333333
    %v2381 = vmul.f32 %v1949, 0.8333333
    %v2382 = vmul.f32 %v1950, 0.8333333
    %v2383 = vmul.f32 %v1951, 0.8333333
    %v2384 = vmul.f32 %v1952, 0.8333333
    %v2385 = vmul.f32 %v1953, 0.8333333
    %v2386 = vmul.f32 %v1954, 0.8333333
    %v2387 = vmul.f32 %v1955, 0.8333333
    %v2388 = vmul.f32 %v1956, 0.8333333
    %v2389 = vmul.f32 %v1957, 0.8333333
    %v2390 = vmul.f32 %v1958, 0.8333333
    %v2391 = vmul.f32 %v1959, 0.8333333
    %v2392 = vmul.f32 %v1960, 0.8333333
    %v2393 = vmul.f32 %v1961, 0.8333333
    %v2394 = vmul.f32 %v1962, 0.8333333
    %v2395 = vmul.f32 %v1963, 0.8333333
    %v2396 = vmul.f32 %v1964, 0.8333333
    %v2397 = vmul.f32 %v1965, 0.8333333
    %v2398 = vmul.f32 %v1966, 0.8333333
    %v2399 = vmul.f32 %v1967, 0.8333333
    %v2400 = vmul.f32 %v1968, 0.8333333
    %v2401 = vmul.f32 %v1969, 0.8333333
    %v2402 = vmul.f32 %v2366, %v2234
    %v2403 = vmul.f32 %v2367, %v2235
    %v2404 = vmul.f32 %v2368, %v2236
    %v2405 = vmul.f32 %v2369, %v2237
    %v2406 = vsub.f32 1.0, %v2370
    %v2407 = vsub.f32 1.0, %v2371
    %v2408 = vsub.f32 1.0, %v2372
    %v2409 = vsub.f32 1.0, %v2373
    %v2410 = vmul.f32 %v2406, %v2250
    %v2411 = vmul.f32 %v2407, %v2251
    %v2412 = vmul.f32 %v2408, %v2252
    %v2413 = vmul.f32 %v2409, %v2253
    %v2414 = vadd.f32 %v2402, %v2410
    %v2415 = vadd.f32 %v2403, %v2411
    %v2416 = vadd.f32 %v2404, %v2412
    %v2417 = vadd.f32 %v2405, %v2413
    %v2418 = vmul.f32 %v2370, %v2250
    %v2419 = vmul.f32 %v2371, %v2251
    %v2420 = vmul.f32 %v2372, %v2252
    %v2421 = vmul.f32 %v2373, %v2253
    %v2422 = vsub.f32 1.0, %v2374
    %v2423 = vsub.f32 1.0, %v2375
    %v2424 = vsub.f32 1.0, %v2376
    %v2425 = vsub.f32 1.0, %v2377
    %v2426 = vmul.f32 %v2422, %v2266
    %v2427 = vmul.f32 %v2423, %v2267
    %v2428 = vmul.f32 %v2424, %v2268
    %v2429 = vmul.f32 %v2425, %v2269
    %v2430 = vadd.f32 %v2418, %v2426
    %v2431 = vadd.f32 %v2419, %v2427
    %v2432 = vadd.f32 %v2420, %v2428
    %v2433 = vadd.f32 %v2421, %v2429
    %v2434 = vmul.f32 %v2374, %v2266
    %v2435 = vmul.f32 %v2375, %v2267
    %v2436 = vmul.f32 %v2376, %v2268
    %v2437 = vmul.f32 %v2377, %v2269
    %v2438 = vsub.f32 1.0, %v2378
    %v2439 = vsub.f32 1.0, %v2379
    %v2440 = vsub.f32 1.0, %v2380
    %v2441 = vsub.f32 1.0, %v2381
    %v2442 = vmul.f32 %v2438, %v2282
    %v2443 = vmul.f32 %v2439, %v2283
    %v2444 = vmul.f32 %v2440, %v2284
    %v2445 = vmul.f32 %v2441, %v2285
    %v2446 = vadd.f32 %v2434, %v2442
    %v2447 = vadd.f32 %v2435, %v2443
    %v2448 = vadd.f32 %v2436, %v2444
    %v2449 = vadd.f32 %v2437, %v2445
    %v2450 = vmul.f32 %v2378, %v2282
    %v2451 = vmul.f32 %v2379, %v2283
    %v2452 = vmul.f32 %v2380, %v2284
    %v2453 = vmul.f32 %v2381, %v2285
    %v2454 = vsub.f32 1.0, %v2382
    %v2455 = vsub.f32 1.0, %v2383
    %v2456 = vsub.f32 1.0, %v2384
    %v2457 = vsub.f32 1.0, %v2385
    %v2458 = vmul.f32 %v2454, %v2298
    %v2459 = vmul.f32 %v2455, %v2299
    %v2460 = vmul.f32 %v2456, %v2300
    %v2461 = vmul.f32 %v2457, %v2301
    %v2462 = vadd.f32 %v2450, %v2458
    %v2463 = vadd.f32 %v2451, %v2459
    %v2464 = vadd.f32 %v2452, %v2460
    %v2465 = vadd.f32 %v2453, %v2461
    %v2466 = vmul.f32 %v2382, %v2298
    %v2467 = vmul.f32 %v2383, %v2299
    %v2468 = vmul.f32 %v2384, %v2300
    %v2469 = vmul.f32 %v2385, %v2301
    %v2470 = vsub.f32 1.0, %v2386
    %v2471 = vsub.f32 1.0, %v2387
    %v2472 = vsub.f32 1.0, %v2388
    %v2473 = vsub.f32 1.0, %v2389
    %v2474 = vmul.f32 %v2470, %v2314
    %v2475 = vmul.f32 %v2471, %v2315
    %v2476 = vmul.f32 %v2472, %v2316
    %v2477 = vmul.f32 %v2473, %v2317
    %v2478 = vadd.f32 %v2466, %v2474
    %v2479 = vadd.f32 %v2467, %v2475
    %v2480 = vadd.f32 %v2468, %v2476
    %v2481 = vadd.f32 %v2469, %v2477
    %v2482 = vmul.f32 %v2386, %v2314
    %v2483 = vmul.f32 %v2387, %v2315
    %v2484 = vmul.f32 %v2388, %v2316
    %v2485 = vmul.f32 %v2389, %v2317
    %v2486 = vsub.f32 1.0, %v2390
    %v2487 = vsub.f32 1.0, %v2391
    %v2488 = vsub.f32 1.0, %v2392
    %v2489 = vsub.f32 1.0, %v2393
    %v2490 = vmul.f32 %v2486, %v2330
    %v2491 = vmul.f32 %v2487, %v2331
    %v2492 = vmul.f32 %v2488, %v2332
    %v2493 = vmul.f32 %v2489, %v2333
    %v2494 = vadd.f32 %v2482, %v2490
    %v2495 = vadd.f32 %v2483, %v2491
    %v2496 = vadd.f32 %v2484, %v2492
    %v2497 = vadd.f32 %v2485, %v2493
    %v2498 = vmul.f32 %v2390, %v2330
    %v2499 = vmul.f32 %v2391, %v2331
    %v2500 = vmul.f32 %v2392, %v2332
    %v2501 = vmul.f32 %v2393, %v2333
    %v2502 = vsub.f32 1.0, %v2394
    %v2503 = vsub.f32 1.0, %v2395
    %v2504 = vsub.f32 1.0, %v2396
    %v2505 = vsub.f32 1.0, %v2397
    %v2506 = vmul.f32 %v2502, %v2346
    %v2507 = vmul.f32 %v2503, %v2347
    %v2508 = vmul.f32 %v2504, %v2348
    %v2509 = vmul.f32 %v2505, %v2349
    %v2510 = vadd.f32 %v2498, %v2506
    %v2511 = vadd.f32 %v2499, %v2507
    %v2512 = vadd.f32 %v2500, %v2508
    %v2513 = vadd.f32 %v2501, %v2509
    %v2514 = vmul.f32 %v2394, %v2346
    %v2515 = vmul.f32 %v2395, %v2347
    %v2516 = vmul.f32 %v2396, %v2348
    %v2517 = vmul.f32 %v2397, %v2349
    %v2518 = vsub.f32 1.0, %v2398
    %v2519 = vsub.f32 1.0, %v2399
    %v2520 = vsub.f32 1.0, %v2400
    %v2521 = vsub.f32 1.0, %v2401
    %v2522 = vmul.f32 %v2518, %v2362
    %v2523 = vmul.f32 %v2519, %v2363
    %v2524 = vmul.f32 %v2520, %v2364
    %v2525 = vmul.f32 %v2521, %v2365
    %v2526 = vadd.f32 %v2514, %v2522
    %v2527 = vadd.f32 %v2515, %v2523
    %v2528 = vadd.f32 %v2516, %v2524
    %v2529 = vadd.f32 %v2517, %v2525
    %v2530 = vpack.c.bf16 %v1744, %v1742
    %v2531 = vpack.c.bf16 %v1745, %v1743
    %2532 = vst [vmem:[#allocation6] sm:$0xff] %v2530
    %2533 = vst [vmem:[#allocation6 + $0x8] sm:$0xff] %v2531
    %v2534 = vpack.c.bf16 %v2416, %v2414
    %v2535 = vpack.c.bf16 %v2417, %v2415
    %2536 = vst [vmem:[#allocation6 + $0x10] sm:$0xff] %v2534
    %2537 = vst [vmem:[#allocation6 + $0x18] sm:$0xff] %v2535
    %v2538 = vpack.c.bf16 %v2432, %v2430
    %v2539 = vpack.c.bf16 %v2433, %v2431
    %2540 = vst [vmem:[#allocation6 + $0x20] sm:$0xff] %v2538
    %2541 = vst [vmem:[#allocation6 + $0x28] sm:$0xff] %v2539
    %v2542 = vpack.c.bf16 %v2448, %v2446
    %v2543 = vpack.c.bf16 %v2449, %v2447
    %2544 = vst [vmem:[#allocation6 + $0x30] sm:$0xff] %v2542
    %2545 = vst [vmem:[#allocation6 + $0x38] sm:$0xff] %v2543
    %v2546 = vpack.c.bf16 %v2464, %v2462
    %v2547 = vpack.c.bf16 %v2465, %v2463
    %2548 = vst [vmem:[#allocation6 + $0x40] sm:$0xff] %v2546
    %2549 = vst [vmem:[#allocation6 + $0x48] sm:$0xff] %v2547
    %v2550 = vpack.c.bf16 %v2480, %v2478
    %v2551 = vpack.c.bf16 %v2481, %v2479
    %2552 = vst [vmem:[#allocation6 + $0x50] sm:$0xff] %v2550
    %2553 = vst [vmem:[#allocation6 + $0x58] sm:$0xff] %v2551
    %v2554 = vpack.c.bf16 %v2496, %v2494
    %v2555 = vpack.c.bf16 %v2497, %v2495
    %2556 = vst [vmem:[#allocation6 + $0x60] sm:$0xff] %v2554
    %2557 = vst [vmem:[#allocation6 + $0x68] sm:$0xff] %v2555
    %v2558 = vpack.c.bf16 %v2512, %v2510
    %v2559 = vpack.c.bf16 %v2513, %v2511
    %2560 = vst [vmem:[#allocation6 + $0x70] sm:$0xff] %v2558
    %2561 = vst [vmem:[#allocation6 + $0x78] sm:$0xff] %v2559
    %v2562 = vpack.c.bf16 %v2528, %v2526
    %v2563 = vpack.c.bf16 %v2529, %v2527
    %2564 = vst [vmem:[#allocation6 + $0x80] sm:$0xff] %v2562
    %2565 = vst [vmem:[#allocation6 + $0x88] sm:$0xff] %v2563
    %v2566 = vld [vmem:[#allocation15] sm:$0xf]
    %v2567 = vld [vmem:[#allocation15 + $0x4] sm:$0xf]
    %v2568 = vld [vmem:[#allocation15 + $0x8] sm:$0xf]
    %v2569 = vld [vmem:[#allocation15 + $0xc] sm:$0xf]
    %v2570 = vld [vmem:[#allocation15 + $0x10] sm:$0xf]
    %v2571 = vld [vmem:[#allocation15 + $0x14] sm:$0xf]
    %v2572 = vld [vmem:[#allocation15 + $0x18] sm:$0xf]
    %v2573 = vld [vmem:[#allocation15 + $0x1c] sm:$0xf]
    %v2574 = vld [vmem:[#allocation15 + $0x20] sm:$0xf]
    %v2575 = vld [vmem:[#allocation15 + $0x24] sm:$0xf]
    %v2576 = vld [vmem:[#allocation15 + $0x28] sm:$0xf]
    %v2577 = vld [vmem:[#allocation15 + $0x2c] sm:$0xf]
    %v2578 = vld [vmem:[#allocation15 + $0x30] sm:$0xf]
    %v2579 = vld [vmem:[#allocation15 + $0x34] sm:$0xf]
    %v2580 = vld [vmem:[#allocation15 + $0x38] sm:$0xf]
    %v2581 = vld [vmem:[#allocation15 + $0x3c] sm:$0xf]
    %v2582 = vld [vmem:[#allocation15 + $0x40] sm:$0xf]
    %v2583 = vld [vmem:[#allocation15 + $0x44] sm:$0xf]
    %v2584 = vld [vmem:[#allocation15 + $0x48] sm:$0xf]
    %v2585 = vld [vmem:[#allocation15 + $0x4c] sm:$0xf]
    %v2586 = vld [vmem:[#allocation15 + $0x50] sm:$0xf]
    %v2587 = vld [vmem:[#allocation15 + $0x54] sm:$0xf]
    %v2588 = vld [vmem:[#allocation15 + $0x58] sm:$0xf]
    %v2589 = vld [vmem:[#allocation15 + $0x5c] sm:$0xf]
    %v2590 = vld [vmem:[#allocation15 + $0x60] sm:$0xf]
    %v2591 = vld [vmem:[#allocation15 + $0x64] sm:$0xf]
    %v2592 = vld [vmem:[#allocation15 + $0x68] sm:$0xf]
    %v2593 = vld [vmem:[#allocation15 + $0x6c] sm:$0xf]
    %v2594 = vld [vmem:[#allocation15 + $0x70] sm:$0xf]
    %v2595 = vld [vmem:[#allocation15 + $0x74] sm:$0xf]
    %v2596 = vld [vmem:[#allocation15 + $0x78] sm:$0xf]
    %v2597 = vld [vmem:[#allocation15 + $0x7c] sm:$0xf]
    %v2598 = vld [vmem:[#allocation15 + $0x80] sm:$0xf]
    %v2599 = vld [vmem:[#allocation15 + $0x84] sm:$0xf]
    %v2600 = vld [vmem:[#allocation15 + $0x88] sm:$0xf]
    %v2601 = vld [vmem:[#allocation15 + $0x8c] sm:$0xf]
    %v2602 = vld [vmem:[#allocation15 + $0x90] sm:$0xf]
    %v2603 = vld [vmem:[#allocation15 + $0x94] sm:$0xf]
    %v2604 = vld [vmem:[#allocation15 + $0x98] sm:$0xf]
    %v2605 = vld [vmem:[#allocation15 + $0x9c] sm:$0xf]
    %v2606 = vld [vmem:[#allocation15 + $0xa0] sm:$0xf]
    %v2607 = vld [vmem:[#allocation15 + $0xa4] sm:$0xf]
    %v2608 = vld [vmem:[#allocation15 + $0xa8] sm:$0xf]
    %v2609 = vld [vmem:[#allocation15 + $0xac] sm:$0xf]
    %v2610 = vld [vmem:[#allocation15 + $0xb0] sm:$0xf]
    %v2611 = vld [vmem:[#allocation15 + $0xb4] sm:$0xf]
    %v2612 = vld [vmem:[#allocation15 + $0xb8] sm:$0xf]
    %v2613 = vld [vmem:[#allocation15 + $0xbc] sm:$0xf]
    %v2614 = vld [vmem:[#allocation15 + $0xc0] sm:$0xf]
    %v2615 = vld [vmem:[#allocation15 + $0xc4] sm:$0xf]
    %v2616 = vld [vmem:[#allocation15 + $0xc8] sm:$0xf]
    %v2617 = vld [vmem:[#allocation15 + $0xcc] sm:$0xf]
    %v2618 = vld [vmem:[#allocation15 + $0xd0] sm:$0xf]
    %v2619 = vld [vmem:[#allocation15 + $0xd4] sm:$0xf]
    %v2620 = vld [vmem:[#allocation15 + $0xd8] sm:$0xf]
    %v2621 = vld [vmem:[#allocation15 + $0xdc] sm:$0xf]
    %v2622 = vld [vmem:[#allocation15 + $0xe0] sm:$0xf]
    %v2623 = vld [vmem:[#allocation15 + $0xe4] sm:$0xf]
    %v2624 = vld [vmem:[#allocation15 + $0xe8] sm:$0xf]
    %v2625 = vld [vmem:[#allocation15 + $0xec] sm:$0xf]
    %v2626 = vld [vmem:[#allocation15 + $0xf0] sm:$0xf]
    %v2627 = vld [vmem:[#allocation15 + $0xf4] sm:$0xf]
    %v2628 = vld [vmem:[#allocation15 + $0xf8] sm:$0xf]
    %v2629 = vld [vmem:[#allocation15 + $0xfc] sm:$0xf]
    %v2630 = vld [vmem:[#allocation15 + $0x100] sm:$0xf]
    %v2631 = vld [vmem:[#allocation15 + $0x104] sm:$0xf]
    %v2632 = vld [vmem:[#allocation15 + $0x108] sm:$0xf]
    %v2633 = vld [vmem:[#allocation15 + $0x10c] sm:$0xf]
    %v2634 = vld [vmem:[#allocation15 + $0x110] sm:$0xf]
    %v2635 = vld [vmem:[#allocation15 + $0x114] sm:$0xf]
    %v2636 = vld [vmem:[#allocation15 + $0x118] sm:$0xf]
    %v2637 = vld [vmem:[#allocation15 + $0x11c] sm:$0xf]
    %v2638 = vld [vmem:[#allocation15 + $0x120] sm:$0xf]
    %v2639 = vld [vmem:[#allocation15 + $0x124] sm:$0xf]
    %v2640 = vld [vmem:[#allocation15 + $0x128] sm:$0xf]
    %v2641 = vld [vmem:[#allocation15 + $0x12c] sm:$0xf]
    %v2642 = vld [vmem:[#allocation15 + $0x130] sm:$0xf]
    %v2643 = vld [vmem:[#allocation15 + $0x134] sm:$0xf]
    %v2644 = vld [vmem:[#allocation15 + $0x138] sm:$0xf]
    %v2645 = vld [vmem:[#allocation15 + $0x13c] sm:$0xf]
    %v2646 = vld [vmem:[#allocation15 + $0x140] sm:$0xf]
    %v2647 = vld [vmem:[#allocation15 + $0x144] sm:$0xf]
    %v2648 = vld [vmem:[#allocation15 + $0x148] sm:$0xf]
    %v2649 = vld [vmem:[#allocation15 + $0x14c] sm:$0xf]
    %v2650 = vld [vmem:[#allocation15 + $0x150] sm:$0xf]
    %v2651 = vld [vmem:[#allocation15 + $0x154] sm:$0xf]
    %v2652 = vld [vmem:[#allocation15 + $0x158] sm:$0xf]
    %v2653 = vld [vmem:[#allocation15 + $0x15c] sm:$0xf]
    %v2654 = vld [vmem:[#allocation15 + $0x160] sm:$0xf]
    %v2655 = vld [vmem:[#allocation15 + $0x164] sm:$0xf]
    %v2656 = vld [vmem:[#allocation15 + $0x168] sm:$0xf]
    %v2657 = vld [vmem:[#allocation15 + $0x16c] sm:$0xf]
    %v2658 = vld [vmem:[#allocation15 + $0x170] sm:$0xf]
    %v2659 = vld [vmem:[#allocation15 + $0x174] sm:$0xf]
    %v2660 = vld [vmem:[#allocation15 + $0x178] sm:$0xf]
    %v2661 = vld [vmem:[#allocation15 + $0x17c] sm:$0xf]
    %v2662 = vld [vmem:[#allocation15 + $0x180] sm:$0xf]
    %v2663 = vld [vmem:[#allocation15 + $0x184] sm:$0xf]
    %v2664 = vld [vmem:[#allocation15 + $0x188] sm:$0xf]
    %v2665 = vld [vmem:[#allocation15 + $0x18c] sm:$0xf]
    %v2666 = vld [vmem:[#allocation15 + $0x190] sm:$0xf]
    %v2667 = vld [vmem:[#allocation15 + $0x194] sm:$0xf]
    %v2668 = vld [vmem:[#allocation15 + $0x198] sm:$0xf]
    %v2669 = vld [vmem:[#allocation15 + $0x19c] sm:$0xf]
    %v2670 = vld [vmem:[#allocation15 + $0x1a0] sm:$0xf]
    %v2671 = vld [vmem:[#allocation15 + $0x1a4] sm:$0xf]
    %v2672 = vld [vmem:[#allocation15 + $0x1a8] sm:$0xf]
    %v2673 = vld [vmem:[#allocation15 + $0x1ac] sm:$0xf]
    %v2674 = vld [vmem:[#allocation15 + $0x1b0] sm:$0xf]
    %v2675 = vld [vmem:[#allocation15 + $0x1b4] sm:$0xf]
    %v2676 = vld [vmem:[#allocation15 + $0x1b8] sm:$0xf]
    %v2677 = vld [vmem:[#allocation15 + $0x1bc] sm:$0xf]
    %v2678 = vld [vmem:[#allocation15 + $0x1c0] sm:$0xf]
    %v2679 = vld [vmem:[#allocation15 + $0x1c4] sm:$0xf]
    %v2680 = vld [vmem:[#allocation15 + $0x1c8] sm:$0xf]
    %v2681 = vld [vmem:[#allocation15 + $0x1cc] sm:$0xf]
    %v2682 = vld [vmem:[#allocation15 + $0x1d0] sm:$0xf]
    %v2683 = vld [vmem:[#allocation15 + $0x1d4] sm:$0xf]
    %v2684 = vld [vmem:[#allocation15 + $0x1d8] sm:$0xf]
    %v2685 = vld [vmem:[#allocation15 + $0x1dc] sm:$0xf]
    %v2686 = vld [vmem:[#allocation15 + $0x1e0] sm:$0xf]
    %v2687 = vld [vmem:[#allocation15 + $0x1e4] sm:$0xf]
    %v2688 = vld [vmem:[#allocation15 + $0x1e8] sm:$0xf]
    %v2689 = vld [vmem:[#allocation15 + $0x1ec] sm:$0xf]
    %v2690 = vld [vmem:[#allocation15 + $0x1f0] sm:$0xf]
    %v2691 = vld [vmem:[#allocation15 + $0x1f4] sm:$0xf]
    %v2692 = vld [vmem:[#allocation15 + $0x1f8] sm:$0xf]
    %v2693 = vld [vmem:[#allocation15 + $0x1fc] sm:$0xf]
    %v2694 = vld [vmem:[#allocation15 + $0x200] sm:$0xf]
    %v2695 = vld [vmem:[#allocation15 + $0x204] sm:$0xf]
    %v2696 = vld [vmem:[#allocation15 + $0x208] sm:$0xf]
    %v2697 = vld [vmem:[#allocation15 + $0x20c] sm:$0xf]
    %v2698 = vld [vmem:[#allocation15 + $0x210] sm:$0xf]
    %v2699 = vld [vmem:[#allocation15 + $0x214] sm:$0xf]
    %v2700 = vld [vmem:[#allocation15 + $0x218] sm:$0xf]
    %v2701 = vld [vmem:[#allocation15 + $0x21c] sm:$0xf]
    %v2702 = vld [vmem:[#allocation15 + $0x220] sm:$0xf]
    %v2703 = vld [vmem:[#allocation15 + $0x224] sm:$0xf]
    %v2704 = vld [vmem:[#allocation15 + $0x228] sm:$0xf]
    %v2705 = vld [vmem:[#allocation15 + $0x22c] sm:$0xf]
    %v2706 = vld [vmem:[#allocation15 + $0x230] sm:$0xf]
    %v2707 = vld [vmem:[#allocation15 + $0x234] sm:$0xf]
    %v2708 = vld [vmem:[#allocation15 + $0x238] sm:$0xf]
    %v2709 = vld [vmem:[#allocation15 + $0x23c] sm:$0xf]
    %v2710 = vld [vmem:[#allocation15 + $0x240] sm:$0xf]
    %v2711 = vld [vmem:[#allocation15 + $0x244] sm:$0xf]
    %v2712 = vld [vmem:[#allocation15 + $0x248] sm:$0xf]
    %v2713 = vld [vmem:[#allocation15 + $0x24c] sm:$0xf]
    %v2714 = vld [vmem:[#allocation15 + $0x250] sm:$0xf]
    %v2715 = vld [vmem:[#allocation15 + $0x254] sm:$0xf]
    %v2716 = vld [vmem:[#allocation15 + $0x258] sm:$0xf]
    %v2717 = vld [vmem:[#allocation15 + $0x25c] sm:$0xf]
    %v2718 = vld [vmem:[#allocation15 + $0x260] sm:$0xf]
    %v2719 = vld [vmem:[#allocation15 + $0x264] sm:$0xf]
    %v2720 = vld [vmem:[#allocation15 + $0x268] sm:$0xf]
    %v2721 = vld [vmem:[#allocation15 + $0x26c] sm:$0xf]
    %v2722 = vld [vmem:[#allocation15 + $0x270] sm:$0xf]
    %v2723 = vld [vmem:[#allocation15 + $0x274] sm:$0xf]
    %v2724 = vld [vmem:[#allocation15 + $0x278] sm:$0xf]
    %v2725 = vld [vmem:[#allocation15 + $0x27c] sm:$0xf]
    %v2726 = vld [vmem:[#allocation15 + $0x280] sm:$0xf]
    %v2727 = vld [vmem:[#allocation15 + $0x284] sm:$0xf]
    %v2728 = vld [vmem:[#allocation15 + $0x288] sm:$0xf]
    %v2729 = vld [vmem:[#allocation15 + $0x28c] sm:$0xf]
    %v2730 = vld [vmem:[#allocation15 + $0x290] sm:$0xf]
    %v2731 = vld [vmem:[#allocation15 + $0x294] sm:$0xf]
    %v2732 = vld [vmem:[#allocation15 + $0x298] sm:$0xf]
    %v2733 = vld [vmem:[#allocation15 + $0x29c] sm:$0xf]
    %v2734 = vld [vmem:[#allocation15 + $0x2a0] sm:$0xf]
    %v2735 = vld [vmem:[#allocation15 + $0x2a4] sm:$0xf]
    %v2736 = vld [vmem:[#allocation15 + $0x2a8] sm:$0xf]
    %v2737 = vld [vmem:[#allocation15 + $0x2ac] sm:$0xf]
    %v2738 = vld [vmem:[#allocation15 + $0x2b0] sm:$0xf]
    %v2739 = vld [vmem:[#allocation15 + $0x2b4] sm:$0xf]
    %v2740 = vld [vmem:[#allocation15 + $0x2b8] sm:$0xf]
    %v2741 = vld [vmem:[#allocation15 + $0x2bc] sm:$0xf]
    %v2742 = vld [vmem:[#allocation15 + $0x2c0] sm:$0xf]
    %v2743 = vld [vmem:[#allocation15 + $0x2c4] sm:$0xf]
    %v2744 = vld [vmem:[#allocation15 + $0x2c8] sm:$0xf]
    %v2745 = vld [vmem:[#allocation15 + $0x2cc] sm:$0xf]
    %v2746 = vld [vmem:[#allocation15 + $0x2d0] sm:$0xf]
    %v2747 = vld [vmem:[#allocation15 + $0x2d4] sm:$0xf]
    %v2748 = vld [vmem:[#allocation15 + $0x2d8] sm:$0xf]
    %v2749 = vld [vmem:[#allocation15 + $0x2dc] sm:$0xf]
    %v2750 = vld [vmem:[#allocation15 + $0x2e0] sm:$0xf]
    %v2751 = vld [vmem:[#allocation15 + $0x2e4] sm:$0xf]
    %v2752 = vld [vmem:[#allocation15 + $0x2e8] sm:$0xf]
    %v2753 = vld [vmem:[#allocation15 + $0x2ec] sm:$0xf]
    %v2754 = vld [vmem:[#allocation15 + $0x2f0] sm:$0xf]
    %v2755 = vld [vmem:[#allocation15 + $0x2f4] sm:$0xf]
    %v2756 = vld [vmem:[#allocation15 + $0x2f8] sm:$0xf]
    %v2757 = vld [vmem:[#allocation15 + $0x2fc] sm:$0xf]
    %v2758 = vld [vmem:[#allocation15 + $0x300] sm:$0xf]
    %v2759 = vld [vmem:[#allocation15 + $0x304] sm:$0xf]
    %v2760 = vld [vmem:[#allocation15 + $0x308] sm:$0xf]
    %v2761 = vld [vmem:[#allocation15 + $0x30c] sm:$0xf]
    %v2762 = vld [vmem:[#allocation15 + $0x310] sm:$0xf]
    %v2763 = vld [vmem:[#allocation15 + $0x314] sm:$0xf]
    %v2764 = vld [vmem:[#allocation15 + $0x318] sm:$0xf]
    %v2765 = vld [vmem:[#allocation15 + $0x31c] sm:$0xf]
    %v2766 = vld [vmem:[#allocation15 + $0x320] sm:$0xf]
    %v2767 = vld [vmem:[#allocation15 + $0x324] sm:$0xf]
    %v2768 = vld [vmem:[#allocation15 + $0x328] sm:$0xf]
    %v2769 = vld [vmem:[#allocation15 + $0x32c] sm:$0xf]
    %v2770 = vld [vmem:[#allocation15 + $0x330] sm:$0xf]
    %v2771 = vld [vmem:[#allocation15 + $0x334] sm:$0xf]
    %v2772 = vld [vmem:[#allocation15 + $0x338] sm:$0xf]
    %v2773 = vld [vmem:[#allocation15 + $0x33c] sm:$0xf]
    %v2774 = vld [vmem:[#allocation15 + $0x340] sm:$0xf]
    %v2775 = vld [vmem:[#allocation15 + $0x344] sm:$0xf]
    %v2776 = vld [vmem:[#allocation15 + $0x348] sm:$0xf]
    %v2777 = vld [vmem:[#allocation15 + $0x34c] sm:$0xf]
    %v2778 = vld [vmem:[#allocation15 + $0x350] sm:$0xf]
    %v2779 = vld [vmem:[#allocation15 + $0x354] sm:$0xf]
    %v2780 = vld [vmem:[#allocation15 + $0x358] sm:$0xf]
    %v2781 = vld [vmem:[#allocation15 + $0x35c] sm:$0xf]
    %v2782 = vld [vmem:[#allocation15 + $0x360] sm:$0xf]
    %v2783 = vld [vmem:[#allocation15 + $0x364] sm:$0xf]
    %v2784 = vld [vmem:[#allocation15 + $0x368] sm:$0xf]
    %v2785 = vld [vmem:[#allocation15 + $0x36c] sm:$0xf]
    %v2786 = vld [vmem:[#allocation15 + $0x370] sm:$0xf]
    %v2787 = vld [vmem:[#allocation15 + $0x374] sm:$0xf]
    %v2788 = vld [vmem:[#allocation15 + $0x378] sm:$0xf]
    %v2789 = vld [vmem:[#allocation15 + $0x37c] sm:$0xf]
    %v2790 = vld [vmem:[#allocation15 + $0x380] sm:$0xf]
    %v2791 = vld [vmem:[#allocation15 + $0x384] sm:$0xf]
    %v2792 = vld [vmem:[#allocation15 + $0x388] sm:$0xf]
    %v2793 = vld [vmem:[#allocation15 + $0x38c] sm:$0xf]
    %v2794 = vld [vmem:[#allocation15 + $0x390] sm:$0xf]
    %v2795 = vld [vmem:[#allocation15 + $0x394] sm:$0xf]
    %v2796 = vld [vmem:[#allocation15 + $0x398] sm:$0xf]
    %v2797 = vld [vmem:[#allocation15 + $0x39c] sm:$0xf]
    %v2798 = vld [vmem:[#allocation15 + $0x3a0] sm:$0xf]
    %v2799 = vld [vmem:[#allocation15 + $0x3a4] sm:$0xf]
    %v2800 = vld [vmem:[#allocation15 + $0x3a8] sm:$0xf]
    %v2801 = vld [vmem:[#allocation15 + $0x3ac] sm:$0xf]
    %v2802 = vld [vmem:[#allocation15 + $0x3b0] sm:$0xf]
    %v2803 = vld [vmem:[#allocation15 + $0x3b4] sm:$0xf]
    %v2804 = vld [vmem:[#allocation15 + $0x3b8] sm:$0xf]
    %v2805 = vld [vmem:[#allocation15 + $0x3bc] sm:$0xf]
    %v2806 = vld [vmem:[#allocation15 + $0x3c0] sm:$0xf]
    %v2807 = vld [vmem:[#allocation15 + $0x3c4] sm:$0xf]
    %v2808 = vld [vmem:[#allocation15 + $0x3c8] sm:$0xf]
    %v2809 = vld [vmem:[#allocation15 + $0x3cc] sm:$0xf]
    %v2810 = vld [vmem:[#allocation15 + $0x3d0] sm:$0xf]
    %v2811 = vld [vmem:[#allocation15 + $0x3d4] sm:$0xf]
    %v2812 = vld [vmem:[#allocation15 + $0x3d8] sm:$0xf]
    %v2813 = vld [vmem:[#allocation15 + $0x3dc] sm:$0xf]
    %v2814 = vld [vmem:[#allocation15 + $0x3e0] sm:$0xf]
    %v2815 = vld [vmem:[#allocation15 + $0x3e4] sm:$0xf]
    %v2816 = vld [vmem:[#allocation15 + $0x3e8] sm:$0xf]
    %v2817 = vld [vmem:[#allocation15 + $0x3ec] sm:$0xf]
    %v2818 = vld [vmem:[#allocation15 + $0x3f0] sm:$0xf]
    %v2819 = vld [vmem:[#allocation15 + $0x3f4] sm:$0xf]
    %v2820 = vld [vmem:[#allocation15 + $0x3f8] sm:$0xf]
    %v2821 = vld [vmem:[#allocation15 + $0x3fc] sm:$0xf]
    %v2822 = vld [vmem:[#allocation15 + $0x400] sm:$0xf]
    %v2823 = vld [vmem:[#allocation15 + $0x404] sm:$0xf]
    %v2824 = vld [vmem:[#allocation15 + $0x408] sm:$0xf]
    %v2825 = vld [vmem:[#allocation15 + $0x40c] sm:$0xf]
    %v2826 = vld [vmem:[#allocation15 + $0x410] sm:$0xf]
    %v2827 = vld [vmem:[#allocation15 + $0x414] sm:$0xf]
    %v2828 = vld [vmem:[#allocation15 + $0x418] sm:$0xf]
    %v2829 = vld [vmem:[#allocation15 + $0x41c] sm:$0xf]
    %v2830 = vld [vmem:[#allocation15 + $0x420] sm:$0xf]
    %v2831 = vld [vmem:[#allocation15 + $0x424] sm:$0xf]
    %v2832 = vld [vmem:[#allocation15 + $0x428] sm:$0xf]
    %v2833 = vld [vmem:[#allocation15 + $0x42c] sm:$0xf]
    %v2834 = vld [vmem:[#allocation15 + $0x430] sm:$0xf]
    %v2835 = vld [vmem:[#allocation15 + $0x434] sm:$0xf]
    %v2836 = vld [vmem:[#allocation15 + $0x438] sm:$0xf]
    %v2837 = vld [vmem:[#allocation15 + $0x43c] sm:$0xf]
    %v2838 = vld [vmem:[#allocation15 + $0x440] sm:$0xf]
    %v2839 = vld [vmem:[#allocation15 + $0x444] sm:$0xf]
    %v2840 = vld [vmem:[#allocation15 + $0x448] sm:$0xf]
    %v2841 = vld [vmem:[#allocation15 + $0x44c] sm:$0xf]
    %v2842 = vld [vmem:[#allocation15 + $0x450] sm:$0xf]
    %v2843 = vld [vmem:[#allocation15 + $0x454] sm:$0xf]
    %v2844 = vld [vmem:[#allocation15 + $0x458] sm:$0xf]
    %v2845 = vld [vmem:[#allocation15 + $0x45c] sm:$0xf]
    %v2846 = vld [vmem:[#allocation15 + $0x460] sm:$0xf]
    %v2847 = vld [vmem:[#allocation15 + $0x464] sm:$0xf]
    %v2848 = vld [vmem:[#allocation15 + $0x468] sm:$0xf]
    %v2849 = vld [vmem:[#allocation15 + $0x46c] sm:$0xf]
    %v2850 = vld [vmem:[#allocation15 + $0x470] sm:$0xf]
    %v2851 = vld [vmem:[#allocation15 + $0x474] sm:$0xf]
    %v2852 = vld [vmem:[#allocation15 + $0x478] sm:$0xf]
    %v2853 = vld [vmem:[#allocation15 + $0x47c] sm:$0xf]
    %v2854 = vld [vmem:[#allocation6] sm:$0xff]
    %v2855 = vld [vmem:[#allocation6 + $0x8] sm:$0xff]
    %v2856 = vld [vmem:[#allocation6 + $0x10] sm:$0xff]
    %v2857 = vld [vmem:[#allocation6 + $0x18] sm:$0xff]
    %v2858 = vld [vmem:[#allocation6 + $0x20] sm:$0xff]
    %v2859 = vld [vmem:[#allocation6 + $0x28] sm:$0xff]
    %v2860 = vld [vmem:[#allocation6 + $0x30] sm:$0xff]
    %v2861 = vld [vmem:[#allocation6 + $0x38] sm:$0xff]
    %v2862 = vld [vmem:[#allocation6 + $0x40] sm:$0xff]
    %v2863 = vld [vmem:[#allocation6 + $0x48] sm:$0xff]
    %v2864 = vld [vmem:[#allocation6 + $0x50] sm:$0xff]
    %v2865 = vld [vmem:[#allocation6 + $0x58] sm:$0xff]
    %v2866 = vld [vmem:[#allocation6 + $0x60] sm:$0xff]
    %v2867 = vld [vmem:[#allocation6 + $0x68] sm:$0xff]
    %v2868 = vld [vmem:[#allocation6 + $0x70] sm:$0xff]
    %v2869 = vld [vmem:[#allocation6 + $0x78] sm:$0xff]
    %v2870 = vld [vmem:[#allocation6 + $0x80] sm:$0xff]
    %v2871 = vld [vmem:[#allocation6 + $0x88] sm:$0xff]
    %v3160 = vunpack.c.l.b16 %v2566
    %v3161 = vunpack.c.l.b16 %v2567
    %v3162 = vunpack.c.l.b16 %v2568
    %v3163 = vunpack.c.l.b16 %v2569
    %v3164 = vunpack.c.l.b16 %v2570
    %v3165 = vunpack.c.l.b16 %v2571
    %v3166 = vunpack.c.l.b16 %v2572
    %v3167 = vunpack.c.l.b16 %v2573
    %v3168 = vunpack.c.l.b16 %v2574
    %v3169 = vunpack.c.l.b16 %v2575
    %v3170 = vunpack.c.l.b16 %v2576
    %v3171 = vunpack.c.l.b16 %v2577
    %v3172 = vunpack.c.l.b16 %v2578
    %v3173 = vunpack.c.l.b16 %v2579
    %v3174 = vunpack.c.l.b16 %v2580
    %v3175 = vunpack.c.l.b16 %v2581
    %v3176 = vunpack.c.l.b16 %v2582
    %v3177 = vunpack.c.l.b16 %v2583
    %v3178 = vunpack.c.l.b16 %v2584
    %v3179 = vunpack.c.l.b16 %v2585
    %v3180 = vunpack.c.l.b16 %v2586
    %v3181 = vunpack.c.l.b16 %v2587
    %v3182 = vunpack.c.l.b16 %v2588
    %v3183 = vunpack.c.l.b16 %v2589
    %v3184 = vunpack.c.l.b16 %v2590
    %v3185 = vunpack.c.l.b16 %v2591
    %v3186 = vunpack.c.l.b16 %v2592
    %v3187 = vunpack.c.l.b16 %v2593
    %v3188 = vunpack.c.l.b16 %v2594
    %v3189 = vunpack.c.l.b16 %v2595
    %v3190 = vunpack.c.l.b16 %v2596
    %v3191 = vunpack.c.l.b16 %v2597
    %v3192 = vunpack.c.l.b16 %v2598
    %v3193 = vunpack.c.l.b16 %v2599
    %v3194 = vunpack.c.l.b16 %v2600
    %v3195 = vunpack.c.l.b16 %v2601
    %v3196 = vunpack.c.l.b16 %v2602
    %v3197 = vunpack.c.l.b16 %v2603
    %v3198 = vunpack.c.l.b16 %v2604
    %v3199 = vunpack.c.l.b16 %v2605
    %v3200 = vunpack.c.l.b16 %v2606
    %v3201 = vunpack.c.l.b16 %v2607
    %v3202 = vunpack.c.l.b16 %v2608
    %v3203 = vunpack.c.l.b16 %v2609
    %v3204 = vunpack.c.l.b16 %v2610
    %v3205 = vunpack.c.l.b16 %v2611
    %v3206 = vunpack.c.l.b16 %v2612
    %v3207 = vunpack.c.l.b16 %v2613
    %v3208 = vunpack.c.l.b16 %v2614
    %v3209 = vunpack.c.l.b16 %v2615
    %v3210 = vunpack.c.l.b16 %v2616
    %v3211 = vunpack.c.l.b16 %v2617
    %v3212 = vunpack.c.l.b16 %v2618
    %v3213 = vunpack.c.l.b16 %v2619
    %v3214 = vunpack.c.l.b16 %v2620
    %v3215 = vunpack.c.l.b16 %v2621
    %v3216 = vunpack.c.l.b16 %v2622
    %v3217 = vunpack.c.l.b16 %v2623
    %v3218 = vunpack.c.l.b16 %v2624
    %v3219 = vunpack.c.l.b16 %v2625
    %v3220 = vunpack.c.l.b16 %v2626
    %v3221 = vunpack.c.l.b16 %v2627
    %v3222 = vunpack.c.l.b16 %v2628
    %v3223 = vunpack.c.l.b16 %v2629
    %v3224 = vunpack.c.l.b16 %v2630
    %v3225 = vunpack.c.l.b16 %v2631
    %v3226 = vunpack.c.l.b16 %v2632
    %v3227 = vunpack.c.l.b16 %v2633
    %v3228 = vunpack.c.l.b16 %v2634
    %v3229 = vunpack.c.l.b16 %v2635
    %v3230 = vunpack.c.l.b16 %v2636
    %v3231 = vunpack.c.l.b16 %v2637
    %v3232 = vunpack.c.l.b16 %v2638
    %v3233 = vunpack.c.l.b16 %v2639
    %v3234 = vunpack.c.l.b16 %v2640
    %v3235 = vunpack.c.l.b16 %v2641
    %v3236 = vunpack.c.l.b16 %v2642
    %v3237 = vunpack.c.l.b16 %v2643
    %v3238 = vunpack.c.l.b16 %v2644
    %v3239 = vunpack.c.l.b16 %v2645
    %v3240 = vunpack.c.l.b16 %v2646
    %v3241 = vunpack.c.l.b16 %v2647
    %v3242 = vunpack.c.l.b16 %v2648
    %v3243 = vunpack.c.l.b16 %v2649
    %v3244 = vunpack.c.l.b16 %v2650
    %v3245 = vunpack.c.l.b16 %v2651
    %v3246 = vunpack.c.l.b16 %v2652
    %v3247 = vunpack.c.l.b16 %v2653
    %v3248 = vunpack.c.l.b16 %v2654
    %v3249 = vunpack.c.l.b16 %v2655
    %v3250 = vunpack.c.l.b16 %v2656
    %v3251 = vunpack.c.l.b16 %v2657
    %v3252 = vunpack.c.l.b16 %v2658
    %v3253 = vunpack.c.l.b16 %v2659
    %v3254 = vunpack.c.l.b16 %v2660
    %v3255 = vunpack.c.l.b16 %v2661
    %v3256 = vunpack.c.l.b16 %v2662
    %v3257 = vunpack.c.l.b16 %v2663
    %v3258 = vunpack.c.l.b16 %v2664
    %v3259 = vunpack.c.l.b16 %v2665
    %v3260 = vunpack.c.l.b16 %v2666
    %v3261 = vunpack.c.l.b16 %v2667
    %v3262 = vunpack.c.l.b16 %v2668
    %v3263 = vunpack.c.l.b16 %v2669
    %v3264 = vunpack.c.l.b16 %v2670
    %v3265 = vunpack.c.l.b16 %v2671
    %v3266 = vunpack.c.l.b16 %v2672
    %v3267 = vunpack.c.l.b16 %v2673
    %v3268 = vunpack.c.l.b16 %v2674
    %v3269 = vunpack.c.l.b16 %v2675
    %v3270 = vunpack.c.l.b16 %v2676
    %v3271 = vunpack.c.l.b16 %v2677
    %v3272 = vunpack.c.l.b16 %v2678
    %v3273 = vunpack.c.l.b16 %v2679
    %v3274 = vunpack.c.l.b16 %v2680
    %v3275 = vunpack.c.l.b16 %v2681
    %v3276 = vunpack.c.l.b16 %v2682
    %v3277 = vunpack.c.l.b16 %v2683
    %v3278 = vunpack.c.l.b16 %v2684
    %v3279 = vunpack.c.l.b16 %v2685
    %v3280 = vunpack.c.l.b16 %v2686
    %v3281 = vunpack.c.l.b16 %v2687
    %v3282 = vunpack.c.l.b16 %v2688
    %v3283 = vunpack.c.l.b16 %v2689
    %v3284 = vunpack.c.l.b16 %v2690
    %v3285 = vunpack.c.l.b16 %v2691
    %v3286 = vunpack.c.l.b16 %v2692
    %v3287 = vunpack.c.l.b16 %v2693
    %v3288 = vunpack.c.l.b16 %v2694
    %v3289 = vunpack.c.l.b16 %v2695
    %v3290 = vunpack.c.l.b16 %v2696
    %v3291 = vunpack.c.l.b16 %v2697
    %v3292 = vunpack.c.l.b16 %v2698
    %v3293 = vunpack.c.l.b16 %v2699
    %v3294 = vunpack.c.l.b16 %v2700
    %v3295 = vunpack.c.l.b16 %v2701
    %v3296 = vunpack.c.l.b16 %v2702
    %v3297 = vunpack.c.l.b16 %v2703
    %v3298 = vunpack.c.l.b16 %v2704
    %v3299 = vunpack.c.l.b16 %v2705
    %v3300 = vunpack.c.l.b16 %v2706
    %v3301 = vunpack.c.l.b16 %v2707
    %v3302 = vunpack.c.l.b16 %v2708
    %v3303 = vunpack.c.l.b16 %v2709
    %v3304 = vunpack.c.l.b16 %v2710
    %v3305 = vunpack.c.l.b16 %v2711
    %v3306 = vunpack.c.l.b16 %v2712
    %v3307 = vunpack.c.l.b16 %v2713
    %v3308 = vunpack.c.l.b16 %v2714
    %v3309 = vunpack.c.l.b16 %v2715
    %v3310 = vunpack.c.l.b16 %v2716
    %v3311 = vunpack.c.l.b16 %v2717
    %v3312 = vunpack.c.l.b16 %v2718
    %v3313 = vunpack.c.l.b16 %v2719
    %v3314 = vunpack.c.l.b16 %v2720
    %v3315 = vunpack.c.l.b16 %v2721
    %v3316 = vunpack.c.l.b16 %v2722
    %v3317 = vunpack.c.l.b16 %v2723
    %v3318 = vunpack.c.l.b16 %v2724
    %v3319 = vunpack.c.l.b16 %v2725
    %v3320 = vunpack.c.l.b16 %v2726
    %v3321 = vunpack.c.l.b16 %v2727
    %v3322 = vunpack.c.l.b16 %v2728
    %v3323 = vunpack.c.l.b16 %v2729
    %v3324 = vunpack.c.l.b16 %v2730
    %v3325 = vunpack.c.l.b16 %v2731
    %v3326 = vunpack.c.l.b16 %v2732
    %v3327 = vunpack.c.l.b16 %v2733
    %v3328 = vunpack.c.l.b16 %v2734
    %v3329 = vunpack.c.l.b16 %v2735
    %v3330 = vunpack.c.l.b16 %v2736
    %v3331 = vunpack.c.l.b16 %v2737
    %v3332 = vunpack.c.l.b16 %v2738
    %v3333 = vunpack.c.l.b16 %v2739
    %v3334 = vunpack.c.l.b16 %v2740
    %v3335 = vunpack.c.l.b16 %v2741
    %v3336 = vunpack.c.l.b16 %v2742
    %v3337 = vunpack.c.l.b16 %v2743
    %v3338 = vunpack.c.l.b16 %v2744
    %v3339 = vunpack.c.l.b16 %v2745
    %v3340 = vunpack.c.l.b16 %v2746
    %v3341 = vunpack.c.l.b16 %v2747
    %v3342 = vunpack.c.l.b16 %v2748
    %v3343 = vunpack.c.l.b16 %v2749
    %v3344 = vunpack.c.l.b16 %v2750
    %v3345 = vunpack.c.l.b16 %v2751
    %v3346 = vunpack.c.l.b16 %v2752
    %v3347 = vunpack.c.l.b16 %v2753
    %v3348 = vunpack.c.l.b16 %v2754
    %v3349 = vunpack.c.l.b16 %v2755
    %v3350 = vunpack.c.l.b16 %v2756
    %v3351 = vunpack.c.l.b16 %v2757
    %v3352 = vunpack.c.l.b16 %v2758
    %v3353 = vunpack.c.l.b16 %v2759
    %v3354 = vunpack.c.l.b16 %v2760
    %v3355 = vunpack.c.l.b16 %v2761
    %v3356 = vunpack.c.l.b16 %v2762
    %v3357 = vunpack.c.l.b16 %v2763
    %v3358 = vunpack.c.l.b16 %v2764
    %v3359 = vunpack.c.l.b16 %v2765
    %v3360 = vunpack.c.l.b16 %v2766
    %v3361 = vunpack.c.l.b16 %v2767
    %v3362 = vunpack.c.l.b16 %v2768
    %v3363 = vunpack.c.l.b16 %v2769
    %v3364 = vunpack.c.l.b16 %v2770
    %v3365 = vunpack.c.l.b16 %v2771
    %v3366 = vunpack.c.l.b16 %v2772
    %v3367 = vunpack.c.l.b16 %v2773
    %v3368 = vunpack.c.l.b16 %v2774
    %v3369 = vunpack.c.l.b16 %v2775
    %v3370 = vunpack.c.l.b16 %v2776
    %v3371 = vunpack.c.l.b16 %v2777
    %v3372 = vunpack.c.l.b16 %v2778
    %v3373 = vunpack.c.l.b16 %v2779
    %v3374 = vunpack.c.l.b16 %v2780
    %v3375 = vunpack.c.l.b16 %v2781
    %v3376 = vunpack.c.l.b16 %v2782
    %v3377 = vunpack.c.l.b16 %v2783
    %v3378 = vunpack.c.l.b16 %v2784
    %v3379 = vunpack.c.l.b16 %v2785
    %v3380 = vunpack.c.l.b16 %v2786
    %v3381 = vunpack.c.l.b16 %v2787
    %v3382 = vunpack.c.l.b16 %v2788
    %v3383 = vunpack.c.l.b16 %v2789
    %v3384 = vunpack.c.l.b16 %v2790
    %v3385 = vunpack.c.l.b16 %v2791
    %v3386 = vunpack.c.l.b16 %v2792
    %v3387 = vunpack.c.l.b16 %v2793
    %v3388 = vunpack.c.l.b16 %v2794
    %v3389 = vunpack.c.l.b16 %v2795
    %v3390 = vunpack.c.l.b16 %v2796
    %v3391 = vunpack.c.l.b16 %v2797
    %v3392 = vunpack.c.l.b16 %v2798
    %v3393 = vunpack.c.l.b16 %v2799
    %v3394 = vunpack.c.l.b16 %v2800
    %v3395 = vunpack.c.l.b16 %v2801
    %v3396 = vunpack.c.l.b16 %v2802
    %v3397 = vunpack.c.l.b16 %v2803
    %v3398 = vunpack.c.l.b16 %v2804
    %v3399 = vunpack.c.l.b16 %v2805
    %v3400 = vunpack.c.l.b16 %v2806
    %v3401 = vunpack.c.l.b16 %v2807
    %v3402 = vunpack.c.l.b16 %v2808
    %v3403 = vunpack.c.l.b16 %v2809
    %v3404 = vunpack.c.l.b16 %v2810
    %v3405 = vunpack.c.l.b16 %v2811
    %v3406 = vunpack.c.l.b16 %v2812
    %v3407 = vunpack.c.l.b16 %v2813
    %v3408 = vunpack.c.l.b16 %v2814
    %v3409 = vunpack.c.l.b16 %v2815
    %v3410 = vunpack.c.l.b16 %v2816
    %v3411 = vunpack.c.l.b16 %v2817
    %v3412 = vunpack.c.l.b16 %v2818
    %v3413 = vunpack.c.l.b16 %v2819
    %v3414 = vunpack.c.l.b16 %v2820
    %v3415 = vunpack.c.l.b16 %v2821
    %v3416 = vunpack.c.l.b16 %v2822
    %v3417 = vunpack.c.l.b16 %v2823
    %v3418 = vunpack.c.l.b16 %v2824
    %v3419 = vunpack.c.l.b16 %v2825
    %v3420 = vunpack.c.l.b16 %v2826
    %v3421 = vunpack.c.l.b16 %v2827
    %v3422 = vunpack.c.l.b16 %v2828
    %v3423 = vunpack.c.l.b16 %v2829
    %v3424 = vunpack.c.l.b16 %v2830
    %v3425 = vunpack.c.l.b16 %v2831
    %v3426 = vunpack.c.l.b16 %v2832
    %v3427 = vunpack.c.l.b16 %v2833
    %v3428 = vunpack.c.l.b16 %v2834
    %v3429 = vunpack.c.l.b16 %v2835
    %v3430 = vunpack.c.l.b16 %v2836
    %v3431 = vunpack.c.l.b16 %v2837
    %v3432 = vunpack.c.l.b16 %v2838
    %v3433 = vunpack.c.l.b16 %v2839
    %v3434 = vunpack.c.l.b16 %v2840
    %v3435 = vunpack.c.l.b16 %v2841
    %v3436 = vunpack.c.l.b16 %v2842
    %v3437 = vunpack.c.l.b16 %v2843
    %v3438 = vunpack.c.l.b16 %v2844
    %v3439 = vunpack.c.l.b16 %v2845
    %v3440 = vunpack.c.l.b16 %v2846
    %v3441 = vunpack.c.l.b16 %v2847
    %v3442 = vunpack.c.l.b16 %v2848
    %v3443 = vunpack.c.l.b16 %v2849
    %v3444 = vunpack.c.l.b16 %v2850
    %v3445 = vunpack.c.l.b16 %v2851
    %v3446 = vunpack.c.l.b16 %v2852
    %v3447 = vunpack.c.l.b16 %v2853
    %v3448 = vpack.c.b16 %v3161, %v3160
    %v3449 = vpack.c.b16 %v3163, %v3162
    %v3450 = vpack.c.b16 %v3165, %v3164
    %v3451 = vpack.c.b16 %v3167, %v3166
    %v3452 = vpack.c.b16 %v3169, %v3168
    %v3453 = vpack.c.b16 %v3171, %v3170
    %v3454 = vpack.c.b16 %v3173, %v3172
    %v3455 = vpack.c.b16 %v3175, %v3174
    %v3456 = vpack.c.b16 %v3177, %v3176
    %v3457 = vpack.c.b16 %v3179, %v3178
    %v3458 = vpack.c.b16 %v3181, %v3180
    %v3459 = vpack.c.b16 %v3183, %v3182
    %v3460 = vpack.c.b16 %v3185, %v3184
    %v3461 = vpack.c.b16 %v3187, %v3186
    %v3462 = vpack.c.b16 %v3189, %v3188
    %v3463 = vpack.c.b16 %v3191, %v3190
    %v3464 = vpack.c.b16 %v3193, %v3192
    %v3465 = vpack.c.b16 %v3195, %v3194
    %v3466 = vpack.c.b16 %v3197, %v3196
    %v3467 = vpack.c.b16 %v3199, %v3198
    %v3468 = vpack.c.b16 %v3201, %v3200
    %v3469 = vpack.c.b16 %v3203, %v3202
    %v3470 = vpack.c.b16 %v3205, %v3204
    %v3471 = vpack.c.b16 %v3207, %v3206
    %v3472 = vpack.c.b16 %v3209, %v3208
    %v3473 = vpack.c.b16 %v3211, %v3210
    %v3474 = vpack.c.b16 %v3213, %v3212
    %v3475 = vpack.c.b16 %v3215, %v3214
    %v3476 = vpack.c.b16 %v3217, %v3216
    %v3477 = vpack.c.b16 %v3219, %v3218
    %v3478 = vpack.c.b16 %v3221, %v3220
    %v3479 = vpack.c.b16 %v3223, %v3222
    %v3480 = vpack.c.b16 %v3225, %v3224
    %v3481 = vpack.c.b16 %v3227, %v3226
    %v3482 = vpack.c.b16 %v3229, %v3228
    %v3483 = vpack.c.b16 %v3231, %v3230
    %v3484 = vpack.c.b16 %v3233, %v3232
    %v3485 = vpack.c.b16 %v3235, %v3234
    %v3486 = vpack.c.b16 %v3237, %v3236
    %v3487 = vpack.c.b16 %v3239, %v3238
    %v3488 = vpack.c.b16 %v3241, %v3240
    %v3489 = vpack.c.b16 %v3243, %v3242
    %v3490 = vpack.c.b16 %v3245, %v3244
    %v3491 = vpack.c.b16 %v3247, %v3246
    %v3492 = vpack.c.b16 %v3249, %v3248
    %v3493 = vpack.c.b16 %v3251, %v3250
    %v3494 = vpack.c.b16 %v3253, %v3252
    %v3495 = vpack.c.b16 %v3255, %v3254
    %v3496 = vpack.c.b16 %v3257, %v3256
    %v3497 = vpack.c.b16 %v3259, %v3258
    %v3498 = vpack.c.b16 %v3261, %v3260
    %v3499 = vpack.c.b16 %v3263, %v3262
    %v3500 = vpack.c.b16 %v3265, %v3264
    %v3501 = vpack.c.b16 %v3267, %v3266
    %v3502 = vpack.c.b16 %v3269, %v3268
    %v3503 = vpack.c.b16 %v3271, %v3270
    %v3504 = vpack.c.b16 %v3273, %v3272
    %v3505 = vpack.c.b16 %v3275, %v3274
    %v3506 = vpack.c.b16 %v3277, %v3276
    %v3507 = vpack.c.b16 %v3279, %v3278
    %v3508 = vpack.c.b16 %v3281, %v3280
    %v3509 = vpack.c.b16 %v3283, %v3282
    %v3510 = vpack.c.b16 %v3285, %v3284
    %v3511 = vpack.c.b16 %v3287, %v3286
    %v3512 = vpack.c.b16 %v3289, %v3288
    %v3513 = vpack.c.b16 %v3291, %v3290
    %v3514 = vpack.c.b16 %v3293, %v3292
    %v3515 = vpack.c.b16 %v3295, %v3294
    %v3516 = vpack.c.b16 %v3297, %v3296
    %v3517 = vpack.c.b16 %v3299, %v3298
    %v3518 = vpack.c.b16 %v3301, %v3300
    %v3519 = vpack.c.b16 %v3303, %v3302
    %v3520 = vpack.c.b16 %v3305, %v3304
    %v3521 = vpack.c.b16 %v3307, %v3306
    %v3522 = vpack.c.b16 %v3309, %v3308
    %v3523 = vpack.c.b16 %v3311, %v3310
    %v3524 = vpack.c.b16 %v3313, %v3312
    %v3525 = vpack.c.b16 %v3315, %v3314
    %v3526 = vpack.c.b16 %v3317, %v3316
    %v3527 = vpack.c.b16 %v3319, %v3318
    %v3528 = vpack.c.b16 %v3321, %v3320
    %v3529 = vpack.c.b16 %v3323, %v3322
    %v3530 = vpack.c.b16 %v3325, %v3324
    %v3531 = vpack.c.b16 %v3327, %v3326
    %v3532 = vpack.c.b16 %v3329, %v3328
    %v3533 = vpack.c.b16 %v3331, %v3330
    %v3534 = vpack.c.b16 %v3333, %v3332
    %v3535 = vpack.c.b16 %v3335, %v3334
    %v3536 = vpack.c.b16 %v3337, %v3336
    %v3537 = vpack.c.b16 %v3339, %v3338
    %v3538 = vpack.c.b16 %v3341, %v3340
    %v3539 = vpack.c.b16 %v3343, %v3342
    %v3540 = vpack.c.b16 %v3345, %v3344
    %v3541 = vpack.c.b16 %v3347, %v3346
    %v3542 = vpack.c.b16 %v3349, %v3348
    %v3543 = vpack.c.b16 %v3351, %v3350
    %v3544 = vpack.c.b16 %v3353, %v3352
    %v3545 = vpack.c.b16 %v3355, %v3354
    %v3546 = vpack.c.b16 %v3357, %v3356
    %v3547 = vpack.c.b16 %v3359, %v3358
    %v3548 = vpack.c.b16 %v3361, %v3360
    %v3549 = vpack.c.b16 %v3363, %v3362
    %v3550 = vpack.c.b16 %v3365, %v3364
    %v3551 = vpack.c.b16 %v3367, %v3366
    %v3552 = vpack.c.b16 %v3369, %v3368
    %v3553 = vpack.c.b16 %v3371, %v3370
    %v3554 = vpack.c.b16 %v3373, %v3372
    %v3555 = vpack.c.b16 %v3375, %v3374
    %v3556 = vpack.c.b16 %v3377, %v3376
    %v3557 = vpack.c.b16 %v3379, %v3378
    %v3558 = vpack.c.b16 %v3381, %v3380
    %v3559 = vpack.c.b16 %v3383, %v3382
    %v3560 = vpack.c.b16 %v3385, %v3384
    %v3561 = vpack.c.b16 %v3387, %v3386
    %v3562 = vpack.c.b16 %v3389, %v3388
    %v3563 = vpack.c.b16 %v3391, %v3390
    %v3564 = vpack.c.b16 %v3393, %v3392
    %v3565 = vpack.c.b16 %v3395, %v3394
    %v3566 = vpack.c.b16 %v3397, %v3396
    %v3567 = vpack.c.b16 %v3399, %v3398
    %v3568 = vpack.c.b16 %v3401, %v3400
    %v3569 = vpack.c.b16 %v3403, %v3402
    %v3570 = vpack.c.b16 %v3405, %v3404
    %v3571 = vpack.c.b16 %v3407, %v3406
    %v3572 = vpack.c.b16 %v3409, %v3408
    %v3573 = vpack.c.b16 %v3411, %v3410
    %v3574 = vpack.c.b16 %v3413, %v3412
    %v3575 = vpack.c.b16 %v3415, %v3414
    %v3576 = vpack.c.b16 %v3417, %v3416
    %v3577 = vpack.c.b16 %v3419, %v3418
    %v3578 = vpack.c.b16 %v3421, %v3420
    %v3579 = vpack.c.b16 %v3423, %v3422
    %v3580 = vpack.c.b16 %v3425, %v3424
    %v3581 = vpack.c.b16 %v3427, %v3426
    %v3582 = vpack.c.b16 %v3429, %v3428
    %v3583 = vpack.c.b16 %v3431, %v3430
    %v3584 = vpack.c.b16 %v3433, %v3432
    %v3585 = vpack.c.b16 %v3435, %v3434
    %v3586 = vpack.c.b16 %v3437, %v3436
    %v3587 = vpack.c.b16 %v3439, %v3438
    %v3588 = vpack.c.b16 %v3441, %v3440
    %v3589 = vpack.c.b16 %v3443, %v3442
    %v3590 = vpack.c.b16 %v3445, %v3444
    %v3591 = vpack.c.b16 %v3447, %v3446
    %3736 = vmatprep.subr.bf16.mxu0 0
    %3737 = vmatpush1.bf16.msra.mxu0 %v3448
    %3738 = vmatprep.subr.bf16.mxu0 0
    %3739 = vmatpush1.bf16.msra.mxu0 %v3449
    %3740 = vmatprep.subr.bf16.mxu0 0
    %3741 = vmatpush1.bf16.msra.mxu0 %v3450
    %3742 = vmatprep.subr.bf16.mxu0 0
    %3743 = vmatpush1.bf16.msra.mxu0 %v3451
    %3744 = vmatprep.subr.bf16.mxu0 0
    %3745 = vmatpush1.bf16.msra.mxu0 %v3452
    %3746 = vmatprep.subr.bf16.mxu0 0
    %3747 = vmatpush1.bf16.msra.mxu0 %v3453
    %3748 = vmatprep.subr.bf16.mxu0 0
    %3749 = vmatpush1.bf16.msra.mxu0 %v3454
    %3750 = vmatprep.subr.bf16.mxu0 0
    %3751 = vmatpush1.bf16.msra.mxu0 %v3455
    %3752 = vmatprep.subr.bf16.mxu0 0
    %3753 = vmatpush1.bf16.msra.mxu0 %v3456
    %3754 = vmatprep.subr.bf16.mxu0 0
    %3755 = vmatpush1.bf16.msra.mxu0 %v3457
    %3756 = vmatprep.subr.bf16.mxu0 0
    %3757 = vmatpush1.bf16.msra.mxu0 %v3458
    %3758 = vmatprep.subr.bf16.mxu0 0
    %3759 = vmatpush1.bf16.msra.mxu0 %v3459
    %3760 = vmatprep.subr.bf16.mxu0 0
    %3761 = vmatpush1.bf16.msra.mxu0 %v3460
    %3762 = vmatprep.subr.bf16.mxu0 0
    %3763 = vmatpush1.bf16.msra.mxu0 %v3461
    %3764 = vmatprep.subr.bf16.mxu0 0
    %3765 = vmatpush1.bf16.msra.mxu0 %v3462
    %3766 = vmatprep.subr.bf16.mxu0 0
    %3767 = vmatpush1.bf16.msra.mxu0 %v3463
    %3768 = vmatprep.mubr.bf16.mxu0 %v2855
    %3769 = vmatmul.mubr.bf16.gmra.mrb[0].mxu0 %v2854
    %v3770 = vpop.f32.mrb[0].mxu0
    %v3771 = vadd.f32 0.0, %v3770
    %v3772 = vpop.f32.mrb[0].mxu0
    %v3773 = vpop.f32.mrb[0].mxu0
    %v3774 = vadd.f32 0.0, %v3773
    %v3775 = vpop.f32.mrb[0].mxu0
    %3776 = vdwg.mxu0
    %3777 = vmatprep.subr.bf16.mxu0 0
    %3778 = vmatpush1.bf16.msra.mxu0 %v3464
    %3779 = vmatprep.subr.bf16.mxu0 0
    %3780 = vmatpush1.bf16.msra.mxu0 %v3465
    %3781 = vmatprep.subr.bf16.mxu0 0
    %3782 = vmatpush1.bf16.msra.mxu0 %v3466
    %3783 = vmatprep.subr.bf16.mxu0 0
    %3784 = vmatpush1.bf16.msra.mxu0 %v3467
    %3785 = vmatprep.subr.bf16.mxu0 0
    %3786 = vmatpush1.bf16.msra.mxu0 %v3468
    %3787 = vmatprep.subr.bf16.mxu0 0
    %3788 = vmatpush1.bf16.msra.mxu0 %v3469
    %3789 = vmatprep.subr.bf16.mxu0 0
    %3790 = vmatpush1.bf16.msra.mxu0 %v3470
    %3791 = vmatprep.subr.bf16.mxu0 0
    %3792 = vmatpush1.bf16.msra.mxu0 %v3471
    %3793 = vmatprep.subr.bf16.mxu0 0
    %3794 = vmatpush1.bf16.msra.mxu0 %v3472
    %3795 = vmatprep.subr.bf16.mxu0 0
    %3796 = vmatpush1.bf16.msra.mxu0 %v3473
    %3797 = vmatprep.subr.bf16.mxu0 0
    %3798 = vmatpush1.bf16.msra.mxu0 %v3474
    %3799 = vmatprep.subr.bf16.mxu0 0
    %3800 = vmatpush1.bf16.msra.mxu0 %v3475
    %3801 = vmatprep.subr.bf16.mxu0 0
    %3802 = vmatpush1.bf16.msra.mxu0 %v3476
    %3803 = vmatprep.subr.bf16.mxu0 0
    %3804 = vmatpush1.bf16.msra.mxu0 %v3477
    %3805 = vmatprep.subr.bf16.mxu0 0
    %3806 = vmatpush1.bf16.msra.mxu0 %v3478
    %3807 = vmatprep.subr.bf16.mxu0 0
    %3808 = vmatpush1.bf16.msra.mxu0 %v3479
    %3809 = vmatprep.mubr.bf16.mxu0 %v2857
    %3810 = vmatmul.mubr.bf16.gmra.mrb[0].mxu0 %v2856
    %v3811 = vpop.f32.mrb[0].mxu0
    %v3812 = vadd.f32 %v3771, %v3811
    %v3813 = vpop.f32.mrb[0].mxu0
    %v3814 = vpop.f32.mrb[0].mxu0
    %v3815 = vadd.f32 %v3774, %v3814
    %v3816 = vpop.f32.mrb[0].mxu0
    %3817 = vdwg.mxu0
    %3818 = vmatprep.subr.bf16.mxu0 0
    %3819 = vmatpush1.bf16.msra.mxu0 %v3480
    %3820 = vmatprep.subr.bf16.mxu0 0
    %3821 = vmatpush1.bf16.msra.mxu0 %v3481
    %3822 = vmatprep.subr.bf16.mxu0 0
    %3823 = vmatpush1.bf16.msra.mxu0 %v3482
    %3824 = vmatprep.subr.bf16.mxu0 0
    %3825 = vmatpush1.bf16.msra.mxu0 %v3483
    %3826 = vmatprep.subr.bf16.mxu0 0
    %3827 = vmatpush1.bf16.msra.mxu0 %v3484
    %3828 = vmatprep.subr.bf16.mxu0 0
    %3829 = vmatpush1.bf16.msra.mxu0 %v3485
    %3830 = vmatprep.subr.bf16.mxu0 0
    %3831 = vmatpush1.bf16.msra.mxu0 %v3486
    %3832 = vmatprep.subr.bf16.mxu0 0
    %3833 = vmatpush1.bf16.msra.mxu0 %v3487
    %3834 = vmatprep.subr.bf16.mxu0 0
    %3835 = vmatpush1.bf16.msra.mxu0 %v3488
    %3836 = vmatprep.subr.bf16.mxu0 0
    %3837 = vmatpush1.bf16.msra.mxu0 %v3489
    %3838 = vmatprep.subr.bf16.mxu0 0
    %3839 = vmatpush1.bf16.msra.mxu0 %v3490
    %3840 = vmatprep.subr.bf16.mxu0 0
    %3841 = vmatpush1.bf16.msra.mxu0 %v3491
    %3842 = vmatprep.subr.bf16.mxu0 0
    %3843 = vmatpush1.bf16.msra.mxu0 %v3492
    %3844 = vmatprep.subr.bf16.mxu0 0
    %3845 = vmatpush1.bf16.msra.mxu0 %v3493
    %3846 = vmatprep.subr.bf16.mxu0 0
    %3847 = vmatpush1.bf16.msra.mxu0 %v3494
    %3848 = vmatprep.subr.bf16.mxu0 0
    %3849 = vmatpush1.bf16.msra.mxu0 %v3495
    %3850 = vmatprep.mubr.bf16.mxu0 %v2859
    %3851 = vmatmul.mubr.bf16.gmra.mrb[0].mxu0 %v2858
    %v3852 = vpop.f32.mrb[0].mxu0
    %v3853 = vadd.f32 %v3812, %v3852
    %v3854 = vpop.f32.mrb[0].mxu0
    %v3855 = vpop.f32.mrb[0].mxu0
    %v3856 = vadd.f32 %v3815, %v3855
    %v3857 = vpop.f32.mrb[0].mxu0
    %3858 = vdwg.mxu0
    %3859 = vmatprep.subr.bf16.mxu0 0
    %3860 = vmatpush1.bf16.msra.mxu0 %v3496
    %3861 = vmatprep.subr.bf16.mxu0 0
    %3862 = vmatpush1.bf16.msra.mxu0 %v3497
    %3863 = vmatprep.subr.bf16.mxu0 0
    %3864 = vmatpush1.bf16.msra.mxu0 %v3498
    %3865 = vmatprep.subr.bf16.mxu0 0
    %3866 = vmatpush1.bf16.msra.mxu0 %v3499
    %3867 = vmatprep.subr.bf16.mxu0 0
    %3868 = vmatpush1.bf16.msra.mxu0 %v3500
    %3869 = vmatprep.subr.bf16.mxu0 0
    %3870 = vmatpush1.bf16.msra.mxu0 %v3501
    %3871 = vmatprep.subr.bf16.mxu0 0
    %3872 = vmatpush1.bf16.msra.mxu0 %v3502
    %3873 = vmatprep.subr.bf16.mxu0 0
    %3874 = vmatpush1.bf16.msra.mxu0 %v3503
    %3875 = vmatprep.subr.bf16.mxu0 0
    %3876 = vmatpush1.bf16.msra.mxu0 %v3504
    %3877 = vmatprep.subr.bf16.mxu0 0
    %3878 = vmatpush1.bf16.msra.mxu0 %v3505
    %3879 = vmatprep.subr.bf16.mxu0 0
    %3880 = vmatpush1.bf16.msra.mxu0 %v3506
    %3881 = vmatprep.subr.bf16.mxu0 0
    %3882 = vmatpush1.bf16.msra.mxu0 %v3507
    %3883 = vmatprep.subr.bf16.mxu0 0
    %3884 = vmatpush1.bf16.msra.mxu0 %v3508
    %3885 = vmatprep.subr.bf16.mxu0 0
    %3886 = vmatpush1.bf16.msra.mxu0 %v3509
    %3887 = vmatprep.subr.bf16.mxu0 0
    %3888 = vmatpush1.bf16.msra.mxu0 %v3510
    %3889 = vmatprep.subr.bf16.mxu0 0
    %3890 = vmatpush1.bf16.msra.mxu0 %v3511
    %3891 = vmatprep.mubr.bf16.mxu0 %v2861
    %3892 = vmatmul.mubr.bf16.gmra.mrb[0].mxu0 %v2860
    %v3893 = vpop.f32.mrb[0].mxu0
    %v3894 = vadd.f32 %v3853, %v3893
    %v3895 = vpop.f32.mrb[0].mxu0
    %v3896 = vpop.f32.mrb[0].mxu0
    %v3897 = vadd.f32 %v3856, %v3896
    %v3898 = vpop.f32.mrb[0].mxu0
    %3899 = vdwg.mxu0
    %3900 = vmatprep.subr.bf16.mxu0 0
    %3901 = vmatpush1.bf16.msra.mxu0 %v3512
    %3902 = vmatprep.subr.bf16.mxu0 0
    %3903 = vmatpush1.bf16.msra.mxu0 %v3513
    %3904 = vmatprep.subr.bf16.mxu0 0
    %3905 = vmatpush1.bf16.msra.mxu0 %v3514
    %3906 = vmatprep.subr.bf16.mxu0 0
    %3907 = vmatpush1.bf16.msra.mxu0 %v3515
    %3908 = vmatprep.subr.bf16.mxu0 0
    %3909 = vmatpush1.bf16.msra.mxu0 %v3516
    %3910 = vmatprep.subr.bf16.mxu0 0
    %3911 = vmatpush1.bf16.msra.mxu0 %v3517
    %3912 = vmatprep.subr.bf16.mxu0 0
    %3913 = vmatpush1.bf16.msra.mxu0 %v3518
    %3914 = vmatprep.subr.bf16.mxu0 0
    %3915 = vmatpush1.bf16.msra.mxu0 %v3519
    %3916 = vmatprep.subr.bf16.mxu0 0
    %3917 = vmatpush1.bf16.msra.mxu0 %v3520
    %3918 = vmatprep.subr.bf16.mxu0 0
    %3919 = vmatpush1.bf16.msra.mxu0 %v3521
    %3920 = vmatprep.subr.bf16.mxu0 0
    %3921 = vmatpush1.bf16.msra.mxu0 %v3522
    %3922 = vmatprep.subr.bf16.mxu0 0
    %3923 = vmatpush1.bf16.msra.mxu0 %v3523
    %3924 = vmatprep.subr.bf16.mxu0 0
    %3925 = vmatpush1.bf16.msra.mxu0 %v3524
    %3926 = vmatprep.subr.bf16.mxu0 0
    %3927 = vmatpush1.bf16.msra.mxu0 %v3525
    %3928 = vmatprep.subr.bf16.mxu0 0
    %3929 = vmatpush1.bf16.msra.mxu0 %v3526
    %3930 = vmatprep.subr.bf16.mxu0 0
    %3931 = vmatpush1.bf16.msra.mxu0 %v3527
    %3932 = vmatprep.mubr.bf16.mxu0 %v2863
    %3933 = vmatmul.mubr.bf16.gmra.mrb[0].mxu0 %v2862
    %v3934 = vpop.f32.mrb[0].mxu0
    %v3935 = vadd.f32 %v3894, %v3934
    %v3936 = vpop.f32.mrb[0].mxu0
    %v3937 = vpop.f32.mrb[0].mxu0
    %v3938 = vadd.f32 %v3897, %v3937
    %v3939 = vpop.f32.mrb[0].mxu0
    %3940 = vdwg.mxu0
    %3941 = vmatprep.subr.bf16.mxu0 0
    %3942 = vmatpush1.bf16.msra.mxu0 %v3528
    %3943 = vmatprep.subr.bf16.mxu0 0
    %3944 = vmatpush1.bf16.msra.mxu0 %v3529
    %3945 = vmatprep.subr.bf16.mxu0 0
    %3946 = vmatpush1.bf16.msra.mxu0 %v3530
    %3947 = vmatprep.subr.bf16.mxu0 0
    %3948 = vmatpush1.bf16.msra.mxu0 %v3531
    %3949 = vmatprep.subr.bf16.mxu0 0
    %3950 = vmatpush1.bf16.msra.mxu0 %v3532
    %3951 = vmatprep.subr.bf16.mxu0 0
    %3952 = vmatpush1.bf16.msra.mxu0 %v3533
    %3953 = vmatprep.subr.bf16.mxu0 0
    %3954 = vmatpush1.bf16.msra.mxu0 %v3534
    %3955 = vmatprep.subr.bf16.mxu0 0
    %3956 = vmatpush1.bf16.msra.mxu0 %v3535
    %3957 = vmatprep.subr.bf16.mxu0 0
    %3958 = vmatpush1.bf16.msra.mxu0 %v3536
    %3959 = vmatprep.subr.bf16.mxu0 0
    %3960 = vmatpush1.bf16.msra.mxu0 %v3537
    %3961 = vmatprep.subr.bf16.mxu0 0
    %3962 = vmatpush1.bf16.msra.mxu0 %v3538
    %3963 = vmatprep.subr.bf16.mxu0 0
    %3964 = vmatpush1.bf16.msra.mxu0 %v3539
    %3965 = vmatprep.subr.bf16.mxu0 0
    %3966 = vmatpush1.bf16.msra.mxu0 %v3540
    %3967 = vmatprep.subr.bf16.mxu0 0
    %3968 = vmatpush1.bf16.msra.mxu0 %v3541
    %3969 = vmatprep.subr.bf16.mxu0 0
    %3970 = vmatpush1.bf16.msra.mxu0 %v3542
    %3971 = vmatprep.subr.bf16.mxu0 0
    %3972 = vmatpush1.bf16.msra.mxu0 %v3543
    %3973 = vmatprep.mubr.bf16.mxu0 %v2865
    %3974 = vmatmul.mubr.bf16.gmra.mrb[0].mxu0 %v2864
    %v3975 = vpop.f32.mrb[0].mxu0
    %v3976 = vadd.f32 %v3935, %v3975
    %v3977 = vpop.f32.mrb[0].mxu0
    %v3978 = vpop.f32.mrb[0].mxu0
    %v3979 = vadd.f32 %v3938, %v3978
    %v3980 = vpop.f32.mrb[0].mxu0
    %3981 = vdwg.mxu0
    %3982 = vmatprep.subr.bf16.mxu0 0
    %3983 = vmatpush1.bf16.msra.mxu0 %v3544
    %3984 = vmatprep.subr.bf16.mxu0 0
    %3985 = vmatpush1.bf16.msra.mxu0 %v3545
    %3986 = vmatprep.subr.bf16.mxu0 0
    %3987 = vmatpush1.bf16.msra.mxu0 %v3546
    %3988 = vmatprep.subr.bf16.mxu0 0
    %3989 = vmatpush1.bf16.msra.mxu0 %v3547
    %3990 = vmatprep.subr.bf16.mxu0 0
    %3991 = vmatpush1.bf16.msra.mxu0 %v3548
    %3992 = vmatprep.subr.bf16.mxu0 0
    %3993 = vmatpush1.bf16.msra.mxu0 %v3549
    %3994 = vmatprep.subr.bf16.mxu0 0
    %3995 = vmatpush1.bf16.msra.mxu0 %v3550
    %3996 = vmatprep.subr.bf16.mxu0 0
    %3997 = vmatpush1.bf16.msra.mxu0 %v3551
    %3998 = vmatprep.subr.bf16.mxu0 0
    %3999 = vmatpush1.bf16.msra.mxu0 %v3552
    %4000 = vmatprep.subr.bf16.mxu0 0
    %4001 = vmatpush1.bf16.msra.mxu0 %v3553
    %4002 = vmatprep.subr.bf16.mxu0 0
    %4003 = vmatpush1.bf16.msra.mxu0 %v3554
    %4004 = vmatprep.subr.bf16.mxu0 0
    %4005 = vmatpush1.bf16.msra.mxu0 %v3555
    %4006 = vmatprep.subr.bf16.mxu0 0
    %4007 = vmatpush1.bf16.msra.mxu0 %v3556
    %4008 = vmatprep.subr.bf16.mxu0 0
    %4009 = vmatpush1.bf16.msra.mxu0 %v3557
    %4010 = vmatprep.subr.bf16.mxu0 0
    %4011 = vmatpush1.bf16.msra.mxu0 %v3558
    %4012 = vmatprep.subr.bf16.mxu0 0
    %4013 = vmatpush1.bf16.msra.mxu0 %v3559
    %4014 = vmatprep.mubr.bf16.mxu0 %v2867
    %4015 = vmatmul.mubr.bf16.gmra.mrb[0].mxu0 %v2866
    %v4016 = vpop.f32.mrb[0].mxu0
    %v4017 = vadd.f32 %v3976, %v4016
    %v4018 = vpop.f32.mrb[0].mxu0
    %v4019 = vpop.f32.mrb[0].mxu0
    %v4020 = vadd.f32 %v3979, %v4019
    %v4021 = vpop.f32.mrb[0].mxu0
    %4022 = vdwg.mxu0
    %4023 = vmatprep.subr.bf16.mxu0 0
    %4024 = vmatpush1.bf16.msra.mxu0 %v3560
    %4025 = vmatprep.subr.bf16.mxu0 0
    %4026 = vmatpush1.bf16.msra.mxu0 %v3561
    %4027 = vmatprep.subr.bf16.mxu0 0
    %4028 = vmatpush1.bf16.msra.mxu0 %v3562
    %4029 = vmatprep.subr.bf16.mxu0 0
    %4030 = vmatpush1.bf16.msra.mxu0 %v3563
    %4031 = vmatprep.subr.bf16.mxu0 0
    %4032 = vmatpush1.bf16.msra.mxu0 %v3564
    %4033 = vmatprep.subr.bf16.mxu0 0
    %4034 = vmatpush1.bf16.msra.mxu0 %v3565
    %4035 = vmatprep.subr.bf16.mxu0 0
    %4036 = vmatpush1.bf16.msra.mxu0 %v3566
    %4037 = vmatprep.subr.bf16.mxu0 0
    %4038 = vmatpush1.bf16.msra.mxu0 %v3567
    %4039 = vmatprep.subr.bf16.mxu0 0
    %4040 = vmatpush1.bf16.msra.mxu0 %v3568
    %4041 = vmatprep.subr.bf16.mxu0 0
    %4042 = vmatpush1.bf16.msra.mxu0 %v3569
    %4043 = vmatprep.subr.bf16.mxu0 0
    %4044 = vmatpush1.bf16.msra.mxu0 %v3570
    %4045 = vmatprep.subr.bf16.mxu0 0
    %4046 = vmatpush1.bf16.msra.mxu0 %v3571
    %4047 = vmatprep.subr.bf16.mxu0 0
    %4048 = vmatpush1.bf16.msra.mxu0 %v3572
    %4049 = vmatprep.subr.bf16.mxu0 0
    %4050 = vmatpush1.bf16.msra.mxu0 %v3573
    %4051 = vmatprep.subr.bf16.mxu0 0
    %4052 = vmatpush1.bf16.msra.mxu0 %v3574
    %4053 = vmatprep.subr.bf16.mxu0 0
    %4054 = vmatpush1.bf16.msra.mxu0 %v3575
    %4055 = vmatprep.mubr.bf16.mxu0 %v2869
    %4056 = vmatmul.mubr.bf16.gmra.mrb[0].mxu0 %v2868
    %v4057 = vpop.f32.mrb[0].mxu0
    %v4058 = vadd.f32 %v4017, %v4057
    %v4059 = vpop.f32.mrb[0].mxu0
    %v4060 = vpop.f32.mrb[0].mxu0
    %v4061 = vadd.f32 %v4020, %v4060
    %v4062 = vpop.f32.mrb[0].mxu0
    %4063 = vdwg.mxu0
    %4064 = vmatprep.subr.bf16.mxu0 0
    %4065 = vmatpush1.bf16.msra.mxu0 %v3576
    %4066 = vmatprep.subr.bf16.mxu0 0
    %4067 = vmatpush1.bf16.msra.mxu0 %v3577
    %4068 = vmatprep.subr.bf16.mxu0 0
    %4069 = vmatpush1.bf16.msra.mxu0 %v3578
    %4070 = vmatprep.subr.bf16.mxu0 0
    %4071 = vmatpush1.bf16.msra.mxu0 %v3579
    %4072 = vmatprep.subr.bf16.mxu0 0
    %4073 = vmatpush1.bf16.msra.mxu0 %v3580
    %4074 = vmatprep.subr.bf16.mxu0 0
    %4075 = vmatpush1.bf16.msra.mxu0 %v3581
    %4076 = vmatprep.subr.bf16.mxu0 0
    %4077 = vmatpush1.bf16.msra.mxu0 %v3582
    %4078 = vmatprep.subr.bf16.mxu0 0
    %4079 = vmatpush1.bf16.msra.mxu0 %v3583
    %4080 = vmatprep.subr.bf16.mxu0 0
    %4081 = vmatpush1.bf16.msra.mxu0 %v3584
    %4082 = vmatprep.subr.bf16.mxu0 0
    %4083 = vmatpush1.bf16.msra.mxu0 %v3585
    %4084 = vmatprep.subr.bf16.mxu0 0
    %4085 = vmatpush1.bf16.msra.mxu0 %v3586
    %4086 = vmatprep.subr.bf16.mxu0 0
    %4087 = vmatpush1.bf16.msra.mxu0 %v3587
    %4088 = vmatprep.subr.bf16.mxu0 0
    %4089 = vmatpush1.bf16.msra.mxu0 %v3588
    %4090 = vmatprep.subr.bf16.mxu0 0
    %4091 = vmatpush1.bf16.msra.mxu0 %v3589
    %4092 = vmatprep.subr.bf16.mxu0 0
    %4093 = vmatpush1.bf16.msra.mxu0 %v3590
    %4094 = vmatprep.subr.bf16.mxu0 0
    %4095 = vmatpush1.bf16.msra.mxu0 %v3591
    %4096 = vmatprep.mubr.bf16.mxu0 %v2871
    %4097 = vmatmul.mubr.bf16.gmra.mrb[0].mxu0 %v2870
    %v4098 = vpop.f32.mrb[0].mxu0
    %v4099 = vadd.f32 %v4058, %v4098
    %v4100 = vpop.f32.mrb[0].mxu0
    %v4101 = vpop.f32.mrb[0].mxu0
    %v4102 = vadd.f32 %v4061, %v4101
    %v4103 = vpop.f32.mrb[0].mxu0
    %4104 = vdwg.mxu0
    %4105 = vst [vmem:[#allocation4] sm:$0xff] %v4099
    %4106 = vst [vmem:[#allocation4 + $0x8] sm:$0xff] %v4102
    %v4107 = vld [vmem:[#allocation4] sm:$0xff]
    %v4108 = vld [vmem:[#allocation4 + $0x8] sm:$0xff]
    %v4109 = vld [vmem:[#allocation16] sm:$0x1]
    %v4110 = vld [vmem:[#allocation18] sm:$0x1]
    %4111 = vadd.xlane.f32.xlu0 %v4107
    %v4112 = vpop.xlane.xlu0 %4111
    %4113 = vadd.xlane.f32.xlu0 %v4108
    %v4114 = vpop.xlane.xlu0 %4113
    %v4115 = vmul.f32 %v4112, %v123
    %v4116 = vmul.f32 %v4114, %v123
    %v4117 = vsub.f32 %v4107, %v4115
    %v4118 = vsub.f32 %v4108, %v4116
    %v4119 = vmul.f32 %v4117, %v4117
    %v4120 = vmul.f32 %v4118, %v4118
    %4121 = vadd.xlane.f32.xlu0 %v4119
    %v4122 = vpop.xlane.xlu0 %4121
    %4123 = vadd.xlane.f32.xlu0 %v4120
    %v4124 = vpop.xlane.xlu0 %4123
    %v4125 = vmul.f32 %v4122, %v123
    %v4126 = vmul.f32 %v4124, %v123
    %v4127 = vadd.f32 %v4125, 1e-05
    %v4128 = vadd.f32 %v4126, 1e-05
    %v4129 = vrsqrt.pop %v4127
    %v4130 = vrsqrt.pop %v4128
    %v4131 = vmul.f32 %v4117, %v4129
    %v4132 = vmul.f32 %v4118, %v4130
    %v4134 = vlaneseq
    %v4135 = vshrl.u32 %v4134, 7
    %v4136 = vsub.s32 0, %v4135
    %v4137 = vrot.slane %v4109, %v4136
    %v4139 = vmul.f32 %v4131, %v4137
    %v4140 = vmul.f32 %v4132, %v4137
    %v4142 = vlaneseq
    %v4143 = vshrl.u32 %v4142, 7
    %v4144 = vsub.s32 0, %v4143
    %v4145 = vrot.slane %v4110, %v4144
    %v4147 = vadd.f32 %v4139, %v4145
    %v4148 = vadd.f32 %v4140, %v4145
    %4149 = vst [vmem:[#allocation19] sm:$0xff] %v4147
    %4150 = vst [vmem:[#allocation19 + $0x8] sm:$0xff] %v4148
    // Predicated region
    $region58: #{tpu_custom_call.1} parent=1 // pred_check
      _
    $region59: #{tpu_custom_call.1} parent=1 // pred_check_branch
      %4152 = sbr.rel (0) target = $region61
    $region60: #{tpu_custom_call.1} parent=1 // pred_region
      %s4154 = ssub.s32 256, 256
      %4155 = vsyncadd [#allocation9], %s4154
      %s4156 = sshll.u32 [#allocation19], 4
      %s4157 = int_to_ptr.vmem [resolvable:$true] %s4156
      %4162 = dma.vmem_to_hbm [thread:$0]  %s4157, 256, %s7, [#allocation9], 128, 128, 8
    $region61: #{tpu_custom_call.1} parent=1 // pred_fallthru
      _
    // Predicated region
    $region62: #{tpu_custom_call.1} parent=1 // pred_check
      _
    $region63: #{tpu_custom_call.1} parent=1 // pred_check_branch
      %4164 = sbr.rel (0) target = $region65
    $region64: #{tpu_custom_call.1} parent=1 // pred_region
      %4165 = dma.done [#allocation9], 256
    $region65: #{tpu_custom_call.1} parent=1 // pred_fallthru
      _
    %4166 = vsyncpa [#allocation8], 1
    %4167 = vsyncpa [#allocation11], 1
    %4168 = vsyncpa [#allocation14], 1
    %4169 = vsyncpa [#allocation17], 1
    %4170 = vsyncpa [#allocation9], 1

// kernel: tpu_custom_call.1
$region0: #{tpu_custom_call.1}
  #allocation0 [shape = 'u32[]', space=smem, size = 0x4, offset = 0x4, fixed_abs, tag = 'smem constant byte address 0x4 - core index']
  #allocation1 [shape = 'u32[144,128]{1,0:T(1,128)}', space=vmem, size = 0x12000, scoped, tag = 'internal scratch']
  #allocation2 [shape = 'f32[16,128]{1,0:T(8,128)}', space=vmem, size = 0x2000, scoped, tag = 'scratch operand']
  #allocation3 [shape = 'f32[16,256]{1,0:T(8,128)}', space=vmem, size = 0x4000, scoped, tag = 'scratch operand']
  #allocation4 [shape = 'f32[16,128]{1,0:T(8,128)}', space=vmem, size = 0x2000, scoped, tag = 'scratch operand']
  #allocation5 [shape = 'bf16[16,1152]{1,0:T(16,128)(2,1)}', space=vmem, size = 0x9000, scoped, tag = 'scratch operand']
  #allocation6 [shape = 'bf16[16,2304]{1,0:T(16,128)(2,1)}', space=vmem, size = 0x12000, scoped, tag = 'scratch operand']
  %s0 = inlined_call_operand.hbm [shape: f32[16,128], index: 0, kind: input, shape index: {}]
  %s1 = inlined_call_operand.hbm [shape: f32[1,128], index: 1, kind: input, shape index: {}]
  %s2 = inlined_call_operand.hbm [shape: f32[1,128], index: 2, kind: input, shape index: {}]
  %s3 = inlined_call_operand.hbm [shape: bf16[1152,256], index: 3, kind: input, shape index: {}]
  %s4 = inlined_call_operand.hbm [shape: bf16[2304,128], index: 4, kind: input, shape index: {}]
  %s5 = inlined_call_operand.hbm [shape: f32[1,128], index: 5, kind: input, shape index: {}]
  %s6 = inlined_call_operand.hbm [shape: f32[1,128], index: 6, kind: input, shape index: {}]
  %s7 = inlined_call_operand.hbm [shape: f32[16,128], index: 7, kind: output, shape index: {}]
  %s8 = sld [smem:[#allocation0]]
  $region66: #{tpu_custom_call.1} parent=0
    _
  %s10 = ssub.s32 1, %s8
  %s11 = scalar_select 0, %s10, %s8
  $region1: #{tpu_custom_call.1} parent=0
    #allocation7 [shape = 'u8[8192]{0}', space=vmem, size = 0x2000, scoped, tag = 'input window, operand 0, single buffered']
    #allocation8 [shape = 's32[1]{0}', space=sflag, size = 0x4, scoped, tag = 'scoped memory for tpu_custom_call.1']
    #allocation9 [shape = 's32[1]{0}', space=sflag, size = 0x4, scoped, tag = 'scoped memory for tpu_custom_call.1']
    #allocation10 [shape = 'u8[512]{0}', space=vmem, size = 0x400, scoped, tag = 'input window, operand 1, single buffered']
    #allocation11 [shape = 's32[1]{0}', space=sflag, size = 0x4, scoped, tag = 'scoped memory for tpu_custom_call.1']
    #allocation12 [shape = 'u8[512]{0}', space=vmem, size = 0x400, scoped, tag = 'input window, operand 2, single buffered']
    #allocation13 [shape = 'u8[589824]{0}', space=vmem, size = 0x90000, scoped, tag = 'input window, operand 3, single buffered']
    #allocation14 [shape = 's32[1]{0}', space=sflag, size = 0x4, scoped, tag = 'scoped memory for tpu_custom_call.1']
    #allocation15 [shape = 'u8[589824]{0}', space=vmem, size = 0x90000, scoped, tag = 'input window, operand 4, single buffered']
    #allocation16 [shape = 'u8[512]{0}', space=vmem, size = 0x400, scoped, tag = 'input window, operand 5, single buffered']
    #allocation17 [shape = 's32[1]{0}', space=sflag, size = 0x4, scoped, tag = 'scoped memory for tpu_custom_call.1']
    #allocation18 [shape = 'u8[512]{0}', space=vmem, size = 0x400, scoped, tag = 'input window, operand 6, single buffered']
    #allocation19 [shape = 'u8[8192]{0}', space=vmem, size = 0x2000, scoped, tag = 'output window, operand 0, single buffered']
    %12 = vsyncpa [#allocation8], 0
    %13 = vsyncpa [#allocation11], 0
    %14 = vsyncpa [#allocation14], 0
    %15 = vsyncpa [#allocation17], 0
    %16 = vsyncpa [#allocation9], 0
    // Predicated region
    $region2: #{tpu_custom_call.1} parent=1 // pred_check
      _
    $region3: #{tpu_custom_call.1} parent=1 // pred_check_branch
      %18 = sbr.rel (0) target = $region5
    $region4: #{tpu_custom_call.1} parent=1 // pred_region
      %s20 = ssub.s32 256, 256
      %21 = vsyncadd [#allocation8], %s20
      %s22 = sshll.u32 [#allocation7], 4
      %s23 = int_to_ptr.vmem [resolvable:$true] %s22
      %28 = dma.hbm_to_vmem [thread:$0]  %s0, 256, %s23, [#allocation8], 128, 128, 8
    $region5: #{tpu_custom_call.1} parent=1 // pred_fallthru
      _
    // Predicated region
    $region6: #{tpu_custom_call.1} parent=1 // pred_check
      _
    $region7: #{tpu_custom_call.1} parent=1 // pred_check_branch
      %30 = sbr.rel (0) target = $region9
    $region8: #{tpu_custom_call.1} parent=1 // pred_region
      %s32 = ssub.s32 16, 16
      %33 = vsyncadd [#allocation11], %s32
      %s35 = sshll.u32 [#allocation10], 4
      %s36 = int_to_ptr.vmem [resolvable:$true] %s35
      %38 = dma.hbm_to_vmem [thread:$0]  %s1, 16, %s36, [#allocation11]
    $region9: #{tpu_custom_call.1} parent=1 // pred_fallthru
      _
    // Predicated region
    $region10: #{tpu_custom_call.1} parent=1 // pred_check
      _
    $region11: #{tpu_custom_call.1} parent=1 // pred_check_branch
      %40 = sbr.rel (0) target = $region13
    $region12: #{tpu_custom_call.1} parent=1 // pred_region
      %s42 = ssub.s32 16, 16
      %43 = vsyncadd [#allocation11], %s42
      %s45 = sshll.u32 [#allocation12], 4
      %s46 = int_to_ptr.vmem [resolvable:$true] %s45
      %48 = dma.hbm_to_vmem [thread:$0]  %s2, 16, %s46, [#allocation11]
    $region13: #{tpu_custom_call.1} parent=1 // pred_fallthru
      _
    // Predicated region
    $region14: #{tpu_custom_call.1} parent=1 // pred_check
      _
    $region15: #{tpu_custom_call.1} parent=1 // pred_check_branch
      %50 = sbr.rel (0) target = $region17
    $region16: #{tpu_custom_call.1} parent=1 // pred_region
      %s52 = ssub.s32 18432, 18432
      %53 = vsyncadd [#allocation14], %s52
      %s54 = sshll.u32 [#allocation13], 4
      %s55 = int_to_ptr.vmem [resolvable:$true] %s54
      %60 = dma.hbm_to_vmem [thread:$0]  %s3, 18432, %s55, [#allocation14], 128, 128, 8
    $region17: #{tpu_custom_call.1} parent=1 // pred_fallthru
      _
    // Predicated region
    $region18: #{tpu_custom_call.1} parent=1 // pred_check
      _
    $region19: #{tpu_custom_call.1} parent=1 // pred_check_branch
      %62 = sbr.rel (0) target = $region21
    $region20: #{tpu_custom_call.1} parent=1 // pred_region
      %s64 = ssub.s32 18432, 18432
      %65 = vsyncadd [#allocation14], %s64
      %s66 = sshll.u32 [#allocation15], 4
      %s67 = int_to_ptr.vmem [resolvable:$true] %s66
      %72 = dma.hbm_to_vmem [thread:$0]  %s4, 18432, %s67, [#allocation14], 64, 64, 4
    $region21: #{tpu_custom_call.1} parent=1 // pred_fallthru
      _
    // Predicated region
    $region22: #{tpu_custom_call.1} parent=1 // pred_check
      _
    $region23: #{tpu_custom_call.1} parent=1 // pred_check_branch
      %74 = sbr.rel (0) target = $region25
    $region24: #{tpu_custom_call.1} parent=1 // pred_region
      %s76 = ssub.s32 16, 16
      %77 = vsyncadd [#allocation17], %s76
      %s79 = sshll.u32 [#allocation16], 4
      %s80 = int_to_ptr.vmem [resolvable:$true] %s79
      %82 = dma.hbm_to_vmem [thread:$0]  %s5, 16, %s80, [#allocation17]
    $region25: #{tpu_custom_call.1} parent=1 // pred_fallthru
      _
    // Predicated region
    $region26: #{tpu_custom_call.1} parent=1 // pred_check
      _
    $region27: #{tpu_custom_call.1} parent=1 // pred_check_branch
      %84 = sbr.rel (0) target = $region29
    $region28: #{tpu_custom_call.1} parent=1 // pred_region
      %s86 = ssub.s32 16, 16
      %87 = vsyncadd [#allocation17], %s86
      %s89 = sshll.u32 [#allocation18], 4
      %s90 = int_to_ptr.vmem [resolvable:$true] %s89
      %92 = dma.hbm_to_vmem [thread:$0]  %s6, 16, %s90, [#allocation17]
    $region29: #{tpu_custom_call.1} parent=1 // pred_fallthru
      _
    // Predicated region
    $region30: #{tpu_custom_call.1} parent=1 // pred_check
      _
    $region31: #{tpu_custom_call.1} parent=1 // pred_check_branch
      %94 = sbr.rel (0) target = $region33
    $region32: #{tpu_custom_call.1} parent=1 // pred_region
      %95 = dma.done [#allocation8], 256
    $region33: #{tpu_custom_call.1} parent=1 // pred_fallthru
      _
    // Predicated region
    $region34: #{tpu_custom_call.1} parent=1 // pred_check
      _
    $region35: #{tpu_custom_call.1} parent=1 // pred_check_branch
      %97 = sbr.rel (0) target = $region37
    $region36: #{tpu_custom_call.1} parent=1 // pred_region
      %98 = dma.done [#allocation11], 16
    $region37: #{tpu_custom_call.1} parent=1 // pred_fallthru
      _
    // Predicated region
    $region38: #{tpu_custom_call.1} parent=1 // pred_check
      _
    $region39: #{tpu_custom_call.1} parent=1 // pred_check_branch
      %100 = sbr.rel (0) target = $region41
    $region40: #{tpu_custom_call.1} parent=1 // pred_region
      %101 = dma.done [#allocation11], 16
    $region41: #{tpu_custom_call.1} parent=1 // pred_fallthru
      _
    // Predicated region
    $region42: #{tpu_custom_call.1} parent=1 // pred_check
      _
    $region43: #{tpu_custom_call.1} parent=1 // pred_check_branch
      %103 = sbr.rel (0) target = $region45
    $region44: #{tpu_custom_call.1} parent=1 // pred_region
      %104 = dma.done [#allocation14], 18432
    $region45: #{tpu_custom_call.1} parent=1 // pred_fallthru
      _
    // Predicated region
    $region46: #{tpu_custom_call.1} parent=1 // pred_check
      _
    $region47: #{tpu_custom_call.1} parent=1 // pred_check_branch
      %106 = sbr.rel (0) target = $region49
    $region48: #{tpu_custom_call.1} parent=1 // pred_region
      %107 = dma.done [#allocation14], 18432
    $region49: #{tpu_custom_call.1} parent=1 // pred_fallthru
      _
    // Predicated region
    $region50: #{tpu_custom_call.1} parent=1 // pred_check
      _
    $region51: #{tpu_custom_call.1} parent=1 // pred_check_branch
      %109 = sbr.rel (0) target = $region53
    $region52: #{tpu_custom_call.1} parent=1 // pred_region
      %110 = dma.done [#allocation17], 16
    $region53: #{tpu_custom_call.1} parent=1 // pred_fallthru
      _
    // Predicated region
    $region54: #{tpu_custom_call.1} parent=1 // pred_check
      _
    $region55: #{tpu_custom_call.1} parent=1 // pred_check_branch
      %112 = sbr.rel (0) target = $region57
    $region56: #{tpu_custom_call.1} parent=1 // pred_region
      %113 = dma.done [#allocation17], 16
    $region57: #{tpu_custom_call.1} parent=1 // pred_fallthru
      _
    %v115 = vld [vmem:[#allocation7] sm:$0xff]
    %v116 = vld [vmem:[#allocation7 + $0x8] sm:$0xff]
    %v117 = vld [vmem:[#allocation10] sm:$0x1]
    %v118 = vld [vmem:[#allocation12] sm:$0x1]
    %119 = vadd.xlane.f32.xlu0 %v115
    %v120 = vpop.xlane.xlu0 %119
    %121 = vadd.xlane.f32.xlu0 %v116
    %v122 = vpop.xlane.xlu0 %121
    %v123 = vrcp.pop 128.0
    %v124 = vmul.f32 %v120, %v123
    %v125 = vmul.f32 %v122, %v123
    %v126 = vsub.f32 %v115, %v124
    %v127 = vsub.f32 %v116, %v125
    %v128 = vmul.f32 %v126, %v126
    %v129 = vmul.f32 %v127, %v127
    %130 = vadd.xlane.f32.xlu0 %v128
    %v131 = vpop.xlane.xlu0 %130
    %132 = vadd.xlane.f32.xlu0 %v129
    %v133 = vpop.xlane.xlu0 %132
    %v134 = vmul.f32 %v131, %v123
    %v135 = vmul.f32 %v133, %v123
    %v136 = vadd.f32 %v134, 1e-05
    %v137 = vadd.f32 %v135, 1e-05
    %v138 = vrsqrt.pop %v136
    %v139 = vrsqrt.pop %v137
    %v140 = vmul.f32 %v126, %v138
    %v141 = vmul.f32 %v127, %v139
    %v143 = vlaneseq
    %v144 = vshrl.u32 %v143, 7
    %v145 = vsub.s32 0, %v144
    %v146 = vrot.slane %v117, %v145
    %v148 = vmul.f32 %v140, %v146
    %v149 = vmul.f32 %v141, %v146
    %v151 = vlaneseq
    %v152 = vshrl.u32 %v151, 7
    %v153 = vsub.s32 0, %v152
    %v154 = vrot.slane %v118, %v153
    %v156 = vadd.f32 %v148, %v154
    %v157 = vadd.f32 %v149, %v154
    %158 = vst [vmem:[#allocation2] sm:$0xff] %v156
    %159 = vst [vmem:[#allocation2 + $0x8] sm:$0xff] %v157
    %v160 = vld [vmem:[#allocation2] sm:$0xff]
    %v161 = vld [vmem:[#allocation2 + $0x8] sm:$0xff]
    %v162 = vxor.u32 %v160, 2147483648
    %v163 = vxor.u32 %v161, 2147483648
    %v164 = vmul.f32 %v162, 1.442695
    %v165 = vpow.pop %v164
    %v166 = vmul.f32 %v163, 1.442695
    %v167 = vpow.pop %v166
    %v168 = vadd.f32 %v165, 1.0
    %v169 = vadd.f32 %v167, 1.0
    %v170 = vrcp.pop %v168
    %v171 = vmul.f32 1.0, %v170
    %v172 = vrcp.pop %v169
    %v173 = vmul.f32 1.0, %v172
    %v174 = vmul.f32 %v160, %v171
    %v175 = vmul.f32 %v161, %v173
    %vm176 = vcmp.ge.f32.partialorder %v160, -2.2
    %vm177 = vcmp.ge.f32.partialorder %v161, -2.2
    %v178 = vsel %vm176, 1, 0
    %v179 = vsel %vm177, 1, 0
    %v180 = vcvt.s32.f32 %v178
    %v181 = vcvt.s32.f32 %v179
    %vm182 = vcmp.ge.f32.partialorder %v160, -1.8
    %vm183 = vcmp.ge.f32.partialorder %v161, -1.8
    %v184 = vsel %vm182, 1, 0
    %v185 = vsel %vm183, 1, 0
    %v186 = vcvt.s32.f32 %v184
    %v187 = vcvt.s32.f32 %v185
    %vm188 = vcmp.ge.f32.partialorder %v160, -1.4
    %vm189 = vcmp.ge.f32.partialorder %v161, -1.4
    %v190 = vsel %vm188, 1, 0
    %v191 = vsel %vm189, 1, 0
    %v192 = vcvt.s32.f32 %v190
    %v193 = vcvt.s32.f32 %v191
    %vm194 = vcmp.ge.f32.partialorder %v160, -1.0
    %vm195 = vcmp.ge.f32.partialorder %v161, -1.0
    %v196 = vsel %vm194, 1, 0
    %v197 = vsel %vm195, 1, 0
    %v198 = vcvt.s32.f32 %v196
    %v199 = vcvt.s32.f32 %v197
    %vm200 = vcmp.ge.f32.partialorder %v160, -0.6
    %vm201 = vcmp.ge.f32.partialorder %v161, -0.6
    %v202 = vsel %vm200, 1, 0
    %v203 = vsel %vm201, 1, 0
    %v204 = vcvt.s32.f32 %v202
    %v205 = vcvt.s32.f32 %v203
    %vm206 = vcmp.ge.f32.partialorder %v160, -0.2
    %vm207 = vcmp.ge.f32.partialorder %v161, -0.2
    %v208 = vsel %vm206, 1, 0
    %v209 = vsel %vm207, 1, 0
    %v210 = vcvt.s32.f32 %v208
    %v211 = vcvt.s32.f32 %v209
    %vm212 = vcmp.ge.f32.partialorder %v160, 0.2
    %vm213 = vcmp.ge.f32.partialorder %v161, 0.2
    %v214 = vsel %vm212, 1, 0
    %v215 = vsel %vm213, 1, 0
    %v216 = vcvt.s32.f32 %v214
    %v217 = vcvt.s32.f32 %v215
    %vm218 = vcmp.ge.f32.partialorder %v160, 0.6
    %vm219 = vcmp.ge.f32.partialorder %v161, 0.6
    %v220 = vsel %vm218, 1, 0
    %v221 = vsel %vm219, 1, 0
    %v222 = vcvt.s32.f32 %v220
    %v223 = vcvt.s32.f32 %v221
    %vm224 = vcmp.ge.f32.partialorder %v160, 1.0
    %vm225 = vcmp.ge.f32.partialorder %v161, 1.0
    %v226 = vsel %vm224, 1, 0
    %v227 = vsel %vm225, 1, 0
    %v228 = vcvt.s32.f32 %v226
    %v229 = vcvt.s32.f32 %v227
    %vm230 = vcmp.ge.f32.partialorder %v160, 1.4
    %vm231 = vcmp.ge.f32.partialorder %v161, 1.4
    %v232 = vsel %vm230, 1, 0
    %v233 = vsel %vm231, 1, 0
    %v234 = vcvt.s32.f32 %v232
    %v235 = vcvt.s32.f32 %v233
    %vm236 = vcmp.ge.f32.partialorder %v160, 1.8
    %vm237 = vcmp.ge.f32.partialorder %v161, 1.8
    %v238 = vsel %vm236, 1, 0
    %v239 = vsel %vm237, 1, 0
    %v240 = vcvt.s32.f32 %v238
    %v241 = vcvt.s32.f32 %v239
    %vm242 = vcmp.ge.f32.partialorder %v160, 2.2
    %vm243 = vcmp.ge.f32.partialorder %v161, 2.2
    %v244 = vsel %vm242, 1, 0
    %v245 = vsel %vm243, 1, 0
    %v246 = vcvt.s32.f32 %v244
    %v247 = vcvt.s32.f32 %v245
    %v248 = vsub.f32 %v180, %v186
    %v249 = vsub.f32 %v181, %v187
    %v250 = vsub.f32 %v186, %v192
    %v251 = vsub.f32 %v187, %v193
    %v252 = vsub.f32 %v192, %v198
    %v253 = vsub.f32 %v193, %v199
    %v254 = vsub.f32 %v198, %v204
    %v255 = vsub.f32 %v199, %v205
    %v256 = vsub.f32 %v204, %v210
    %v257 = vsub.f32 %v205, %v211
    %v258 = vsub.f32 %v210, %v216
    %v259 = vsub.f32 %v211, %v217
    %v260 = vsub.f32 %v216, %v222
    %v261 = vsub.f32 %v217, %v223
    %v262 = vsub.f32 %v222, %v228
    %v263 = vsub.f32 %v223, %v229
    %v264 = vsub.f32 %v228, %v234
    %v265 = vsub.f32 %v229, %v235
    %v266 = vsub.f32 %v234, %v240
    %v267 = vsub.f32 %v235, %v241
    %v268 = vsub.f32 %v240, %v246
    %v269 = vsub.f32 %v241, %v247
    %v270 = vsub.f32 %v160, -2.2
    %v271 = vsub.f32 %v161, -2.2
    %v272 = vsub.f32 %v160, -1.8
    %v273 = vsub.f32 %v161, -1.8
    %v274 = vsub.f32 %v160, -1.4
    %v275 = vsub.f32 %v161, -1.4
    %v276 = vsub.f32 %v160, -1.0
    %v277 = vsub.f32 %v161, -1.0
    %v278 = vsub.f32 %v160, -0.6
    %v279 = vsub.f32 %v161, -0.6
    %v280 = vsub.f32 %v160, -0.2
    %v281 = vsub.f32 %v161, -0.2
    %v282 = vsub.f32 %v160, 0.2
    %v283 = vsub.f32 %v161, 0.2
    %v284 = vsub.f32 %v160, 0.6
    %v285 = vsub.f32 %v161, 0.6
    %v286 = vsub.f32 %v160, 1.0
    %v287 = vsub.f32 %v161, 1.0
    %v288 = vsub.f32 %v160, 1.4
    %v289 = vsub.f32 %v161, 1.4
    %v290 = vsub.f32 %v160, 1.8
    %v291 = vsub.f32 %v161, 1.8
    %v292 = vmul.f32 %v270, 2.5
    %v293 = vmul.f32 %v271, 2.5
    %v294 = vmul.f32 %v272, 2.5
    %v295 = vmul.f32 %v273, 2.5
    %v296 = vmul.f32 %v274, 2.5
    %v297 = vmul.f32 %v275, 2.5
    %v298 = vmul.f32 %v276, 2.5
    %v299 = vmul.f32 %v277, 2.5
    %v300 = vmul.f32 %v278, 2.5
    %v301 = vmul.f32 %v279, 2.5
    %v302 = vmul.f32 %v280, 2.5
    %v303 = vmul.f32 %v281, 2.5
    %v304 = vmul.f32 %v282, 2.5
    %v305 = vmul.f32 %v283, 2.5
    %v306 = vmul.f32 %v284, 2.5
    %v307 = vmul.f32 %v285, 2.5
    %v308 = vmul.f32 %v286, 2.5
    %v309 = vmul.f32 %v287, 2.5
    %v310 = vmul.f32 %v288, 2.5
    %v311 = vmul.f32 %v289, 2.5
    %v312 = vmul.f32 %v290, 2.5
    %v313 = vmul.f32 %v291, 2.5
    %v314 = vmul.f32 %v292, %v248
    %v315 = vmul.f32 %v293, %v249
    %v316 = vsub.f32 1.0, %v294
    %v317 = vsub.f32 1.0, %v295
    %v318 = vmul.f32 %v316, %v250
    %v319 = vmul.f32 %v317, %v251
    %v320 = vadd.f32 %v314, %v318
    %v321 = vadd.f32 %v315, %v319
    %v322 = vmul.f32 %v294, %v250
    %v323 = vmul.f32 %v295, %v251
    %v324 = vsub.f32 1.0, %v296
    %v325 = vsub.f32 1.0, %v297
    %v326 = vmul.f32 %v324, %v252
    %v327 = vmul.f32 %v325, %v253
    %v328 = vadd.f32 %v322, %v326
    %v329 = vadd.f32 %v323, %v327
    %v330 = vmul.f32 %v296, %v252
    %v331 = vmul.f32 %v297, %v253
    %v332 = vsub.f32 1.0, %v298
    %v333 = vsub.f32 1.0, %v299
    %v334 = vmul.f32 %v332, %v254
    %v335 = vmul.f32 %v333, %v255
    %v336 = vadd.f32 %v330, %v334
    %v337 = vadd.f32 %v331, %v335
    %v338 = vmul.f32 %v298, %v254
    %v339 = vmul.f32 %v299, %v255
    %v340 = vsub.f32 1.0, %v300
    %v341 = vsub.f32 1.0, %v301
    %v342 = vmul.f32 %v340, %v256
    %v343 = vmul.f32 %v341, %v257
    %v344 = vadd.f32 %v338, %v342
    %v345 = vadd.f32 %v339, %v343
    %v346 = vmul.f32 %v300, %v256
    %v347 = vmul.f32 %v301, %v257
    %v348 = vsub.f32 1.0, %v302
    %v349 = vsub.f32 1.0, %v303
    %v350 = vmul.f32 %v348, %v258
    %v351 = vmul.f32 %v349, %v259
    %v352 = vadd.f32 %v346, %v350
    %v353 = vadd.f32 %v347, %v351
    %v354 = vmul.f32 %v302, %v258
    %v355 = vmul.f32 %v303, %v259
    %v356 = vsub.f32 1.0, %v304
    %v357 = vsub.f32 1.0, %v305
    %v358 = vmul.f32 %v356, %v260
    %v359 = vmul.f32 %v357, %v261
    %v360 = vadd.f32 %v354, %v358
    %v361 = vadd.f32 %v355, %v359
    %v362 = vmul.f32 %v304, %v260
    %v363 = vmul.f32 %v305, %v261
    %v364 = vsub.f32 1.0, %v306
    %v365 = vsub.f32 1.0, %v307
    %v366 = vmul.f32 %v364, %v262
    %v367 = vmul.f32 %v365, %v263
    %v368 = vadd.f32 %v362, %v366
    %v369 = vadd.f32 %v363, %v367
    %v370 = vmul.f32 %v306, %v262
    %v371 = vmul.f32 %v307, %v263
    %v372 = vsub.f32 1.0, %v308
    %v373 = vsub.f32 1.0, %v309
    %v374 = vmul.f32 %v372, %v264
    %v375 = vmul.f32 %v373, %v265
    %v376 = vadd.f32 %v370, %v374
    %v377 = vadd.f32 %v371, %v375
    %v378 = vmul.f32 %v308, %v264
    %v379 = vmul.f32 %v309, %v265
    %v380 = vsub.f32 1.0, %v310
    %v381 = vsub.f32 1.0, %v311
    %v382 = vmul.f32 %v380, %v266
    %v383 = vmul.f32 %v381, %v267
    %v384 = vadd.f32 %v378, %v382
    %v385 = vadd.f32 %v379, %v383
    %v386 = vmul.f32 %v310, %v266
    %v387 = vmul.f32 %v311, %v267
    %v388 = vsub.f32 1.0, %v312
    %v389 = vsub.f32 1.0, %v313
    %v390 = vmul.f32 %v388, %v268
    %v391 = vmul.f32 %v389, %v269
    %v392 = vadd.f32 %v386, %v390
    %v393 = vadd.f32 %v387, %v391
    %v394 = vmul.f32 %v270, 1.25
    %v395 = vmul.f32 %v271, 1.25
    %v396 = vmul.f32 %v272, 1.25
    %v397 = vmul.f32 %v273, 1.25
    %v398 = vmul.f32 %v274, 1.25
    %v399 = vmul.f32 %v275, 1.25
    %v400 = vmul.f32 %v276, 1.25
    %v401 = vmul.f32 %v277, 1.25
    %v402 = vmul.f32 %v278, 1.25
    %v403 = vmul.f32 %v279, 1.25
    %v404 = vmul.f32 %v280, 1.25
    %v405 = vmul.f32 %v281, 1.25
    %v406 = vmul.f32 %v282, 1.25
    %v407 = vmul.f32 %v283, 1.25
    %v408 = vmul.f32 %v284, 1.25
    %v409 = vmul.f32 %v285, 1.25
    %v410 = vmul.f32 %v286, 1.25
    %v411 = vmul.f32 %v287, 1.25
    %v412 = vmul.f32 %v288, 1.25
    %v413 = vmul.f32 %v289, 1.25
    %v414 = vmul.f32 %v394, %v320
    %v415 = vmul.f32 %v395, %v321
    %v416 = vsub.f32 1.0, %v396
    %v417 = vsub.f32 1.0, %v397
    %v418 = vmul.f32 %v416, %v328
    %v419 = vmul.f32 %v417, %v329
    %v420 = vadd.f32 %v414, %v418
    %v421 = vadd.f32 %v415, %v419
    %v422 = vmul.f32 %v396, %v328
    %v423 = vmul.f32 %v397, %v329
    %v424 = vsub.f32 1.0, %v398
    %v425 = vsub.f32 1.0, %v399
    %v426 = vmul.f32 %v424, %v336
    %v427 = vmul.f32 %v425, %v337
    %v428 = vadd.f32 %v422, %v426
    %v429 = vadd.f32 %v423, %v427
    %v430 = vmul.f32 %v398, %v336
    %v431 = vmul.f32 %v399, %v337
    %v432 = vsub.f32 1.0, %v400
    %v433 = vsub.f32 1.0, %v401
    %v434 = vmul.f32 %v432, %v344
    %v435 = vmul.f32 %v433, %v345
    %v436 = vadd.f32 %v430, %v434
    %v437 = vadd.f32 %v431, %v435
    %v438 = vmul.f32 %v400, %v344
    %v439 = vmul.f32 %v401, %v345
    %v440 = vsub.f32 1.0, %v402
    %v441 = vsub.f32 1.0, %v403
    %v442 = vmul.f32 %v440, %v352
    %v443 = vmul.f32 %v441, %v353
    %v444 = vadd.f32 %v438, %v442
    %v445 = vadd.f32 %v439, %v443
    %v446 = vmul.f32 %v402, %v352
    %v447 = vmul.f32 %v403, %v353
    %v448 = vsub.f32 1.0, %v404
    %v449 = vsub.f32 1.0, %v405
    %v450 = vmul.f32 %v448, %v360
    %v451 = vmul.f32 %v449, %v361
    %v452 = vadd.f32 %v446, %v450
    %v453 = vadd.f32 %v447, %v451
    %v454 = vmul.f32 %v404, %v360
    %v455 = vmul.f32 %v405, %v361
    %v456 = vsub.f32 1.0, %v406
    %v457 = vsub.f32 1.0, %v407
    %v458 = vmul.f32 %v456, %v368
    %v459 = vmul.f32 %v457, %v369
    %v460 = vadd.f32 %v454, %v458
    %v461 = vadd.f32 %v455, %v459
    %v462 = vmul.f32 %v406, %v368
    %v463 = vmul.f32 %v407, %v369
    %v464 = vsub.f32 1.0, %v408
    %v465 = vsub.f32 1.0, %v409
    %v466 = vmul.f32 %v464, %v376
    %v467 = vmul.f32 %v465, %v377
    %v468 = vadd.f32 %v462, %v466
    %v469 = vadd.f32 %v463, %v467
    %v470 = vmul.f32 %v408, %v376
    %v471 = vmul.f32 %v409, %v377
    %v472 = vsub.f32 1.0, %v410
    %v473 = vsub.f32 1.0, %v411
    %v474 = vmul.f32 %v472, %v384
    %v475 = vmul.f32 %v473, %v385
    %v476 = vadd.f32 %v470, %v474
    %v477 = vadd.f32 %v471, %v475
    %v478 = vmul.f32 %v410, %v384
    %v479 = vmul.f32 %v411, %v385
    %v480 = vsub.f32 1.0, %v412
    %v481 = vsub.f32 1.0, %v413
    %v482 = vmul.f32 %v480, %v392
    %v483 = vmul.f32 %v481, %v393
    %v484 = vadd.f32 %v478, %v482
    %v485 = vadd.f32 %v479, %v483
    %v486 = vmul.f32 %v270, 0.8333333
    %v487 = vmul.f32 %v271, 0.8333333
    %v488 = vmul.f32 %v272, 0.8333333
    %v489 = vmul.f32 %v273, 0.8333333
    %v490 = vmul.f32 %v274, 0.8333333
    %v491 = vmul.f32 %v275, 0.8333333
    %v492 = vmul.f32 %v276, 0.8333333
    %v493 = vmul.f32 %v277, 0.8333333
    %v494 = vmul.f32 %v278, 0.8333333
    %v495 = vmul.f32 %v279, 0.8333333
    %v496 = vmul.f32 %v280, 0.8333333
    %v497 = vmul.f32 %v281, 0.8333333
    %v498 = vmul.f32 %v282, 0.8333333
    %v499 = vmul.f32 %v283, 0.8333333
    %v500 = vmul.f32 %v284, 0.8333333
    %v501 = vmul.f32 %v285, 0.8333333
    %v502 = vmul.f32 %v286, 0.8333333
    %v503 = vmul.f32 %v287, 0.8333333
    %v504 = vmul.f32 %v486, %v420
    %v505 = vmul.f32 %v487, %v421
    %v506 = vsub.f32 1.0, %v488
    %v507 = vsub.f32 1.0, %v489
    %v508 = vmul.f32 %v506, %v428
    %v509 = vmul.f32 %v507, %v429
    %v510 = vadd.f32 %v504, %v508
    %v511 = vadd.f32 %v505, %v509
    %v512 = vmul.f32 %v488, %v428
    %v513 = vmul.f32 %v489, %v429
    %v514 = vsub.f32 1.0, %v490
    %v515 = vsub.f32 1.0, %v491
    %v516 = vmul.f32 %v514, %v436
    %v517 = vmul.f32 %v515, %v437
    %v518 = vadd.f32 %v512, %v516
    %v519 = vadd.f32 %v513, %v517
    %v520 = vmul.f32 %v490, %v436
    %v521 = vmul.f32 %v491, %v437
    %v522 = vsub.f32 1.0, %v492
    %v523 = vsub.f32 1.0, %v493
    %v524 = vmul.f32 %v522, %v444
    %v525 = vmul.f32 %v523, %v445
    %v526 = vadd.f32 %v520, %v524
    %v527 = vadd.f32 %v521, %v525
    %v528 = vmul.f32 %v492, %v444
    %v529 = vmul.f32 %v493, %v445
    %v530 = vsub.f32 1.0, %v494
    %v531 = vsub.f32 1.0, %v495
    %v532 = vmul.f32 %v530, %v452
    %v533 = vmul.f32 %v531, %v453
    %v534 = vadd.f32 %v528, %v532
    %v535 = vadd.f32 %v529, %v533
    %v536 = vmul.f32 %v494, %v452
    %v537 = vmul.f32 %v495, %v453
    %v538 = vsub.f32 1.0, %v496
    %v539 = vsub.f32 1.0, %v497
    %v540 = vmul.f32 %v538, %v460
    %v541 = vmul.f32 %v539, %v461
    %v542 = vadd.f32 %v536, %v540
    %v543 = vadd.f32 %v537, %v541
    %v544 = vmul.f32 %v496, %v460
    %v545 = vmul.f32 %v497, %v461
    %v546 = vsub.f32 1.0, %v498
    %v547 = vsub.f32 1.0, %v499
    %v548 = vmul.f32 %v546, %v468
    %v549 = vmul.f32 %v547, %v469
    %v550 = vadd.f32 %v544, %v548
    %v551 = vadd.f32 %v545, %v549
    %v552 = vmul.f32 %v498, %v468
    %v553 = vmul.f32 %v499, %v469
    %v554 = vsub.f32 1.0, %v500
    %v555 = vsub.f32 1.0, %v501
    %v556 = vmul.f32 %v554, %v476
    %v557 = vmul.f32 %v555, %v477
    %v558 = vadd.f32 %v552, %v556
    %v559 = vadd.f32 %v553, %v557
    %v560 = vmul.f32 %v500, %v476
    %v561 = vmul.f32 %v501, %v477
    %v562 = vsub.f32 1.0, %v502
    %v563 = vsub.f32 1.0, %v503
    %v564 = vmul.f32 %v562, %v484
    %v565 = vmul.f32 %v563, %v485
    %v566 = vadd.f32 %v560, %v564
    %v567 = vadd.f32 %v561, %v565
    %v568 = vpack.c.bf16 %v175, %v174
    %569 = vst [vmem:[#allocation5] sm:$0xff] %v568
    %v570 = vpack.c.bf16 %v511, %v510
    %571 = vst [vmem:[#allocation5 + $0x8] sm:$0xff] %v570
    %v572 = vpack.c.bf16 %v519, %v518
    %573 = vst [vmem:[#allocation5 + $0x10] sm:$0xff] %v572
    %v574 = vpack.c.bf16 %v527, %v526
    %575 = vst [vmem:[#allocation5 + $0x18] sm:$0xff] %v574
    %v576 = vpack.c.bf16 %v535, %v534
    %577 = vst [vmem:[#allocation5 + $0x20] sm:$0xff] %v576
    %v578 = vpack.c.bf16 %v543, %v542
    %579 = vst [vmem:[#allocation5 + $0x28] sm:$0xff] %v578
    %v580 = vpack.c.bf16 %v551, %v550
    %581 = vst [vmem:[#allocation5 + $0x30] sm:$0xff] %v580
    %v582 = vpack.c.bf16 %v559, %v558
    %583 = vst [vmem:[#allocation5 + $0x38] sm:$0xff] %v582
    %v584 = vpack.c.bf16 %v567, %v566
    %585 = vst [vmem:[#allocation5 + $0x40] sm:$0xff] %v584
    %v586 = vld [vmem:[#allocation13] sm:$0xff]
    %v587 = vld [vmem:[#allocation13 + $0x8] sm:$0xff]
    %v588 = vld [vmem:[#allocation13 + $0x10] sm:$0xff]
    %v589 = vld [vmem:[#allocation13 + $0x18] sm:$0xff]
    %v590 = vld [vmem:[#allocation13 + $0x20] sm:$0xff]
    %v591 = vld [vmem:[#allocation13 + $0x28] sm:$0xff]
    %v592 = vld [vmem:[#allocation13 + $0x30] sm:$0xff]
    %v593 = vld [vmem:[#allocation13 + $0x38] sm:$0xff]
    %v594 = vld [vmem:[#allocation13 + $0x40] sm:$0xff]
    %v595 = vld [vmem:[#allocation13 + $0x48] sm:$0xff]
    %v596 = vld [vmem:[#allocation13 + $0x50] sm:$0xff]
    %v597 = vld [vmem:[#allocation13 + $0x58] sm:$0xff]
    %v598 = vld [vmem:[#allocation13 + $0x60] sm:$0xff]
    %v599 = vld [vmem:[#allocation13 + $0x68] sm:$0xff]
    %v600 = vld [vmem:[#allocation13 + $0x70] sm:$0xff]
    %v601 = vld [vmem:[#allocation13 + $0x78] sm:$0xff]
    %v602 = vld [vmem:[#allocation13 + $0x80] sm:$0xff]
    %v603 = vld [vmem:[#allocation13 + $0x88] sm:$0xff]
    %v604 = vld [vmem:[#allocation13 + $0x90] sm:$0xff]
    %v605 = vld [vmem:[#allocation13 + $0x98] sm:$0xff]
    %v606 = vld [vmem:[#allocation13 + $0xa0] sm:$0xff]
    %v607 = vld [vmem:[#allocation13 + $0xa8] sm:$0xff]
    %v608 = vld [vmem:[#allocation13 + $0xb0] sm:$0xff]
    %v609 = vld [vmem:[#allocation13 + $0xb8] sm:$0xff]
    %v610 = vld [vmem:[#allocation13 + $0xc0] sm:$0xff]
    %v611 = vld [vmem:[#allocation13 + $0xc8] sm:$0xff]
    %v612 = vld [vmem:[#allocation13 + $0xd0] sm:$0xff]
    %v613 = vld [vmem:[#allocation13 + $0xd8] sm:$0xff]
    %v614 = vld [vmem:[#allocation13 + $0xe0] sm:$0xff]
    %v615 = vld [vmem:[#allocation13 + $0xe8] sm:$0xff]
    %v616 = vld [vmem:[#allocation13 + $0xf0] sm:$0xff]
    %v617 = vld [vmem:[#allocation13 + $0xf8] sm:$0xff]
    %v618 = vld [vmem:[#allocation13 + $0x100] sm:$0xff]
    %v619 = vld [vmem:[#allocation13 + $0x108] sm:$0xff]
    %v620 = vld [vmem:[#allocation13 + $0x110] sm:$0xff]
    %v621 = vld [vmem:[#allocation13 + $0x118] sm:$0xff]
    %v622 = vld [vmem:[#allocation13 + $0x120] sm:$0xff]
    %v623 = vld [vmem:[#allocation13 + $0x128] sm:$0xff]
    %v624 = vld [vmem:[#allocation13 + $0x130] sm:$0xff]
    %v625 = vld [vmem:[#allocation13 + $0x138] sm:$0xff]
    %v626 = vld [vmem:[#allocation13 + $0x140] sm:$0xff]
    %v627 = vld [vmem:[#allocation13 + $0x148] sm:$0xff]
    %v628 = vld [vmem:[#allocation13 + $0x150] sm:$0xff]
    %v629 = vld [vmem:[#allocation13 + $0x158] sm:$0xff]
    %v630 = vld [vmem:[#allocation13 + $0x160] sm:$0xff]
    %v631 = vld [vmem:[#allocation13 + $0x168] sm:$0xff]
    %v632 = vld [vmem:[#allocation13 + $0x170] sm:$0xff]
    %v633 = vld [vmem:[#allocation13 + $0x178] sm:$0xff]
    %v634 = vld [vmem:[#allocation13 + $0x180] sm:$0xff]
    %v635 = vld [vmem:[#allocation13 + $0x188] sm:$0xff]
    %v636 = vld [vmem:[#allocation13 + $0x190] sm:$0xff]
    %v637 = vld [vmem:[#allocation13 + $0x198] sm:$0xff]
    %v638 = vld [vmem:[#allocation13 + $0x1a0] sm:$0xff]
    %v639 = vld [vmem:[#allocation13 + $0x1a8] sm:$0xff]
    %v640 = vld [vmem:[#allocation13 + $0x1b0] sm:$0xff]
    %v641 = vld [vmem:[#allocation13 + $0x1b8] sm:$0xff]
    %v642 = vld [vmem:[#allocation13 + $0x1c0] sm:$0xff]
    %v643 = vld [vmem:[#allocation13 + $0x1c8] sm:$0xff]
    %v644 = vld [vmem:[#allocation13 + $0x1d0] sm:$0xff]
    %v645 = vld [vmem:[#allocation13 + $0x1d8] sm:$0xff]
    %v646 = vld [vmem:[#allocation13 + $0x1e0] sm:$0xff]
    %v647 = vld [vmem:[#allocation13 + $0x1e8] sm:$0xff]
    %v648 = vld [vmem:[#allocation13 + $0x1f0] sm:$0xff]
    %v649 = vld [vmem:[#allocation13 + $0x1f8] sm:$0xff]
    %v650 = vld [vmem:[#allocation13 + $0x200] sm:$0xff]
    %v651 = vld [vmem:[#allocation13 + $0x208] sm:$0xff]
    %v652 = vld [vmem:[#allocation13 + $0x210] sm:$0xff]
    %v653 = vld [vmem:[#allocation13 + $0x218] sm:$0xff]
    %v654 = vld [vmem:[#allocation13 + $0x220] sm:$0xff]
    %v655 = vld [vmem:[#allocation13 + $0x228] sm:$0xff]
    %v656 = vld [vmem:[#allocation13 + $0x230] sm:$0xff]
    %v657 = vld [vmem:[#allocation13 + $0x238] sm:$0xff]
    %v658 = vld [vmem:[#allocation13 + $0x240] sm:$0xff]
    %v659 = vld [vmem:[#allocation13 + $0x248] sm:$0xff]
    %v660 = vld [vmem:[#allocation13 + $0x250] sm:$0xff]
    %v661 = vld [vmem:[#allocation13 + $0x258] sm:$0xff]
    %v662 = vld [vmem:[#allocation13 + $0x260] sm:$0xff]
    %v663 = vld [vmem:[#allocation13 + $0x268] sm:$0xff]
    %v664 = vld [vmem:[#allocation13 + $0x270] sm:$0xff]
    %v665 = vld [vmem:[#allocation13 + $0x278] sm:$0xff]
    %v666 = vld [vmem:[#allocation13 + $0x280] sm:$0xff]
    %v667 = vld [vmem:[#allocation13 + $0x288] sm:$0xff]
    %v668 = vld [vmem:[#allocation13 + $0x290] sm:$0xff]
    %v669 = vld [vmem:[#allocation13 + $0x298] sm:$0xff]
    %v670 = vld [vmem:[#allocation13 + $0x2a0] sm:$0xff]
    %v671 = vld [vmem:[#allocation13 + $0x2a8] sm:$0xff]
    %v672 = vld [vmem:[#allocation13 + $0x2b0] sm:$0xff]
    %v673 = vld [vmem:[#allocation13 + $0x2b8] sm:$0xff]
    %v674 = vld [vmem:[#allocation13 + $0x2c0] sm:$0xff]
    %v675 = vld [vmem:[#allocation13 + $0x2c8] sm:$0xff]
    %v676 = vld [vmem:[#allocation13 + $0x2d0] sm:$0xff]
    %v677 = vld [vmem:[#allocation13 + $0x2d8] sm:$0xff]
    %v678 = vld [vmem:[#allocation13 + $0x2e0] sm:$0xff]
    %v679 = vld [vmem:[#allocation13 + $0x2e8] sm:$0xff]
    %v680 = vld [vmem:[#allocation13 + $0x2f0] sm:$0xff]
    %v681 = vld [vmem:[#allocation13 + $0x2f8] sm:$0xff]
    %v682 = vld [vmem:[#allocation13 + $0x300] sm:$0xff]
    %v683 = vld [vmem:[#allocation13 + $0x308] sm:$0xff]
    %v684 = vld [vmem:[#allocation13 + $0x310] sm:$0xff]
    %v685 = vld [vmem:[#allocation13 + $0x318] sm:$0xff]
    %v686 = vld [vmem:[#allocation13 + $0x320] sm:$0xff]
    %v687 = vld [vmem:[#allocation13 + $0x328] sm:$0xff]
    %v688 = vld [vmem:[#allocation13 + $0x330] sm:$0xff]
    %v689 = vld [vmem:[#allocation13 + $0x338] sm:$0xff]
    %v690 = vld [vmem:[#allocation13 + $0x340] sm:$0xff]
    %v691 = vld [vmem:[#allocation13 + $0x348] sm:$0xff]
    %v692 = vld [vmem:[#allocation13 + $0x350] sm:$0xff]
    %v693 = vld [vmem:[#allocation13 + $0x358] sm:$0xff]
    %v694 = vld [vmem:[#allocation13 + $0x360] sm:$0xff]
    %v695 = vld [vmem:[#allocation13 + $0x368] sm:$0xff]
    %v696 = vld [vmem:[#allocation13 + $0x370] sm:$0xff]
    %v697 = vld [vmem:[#allocation13 + $0x378] sm:$0xff]
    %v698 = vld [vmem:[#allocation13 + $0x380] sm:$0xff]
    %v699 = vld [vmem:[#allocation13 + $0x388] sm:$0xff]
    %v700 = vld [vmem:[#allocation13 + $0x390] sm:$0xff]
    %v701 = vld [vmem:[#allocation13 + $0x398] sm:$0xff]
    %v702 = vld [vmem:[#allocation13 + $0x3a0] sm:$0xff]
    %v703 = vld [vmem:[#allocation13 + $0x3a8] sm:$0xff]
    %v704 = vld [vmem:[#allocation13 + $0x3b0] sm:$0xff]
    %v705 = vld [vmem:[#allocation13 + $0x3b8] sm:$0xff]
    %v706 = vld [vmem:[#allocation13 + $0x3c0] sm:$0xff]
    %v707 = vld [vmem:[#allocation13 + $0x3c8] sm:$0xff]
    %v708 = vld [vmem:[#allocation13 + $0x3d0] sm:$0xff]
    %v709 = vld [vmem:[#allocation13 + $0x3d8] sm:$0xff]
    %v710 = vld [vmem:[#allocation13 + $0x3e0] sm:$0xff]
    %v711 = vld [vmem:[#allocation13 + $0x3e8] sm:$0xff]
    %v712 = vld [vmem:[#allocation13 + $0x3f0] sm:$0xff]
    %v713 = vld [vmem:[#allocation13 + $0x3f8] sm:$0xff]
    %v714 = vld [vmem:[#allocation13 + $0x400] sm:$0xff]
    %v715 = vld [vmem:[#allocation13 + $0x408] sm:$0xff]
    %v716 = vld [vmem:[#allocation13 + $0x410] sm:$0xff]
    %v717 = vld [vmem:[#allocation13 + $0x418] sm:$0xff]
    %v718 = vld [vmem:[#allocation13 + $0x420] sm:$0xff]
    %v719 = vld [vmem:[#allocation13 + $0x428] sm:$0xff]
    %v720 = vld [vmem:[#allocation13 + $0x430] sm:$0xff]
    %v721 = vld [vmem:[#allocation13 + $0x438] sm:$0xff]
    %v722 = vld [vmem:[#allocation13 + $0x440] sm:$0xff]
    %v723 = vld [vmem:[#allocation13 + $0x448] sm:$0xff]
    %v724 = vld [vmem:[#allocation13 + $0x450] sm:$0xff]
    %v725 = vld [vmem:[#allocation13 + $0x458] sm:$0xff]
    %v726 = vld [vmem:[#allocation13 + $0x460] sm:$0xff]
    %v727 = vld [vmem:[#allocation13 + $0x468] sm:$0xff]
    %v728 = vld [vmem:[#allocation13 + $0x470] sm:$0xff]
    %v729 = vld [vmem:[#allocation13 + $0x478] sm:$0xff]
    %v730 = vld [vmem:[#allocation5] sm:$0xff]
    %v731 = vld [vmem:[#allocation5 + $0x8] sm:$0xff]
    %v732 = vld [vmem:[#allocation5 + $0x10] sm:$0xff]
    %v733 = vld [vmem:[#allocation5 + $0x18] sm:$0xff]
    %v734 = vld [vmem:[#allocation5 + $0x20] sm:$0xff]
    %v735 = vld [vmem:[#allocation5 + $0x28] sm:$0xff]
    %v736 = vld [vmem:[#allocation5 + $0x30] sm:$0xff]
    %v737 = vld [vmem:[#allocation5 + $0x38] sm:$0xff]
    %v738 = vld [vmem:[#allocation5 + $0x40] sm:$0xff]
    %v883 = vunpack.c.l.b16 %v586
    %v884 = vunpack.c.h.b16 %v586
    %v885 = vunpack.c.l.b16 %v587
    %v886 = vunpack.c.h.b16 %v587
    %v887 = vunpack.c.l.b16 %v588
    %v888 = vunpack.c.h.b16 %v588
    %v889 = vunpack.c.l.b16 %v589
    %v890 = vunpack.c.h.b16 %v589
    %v891 = vunpack.c.l.b16 %v590
    %v892 = vunpack.c.h.b16 %v590
    %v893 = vunpack.c.l.b16 %v591
    %v894 = vunpack.c.h.b16 %v591
    %v895 = vunpack.c.l.b16 %v592
    %v896 = vunpack.c.h.b16 %v592
    %v897 = vunpack.c.l.b16 %v593
    %v898 = vunpack.c.h.b16 %v593
    %v899 = vunpack.c.l.b16 %v594
    %v900 = vunpack.c.h.b16 %v594
    %v901 = vunpack.c.l.b16 %v595
    %v902 = vunpack.c.h.b16 %v595
    %v903 = vunpack.c.l.b16 %v596
    %v904 = vunpack.c.h.b16 %v596
    %v905 = vunpack.c.l.b16 %v597
    %v906 = vunpack.c.h.b16 %v597
    %v907 = vunpack.c.l.b16 %v598
    %v908 = vunpack.c.h.b16 %v598
    %v909 = vunpack.c.l.b16 %v599
    %v910 = vunpack.c.h.b16 %v599
    %v911 = vunpack.c.l.b16 %v600
    %v912 = vunpack.c.h.b16 %v600
    %v913 = vunpack.c.l.b16 %v601
    %v914 = vunpack.c.h.b16 %v601
    %v915 = vunpack.c.l.b16 %v602
    %v916 = vunpack.c.h.b16 %v602
    %v917 = vunpack.c.l.b16 %v603
    %v918 = vunpack.c.h.b16 %v603
    %v919 = vunpack.c.l.b16 %v604
    %v920 = vunpack.c.h.b16 %v604
    %v921 = vunpack.c.l.b16 %v605
    %v922 = vunpack.c.h.b16 %v605
    %v923 = vunpack.c.l.b16 %v606
    %v924 = vunpack.c.h.b16 %v606
    %v925 = vunpack.c.l.b16 %v607
    %v926 = vunpack.c.h.b16 %v607
    %v927 = vunpack.c.l.b16 %v608
    %v928 = vunpack.c.h.b16 %v608
    %v929 = vunpack.c.l.b16 %v609
    %v930 = vunpack.c.h.b16 %v609
    %v931 = vunpack.c.l.b16 %v610
    %v932 = vunpack.c.h.b16 %v610
    %v933 = vunpack.c.l.b16 %v611
    %v934 = vunpack.c.h.b16 %v611
    %v935 = vunpack.c.l.b16 %v612
    %v936 = vunpack.c.h.b16 %v612
    %v937 = vunpack.c.l.b16 %v613
    %v938 = vunpack.c.h.b16 %v613
    %v939 = vunpack.c.l.b16 %v614
    %v940 = vunpack.c.h.b16 %v614
    %v941 = vunpack.c.l.b16 %v615
    %v942 = vunpack.c.h.b16 %v615
    %v943 = vunpack.c.l.b16 %v616
    %v944 = vunpack.c.h.b16 %v616
    %v945 = vunpack.c.l.b16 %v617
    %v946 = vunpack.c.h.b16 %v617
    %v947 = vunpack.c.l.b16 %v618
    %v948 = vunpack.c.h.b16 %v618
    %v949 = vunpack.c.l.b16 %v619
    %v950 = vunpack.c.h.b16 %v619
    %v951 = vunpack.c.l.b16 %v620
    %v952 = vunpack.c.h.b16 %v620
    %v953 = vunpack.c.l.b16 %v621
    %v954 = vunpack.c.h.b16 %v621
    %v955 = vunpack.c.l.b16 %v622
    %v956 = vunpack.c.h.b16 %v622
    %v957 = vunpack.c.l.b16 %v623
    %v958 = vunpack.c.h.b16 %v623
    %v959 = vunpack.c.l.b16 %v624
    %v960 = vunpack.c.h.b16 %v624
    %v961 = vunpack.c.l.b16 %v625
    %v962 = vunpack.c.h.b16 %v625
    %v963 = vunpack.c.l.b16 %v626
    %v964 = vunpack.c.h.b16 %v626
    %v965 = vunpack.c.l.b16 %v627
    %v966 = vunpack.c.h.b16 %v627
    %v967 = vunpack.c.l.b16 %v628
    %v968 = vunpack.c.h.b16 %v628
    %v969 = vunpack.c.l.b16 %v629
    %v970 = vunpack.c.h.b16 %v629
    %v971 = vunpack.c.l.b16 %v630
    %v972 = vunpack.c.h.b16 %v630
    %v973 = vunpack.c.l.b16 %v631
    %v974 = vunpack.c.h.b16 %v631
    %v975 = vunpack.c.l.b16 %v632
    %v976 = vunpack.c.h.b16 %v632
    %v977 = vunpack.c.l.b16 %v633
    %v978 = vunpack.c.h.b16 %v633
    %v979 = vunpack.c.l.b16 %v634
    %v980 = vunpack.c.h.b16 %v634
    %v981 = vunpack.c.l.b16 %v635
    %v982 = vunpack.c.h.b16 %v635
    %v983 = vunpack.c.l.b16 %v636
    %v984 = vunpack.c.h.b16 %v636
    %v985 = vunpack.c.l.b16 %v637
    %v986 = vunpack.c.h.b16 %v637
    %v987 = vunpack.c.l.b16 %v638
    %v988 = vunpack.c.h.b16 %v638
    %v989 = vunpack.c.l.b16 %v639
    %v990 = vunpack.c.h.b16 %v639
    %v991 = vunpack.c.l.b16 %v640
    %v992 = vunpack.c.h.b16 %v640
    %v993 = vunpack.c.l.b16 %v641
    %v994 = vunpack.c.h.b16 %v641
    %v995 = vunpack.c.l.b16 %v642
    %v996 = vunpack.c.h.b16 %v642
    %v997 = vunpack.c.l.b16 %v643
    %v998 = vunpack.c.h.b16 %v643
    %v999 = vunpack.c.l.b16 %v644
    %v1000 = vunpack.c.h.b16 %v644
    %v1001 = vunpack.c.l.b16 %v645
    %v1002 = vunpack.c.h.b16 %v645
    %v1003 = vunpack.c.l.b16 %v646
    %v1004 = vunpack.c.h.b16 %v646
    %v1005 = vunpack.c.l.b16 %v647
    %v1006 = vunpack.c.h.b16 %v647
    %v1007 = vunpack.c.l.b16 %v648
    %v1008 = vunpack.c.h.b16 %v648
    %v1009 = vunpack.c.l.b16 %v649
    %v1010 = vunpack.c.h.b16 %v649
    %v1011 = vunpack.c.l.b16 %v650
    %v1012 = vunpack.c.h.b16 %v650
    %v1013 = vunpack.c.l.b16 %v651
    %v1014 = vunpack.c.h.b16 %v651
    %v1015 = vunpack.c.l.b16 %v652
    %v1016 = vunpack.c.h.b16 %v652
    %v1017 = vunpack.c.l.b16 %v653
    %v1018 = vunpack.c.h.b16 %v653
    %v1019 = vunpack.c.l.b16 %v654
    %v1020 = vunpack.c.h.b16 %v654
    %v1021 = vunpack.c.l.b16 %v655
    %v1022 = vunpack.c.h.b16 %v655
    %v1023 = vunpack.c.l.b16 %v656
    %v1024 = vunpack.c.h.b16 %v656
    %v1025 = vunpack.c.l.b16 %v657
    %v1026 = vunpack.c.h.b16 %v657
    %v1027 = vunpack.c.l.b16 %v658
    %v1028 = vunpack.c.h.b16 %v658
    %v1029 = vunpack.c.l.b16 %v659
    %v1030 = vunpack.c.h.b16 %v659
    %v1031 = vunpack.c.l.b16 %v660
    %v1032 = vunpack.c.h.b16 %v660
    %v1033 = vunpack.c.l.b16 %v661
    %v1034 = vunpack.c.h.b16 %v661
    %v1035 = vunpack.c.l.b16 %v662
    %v1036 = vunpack.c.h.b16 %v662
    %v1037 = vunpack.c.l.b16 %v663
    %v1038 = vunpack.c.h.b16 %v663
    %v1039 = vunpack.c.l.b16 %v664
    %v1040 = vunpack.c.h.b16 %v664
    %v1041 = vunpack.c.l.b16 %v665
    %v1042 = vunpack.c.h.b16 %v665
    %v1043 = vunpack.c.l.b16 %v666
    %v1044 = vunpack.c.h.b16 %v666
    %v1045 = vunpack.c.l.b16 %v667
    %v1046 = vunpack.c.h.b16 %v667
    %v1047 = vunpack.c.l.b16 %v668
    %v1048 = vunpack.c.h.b16 %v668
    %v1049 = vunpack.c.l.b16 %v669
    %v1050 = vunpack.c.h.b16 %v669
    %v1051 = vunpack.c.l.b16 %v670
    %v1052 = vunpack.c.h.b16 %v670
    %v1053 = vunpack.c.l.b16 %v671
    %v1054 = vunpack.c.h.b16 %v671
    %v1055 = vunpack.c.l.b16 %v672
    %v1056 = vunpack.c.h.b16 %v672
    %v1057 = vunpack.c.l.b16 %v673
    %v1058 = vunpack.c.h.b16 %v673
    %v1059 = vunpack.c.l.b16 %v674
    %v1060 = vunpack.c.h.b16 %v674
    %v1061 = vunpack.c.l.b16 %v675
    %v1062 = vunpack.c.h.b16 %v675
    %v1063 = vunpack.c.l.b16 %v676
    %v1064 = vunpack.c.h.b16 %v676
    %v1065 = vunpack.c.l.b16 %v677
    %v1066 = vunpack.c.h.b16 %v677
    %v1067 = vunpack.c.l.b16 %v678
    %v1068 = vunpack.c.h.b16 %v678
    %v1069 = vunpack.c.l.b16 %v679
    %v1070 = vunpack.c.h.b16 %v679
    %v1071 = vunpack.c.l.b16 %v680
    %v1072 = vunpack.c.h.b16 %v680
    %v1073 = vunpack.c.l.b16 %v681
    %v1074 = vunpack.c.h.b16 %v681
    %v1075 = vunpack.c.l.b16 %v682
    %v1076 = vunpack.c.h.b16 %v682
    %v1077 = vunpack.c.l.b16 %v683
    %v1078 = vunpack.c.h.b16 %v683
    %v1079 = vunpack.c.l.b16 %v684
    %v1080 = vunpack.c.h.b16 %v684
    %v1081 = vunpack.c.l.b16 %v685
    %v1082 = vunpack.c.h.b16 %v685
    %v1083 = vunpack.c.l.b16 %v686
    %v1084 = vunpack.c.h.b16 %v686
    %v1085 = vunpack.c.l.b16 %v687
    %v1086 = vunpack.c.h.b16 %v687
    %v1087 = vunpack.c.l.b16 %v688
    %v1088 = vunpack.c.h.b16 %v688
    %v1089 = vunpack.c.l.b16 %v689
    %v1090 = vunpack.c.h.b16 %v689
    %v1091 = vunpack.c.l.b16 %v690
    %v1092 = vunpack.c.h.b16 %v690
    %v1093 = vunpack.c.l.b16 %v691
    %v1094 = vunpack.c.h.b16 %v691
    %v1095 = vunpack.c.l.b16 %v692
    %v1096 = vunpack.c.h.b16 %v692
    %v1097 = vunpack.c.l.b16 %v693
    %v1098 = vunpack.c.h.b16 %v693
    %v1099 = vunpack.c.l.b16 %v694
    %v1100 = vunpack.c.h.b16 %v694
    %v1101 = vunpack.c.l.b16 %v695
    %v1102 = vunpack.c.h.b16 %v695
    %v1103 = vunpack.c.l.b16 %v696
    %v1104 = vunpack.c.h.b16 %v696
    %v1105 = vunpack.c.l.b16 %v697
    %v1106 = vunpack.c.h.b16 %v697
    %v1107 = vunpack.c.l.b16 %v698
    %v1108 = vunpack.c.h.b16 %v698
    %v1109 = vunpack.c.l.b16 %v699
    %v1110 = vunpack.c.h.b16 %v699
    %v1111 = vunpack.c.l.b16 %v700
    %v1112 = vunpack.c.h.b16 %v700
    %v1113 = vunpack.c.l.b16 %v701
    %v1114 = vunpack.c.h.b16 %v701
    %v1115 = vunpack.c.l.b16 %v702
    %v1116 = vunpack.c.h.b16 %v702
    %v1117 = vunpack.c.l.b16 %v703
    %v1118 = vunpack.c.h.b16 %v703
    %v1119 = vunpack.c.l.b16 %v704
    %v1120 = vunpack.c.h.b16 %v704
    %v1121 = vunpack.c.l.b16 %v705
    %v1122 = vunpack.c.h.b16 %v705
    %v1123 = vunpack.c.l.b16 %v706
    %v1124 = vunpack.c.h.b16 %v706
    %v1125 = vunpack.c.l.b16 %v707
    %v1126 = vunpack.c.h.b16 %v707
    %v1127 = vunpack.c.l.b16 %v708
    %v1128 = vunpack.c.h.b16 %v708
    %v1129 = vunpack.c.l.b16 %v709
    %v1130 = vunpack.c.h.b16 %v709
    %v1131 = vunpack.c.l.b16 %v710
    %v1132 = vunpack.c.h.b16 %v710
    %v1133 = vunpack.c.l.b16 %v711
    %v1134 = vunpack.c.h.b16 %v711
    %v1135 = vunpack.c.l.b16 %v712
    %v1136 = vunpack.c.h.b16 %v712
    %v1137 = vunpack.c.l.b16 %v713
    %v1138 = vunpack.c.h.b16 %v713
    %v1139 = vunpack.c.l.b16 %v714
    %v1140 = vunpack.c.h.b16 %v714
    %v1141 = vunpack.c.l.b16 %v715
    %v1142 = vunpack.c.h.b16 %v715
    %v1143 = vunpack.c.l.b16 %v716
    %v1144 = vunpack.c.h.b16 %v716
    %v1145 = vunpack.c.l.b16 %v717
    %v1146 = vunpack.c.h.b16 %v717
    %v1147 = vunpack.c.l.b16 %v718
    %v1148 = vunpack.c.h.b16 %v718
    %v1149 = vunpack.c.l.b16 %v719
    %v1150 = vunpack.c.h.b16 %v719
    %v1151 = vunpack.c.l.b16 %v720
    %v1152 = vunpack.c.h.b16 %v720
    %v1153 = vunpack.c.l.b16 %v721
    %v1154 = vunpack.c.h.b16 %v721
    %v1155 = vunpack.c.l.b16 %v722
    %v1156 = vunpack.c.h.b16 %v722
    %v1157 = vunpack.c.l.b16 %v723
    %v1158 = vunpack.c.h.b16 %v723
    %v1159 = vunpack.c.l.b16 %v724
    %v1160 = vunpack.c.h.b16 %v724
    %v1161 = vunpack.c.l.b16 %v725
    %v1162 = vunpack.c.h.b16 %v725
    %v1163 = vunpack.c.l.b16 %v726
    %v1164 = vunpack.c.h.b16 %v726
    %v1165 = vunpack.c.l.b16 %v727
    %v1166 = vunpack.c.h.b16 %v727
    %v1167 = vunpack.c.l.b16 %v728
    %v1168 = vunpack.c.h.b16 %v728
    %v1169 = vunpack.c.l.b16 %v729
    %v1170 = vunpack.c.h.b16 %v729
    %v1171 = vpack.c.b16 %v885, %v883
    %v1172 = vpack.c.b16 %v886, %v884
    %v1173 = vpack.c.b16 %v889, %v887
    %v1174 = vpack.c.b16 %v890, %v888
    %v1175 = vpack.c.b16 %v893, %v891
    %v1176 = vpack.c.b16 %v894, %v892
    %v1177 = vpack.c.b16 %v897, %v895
    %v1178 = vpack.c.b16 %v898, %v896
    %v1179 = vpack.c.b16 %v901, %v899
    %v1180 = vpack.c.b16 %v902, %v900
    %v1181 = vpack.c.b16 %v905, %v903
    %v1182 = vpack.c.b16 %v906, %v904
    %v1183 = vpack.c.b16 %v909, %v907
    %v1184 = vpack.c.b16 %v910, %v908
    %v1185 = vpack.c.b16 %v913, %v911
    %v1186 = vpack.c.b16 %v914, %v912
    %v1187 = vpack.c.b16 %v917, %v915
    %v1188 = vpack.c.b16 %v918, %v916
    %v1189 = vpack.c.b16 %v921, %v919
    %v1190 = vpack.c.b16 %v922, %v920
    %v1191 = vpack.c.b16 %v925, %v923
    %v1192 = vpack.c.b16 %v926, %v924
    %v1193 = vpack.c.b16 %v929, %v927
    %v1194 = vpack.c.b16 %v930, %v928
    %v1195 = vpack.c.b16 %v933, %v931
    %v1196 = vpack.c.b16 %v934, %v932
    %v1197 = vpack.c.b16 %v937, %v935
    %v1198 = vpack.c.b16 %v938, %v936
    %v1199 = vpack.c.b16 %v941, %v939
    %v1200 = vpack.c.b16 %v942, %v940
    %v1201 = vpack.c.b16 %v945, %v943
    %v1202 = vpack.c.b16 %v946, %v944
    %v1203 = vpack.c.b16 %v949, %v947
    %v1204 = vpack.c.b16 %v950, %v948
    %v1205 = vpack.c.b16 %v953, %v951
    %v1206 = vpack.c.b16 %v954, %v952
    %v1207 = vpack.c.b16 %v957, %v955
    %v1208 = vpack.c.b16 %v958, %v956
    %v1209 = vpack.c.b16 %v961, %v959
    %v1210 = vpack.c.b16 %v962, %v960
    %v1211 = vpack.c.b16 %v965, %v963
    %v1212 = vpack.c.b16 %v966, %v964
    %v1213 = vpack.c.b16 %v969, %v967
    %v1214 = vpack.c.b16 %v970, %v968
    %v1215 = vpack.c.b16 %v973, %v971
    %v1216 = vpack.c.b16 %v974, %v972
    %v1217 = vpack.c.b16 %v977, %v975
    %v1218 = vpack.c.b16 %v978, %v976
    %v1219 = vpack.c.b16 %v981, %v979
    %v1220 = vpack.c.b16 %v982, %v980
    %v1221 = vpack.c.b16 %v985, %v983
    %v1222 = vpack.c.b16 %v986, %v984
    %v1223 = vpack.c.b16 %v989, %v987
    %v1224 = vpack.c.b16 %v990, %v988
    %v1225 = vpack.c.b16 %v993, %v991
    %v1226 = vpack.c.b16 %v994, %v992
    %v1227 = vpack.c.b16 %v997, %v995
    %v1228 = vpack.c.b16 %v998, %v996
    %v1229 = vpack.c.b16 %v1001, %v999
    %v1230 = vpack.c.b16 %v1002, %v1000
    %v1231 = vpack.c.b16 %v1005, %v1003
    %v1232 = vpack.c.b16 %v1006, %v1004
    %v1233 = vpack.c.b16 %v1009, %v1007
    %v1234 = vpack.c.b16 %v1010, %v1008
    %v1235 = vpack.c.b16 %v1013, %v1011
    %v1236 = vpack.c.b16 %v1014, %v1012
    %v1237 = vpack.c.b16 %v1017, %v1015
    %v1238 = vpack.c.b16 %v1018, %v1016
    %v1239 = vpack.c.b16 %v1021, %v1019
    %v1240 = vpack.c.b16 %v1022, %v1020
    %v1241 = vpack.c.b16 %v1025, %v1023
    %v1242 = vpack.c.b16 %v1026, %v1024
    %v1243 = vpack.c.b16 %v1029, %v1027
    %v1244 = vpack.c.b16 %v1030, %v1028
    %v1245 = vpack.c.b16 %v1033, %v1031
    %v1246 = vpack.c.b16 %v1034, %v1032
    %v1247 = vpack.c.b16 %v1037, %v1035
    %v1248 = vpack.c.b16 %v1038, %v1036
    %v1249 = vpack.c.b16 %v1041, %v1039
    %v1250 = vpack.c.b16 %v1042, %v1040
    %v1251 = vpack.c.b16 %v1045, %v1043
    %v1252 = vpack.c.b16 %v1046, %v1044
    %v1253 = vpack.c.b16 %v1049, %v1047
    %v1254 = vpack.c.b16 %v1050, %v1048
    %v1255 = vpack.c.b16 %v1053, %v1051
    %v1256 = vpack.c.b16 %v1054, %v1052
    %v1257 = vpack.c.b16 %v1057, %v1055
    %v1258 = vpack.c.b16 %v1058, %v1056
    %v1259 = vpack.c.b16 %v1061, %v1059
    %v1260 = vpack.c.b16 %v1062, %v1060
    %v1261 = vpack.c.b16 %v1065, %v1063
    %v1262 = vpack.c.b16 %v1066, %v1064
    %v1263 = vpack.c.b16 %v1069, %v1067
    %v1264 = vpack.c.b16 %v1070, %v1068
    %v1265 = vpack.c.b16 %v1073, %v1071
    %v1266 = vpack.c.b16 %v1074, %v1072
    %v1267 = vpack.c.b16 %v1077, %v1075
    %v1268 = vpack.c.b16 %v1078, %v1076
    %v1269 = vpack.c.b16 %v1081, %v1079
    %v1270 = vpack.c.b16 %v1082, %v1080
    %v1271 = vpack.c.b16 %v1085, %v1083
    %v1272 = vpack.c.b16 %v1086, %v1084
    %v1273 = vpack.c.b16 %v1089, %v1087
    %v1274 = vpack.c.b16 %v1090, %v1088
    %v1275 = vpack.c.b16 %v1093, %v1091
    %v1276 = vpack.c.b16 %v1094, %v1092
    %v1277 = vpack.c.b16 %v1097, %v1095
    %v1278 = vpack.c.b16 %v1098, %v1096
    %v1279 = vpack.c.b16 %v1101, %v1099
    %v1280 = vpack.c.b16 %v1102, %v1100
    %v1281 = vpack.c.b16 %v1105, %v1103
    %v1282 = vpack.c.b16 %v1106, %v1104
    %v1283 = vpack.c.b16 %v1109, %v1107
    %v1284 = vpack.c.b16 %v1110, %v1108
    %v1285 = vpack.c.b16 %v1113, %v1111
    %v1286 = vpack.c.b16 %v1114, %v1112
    %v1287 = vpack.c.b16 %v1117, %v1115
    %v1288 = vpack.c.b16 %v1118, %v1116
    %v1289 = vpack.c.b16 %v1121, %v1119
    %v1290 = vpack.c.b16 %v1122, %v1120
    %v1291 = vpack.c.b16 %v1125, %v1123
    %v1292 = vpack.c.b16 %v1126, %v1124
    %v1293 = vpack.c.b16 %v1129, %v1127
    %v1294 = vpack.c.b16 %v1130, %v1128
    %v1295 = vpack.c.b16 %v1133, %v1131
    %v1296 = vpack.c.b16 %v1134, %v1132
    %v1297 = vpack.c.b16 %v1137, %v1135
    %v1298 = vpack.c.b16 %v1138, %v1136
    %v1299 = vpack.c.b16 %v1141, %v1139
    %v1300 = vpack.c.b16 %v1142, %v1140
    %v1301 = vpack.c.b16 %v1145, %v1143
    %v1302 = vpack.c.b16 %v1146, %v1144
    %v1303 = vpack.c.b16 %v1149, %v1147
    %v1304 = vpack.c.b16 %v1150, %v1148
    %v1305 = vpack.c.b16 %v1153, %v1151
    %v1306 = vpack.c.b16 %v1154, %v1152
    %v1307 = vpack.c.b16 %v1157, %v1155
    %v1308 = vpack.c.b16 %v1158, %v1156
    %v1309 = vpack.c.b16 %v1161, %v1159
    %v1310 = vpack.c.b16 %v1162, %v1160
    %v1311 = vpack.c.b16 %v1165, %v1163
    %v1312 = vpack.c.b16 %v1166, %v1164
    %v1313 = vpack.c.b16 %v1169, %v1167
    %v1314 = vpack.c.b16 %v1170, %v1168
    %1459 = vmatprep.subr.bf16.mxu0 %v1172
    %1460 = vmatpush1.bf16.msra.mxu0 %v1171
    %1461 = vmatprep.subr.bf16.mxu0 %v1174
    %1462 = vmatpush1.bf16.msra.mxu0 %v1173
    %1463 = vmatprep.subr.bf16.mxu0 %v1176
    %1464 = vmatpush1.bf16.msra.mxu0 %v1175
    %1465 = vmatprep.subr.bf16.mxu0 %v1178
    %1466 = vmatpush1.bf16.msra.mxu0 %v1177
    %1467 = vmatprep.subr.bf16.mxu0 %v1180
    %1468 = vmatpush1.bf16.msra.mxu0 %v1179
    %1469 = vmatprep.subr.bf16.mxu0 %v1182
    %1470 = vmatpush1.bf16.msra.mxu0 %v1181
    %1471 = vmatprep.subr.bf16.mxu0 %v1184
    %1472 = vmatpush1.bf16.msra.mxu0 %v1183
    %1473 = vmatprep.subr.bf16.mxu0 %v1186
    %1474 = vmatpush1.bf16.msra.mxu0 %v1185
    %1475 = vmatprep.subr.bf16.mxu0 %v1188
    %1476 = vmatpush1.bf16.msra.mxu0 %v1187
    %1477 = vmatprep.subr.bf16.mxu0 %v1190
    %1478 = vmatpush1.bf16.msra.mxu0 %v1189
    %1479 = vmatprep.subr.bf16.mxu0 %v1192
    %1480 = vmatpush1.bf16.msra.mxu0 %v1191
    %1481 = vmatprep.subr.bf16.mxu0 %v1194
    %1482 = vmatpush1.bf16.msra.mxu0 %v1193
    %1483 = vmatprep.subr.bf16.mxu0 %v1196
    %1484 = vmatpush1.bf16.msra.mxu0 %v1195
    %1485 = vmatprep.subr.bf16.mxu0 %v1198
    %1486 = vmatpush1.bf16.msra.mxu0 %v1197
    %1487 = vmatprep.subr.bf16.mxu0 %v1200
    %1488 = vmatpush1.bf16.msra.mxu0 %v1199
    %1489 = vmatprep.subr.bf16.mxu0 %v1202
    %1490 = vmatpush1.bf16.msra.mxu0 %v1201
    %1491 = vmatprep.mubr.bf16.mxu0 %v731
    %1492 = vmatmul.mubr.bf16.gmra.mrb[0].mxu0 %v730
    %v1493 = vpop.f32.mrb[0].mxu0
    %v1494 = vadd.f32 0.0, %v1493
    %v1495 = vpop.f32.mrb[0].mxu0
    %v1496 = vadd.f32 0.0, %v1495
    %v1497 = vpop.f32.mrb[0].mxu0
    %v1498 = vadd.f32 0.0, %v1497
    %v1499 = vpop.f32.mrb[0].mxu0
    %v1500 = vadd.f32 0.0, %v1499
    %1501 = vdwg.mxu0
    %1502 = vmatprep.subr.bf16.mxu0 %v1204
    %1503 = vmatpush1.bf16.msra.mxu0 %v1203
    %1504 = vmatprep.subr.bf16.mxu0 %v1206
    %1505 = vmatpush1.bf16.msra.mxu0 %v1205
    %1506 = vmatprep.subr.bf16.mxu0 %v1208
    %1507 = vmatpush1.bf16.msra.mxu0 %v1207
    %1508 = vmatprep.subr.bf16.mxu0 %v1210
    %1509 = vmatpush1.bf16.msra.mxu0 %v1209
    %1510 = vmatprep.subr.bf16.mxu0 %v1212
    %1511 = vmatpush1.bf16.msra.mxu0 %v1211
    %1512 = vmatprep.subr.bf16.mxu0 %v1214
    %1513 = vmatpush1.bf16.msra.mxu0 %v1213
    %1514 = vmatprep.subr.bf16.mxu0 %v1216
    %1515 = vmatpush1.bf16.msra.mxu0 %v1215
    %1516 = vmatprep.subr.bf16.mxu0 %v1218
    %1517 = vmatpush1.bf16.msra.mxu0 %v1217
    %1518 = vmatprep.subr.bf16.mxu0 %v1220
    %1519 = vmatpush1.bf16.msra.mxu0 %v1219
    %1520 = vmatprep.subr.bf16.mxu0 %v1222
    %1521 = vmatpush1.bf16.msra.mxu0 %v1221
    %1522 = vmatprep.subr.bf16.mxu0 %v1224
    %1523 = vmatpush1.bf16.msra.mxu0 %v1223
    %1524 = vmatprep.subr.bf16.mxu0 %v1226
    %1525 = vmatpush1.bf16.msra.mxu0 %v1225
    %1526 = vmatprep.subr.bf16.mxu0 %v1228
    %1527 = vmatpush1.bf16.msra.mxu0 %v1227
    %1528 = vmatprep.subr.bf16.mxu0 %v1230
    %1529 = vmatpush1.bf16.msra.mxu0 %v1229
    %1530 = vmatprep.subr.bf16.mxu0 %v1232
    %1531 = vmatpush1.bf16.msra.mxu0 %v1231
    %1532 = vmatprep.subr.bf16.mxu0 %v1234
    %1533 = vmatpush1.bf16.msra.mxu0 %v1233
    %1534 = vmatprep.mubr.bf16.mxu0 %v733
    %1535 = vmatmul.mubr.bf16.gmra.mrb[0].mxu0 %v732
    %v1536 = vpop.f32.mrb[0].mxu0
    %v1537 = vadd.f32 %v1494, %v1536
    %v1538 = vpop.f32.mrb[0].mxu0
    %v1539 = vadd.f32 %v1496, %v1538
    %v1540 = vpop.f32.mrb[0].mxu0
    %v1541 = vadd.f32 %v1498, %v1540
    %v1542 = vpop.f32.mrb[0].mxu0
    %v1543 = vadd.f32 %v1500, %v1542
    %1544 = vdwg.mxu0
    %1545 = vmatprep.subr.bf16.mxu0 %v1236
    %1546 = vmatpush1.bf16.msra.mxu0 %v1235
    %1547 = vmatprep.subr.bf16.mxu0 %v1238
    %1548 = vmatpush1.bf16.msra.mxu0 %v1237
    %1549 = vmatprep.subr.bf16.mxu0 %v1240
    %1550 = vmatpush1.bf16.msra.mxu0 %v1239
    %1551 = vmatprep.subr.bf16.mxu0 %v1242
    %1552 = vmatpush1.bf16.msra.mxu0 %v1241
    %1553 = vmatprep.subr.bf16.mxu0 %v1244
    %1554 = vmatpush1.bf16.msra.mxu0 %v1243
    %1555 = vmatprep.subr.bf16.mxu0 %v1246
    %1556 = vmatpush1.bf16.msra.mxu0 %v1245
    %1557 = vmatprep.subr.bf16.mxu0 %v1248
    %1558 = vmatpush1.bf16.msra.mxu0 %v1247
    %1559 = vmatprep.subr.bf16.mxu0 %v1250
    %1560 = vmatpush1.bf16.msra.mxu0 %v1249
    %1561 = vmatprep.subr.bf16.mxu0 %v1252
    %1562 = vmatpush1.bf16.msra.mxu0 %v1251
    %1563 = vmatprep.subr.bf16.mxu0 %v1254
    %1564 = vmatpush1.bf16.msra.mxu0 %v1253
    %1565 = vmatprep.subr.bf16.mxu0 %v1256
    %1566 = vmatpush1.bf16.msra.mxu0 %v1255
    %1567 = vmatprep.subr.bf16.mxu0 %v1258
    %1568 = vmatpush1.bf16.msra.mxu0 %v1257
    %1569 = vmatprep.subr.bf16.mxu0 %v1260
    %1570 = vmatpush1.bf16.msra.mxu0 %v1259
    %1571 = vmatprep.subr.bf16.mxu0 %v1262
    %1572 = vmatpush1.bf16.msra.mxu0 %v1261
    %1573 = vmatprep.subr.bf16.mxu0 %v1264
    %1574 = vmatpush1.bf16.msra.mxu0 %v1263
    %1575 = vmatprep.subr.bf16.mxu0 %v1266
    %1576 = vmatpush1.bf16.msra.mxu0 %v1265
    %1577 = vmatprep.mubr.bf16.mxu0 %v735
    %1578 = vmatmul.mubr.bf16.gmra.mrb[0].mxu0 %v734
    %v1579 = vpop.f32.mrb[0].mxu0
    %v1580 = vadd.f32 %v1537, %v1579
    %v1581 = vpop.f32.mrb[0].mxu0
    %v1582 = vadd.f32 %v1539, %v1581
    %v1583 = vpop.f32.mrb[0].mxu0
    %v1584 = vadd.f32 %v1541, %v1583
    %v1585 = vpop.f32.mrb[0].mxu0
    %v1586 = vadd.f32 %v1543, %v1585
    %1587 = vdwg.mxu0
    %1588 = vmatprep.subr.bf16.mxu0 %v1268
    %1589 = vmatpush1.bf16.msra.mxu0 %v1267
    %1590 = vmatprep.subr.bf16.mxu0 %v1270
    %1591 = vmatpush1.bf16.msra.mxu0 %v1269
    %1592 = vmatprep.subr.bf16.mxu0 %v1272
    %1593 = vmatpush1.bf16.msra.mxu0 %v1271
    %1594 = vmatprep.subr.bf16.mxu0 %v1274
    %1595 = vmatpush1.bf16.msra.mxu0 %v1273
    %1596 = vmatprep.subr.bf16.mxu0 %v1276
    %1597 = vmatpush1.bf16.msra.mxu0 %v1275
    %1598 = vmatprep.subr.bf16.mxu0 %v1278
    %1599 = vmatpush1.bf16.msra.mxu0 %v1277
    %1600 = vmatprep.subr.bf16.mxu0 %v1280
    %1601 = vmatpush1.bf16.msra.mxu0 %v1279
    %1602 = vmatprep.subr.bf16.mxu0 %v1282
    %1603 = vmatpush1.bf16.msra.mxu0 %v1281
    %1604 = vmatprep.subr.bf16.mxu0 %v1284
    %1605 = vmatpush1.bf16.msra.mxu0 %v1283
    %1606 = vmatprep.subr.bf16.mxu0 %v1286
    %1607 = vmatpush1.bf16.msra.mxu0 %v1285
    %1608 = vmatprep.subr.bf16.mxu0 %v1288
    %1609 = vmatpush1.bf16.msra.mxu0 %v1287
    %1610 = vmatprep.subr.bf16.mxu0 %v1290
    %1611 = vmatpush1.bf16.msra.mxu0 %v1289
    %1612 = vmatprep.subr.bf16.mxu0 %v1292
    %1613 = vmatpush1.bf16.msra.mxu0 %v1291
    %1614 = vmatprep.subr.bf16.mxu0 %v1294
    %1615 = vmatpush1.bf16.msra.mxu0 %v1293
    %1616 = vmatprep.subr.bf16.mxu0 %v1296
    %1617 = vmatpush1.bf16.msra.mxu0 %v1295
    %1618 = vmatprep.subr.bf16.mxu0 %v1298
    %1619 = vmatpush1.bf16.msra.mxu0 %v1297
    %1620 = vmatprep.mubr.bf16.mxu0 %v737
    %1621 = vmatmul.mubr.bf16.gmra.mrb[0].mxu0 %v736
    %v1622 = vpop.f32.mrb[0].mxu0
    %v1623 = vadd.f32 %v1580, %v1622
    %v1624 = vpop.f32.mrb[0].mxu0
    %v1625 = vadd.f32 %v1582, %v1624
    %v1626 = vpop.f32.mrb[0].mxu0
    %v1627 = vadd.f32 %v1584, %v1626
    %v1628 = vpop.f32.mrb[0].mxu0
    %v1629 = vadd.f32 %v1586, %v1628
    %1630 = vdwg.mxu0
    %1631 = vmatprep.subr.bf16.mxu0 %v1300
    %1632 = vmatpush1.bf16.msra.mxu0 %v1299
    %1633 = vmatprep.subr.bf16.mxu0 %v1302
    %1634 = vmatpush1.bf16.msra.mxu0 %v1301
    %1635 = vmatprep.subr.bf16.mxu0 %v1304
    %1636 = vmatpush1.bf16.msra.mxu0 %v1303
    %1637 = vmatprep.subr.bf16.mxu0 %v1306
    %1638 = vmatpush1.bf16.msra.mxu0 %v1305
    %1639 = vmatprep.subr.bf16.mxu0 %v1308
    %1640 = vmatpush1.bf16.msra.mxu0 %v1307
    %1641 = vmatprep.subr.bf16.mxu0 %v1310
    %1642 = vmatpush1.bf16.msra.mxu0 %v1309
    %1643 = vmatprep.subr.bf16.mxu0 %v1312
    %1644 = vmatpush1.bf16.msra.mxu0 %v1311
    %1645 = vmatprep.subr.bf16.mxu0 %v1314
    %1646 = vmatpush1.bf16.msra.mxu0 %v1313
    %1647 = vmatprep.subr.bf16.mxu0 0
    %1648 = vmatpush1.bf16.msra.mxu0 0
    %1649 = vmatprep.subr.bf16.mxu0 0
    %1650 = vmatpush1.bf16.msra.mxu0 0
    %1651 = vmatprep.subr.bf16.mxu0 0
    %1652 = vmatpush1.bf16.msra.mxu0 0
    %1653 = vmatprep.subr.bf16.mxu0 0
    %1654 = vmatpush1.bf16.msra.mxu0 0
    %1655 = vmatprep.subr.bf16.mxu0 0
    %1656 = vmatpush1.bf16.msra.mxu0 0
    %1657 = vmatprep.subr.bf16.mxu0 0
    %1658 = vmatpush1.bf16.msra.mxu0 0
    %1659 = vmatprep.subr.bf16.mxu0 0
    %1660 = vmatpush1.bf16.msra.mxu0 0
    %1661 = vmatprep.subr.bf16.mxu0 0
    %1662 = vmatpush1.bf16.msra.mxu0 0
    %1663 = vmatprep.mubr.bf16.mxu0 0
    %1664 = vmatmul.mubr.bf16.gmra.mrb[0].mxu0 %v738
    %v1665 = vpop.f32.mrb[0].mxu0
    %v1666 = vadd.f32 %v1623, %v1665
    %v1667 = vpop.f32.mrb[0].mxu0
    %v1668 = vadd.f32 %v1625, %v1667
    %v1669 = vpop.f32.mrb[0].mxu0
    %v1670 = vadd.f32 %v1627, %v1669
    %v1671 = vpop.f32.mrb[0].mxu0
    %v1672 = vadd.f32 %v1629, %v1671
    %1673 = vdwg.mxu0
    %1674 = vst [vmem:[#allocation3] sm:$0xff] %v1666
    %1675 = vst [vmem:[#allocation3 + $0x8] sm:$0xff] %v1668
    %1676 = vst [vmem:[#allocation3 + $0x10] sm:$0xff] %v1670
    %1677 = vst [vmem:[#allocation3 + $0x18] sm:$0xff] %v1672
    %v1678 = vld [vmem:[#allocation3] sm:$0xff]
    %v1679 = vld [vmem:[#allocation3 + $0x8] sm:$0xff]
    %v1680 = vld [vmem:[#allocation3 + $0x10] sm:$0xff]
    %v1681 = vld [vmem:[#allocation3 + $0x18] sm:$0xff]
    %v1682 = vmul.f32 %v1678, %v1678
    %v1683 = vmul.f32 %v1679, %v1679
    %v1684 = vmul.f32 %v1680, %v1680
    %v1685 = vmul.f32 %v1681, %v1681
    %v1686 = vmul.f32 %v1678, %v1682
    %v1687 = vmul.f32 %v1679, %v1683
    %v1688 = vmul.f32 %v1680, %v1684
    %v1689 = vmul.f32 %v1681, %v1685
    %v1690 = vmul.f32 %v1686, 0.044715
    %v1691 = vmul.f32 %v1687, 0.044715
    %v1692 = vmul.f32 %v1688, 0.044715
    %v1693 = vmul.f32 %v1689, 0.044715
    %v1694 = vadd.f32 %v1678, %v1690
    %v1695 = vadd.f32 %v1679, %v1691
    %v1696 = vadd.f32 %v1680, %v1692
    %v1697 = vadd.f32 %v1681, %v1693
    %v1698 = vmul.f32 %v1694, 0.7978846
    %v1699 = vmul.f32 %v1695, 0.7978846
    %v1700 = vmul.f32 %v1696, 0.7978846
    %v1701 = vmul.f32 %v1697, 0.7978846
    %v1702 = vtanh.pop %v1698
    %v1703 = vtanh.pop %v1699
    %v1704 = vtanh.pop %v1700
    %v1705 = vtanh.pop %v1701
    %v1706 = vadd.f32 %v1702, 1.0
    %v1707 = vadd.f32 %v1703, 1.0
    %v1708 = vadd.f32 %v1704, 1.0
    %v1709 = vadd.f32 %v1705, 1.0
    %v1710 = vmul.f32 %v1706, 0.5
    %v1711 = vmul.f32 %v1707, 0.5
    %v1712 = vmul.f32 %v1708, 0.5
    %v1713 = vmul.f32 %v1709, 0.5
    %v1714 = vmul.f32 %v1678, %v1710
    %v1715 = vmul.f32 %v1679, %v1711
    %v1716 = vmul.f32 %v1680, %v1712
    %v1717 = vmul.f32 %v1681, %v1713
    %v1718 = vxor.u32 %v1714, 2147483648
    %v1719 = vxor.u32 %v1715, 2147483648
    %v1720 = vxor.u32 %v1716, 2147483648
    %v1721 = vxor.u32 %v1717, 2147483648
    %v1722 = vmul.f32 %v1718, 1.442695
    %v1723 = vpow.pop %v1722
    %v1724 = vmul.f32 %v1719, 1.442695
    %v1725 = vpow.pop %v1724
    %v1726 = vmul.f32 %v1720, 1.442695
    %v1727 = vpow.pop %v1726
    %v1728 = vmul.f32 %v1721, 1.442695
    %v1729 = vpow.pop %v1728
    %v1730 = vadd.f32 %v1723, 1.0
    %v1731 = vadd.f32 %v1725, 1.0
    %v1732 = vadd.f32 %v1727, 1.0
    %v1733 = vadd.f32 %v1729, 1.0
    %v1734 = vrcp.pop %v1730
    %v1735 = vmul.f32 1.0, %v1734
    %v1736 = vrcp.pop %v1731
    %v1737 = vmul.f32 1.0, %v1736
    %v1738 = vrcp.pop %v1732
    %v1739 = vmul.f32 1.0, %v1738
    %v1740 = vrcp.pop %v1733
    %v1741 = vmul.f32 1.0, %v1740
    %v1742 = vmul.f32 %v1714, %v1735
    %v1743 = vmul.f32 %v1715, %v1737
    %v1744 = vmul.f32 %v1716, %v1739
    %v1745 = vmul.f32 %v1717, %v1741
    %vm1746 = vcmp.ge.f32.partialorder %v1714, -2.2
    %vm1747 = vcmp.ge.f32.partialorder %v1715, -2.2
    %vm1748 = vcmp.ge.f32.partialorder %v1716, -2.2
    %vm1749 = vcmp.ge.f32.partialorder %v1717, -2.2
    %v1750 = vsel %vm1746, 1, 0
    %v1751 = vsel %vm1747, 1, 0
    %v1752 = vsel %vm1748, 1, 0
    %v1753 = vsel %vm1749, 1, 0
    %v1754 = vcvt.s32.f32 %v1750
    %v1755 = vcvt.s32.f32 %v1751
    %v1756 = vcvt.s32.f32 %v1752
    %v1757 = vcvt.s32.f32 %v1753
    %vm1758 = vcmp.ge.f32.partialorder %v1714, -1.8
    %vm1759 = vcmp.ge.f32.partialorder %v1715, -1.8
    %vm1760 = vcmp.ge.f32.partialorder %v1716, -1.8
    %vm1761 = vcmp.ge.f32.partialorder %v1717, -1.8
    %v1762 = vsel %vm1758, 1, 0
    %v1763 = vsel %vm1759, 1, 0
    %v1764 = vsel %vm1760, 1, 0
    %v1765 = vsel %vm1761, 1, 0
    %v1766 = vcvt.s32.f32 %v1762
    %v1767 = vcvt.s32.f32 %v1763
    %v1768 = vcvt.s32.f32 %v1764
    %v1769 = vcvt.s32.f32 %v1765
    %vm1770 = vcmp.ge.f32.partialorder %v1714, -1.4
    %vm1771 = vcmp.ge.f32.partialorder %v1715, -1.4
    %vm1772 = vcmp.ge.f32.partialorder %v1716, -1.4
    %vm1773 = vcmp.ge.f32.partialorder %v1717, -1.4
    %v1774 = vsel %vm1770, 1, 0
    %v1775 = vsel %vm1771, 1, 0
    %v1776 = vsel %vm1772, 1, 0
    %v1777 = vsel %vm1773, 1, 0
    %v1778 = vcvt.s32.f32 %v1774
    %v1779 = vcvt.s32.f32 %v1775
    %v1780 = vcvt.s32.f32 %v1776
    %v1781 = vcvt.s32.f32 %v1777
    %vm1782 = vcmp.ge.f32.partialorder %v1714, -1.0
    %vm1783 = vcmp.ge.f32.partialorder %v1715, -1.0
    %vm1784 = vcmp.ge.f32.partialorder %v1716, -1.0
    %vm1785 = vcmp.ge.f32.partialorder %v1717, -1.0
    %v1786 = vsel %vm1782, 1, 0
    %v1787 = vsel %vm1783, 1, 0
    %v1788 = vsel %vm1784, 1, 0
    %v1789 = vsel %vm1785, 1, 0
    %v1790 = vcvt.s32.f32 %v1786
    %v1791 = vcvt.s32.f32 %v1787
    %v1792 = vcvt.s32.f32 %v1788
    %v1793 = vcvt.s32.f32 %v1789
    %vm1794 = vcmp.ge.f32.partialorder %v1714, -0.6
    %vm1795 = vcmp.ge.f32.partialorder %v1715, -0.6
    %vm1796 = vcmp.ge.f32.partialorder %v1716, -0.6
    %vm1797 = vcmp.ge.f32.partialorder %v1717, -0.6
    %v1798 = vsel %vm1794, 1, 0
    %v1799 = vsel %vm1795, 1, 0
    %v1800 = vsel %vm1796, 1, 0
    %v1801 = vsel %vm1797, 1, 0
    %v1802 = vcvt.s32.f32 %v1798
    %v1803 = vcvt.s32.f32 %v1799
    %v1804 = vcvt.s32.f32 %v1800
    %v1805 = vcvt.s32.f32 %v1801
    %vm1806 = vcmp.ge.f32.partialorder %v1714, -0.2
    %vm1807 = vcmp.ge.f32.partialorder %v1715, -0.2
    %vm1808 = vcmp.ge.f32.partialorder %v1716, -0.2
    %vm1809 = vcmp.ge.f32.partialorder %v1717, -0.2
    %v1810 = vsel %vm1806, 1, 0
    %v1811 = vsel %vm1807, 1, 0
    %v1812 = vsel %vm1808, 1, 0
    %v1813 = vsel %vm1809, 1, 0
    %v1814 = vcvt.s32.f32 %v1810
    %v1815 = vcvt.s32.f32 %v1811
    %v1816 = vcvt.s32.f32 %v1812
    %v1817 = vcvt.s32.f32 %v1813
    %vm1818 = vcmp.ge.f32.partialorder %v1714, 0.2
    %vm1819 = vcmp.ge.f32.partialorder %v1715, 0.2
    %vm1820 = vcmp.ge.f32.partialorder %v1716, 0.2
    %vm1821 = vcmp.ge.f32.partialorder %v1717, 0.2
    %v1822 = vsel %vm1818, 1, 0
    %v1823 = vsel %vm1819, 1, 0
    %v1824 = vsel %vm1820, 1, 0
    %v1825 = vsel %vm1821, 1, 0
    %v1826 = vcvt.s32.f32 %v1822
    %v1827 = vcvt.s32.f32 %v1823
    %v1828 = vcvt.s32.f32 %v1824
    %v1829 = vcvt.s32.f32 %v1825
    %vm1830 = vcmp.ge.f32.partialorder %v1714, 0.6
    %vm1831 = vcmp.ge.f32.partialorder %v1715, 0.6
    %vm1832 = vcmp.ge.f32.partialorder %v1716, 0.6
    %vm1833 = vcmp.ge.f32.partialorder %v1717, 0.6
    %v1834 = vsel %vm1830, 1, 0
    %v1835 = vsel %vm1831, 1, 0
    %v1836 = vsel %vm1832, 1, 0
    %v1837 = vsel %vm1833, 1, 0
    %v1838 = vcvt.s32.f32 %v1834
    %v1839 = vcvt.s32.f32 %v1835
    %v1840 = vcvt.s32.f32 %v1836
    %v1841 = vcvt.s32.f32 %v1837
    %vm1842 = vcmp.ge.f32.partialorder %v1714, 1.0
    %vm1843 = vcmp.ge.f32.partialorder %v1715, 1.0
    %vm1844 = vcmp.ge.f32.partialorder %v1716, 1.0
    %vm1845 = vcmp.ge.f32.partialorder %v1717, 1.0
    %v1846 = vsel %vm1842, 1, 0
    %v1847 = vsel %vm1843, 1, 0
    %v1848 = vsel %vm1844, 1, 0
    %v1849 = vsel %vm1845, 1, 0
    %v1850 = vcvt.s32.f32 %v1846
    %v1851 = vcvt.s32.f32 %v1847
    %v1852 = vcvt.s32.f32 %v1848
    %v1853 = vcvt.s32.f32 %v1849
    %vm1854 = vcmp.ge.f32.partialorder %v1714, 1.4
    %vm1855 = vcmp.ge.f32.partialorder %v1715, 1.4
    %vm1856 = vcmp.ge.f32.partialorder %v1716, 1.4
    %vm1857 = vcmp.ge.f32.partialorder %v1717, 1.4
    %v1858 = vsel %vm1854, 1, 0
    %v1859 = vsel %vm1855, 1, 0
    %v1860 = vsel %vm1856, 1, 0
    %v1861 = vsel %vm1857, 1, 0
    %v1862 = vcvt.s32.f32 %v1858
    %v1863 = vcvt.s32.f32 %v1859
    %v1864 = vcvt.s32.f32 %v1860
    %v1865 = vcvt.s32.f32 %v1861
    %vm1866 = vcmp.ge.f32.partialorder %v1714, 1.8
    %vm1867 = vcmp.ge.f32.partialorder %v1715, 1.8
    %vm1868 = vcmp.ge.f32.partialorder %v1716, 1.8
    %vm1869 = vcmp.ge.f32.partialorder %v1717, 1.8
    %v1870 = vsel %vm1866, 1, 0
    %v1871 = vsel %vm1867, 1, 0
    %v1872 = vsel %vm1868, 1, 0
    %v1873 = vsel %vm1869, 1, 0
    %v1874 = vcvt.s32.f32 %v1870
    %v1875 = vcvt.s32.f32 %v1871
    %v1876 = vcvt.s32.f32 %v1872
    %v1877 = vcvt.s32.f32 %v1873
    %vm1878 = vcmp.ge.f32.partialorder %v1714, 2.2
    %vm1879 = vcmp.ge.f32.partialorder %v1715, 2.2
    %vm1880 = vcmp.ge.f32.partialorder %v1716, 2.2
    %vm1881 = vcmp.ge.f32.partialorder %v1717, 2.2
    %v1882 = vsel %vm1878, 1, 0
    %v1883 = vsel %vm1879, 1, 0
    %v1884 = vsel %vm1880, 1, 0
    %v1885 = vsel %vm1881, 1, 0
    %v1886 = vcvt.s32.f32 %v1882
    %v1887 = vcvt.s32.f32 %v1883
    %v1888 = vcvt.s32.f32 %v1884
    %v1889 = vcvt.s32.f32 %v1885
    %v1890 = vsub.f32 %v1754, %v1766
    %v1891 = vsub.f32 %v1755, %v1767
    %v1892 = vsub.f32 %v1756, %v1768
    %v1893 = vsub.f32 %v1757, %v1769
    %v1894 = vsub.f32 %v1766, %v1778
    %v1895 = vsub.f32 %v1767, %v1779
    %v1896 = vsub.f32 %v1768, %v1780
    %v1897 = vsub.f32 %v1769, %v1781
    %v1898 = vsub.f32 %v1778, %v1790
    %v1899 = vsub.f32 %v1779, %v1791
    %v1900 = vsub.f32 %v1780, %v1792
    %v1901 = vsub.f32 %v1781, %v1793
    %v1902 = vsub.f32 %v1790, %v1802
    %v1903 = vsub.f32 %v1791, %v1803
    %v1904 = vsub.f32 %v1792, %v1804
    %v1905 = vsub.f32 %v1793, %v1805
    %v1906 = vsub.f32 %v1802, %v1814
    %v1907 = vsub.f32 %v1803, %v1815
    %v1908 = vsub.f32 %v1804, %v1816
    %v1909 = vsub.f32 %v1805, %v1817
    %v1910 = vsub.f32 %v1814, %v1826
    %v1911 = vsub.f32 %v1815, %v1827
    %v1912 = vsub.f32 %v1816, %v1828
    %v1913 = vsub.f32 %v1817, %v1829
    %v1914 = vsub.f32 %v1826, %v1838
    %v1915 = vsub.f32 %v1827, %v1839
    %v1916 = vsub.f32 %v1828, %v1840
    %v1917 = vsub.f32 %v1829, %v1841
    %v1918 = vsub.f32 %v1838, %v1850
    %v1919 = vsub.f32 %v1839, %v1851
    %v1920 = vsub.f32 %v1840, %v1852
    %v1921 = vsub.f32 %v1841, %v1853
    %v1922 = vsub.f32 %v1850, %v1862
    %v1923 = vsub.f32 %v1851, %v1863
    %v1924 = vsub.f32 %v1852, %v1864
    %v1925 = vsub.f32 %v1853, %v1865
    %v1926 = vsub.f32 %v1862, %v1874
    %v1927 = vsub.f32 %v1863, %v1875
    %v1928 = vsub.f32 %v1864, %v1876
    %v1929 = vsub.f32 %v1865, %v1877
    %v1930 = vsub.f32 %v1874, %v1886
    %v1931 = vsub.f32 %v1875, %v1887
    %v1932 = vsub.f32 %v1876, %v1888
    %v1933 = vsub.f32 %v1877, %v1889
    %v1934 = vsub.f32 %v1714, -2.2
    %v1935 = vsub.f32 %v1715, -2.2
    %v1936 = vsub.f32 %v1716, -2.2
    %v1937 = vsub.f32 %v1717, -2.2
    %v1938 = vsub.f32 %v1714, -1.8
    %v1939 = vsub.f32 %v1715, -1.8
    %v1940 = vsub.f32 %v1716, -1.8
    %v1941 = vsub.f32 %v1717, -1.8
    %v1942 = vsub.f32 %v1714, -1.4
    %v1943 = vsub.f32 %v1715, -1.4
    %v1944 = vsub.f32 %v1716, -1.4
    %v1945 = vsub.f32 %v1717, -1.4
    %v1946 = vsub.f32 %v1714, -1.0
    %v1947 = vsub.f32 %v1715, -1.0
    %v1948 = vsub.f32 %v1716, -1.0
    %v1949 = vsub.f32 %v1717, -1.0
    %v1950 = vsub.f32 %v1714, -0.6
    %v1951 = vsub.f32 %v1715, -0.6
    %v1952 = vsub.f32 %v1716, -0.6
    %v1953 = vsub.f32 %v1717, -0.6
    %v1954 = vsub.f32 %v1714, -0.2
    %v1955 = vsub.f32 %v1715, -0.2
    %v1956 = vsub.f32 %v1716, -0.2
    %v1957 = vsub.f32 %v1717, -0.2
    %v1958 = vsub.f32 %v1714, 0.2
    %v1959 = vsub.f32 %v1715, 0.2
    %v1960 = vsub.f32 %v1716, 0.2
    %v1961 = vsub.f32 %v1717, 0.2
    %v1962 = vsub.f32 %v1714, 0.6
    %v1963 = vsub.f32 %v1715, 0.6
    %v1964 = vsub.f32 %v1716, 0.6
    %v1965 = vsub.f32 %v1717, 0.6
    %v1966 = vsub.f32 %v1714, 1.0
    %v1967 = vsub.f32 %v1715, 1.0
    %v1968 = vsub.f32 %v1716, 1.0
    %v1969 = vsub.f32 %v1717, 1.0
    %v1970 = vsub.f32 %v1714, 1.4
    %v1971 = vsub.f32 %v1715, 1.4
    %v1972 = vsub.f32 %v1716, 1.4
    %v1973 = vsub.f32 %v1717, 1.4
    %v1974 = vsub.f32 %v1714, 1.8
    %v1975 = vsub.f32 %v1715, 1.8
    %v1976 = vsub.f32 %v1716, 1.8
    %v1977 = vsub.f32 %v1717, 1.8
    %v1978 = vmul.f32 %v1934, 2.5
    %v1979 = vmul.f32 %v1935, 2.5
    %v1980 = vmul.f32 %v1936, 2.5
    %v1981 = vmul.f32 %v1937, 2.5
    %v1982 = vmul.f32 %v1938, 2.5
    %v1983 = vmul.f32 %v1939, 2.5
    %v1984 = vmul.f32 %v1940, 2.5
    %v1985 = vmul.f32 %v1941, 2.5
    %v1986 = vmul.f32 %v1942, 2.5
    %v1987 = vmul.f32 %v1943, 2.5
    %v1988 = vmul.f32 %v1944, 2.5
    %v1989 = vmul.f32 %v1945, 2.5
    %v1990 = vmul.f32 %v1946, 2.5
    %v1991 = vmul.f32 %v1947, 2.5
    %v1992 = vmul.f32 %v1948, 2.5
    %v1993 = vmul.f32 %v1949, 2.5
    %v1994 = vmul.f32 %v1950, 2.5
    %v1995 = vmul.f32 %v1951, 2.5
    %v1996 = vmul.f32 %v1952, 2.5
    %v1997 = vmul.f32 %v1953, 2.5
    %v1998 = vmul.f32 %v1954, 2.5
    %v1999 = vmul.f32 %v1955, 2.5
    %v2000 = vmul.f32 %v1956, 2.5
    %v2001 = vmul.f32 %v1957, 2.5
    %v2002 = vmul.f32 %v1958, 2.5
    %v2003 = vmul.f32 %v1959, 2.5
    %v2004 = vmul.f32 %v1960, 2.5
    %v2005 = vmul.f32 %v1961, 2.5
    %v2006 = vmul.f32 %v1962, 2.5
    %v2007 = vmul.f32 %v1963, 2.5
    %v2008 = vmul.f32 %v1964, 2.5
    %v2009 = vmul.f32 %v1965, 2.5
    %v2010 = vmul.f32 %v1966, 2.5
    %v2011 = vmul.f32 %v1967, 2.5
    %v2012 = vmul.f32 %v1968, 2.5
    %v2013 = vmul.f32 %v1969, 2.5
    %v2014 = vmul.f32 %v1970, 2.5
    %v2015 = vmul.f32 %v1971, 2.5
    %v2016 = vmul.f32 %v1972, 2.5
    %v2017 = vmul.f32 %v1973, 2.5
    %v2018 = vmul.f32 %v1974, 2.5
    %v2019 = vmul.f32 %v1975, 2.5
    %v2020 = vmul.f32 %v1976, 2.5
    %v2021 = vmul.f32 %v1977, 2.5
    %v2022 = vmul.f32 %v1978, %v1890
    %v2023 = vmul.f32 %v1979, %v1891
    %v2024 = vmul.f32 %v1980, %v1892
    %v2025 = vmul.f32 %v1981, %v1893
    %v2026 = vsub.f32 1.0, %v1982
    %v2027 = vsub.f32 1.0, %v1983
    %v2028 = vsub.f32 1.0, %v1984
    %v2029 = vsub.f32 1.0, %v1985
    %v2030 = vmul.f32 %v2026, %v1894
    %v2031 = vmul.f32 %v2027, %v1895
    %v2032 = vmul.f32 %v2028, %v1896
    %v2033 = vmul.f32 %v2029, %v1897
    %v2034 = vadd.f32 %v2022, %v2030
    %v2035 = vadd.f32 %v2023, %v2031
    %v2036 = vadd.f32 %v2024, %v2032
    %v2037 = vadd.f32 %v2025, %v2033
    %v2038 = vmul.f32 %v1982, %v1894
    %v2039 = vmul.f32 %v1983, %v1895
    %v2040 = vmul.f32 %v1984, %v1896
    %v2041 = vmul.f32 %v1985, %v1897
    %v2042 = vsub.f32 1.0, %v1986
    %v2043 = vsub.f32 1.0, %v1987
    %v2044 = vsub.f32 1.0, %v1988
    %v2045 = vsub.f32 1.0, %v1989
    %v2046 = vmul.f32 %v2042, %v1898
    %v2047 = vmul.f32 %v2043, %v1899
    %v2048 = vmul.f32 %v2044, %v1900
    %v2049 = vmul.f32 %v2045, %v1901
    %v2050 = vadd.f32 %v2038, %v2046
    %v2051 = vadd.f32 %v2039, %v2047
    %v2052 = vadd.f32 %v2040, %v2048
    %v2053 = vadd.f32 %v2041, %v2049
    %v2054 = vmul.f32 %v1986, %v1898
    %v2055 = vmul.f32 %v1987, %v1899
    %v2056 = vmul.f32 %v1988, %v1900
    %v2057 = vmul.f32 %v1989, %v1901
    %v2058 = vsub.f32 1.0, %v1990
    %v2059 = vsub.f32 1.0, %v1991
    %v2060 = vsub.f32 1.0, %v1992
    %v2061 = vsub.f32 1.0, %v1993
    %v2062 = vmul.f32 %v2058, %v1902
    %v2063 = vmul.f32 %v2059, %v1903
    %v2064 = vmul.f32 %v2060, %v1904
    %v2065 = vmul.f32 %v2061, %v1905
    %v2066 = vadd.f32 %v2054, %v2062
    %v2067 = vadd.f32 %v2055, %v2063
    %v2068 = vadd.f32 %v2056, %v2064
    %v2069 = vadd.f32 %v2057, %v2065
    %v2070 = vmul.f32 %v1990, %v1902
    %v2071 = vmul.f32 %v1991, %v1903
    %v2072 = vmul.f32 %v1992, %v1904
    %v2073 = vmul.f32 %v1993, %v1905
    %v2074 = vsub.f32 1.0, %v1994
    %v2075 = vsub.f32 1.0, %v1995
    %v2076 = vsub.f32 1.0, %v1996
    %v2077 = vsub.f32 1.0, %v1997
    %v2078 = vmul.f32 %v2074, %v1906
    %v2079 = vmul.f32 %v2075, %v1907
    %v2080 = vmul.f32 %v2076, %v1908
    %v2081 = vmul.f32 %v2077, %v1909
    %v2082 = vadd.f32 %v2070, %v2078
    %v2083 = vadd.f32 %v2071, %v2079
    %v2084 = vadd.f32 %v2072, %v2080
    %v2085 = vadd.f32 %v2073, %v2081
    %v2086 = vmul.f32 %v1994, %v1906
    %v2087 = vmul.f32 %v1995, %v1907
    %v2088 = vmul.f32 %v1996, %v1908
    %v2089 = vmul.f32 %v1997, %v1909
    %v2090 = vsub.f32 1.0, %v1998
    %v2091 = vsub.f32 1.0, %v1999
    %v2092 = vsub.f32 1.0, %v2000
    %v2093 = vsub.f32 1.0, %v2001
    %v2094 = vmul.f32 %v2090, %v1910
    %v2095 = vmul.f32 %v2091, %v1911
    %v2096 = vmul.f32 %v2092, %v1912
    %v2097 = vmul.f32 %v2093, %v1913
    %v2098 = vadd.f32 %v2086, %v2094
    %v2099 = vadd.f32 %v2087, %v2095
    %v2100 = vadd.f32 %v2088, %v2096
    %v2101 = vadd.f32 %v2089, %v2097
    %v2102 = vmul.f32 %v1998, %v1910
    %v2103 = vmul.f32 %v1999, %v1911
    %v2104 = vmul.f32 %v2000, %v1912
    %v2105 = vmul.f32 %v2001, %v1913
    %v2106 = vsub.f32 1.0, %v2002
    %v2107 = vsub.f32 1.0, %v2003
    %v2108 = vsub.f32 1.0, %v2004
    %v2109 = vsub.f32 1.0, %v2005
    %v2110 = vmul.f32 %v2106, %v1914
    %v2111 = vmul.f32 %v2107, %v1915
    %v2112 = vmul.f32 %v2108, %v1916
    %v2113 = vmul.f32 %v2109, %v1917
    %v2114 = vadd.f32 %v2102, %v2110
    %v2115 = vadd.f32 %v2103, %v2111
    %v2116 = vadd.f32 %v2104, %v2112
    %v2117 = vadd.f32 %v2105, %v2113
    %v2118 = vmul.f32 %v2002, %v1914
    %v2119 = vmul.f32 %v2003, %v1915
    %v2120 = vmul.f32 %v2004, %v1916
    %v2121 = vmul.f32 %v2005, %v1917
    %v2122 = vsub.f32 1.0, %v2006
    %v2123 = vsub.f32 1.0, %v2007
    %v2124 = vsub.f32 1.0, %v2008
    %v2125 = vsub.f32 1.0, %v2009
    %v2126 = vmul.f32 %v2122, %v1918
    %v2127 = vmul.f32 %v2123, %v1919
    %v2128 = vmul.f32 %v2124, %v1920
    %v2129 = vmul.f32 %v2125, %v1921
    %v2130 = vadd.f32 %v2118, %v2126
    %v2131 = vadd.f32 %v2119, %v2127
    %v2132 = vadd.f32 %v2120, %v2128
    %v2133 = vadd.f32 %v2121, %v2129
    %v2134 = vmul.f32 %v2006, %v1918
    %v2135 = vmul.f32 %v2007, %v1919
    %v2136 = vmul.f32 %v2008, %v1920
    %v2137 = vmul.f32 %v2009, %v1921
    %v2138 = vsub.f32 1.0, %v2010
    %v2139 = vsub.f32 1.0, %v2011
    %v2140 = vsub.f32 1.0, %v2012
    %v2141 = vsub.f32 1.0, %v2013
    %v2142 = vmul.f32 %v2138, %v1922
    %v2143 = vmul.f32 %v2139, %v1923
    %v2144 = vmul.f32 %v2140, %v1924
    %v2145 = vmul.f32 %v2141, %v1925
    %v2146 = vadd.f32 %v2134, %v2142
    %v2147 = vadd.f32 %v2135, %v2143
    %v2148 = vadd.f32 %v2136, %v2144
    %v2149 = vadd.f32 %v2137, %v2145
    %v2150 = vmul.f32 %v2010, %v1922
    %v2151 = vmul.f32 %v2011, %v1923
    %v2152 = vmul.f32 %v2012, %v1924
    %v2153 = vmul.f32 %v2013, %v1925
    %v2154 = vsub.f32 1.0, %v2014
    %v2155 = vsub.f32 1.0, %v2015
    %v2156 = vsub.f32 1.0, %v2016
    %v2157 = vsub.f32 1.0, %v2017
    %v2158 = vmul.f32 %v2154, %v1926
    %v2159 = vmul.f32 %v2155, %v1927
    %v2160 = vmul.f32 %v2156, %v1928
    %v2161 = vmul.f32 %v2157, %v1929
    %v2162 = vadd.f32 %v2150, %v2158
    %v2163 = vadd.f32 %v2151, %v2159
    %v2164 = vadd.f32 %v2152, %v2160
    %v2165 = vadd.f32 %v2153, %v2161
    %v2166 = vmul.f32 %v2014, %v1926
    %v2167 = vmul.f32 %v2015, %v1927
    %v2168 = vmul.f32 %v2016, %v1928
    %v2169 = vmul.f32 %v2017, %v1929
    %v2170 = vsub.f32 1.0, %v2018
    %v2171 = vsub.f32 1.0, %v2019
    %v2172 = vsub.f32 1.0, %v2020
    %v2173 = vsub.f32 1.0, %v2021
    %v2174 = vmul.f32 %v2170, %v1930
    %v2175 = vmul.f32 %v2171, %v1931
    %v2176 = vmul.f32 %v2172, %v1932
    %v2177 = vmul.f32 %v2173, %v1933
    %v2178 = vadd.f32 %v2166, %v2174
    %v2179 = vadd.f32 %v2167, %v2175
    %v2180 = vadd.f32 %v2168, %v2176
    %v2181 = vadd.f32 %v2169, %v2177
    %v2182 = vmul.f32 %v1934, 1.25
    %v2183 = vmul.f32 %v1935, 1.25
    %v2184 = vmul.f32 %v1936, 1.25
    %v2185 = vmul.f32 %v1937, 1.25
    %v2186 = vmul.f32 %v1938, 1.25
    %v2187 = vmul.f32 %v1939, 1.25
    %v2188 = vmul.f32 %v1940, 1.25
    %v2189 = vmul.f32 %v1941, 1.25
    %v2190 = vmul.f32 %v1942, 1.25
    %v2191 = vmul.f32 %v1943, 1.25
    %v2192 = vmul.f32 %v1944, 1.25
    %v2193 = vmul.f32 %v1945, 1.25
    %v2194 = vmul.f32 %v1946, 1.25
    %v2195 = vmul.f32 %v1947, 1.25
    %v2196 = vmul.f32 %v1948, 1.25
    %v2197 = vmul.f32 %v1949, 1.25
    %v2198 = vmul.f32 %v1950, 1.25
    %v2199 = vmul.f32 %v1951, 1.25
    %v2200 = vmul.f32 %v1952, 1.25
    %v2201 = vmul.f32 %v1953, 1.25
    %v2202 = vmul.f32 %v1954, 1.25
    %v2203 = vmul.f32 %v1955, 1.25
    %v2204 = vmul.f32 %v1956, 1.25
    %v2205 = vmul.f32 %v1957, 1.25
    %v2206 = vmul.f32 %v1958, 1.25
    %v2207 = vmul.f32 %v1959, 1.25
    %v2208 = vmul.f32 %v1960, 1.25
    %v2209 = vmul.f32 %v1961, 1.25
    %v2210 = vmul.f32 %v1962, 1.25
    %v2211 = vmul.f32 %v1963, 1.25
    %v2212 = vmul.f32 %v1964, 1.25
    %v2213 = vmul.f32 %v1965, 1.25
    %v2214 = vmul.f32 %v1966, 1.25
    %v2215 = vmul.f32 %v1967, 1.25
    %v2216 = vmul.f32 %v1968, 1.25
    %v2217 = vmul.f32 %v1969, 1.25
    %v2218 = vmul.f32 %v1970, 1.25
    %v2219 = vmul.f32 %v1971, 1.25
    %v2220 = vmul.f32 %v1972, 1.25
    %v2221 = vmul.f32 %v1973, 1.25
    %v2222 = vmul.f32 %v2182, %v2034
    %v2223 = vmul.f32 %v2183, %v2035
    %v2224 = vmul.f32 %v2184, %v2036
    %v2225 = vmul.f32 %v2185, %v2037
    %v2226 = vsub.f32 1.0, %v2186
    %v2227 = vsub.f32 1.0, %v2187
    %v2228 = vsub.f32 1.0, %v2188
    %v2229 = vsub.f32 1.0, %v2189
    %v2230 = vmul.f32 %v2226, %v2050
    %v2231 = vmul.f32 %v2227, %v2051
    %v2232 = vmul.f32 %v2228, %v2052
    %v2233 = vmul.f32 %v2229, %v2053
    %v2234 = vadd.f32 %v2222, %v2230
    %v2235 = vadd.f32 %v2223, %v2231
    %v2236 = vadd.f32 %v2224, %v2232
    %v2237 = vadd.f32 %v2225, %v2233
    %v2238 = vmul.f32 %v2186, %v2050
    %v2239 = vmul.f32 %v2187, %v2051
    %v2240 = vmul.f32 %v2188, %v2052
    %v2241 = vmul.f32 %v2189, %v2053
    %v2242 = vsub.f32 1.0, %v2190
    %v2243 = vsub.f32 1.0, %v2191
    %v2244 = vsub.f32 1.0, %v2192
    %v2245 = vsub.f32 1.0, %v2193
    %v2246 = vmul.f32 %v2242, %v2066
    %v2247 = vmul.f32 %v2243, %v2067
    %v2248 = vmul.f32 %v2244, %v2068
    %v2249 = vmul.f32 %v2245, %v2069
    %v2250 = vadd.f32 %v2238, %v2246
    %v2251 = vadd.f32 %v2239, %v2247
    %v2252 = vadd.f32 %v2240, %v2248
    %v2253 = vadd.f32 %v2241, %v2249
    %v2254 = vmul.f32 %v2190, %v2066
    %v2255 = vmul.f32 %v2191, %v2067
    %v2256 = vmul.f32 %v2192, %v2068
    %v2257 = vmul.f32 %v2193, %v2069
    %v2258 = vsub.f32 1.0, %v2194
    %v2259 = vsub.f32 1.0, %v2195
    %v2260 = vsub.f32 1.0, %v2196
    %v2261 = vsub.f32 1.0, %v2197
    %v2262 = vmul.f32 %v2258, %v2082
    %v2263 = vmul.f32 %v2259, %v2083
    %v2264 = vmul.f32 %v2260, %v2084
    %v2265 = vmul.f32 %v2261, %v2085
    %v2266 = vadd.f32 %v2254, %v2262
    %v2267 = vadd.f32 %v2255, %v2263
    %v2268 = vadd.f32 %v2256, %v2264
    %v2269 = vadd.f32 %v2257, %v2265
    %v2270 = vmul.f32 %v2194, %v2082
    %v2271 = vmul.f32 %v2195, %v2083
    %v2272 = vmul.f32 %v2196, %v2084
    %v2273 = vmul.f32 %v2197, %v2085
    %v2274 = vsub.f32 1.0, %v2198
    %v2275 = vsub.f32 1.0, %v2199
    %v2276 = vsub.f32 1.0, %v2200
    %v2277 = vsub.f32 1.0, %v2201
    %v2278 = vmul.f32 %v2274, %v2098
    %v2279 = vmul.f32 %v2275, %v2099
    %v2280 = vmul.f32 %v2276, %v2100
    %v2281 = vmul.f32 %v2277, %v2101
    %v2282 = vadd.f32 %v2270, %v2278
    %v2283 = vadd.f32 %v2271, %v2279
    %v2284 = vadd.f32 %v2272, %v2280
    %v2285 = vadd.f32 %v2273, %v2281
    %v2286 = vmul.f32 %v2198, %v2098
    %v2287 = vmul.f32 %v2199, %v2099
    %v2288 = vmul.f32 %v2200, %v2100
    %v2289 = vmul.f32 %v2201, %v2101
    %v2290 = vsub.f32 1.0, %v2202
    %v2291 = vsub.f32 1.0, %v2203
    %v2292 = vsub.f32 1.0, %v2204
    %v2293 = vsub.f32 1.0, %v2205
    %v2294 = vmul.f32 %v2290, %v2114
    %v2295 = vmul.f32 %v2291, %v2115
    %v2296 = vmul.f32 %v2292, %v2116
    %v2297 = vmul.f32 %v2293, %v2117
    %v2298 = vadd.f32 %v2286, %v2294
    %v2299 = vadd.f32 %v2287, %v2295
    %v2300 = vadd.f32 %v2288, %v2296
    %v2301 = vadd.f32 %v2289, %v2297
    %v2302 = vmul.f32 %v2202, %v2114
    %v2303 = vmul.f32 %v2203, %v2115
    %v2304 = vmul.f32 %v2204, %v2116
    %v2305 = vmul.f32 %v2205, %v2117
    %v2306 = vsub.f32 1.0, %v2206
    %v2307 = vsub.f32 1.0, %v2207
    %v2308 = vsub.f32 1.0, %v2208
    %v2309 = vsub.f32 1.0, %v2209
    %v2310 = vmul.f32 %v2306, %v2130
    %v2311 = vmul.f32 %v2307, %v2131
    %v2312 = vmul.f32 %v2308, %v2132
    %v2313 = vmul.f32 %v2309, %v2133
    %v2314 = vadd.f32 %v2302, %v2310
    %v2315 = vadd.f32 %v2303, %v2311
    %v2316 = vadd.f32 %v2304, %v2312
    %v2317 = vadd.f32 %v2305, %v2313
    %v2318 = vmul.f32 %v2206, %v2130
    %v2319 = vmul.f32 %v2207, %v2131
    %v2320 = vmul.f32 %v2208, %v2132
    %v2321 = vmul.f32 %v2209, %v2133
    %v2322 = vsub.f32 1.0, %v2210
    %v2323 = vsub.f32 1.0, %v2211
    %v2324 = vsub.f32 1.0, %v2212
    %v2325 = vsub.f32 1.0, %v2213
    %v2326 = vmul.f32 %v2322, %v2146
    %v2327 = vmul.f32 %v2323, %v2147
    %v2328 = vmul.f32 %v2324, %v2148
    %v2329 = vmul.f32 %v2325, %v2149
    %v2330 = vadd.f32 %v2318, %v2326
    %v2331 = vadd.f32 %v2319, %v2327
    %v2332 = vadd.f32 %v2320, %v2328
    %v2333 = vadd.f32 %v2321, %v2329
    %v2334 = vmul.f32 %v2210, %v2146
    %v2335 = vmul.f32 %v2211, %v2147
    %v2336 = vmul.f32 %v2212, %v2148
    %v2337 = vmul.f32 %v2213, %v2149
    %v2338 = vsub.f32 1.0, %v2214
    %v2339 = vsub.f32 1.0, %v2215
    %v2340 = vsub.f32 1.0, %v2216
    %v2341 = vsub.f32 1.0, %v2217
    %v2342 = vmul.f32 %v2338, %v2162
    %v2343 = vmul.f32 %v2339, %v2163
    %v2344 = vmul.f32 %v2340, %v2164
    %v2345 = vmul.f32 %v2341, %v2165
    %v2346 = vadd.f32 %v2334, %v2342
    %v2347 = vadd.f32 %v2335, %v2343
    %v2348 = vadd.f32 %v2336, %v2344
    %v2349 = vadd.f32 %v2337, %v2345
    %v2350 = vmul.f32 %v2214, %v2162
    %v2351 = vmul.f32 %v2215, %v2163
    %v2352 = vmul.f32 %v2216, %v2164
    %v2353 = vmul.f32 %v2217, %v2165
    %v2354 = vsub.f32 1.0, %v2218
    %v2355 = vsub.f32 1.0, %v2219
    %v2356 = vsub.f32 1.0, %v2220
    %v2357 = vsub.f32 1.0, %v2221
    %v2358 = vmul.f32 %v2354, %v2178
    %v2359 = vmul.f32 %v2355, %v2179
    %v2360 = vmul.f32 %v2356, %v2180
    %v2361 = vmul.f32 %v2357, %v2181
    %v2362 = vadd.f32 %v2350, %v2358
    %v2363 = vadd.f32 %v2351, %v2359
    %v2364 = vadd.f32 %v2352, %v2360
    %v2365 = vadd.f32 %v2353, %v2361
    %v2366 = vmul.f32 %v1934, 0.8333333
    %v2367 = vmul.f32 %v1935, 0.8333333
    %v2368 = vmul.f32 %v1936, 0.8333333
    %v2369 = vmul.f32 %v1937, 0.8333333
    %v2370 = vmul.f32 %v1938, 0.8333333
    %v2371 = vmul.f32 %v1939, 0.8333333
    %v2372 = vmul.f32 %v1940, 0.8333333
    %v2373 = vmul.f32 %v1941, 0.8333333
    %v2374 = vmul.f32 %v1942, 0.8333333
    %v2375 = vmul.f32 %v1943, 0.8333333
    %v2376 = vmul.f32 %v1944, 0.8333333
    %v2377 = vmul.f32 %v1945, 0.8333333
    %v2378 = vmul.f32 %v1946, 0.8333333
    %v2379 = vmul.f32 %v1947, 0.8333333
    %v2380 = vmul.f32 %v1948, 0.8333333
    %v2381 = vmul.f32 %v1949, 0.8333333
    %v2382 = vmul.f32 %v1950, 0.8333333
    %v2383 = vmul.f32 %v1951, 0.8333333
    %v2384 = vmul.f32 %v1952, 0.8333333
    %v2385 = vmul.f32 %v1953, 0.8333333
    %v2386 = vmul.f32 %v1954, 0.8333333
    %v2387 = vmul.f32 %v1955, 0.8333333
    %v2388 = vmul.f32 %v1956, 0.8333333
    %v2389 = vmul.f32 %v1957, 0.8333333
    %v2390 = vmul.f32 %v1958, 0.8333333
    %v2391 = vmul.f32 %v1959, 0.8333333
    %v2392 = vmul.f32 %v1960, 0.8333333
    %v2393 = vmul.f32 %v1961, 0.8333333
    %v2394 = vmul.f32 %v1962, 0.8333333
    %v2395 = vmul.f32 %v1963, 0.8333333
    %v2396 = vmul.f32 %v1964, 0.8333333
    %v2397 = vmul.f32 %v1965, 0.8333333
    %v2398 = vmul.f32 %v1966, 0.8333333
    %v2399 = vmul.f32 %v1967, 0.8333333
    %v2400 = vmul.f32 %v1968, 0.8333333
    %v2401 = vmul.f32 %v1969, 0.8333333
    %v2402 = vmul.f32 %v2366, %v2234
    %v2403 = vmul.f32 %v2367, %v2235
    %v2404 = vmul.f32 %v2368, %v2236
    %v2405 = vmul.f32 %v2369, %v2237
    %v2406 = vsub.f32 1.0, %v2370
    %v2407 = vsub.f32 1.0, %v2371
    %v2408 = vsub.f32 1.0, %v2372
    %v2409 = vsub.f32 1.0, %v2373
    %v2410 = vmul.f32 %v2406, %v2250
    %v2411 = vmul.f32 %v2407, %v2251
    %v2412 = vmul.f32 %v2408, %v2252
    %v2413 = vmul.f32 %v2409, %v2253
    %v2414 = vadd.f32 %v2402, %v2410
    %v2415 = vadd.f32 %v2403, %v2411
    %v2416 = vadd.f32 %v2404, %v2412
    %v2417 = vadd.f32 %v2405, %v2413
    %v2418 = vmul.f32 %v2370, %v2250
    %v2419 = vmul.f32 %v2371, %v2251
    %v2420 = vmul.f32 %v2372, %v2252
    %v2421 = vmul.f32 %v2373, %v2253
    %v2422 = vsub.f32 1.0, %v2374
    %v2423 = vsub.f32 1.0, %v2375
    %v2424 = vsub.f32 1.0, %v2376
    %v2425 = vsub.f32 1.0, %v2377
    %v2426 = vmul.f32 %v2422, %v2266
    %v2427 = vmul.f32 %v2423, %v2267
    %v2428 = vmul.f32 %v2424, %v2268
    %v2429 = vmul.f32 %v2425, %v2269
    %v2430 = vadd.f32 %v2418, %v2426
    %v2431 = vadd.f32 %v2419, %v2427
    %v2432 = vadd.f32 %v2420, %v2428
    %v2433 = vadd.f32 %v2421, %v2429
    %v2434 = vmul.f32 %v2374, %v2266
    %v2435 = vmul.f32 %v2375, %v2267
    %v2436 = vmul.f32 %v2376, %v2268
    %v2437 = vmul.f32 %v2377, %v2269
    %v2438 = vsub.f32 1.0, %v2378
    %v2439 = vsub.f32 1.0, %v2379
    %v2440 = vsub.f32 1.0, %v2380
    %v2441 = vsub.f32 1.0, %v2381
    %v2442 = vmul.f32 %v2438, %v2282
    %v2443 = vmul.f32 %v2439, %v2283
    %v2444 = vmul.f32 %v2440, %v2284
    %v2445 = vmul.f32 %v2441, %v2285
    %v2446 = vadd.f32 %v2434, %v2442
    %v2447 = vadd.f32 %v2435, %v2443
    %v2448 = vadd.f32 %v2436, %v2444
    %v2449 = vadd.f32 %v2437, %v2445
    %v2450 = vmul.f32 %v2378, %v2282
    %v2451 = vmul.f32 %v2379, %v2283
    %v2452 = vmul.f32 %v2380, %v2284
    %v2453 = vmul.f32 %v2381, %v2285
    %v2454 = vsub.f32 1.0, %v2382
    %v2455 = vsub.f32 1.0, %v2383
    %v2456 = vsub.f32 1.0, %v2384
    %v2457 = vsub.f32 1.0, %v2385
    %v2458 = vmul.f32 %v2454, %v2298
    %v2459 = vmul.f32 %v2455, %v2299
    %v2460 = vmul.f32 %v2456, %v2300
    %v2461 = vmul.f32 %v2457, %v2301
    %v2462 = vadd.f32 %v2450, %v2458
    %v2463 = vadd.f32 %v2451, %v2459
    %v2464 = vadd.f32 %v2452, %v2460
    %v2465 = vadd.f32 %v2453, %v2461
    %v2466 = vmul.f32 %v2382, %v2298
    %v2467 = vmul.f32 %v2383, %v2299
    %v2468 = vmul.f32 %v2384, %v2300
    %v2469 = vmul.f32 %v2385, %v2301
    %v2470 = vsub.f32 1.0, %v2386
    %v2471 = vsub.f32 1.0, %v2387
    %v2472 = vsub.f32 1.0, %v2388
    %v2473 = vsub.f32 1.0, %v2389
    %v2474 = vmul.f32 %v2470, %v2314
    %v2475 = vmul.f32 %v2471, %v2315
    %v2476 = vmul.f32 %v2472, %v2316
    %v2477 = vmul.f32 %v2473, %v2317
    %v2478 = vadd.f32 %v2466, %v2474
    %v2479 = vadd.f32 %v2467, %v2475
    %v2480 = vadd.f32 %v2468, %v2476
    %v2481 = vadd.f32 %v2469, %v2477
    %v2482 = vmul.f32 %v2386, %v2314
    %v2483 = vmul.f32 %v2387, %v2315
    %v2484 = vmul.f32 %v2388, %v2316
    %v2485 = vmul.f32 %v2389, %v2317
    %v2486 = vsub.f32 1.0, %v2390
    %v2487 = vsub.f32 1.0, %v2391
    %v2488 = vsub.f32 1.0, %v2392
    %v2489 = vsub.f32 1.0, %v2393
    %v2490 = vmul.f32 %v2486, %v2330
    %v2491 = vmul.f32 %v2487, %v2331
    %v2492 = vmul.f32 %v2488, %v2332
    %v2493 = vmul.f32 %v2489, %v2333
    %v2494 = vadd.f32 %v2482, %v2490
    %v2495 = vadd.f32 %v2483, %v2491
    %v2496 = vadd.f32 %v2484, %v2492
    %v2497 = vadd.f32 %v2485, %v2493
    %v2498 = vmul.f32 %v2390, %v2330
    %v2499 = vmul.f32 %v2391, %v2331
    %v2500 = vmul.f32 %v2392, %v2332
    %v2501 = vmul.f32 %v2393, %v2333
    %v2502 = vsub.f32 1.0, %v2394
    %v2503 = vsub.f32 1.0, %v2395
    %v2504 = vsub.f32 1.0, %v2396
    %v2505 = vsub.f32 1.0, %v2397
    %v2506 = vmul.f32 %v2502, %v2346
    %v2507 = vmul.f32 %v2503, %v2347
    %v2508 = vmul.f32 %v2504, %v2348
    %v2509 = vmul.f32 %v2505, %v2349
    %v2510 = vadd.f32 %v2498, %v2506
    %v2511 = vadd.f32 %v2499, %v2507
    %v2512 = vadd.f32 %v2500, %v2508
    %v2513 = vadd.f32 %v2501, %v2509
    %v2514 = vmul.f32 %v2394, %v2346
    %v2515 = vmul.f32 %v2395, %v2347
    %v2516 = vmul.f32 %v2396, %v2348
    %v2517 = vmul.f32 %v2397, %v2349
    %v2518 = vsub.f32 1.0, %v2398
    %v2519 = vsub.f32 1.0, %v2399
    %v2520 = vsub.f32 1.0, %v2400
    %v2521 = vsub.f32 1.0, %v2401
    %v2522 = vmul.f32 %v2518, %v2362
    %v2523 = vmul.f32 %v2519, %v2363
    %v2524 = vmul.f32 %v2520, %v2364
    %v2525 = vmul.f32 %v2521, %v2365
    %v2526 = vadd.f32 %v2514, %v2522
    %v2527 = vadd.f32 %v2515, %v2523
    %v2528 = vadd.f32 %v2516, %v2524
    %v2529 = vadd.f32 %v2517, %v2525
    %v2530 = vpack.c.bf16 %v1744, %v1742
    %v2531 = vpack.c.bf16 %v1745, %v1743
    %2532 = vst [vmem:[#allocation6] sm:$0xff] %v2530
    %2533 = vst [vmem:[#allocation6 + $0x8] sm:$0xff] %v2531
    %v2534 = vpack.c.bf16 %v2416, %v2414
    %v2535 = vpack.c.bf16 %v2417, %v2415
    %2536 = vst [vmem:[#allocation6 + $0x10] sm:$0xff] %v2534
    %2537 = vst [vmem:[#allocation6 + $0x18] sm:$0xff] %v2535
    %v2538 = vpack.c.bf16 %v2432, %v2430
    %v2539 = vpack.c.bf16 %v2433, %v2431
    %2540 = vst [vmem:[#allocation6 + $0x20] sm:$0xff] %v2538
    %2541 = vst [vmem:[#allocation6 + $0x28] sm:$0xff] %v2539
    %v2542 = vpack.c.bf16 %v2448, %v2446
    %v2543 = vpack.c.bf16 %v2449, %v2447
    %2544 = vst [vmem:[#allocation6 + $0x30] sm:$0xff] %v2542
    %2545 = vst [vmem:[#allocation6 + $0x38] sm:$0xff] %v2543
    %v2546 = vpack.c.bf16 %v2464, %v2462
    %v2547 = vpack.c.bf16 %v2465, %v2463
    %2548 = vst [vmem:[#allocation6 + $0x40] sm:$0xff] %v2546
    %2549 = vst [vmem:[#allocation6 + $0x48] sm:$0xff] %v2547
    %v2550 = vpack.c.bf16 %v2480, %v2478
    %v2551 = vpack.c.bf16 %v2481, %v2479
    %2552 = vst [vmem:[#allocation6 + $0x50] sm:$0xff] %v2550
    %2553 = vst [vmem:[#allocation6 + $0x58] sm:$0xff] %v2551
    %v2554 = vpack.c.bf16 %v2496, %v2494
    %v2555 = vpack.c.bf16 %v2497, %v2495
    %2556 = vst [vmem:[#allocation6 + $0x60] sm:$0xff] %v2554
    %2557 = vst [vmem:[#allocation6 + $0x68] sm:$0xff] %v2555
    %v2558 = vpack.c.bf16 %v2512, %v2510
    %v2559 = vpack.c.bf16 %v2513, %v2511
    %2560 = vst [vmem:[#allocation6 + $0x70] sm:$0xff] %v2558
    %2561 = vst [vmem:[#allocation6 + $0x78] sm:$0xff] %v2559
    %v2562 = vpack.c.bf16 %v2528, %v2526
    %v2563 = vpack.c.bf16 %v2529, %v2527
    %2564 = vst [vmem:[#allocation6 + $0x80] sm:$0xff] %v2562
    %2565 = vst [vmem:[#allocation6 + $0x88] sm:$0xff] %v2563
    %v2566 = vld [vmem:[#allocation15] sm:$0xf]
    %v2567 = vld [vmem:[#allocation15 + $0x4] sm:$0xf]
    %v2568 = vld [vmem:[#allocation15 + $0x8] sm:$0xf]
    %v2569 = vld [vmem:[#allocation15 + $0xc] sm:$0xf]
    %v2570 = vld [vmem:[#allocation15 + $0x10] sm:$0xf]
    %v2571 = vld [vmem:[#allocation15 + $0x14] sm:$0xf]
    %v2572 = vld [vmem:[#allocation15 + $0x18] sm:$0xf]
    %v2573 = vld [vmem:[#allocation15 + $0x1c] sm:$0xf]
    %v2574 = vld [vmem:[#allocation15 + $0x20] sm:$0xf]
    %v2575 = vld [vmem:[#allocation15 + $0x24] sm:$0xf]
    %v2576 = vld [vmem:[#allocation15 + $0x28] sm:$0xf]
    %v2577 = vld [vmem:[#allocation15 + $0x2c] sm:$0xf]
    %v2578 = vld [vmem:[#allocation15 + $0x30] sm:$0xf]
    %v2579 = vld [vmem:[#allocation15 + $0x34] sm:$0xf]
    %v2580 = vld [vmem:[#allocation15 + $0x38] sm:$0xf]
    %v2581 = vld [vmem:[#allocation15 + $0x3c] sm:$0xf]
    %v2582 = vld [vmem:[#allocation15 + $0x40] sm:$0xf]
    %v2583 = vld [vmem:[#allocation15 + $0x44] sm:$0xf]
    %v2584 = vld [vmem:[#allocation15 + $0x48] sm:$0xf]
    %v2585 = vld [vmem:[#allocation15 + $0x4c] sm:$0xf]
    %v2586 = vld [vmem:[#allocation15 + $0x50] sm:$0xf]
    %v2587 = vld [vmem:[#allocation15 + $0x54] sm:$0xf]
    %v2588 = vld [vmem:[#allocation15 + $0x58] sm:$0xf]
    %v2589 = vld [vmem:[#allocation15 + $0x5c] sm:$0xf]
    %v2590 = vld [vmem:[#allocation15 + $0x60] sm:$0xf]
    %v2591 = vld [vmem:[#allocation15 + $0x64] sm:$0xf]
    %v2592 = vld [vmem:[#allocation15 + $0x68] sm:$0xf]
    %v2593 = vld [vmem:[#allocation15 + $0x6c] sm:$0xf]
    %v2594 = vld [vmem:[#allocation15 + $0x70] sm:$0xf]
    %v2595 = vld [vmem:[#allocation15 + $0x74] sm:$0xf]
    %v2596 = vld [vmem:[#allocation15 + $0x78] sm:$0xf]
    %v2597 = vld [vmem:[#allocation15 + $0x7c] sm:$0xf]
    %v2598 = vld [vmem:[#allocation15 + $0x80] sm:$0xf]
    %v2599 = vld [vmem:[#allocation15 + $0x84] sm:$0xf]
    %v2600 = vld [vmem:[#allocation15 + $0x88] sm:$0xf]
    %v2601 = vld [vmem:[#allocation15 + $0x8c] sm:$0xf]
    %v2602 = vld [vmem:[#allocation15 + $0x90] sm:$0xf]
    %v2603 = vld [vmem:[#allocation15 + $0x94] sm:$0xf]
    %v2604 = vld [vmem:[#allocation15 + $0x98] sm:$0xf]
    %v2605 = vld [vmem:[#allocation15 + $0x9c] sm:$0xf]
    %v2606 = vld [vmem:[#allocation15 + $0xa0] sm:$0xf]
    %v2607 = vld [vmem:[#allocation15 + $0xa4] sm:$0xf]
    %v2608 = vld [vmem:[#allocation15 + $0xa8] sm:$0xf]
    %v2609 = vld [vmem:[#allocation15 + $0xac] sm:$0xf]
    %v2610 = vld [vmem:[#allocation15 + $0xb0] sm:$0xf]
    %v2611 = vld [vmem:[#allocation15 + $0xb4] sm:$0xf]
    %v2612 = vld [vmem:[#allocation15 + $0xb8] sm:$0xf]
    %v2613 = vld [vmem:[#allocation15 + $0xbc] sm:$0xf]
    %v2614 = vld [vmem:[#allocation15 + $0xc0] sm:$0xf]
    %v2615 = vld [vmem:[#allocation15 + $0xc4] sm:$0xf]
    %v2616 = vld [vmem:[#allocation15 + $0xc8] sm:$0xf]
    %v2617 = vld [vmem:[#allocation15 + $0xcc] sm:$0xf]
    %v2618 = vld [vmem:[#allocation15 + $0xd0] sm:$0xf]
    %v2619 = vld [vmem:[#allocation15 + $0xd4] sm:$0xf]
    %v2620 = vld [vmem:[#allocation15 + $0xd8] sm:$0xf]
    %v2621 = vld [vmem:[#allocation15 + $0xdc] sm:$0xf]
    %v2622 = vld [vmem:[#allocation15 + $0xe0] sm:$0xf]
    %v2623 = vld [vmem:[#allocation15 + $0xe4] sm:$0xf]
    %v2624 = vld [vmem:[#allocation15 + $0xe8] sm:$0xf]
    %v2625 = vld [vmem:[#allocation15 + $0xec] sm:$0xf]
    %v2626 = vld [vmem:[#allocation15 + $0xf0] sm:$0xf]
    %v2627 = vld [vmem:[#allocation15 + $0xf4] sm:$0xf]
    %v2628 = vld [vmem:[#allocation15 + $0xf8] sm:$0xf]
    %v2629 = vld [vmem:[#allocation15 + $0xfc] sm:$0xf]
    %v2630 = vld [vmem:[#allocation15 + $0x100] sm:$0xf]
    %v2631 = vld [vmem:[#allocation15 + $0x104] sm:$0xf]
    %v2632 = vld [vmem:[#allocation15 + $0x108] sm:$0xf]
    %v2633 = vld [vmem:[#allocation15 + $0x10c] sm:$0xf]
    %v2634 = vld [vmem:[#allocation15 + $0x110] sm:$0xf]
    %v2635 = vld [vmem:[#allocation15 + $0x114] sm:$0xf]
    %v2636 = vld [vmem:[#allocation15 + $0x118] sm:$0xf]
    %v2637 = vld [vmem:[#allocation15 + $0x11c] sm:$0xf]
    %v2638 = vld [vmem:[#allocation15 + $0x120] sm:$0xf]
    %v2639 = vld [vmem:[#allocation15 + $0x124] sm:$0xf]
    %v2640 = vld [vmem:[#allocation15 + $0x128] sm:$0xf]
    %v2641 = vld [vmem:[#allocation15 + $0x12c] sm:$0xf]
    %v2642 = vld [vmem:[#allocation15 + $0x130] sm:$0xf]
    %v2643 = vld [vmem:[#allocation15 + $0x134] sm:$0xf]
    %v2644 = vld [vmem:[#allocation15 + $0x138] sm:$0xf]
    %v2645 = vld [vmem:[#allocation15 + $0x13c] sm:$0xf]
    %v2646 = vld [vmem:[#allocation15 + $0x140] sm:$0xf]
    %v2647 = vld [vmem:[#allocation15 + $0x144] sm:$0xf]
    %v2648 = vld [vmem:[#allocation15 + $0x148] sm:$0xf]
    %v2649 = vld [vmem:[#allocation15 + $0x14c] sm:$0xf]
    %v2650 = vld [vmem:[#allocation15 + $0x150] sm:$0xf]
    %v2651 = vld [vmem:[#allocation15 + $0x154] sm:$0xf]
    %v2652 = vld [vmem:[#allocation15 + $0x158] sm:$0xf]
    %v2653 = vld [vmem:[#allocation15 + $0x15c] sm:$0xf]
    %v2654 = vld [vmem:[#allocation15 + $0x160] sm:$0xf]
    %v2655 = vld [vmem:[#allocation15 + $0x164] sm:$0xf]
    %v2656 = vld [vmem:[#allocation15 + $0x168] sm:$0xf]
    %v2657 = vld [vmem:[#allocation15 + $0x16c] sm:$0xf]
    %v2658 = vld [vmem:[#allocation15 + $0x170] sm:$0xf]
    %v2659 = vld [vmem:[#allocation15 + $0x174] sm:$0xf]
    %v2660 = vld [vmem:[#allocation15 + $0x178] sm:$0xf]
    %v2661 = vld [vmem:[#allocation15 + $0x17c] sm:$0xf]
    %v2662 = vld [vmem:[#allocation15 + $0x180] sm:$0xf]
    %v2663 = vld [vmem:[#allocation15 + $0x184] sm:$0xf]
    %v2664 = vld [vmem:[#allocation15 + $0x188] sm:$0xf]
    %v2665 = vld [vmem:[#allocation15 + $0x18c] sm:$0xf]
    %v2666 = vld [vmem:[#allocation15 + $0x190] sm:$0xf]
    %v2667 = vld [vmem:[#allocation15 + $0x194] sm:$0xf]
    %v2668 = vld [vmem:[#allocation15 + $0x198] sm:$0xf]
    %v2669 = vld [vmem:[#allocation15 + $0x19c] sm:$0xf]
    %v2670 = vld [vmem:[#allocation15 + $0x1a0] sm:$0xf]
    %v2671 = vld [vmem:[#allocation15 + $0x1a4] sm:$0xf]
    %v2672 = vld [vmem:[#allocation15 + $0x1a8] sm:$0xf]
    %v2673 = vld [vmem:[#allocation15 + $0x1ac] sm:$0xf]
    %v2674 = vld [vmem:[#allocation15 + $0x1b0] sm:$0xf]
    %v2675 = vld [vmem:[#allocation15 + $0x1b4] sm:$0xf]
    %v2676 = vld [vmem:[#allocation15 + $0x1b8] sm:$0xf]
    %v2677 = vld [vmem:[#allocation15 + $0x1bc] sm:$0xf]
    %v2678 = vld [vmem:[#allocation15 + $0x1c0] sm:$0xf]
    %v2679 = vld [vmem:[#allocation15 + $0x1c4] sm:$0xf]
    %v2680 = vld [vmem:[#allocation15 + $0x1c8] sm:$0xf]
    %v2681 = vld [vmem:[#allocation15 + $0x1cc] sm:$0xf]
    %v2682 = vld [vmem:[#allocation15 + $0x1d0] sm:$0xf]
    %v2683 = vld [vmem:[#allocation15 + $0x1d4] sm:$0xf]
    %v2684 = vld [vmem:[#allocation15 + $0x1d8] sm:$0xf]
    %v2685 = vld [vmem:[#allocation15 + $0x1dc] sm:$0xf]
    %v2686 = vld [vmem:[#allocation15 + $0x1e0] sm:$0xf]
    %v2687 = vld [vmem:[#allocation15 + $0x1e4] sm:$0xf]
    %v2688 = vld [vmem:[#allocation15 + $0x1e8] sm:$0xf]
    %v2689 = vld [vmem:[#allocation15 + $0x1ec] sm:$0xf]
    %v2690 = vld [vmem:[#allocation15 + $0x1f0] sm:$0xf]
    %v2691 = vld [vmem:[#allocation15 + $0x1f4] sm:$0xf]
    %v2692 = vld [vmem:[#allocation15 + $0x1f8] sm:$0xf]
    %v2693 = vld [vmem:[#allocation15 + $0x1fc] sm:$0xf]
    %v2694 = vld [vmem:[#allocation15 + $0x200] sm:$0xf]
    %v2695 = vld [vmem:[#allocation15 + $0x204] sm:$0xf]
    %v2696 = vld [vmem:[#allocation15 + $0x208] sm:$0xf]
    %v2697 = vld [vmem:[#allocation15 + $0x20c] sm:$0xf]
    %v2698 = vld [vmem:[#allocation15 + $0x210] sm:$0xf]
    %v2699 = vld [vmem:[#allocation15 + $0x214] sm:$0xf]
    %v2700 = vld [vmem:[#allocation15 + $0x218] sm:$0xf]
    %v2701 = vld [vmem:[#allocation15 + $0x21c] sm:$0xf]
    %v2702 = vld [vmem:[#allocation15 + $0x220] sm:$0xf]
    %v2703 = vld [vmem:[#allocation15 + $0x224] sm:$0xf]
    %v2704 = vld [vmem:[#allocation15 + $0x228] sm:$0xf]
    %v2705 = vld [vmem:[#allocation15 + $0x22c] sm:$0xf]
    %v2706 = vld [vmem:[#allocation15 + $0x230] sm:$0xf]
    %v2707 = vld [vmem:[#allocation15 + $0x234] sm:$0xf]
    %v2708 = vld [vmem:[#allocation15 + $0x238] sm:$0xf]
    %v2709 = vld [vmem:[#allocation15 + $0x23c] sm:$0xf]
    %v2710 = vld [vmem:[#allocation15 + $0x240] sm:$0xf]
    %v2711 = vld [vmem:[#allocation15 + $0x244] sm:$0xf]
    %v2712 = vld [vmem:[#allocation15 + $0x248] sm:$0xf]
    %v2713 = vld [vmem:[#allocation15 + $0x24c] sm:$0xf]
    %v2714 = vld [vmem:[#allocation15 + $0x250] sm:$0xf]
    %v2715 = vld [vmem:[#allocation15 + $0x254] sm:$0xf]
    %v2716 = vld [vmem:[#allocation15 + $0x258] sm:$0xf]
    %v2717 = vld [vmem:[#allocation15 + $0x25c] sm:$0xf]
    %v2718 = vld [vmem:[#allocation15 + $0x260] sm:$0xf]
    %v2719 = vld [vmem:[#allocation15 + $0x264] sm:$0xf]
    %v2720 = vld [vmem:[#allocation15 + $0x268] sm:$0xf]
    %v2721 = vld [vmem:[#allocation15 + $0x26c] sm:$0xf]
    %v2722 = vld [vmem:[#allocation15 + $0x270] sm:$0xf]
    %v2723 = vld [vmem:[#allocation15 + $0x274] sm:$0xf]
    %v2724 = vld [vmem:[#allocation15 + $0x278] sm:$0xf]
    %v2725 = vld [vmem:[#allocation15 + $0x27c] sm:$0xf]
    %v2726 = vld [vmem:[#allocation15 + $0x280] sm:$0xf]
    %v2727 = vld [vmem:[#allocation15 + $0x284] sm:$0xf]
    %v2728 = vld [vmem:[#allocation15 + $0x288] sm:$0xf]
    %v2729 = vld [vmem:[#allocation15 + $0x28c] sm:$0xf]
    %v2730 = vld [vmem:[#allocation15 + $0x290] sm:$0xf]
    %v2731 = vld [vmem:[#allocation15 + $0x294] sm:$0xf]
    %v2732 = vld [vmem:[#allocation15 + $0x298] sm:$0xf]
    %v2733 = vld [vmem:[#allocation15 + $0x29c] sm:$0xf]
    %v2734 = vld [vmem:[#allocation15 + $0x2a0] sm:$0xf]
    %v2735 = vld [vmem:[#allocation15 + $0x2a4] sm:$0xf]
    %v2736 = vld [vmem:[#allocation15 + $0x2a8] sm:$0xf]
    %v2737 = vld [vmem:[#allocation15 + $0x2ac] sm:$0xf]
    %v2738 = vld [vmem:[#allocation15 + $0x2b0] sm:$0xf]
    %v2739 = vld [vmem:[#allocation15 + $0x2b4] sm:$0xf]
    %v2740 = vld [vmem:[#allocation15 + $0x2b8] sm:$0xf]
    %v2741 = vld [vmem:[#allocation15 + $0x2bc] sm:$0xf]
    %v2742 = vld [vmem:[#allocation15 + $0x2c0] sm:$0xf]
    %v2743 = vld [vmem:[#allocation15 + $0x2c4] sm:$0xf]
    %v2744 = vld [vmem:[#allocation15 + $0x2c8] sm:$0xf]
    %v2745 = vld [vmem:[#allocation15 + $0x2cc] sm:$0xf]
    %v2746 = vld [vmem:[#allocation15 + $0x2d0] sm:$0xf]
    %v2747 = vld [vmem:[#allocation15 + $0x2d4] sm:$0xf]
    %v2748 = vld [vmem:[#allocation15 + $0x2d8] sm:$0xf]
    %v2749 = vld [vmem:[#allocation15 + $0x2dc] sm:$0xf]
    %v2750 = vld [vmem:[#allocation15 + $0x2e0] sm:$0xf]
    %v2751 = vld [vmem:[#allocation15 + $0x2e4] sm:$0xf]
    %v2752 = vld [vmem:[#allocation15 + $0x2e8] sm:$0xf]
    %v2753 = vld [vmem:[#allocation15 + $0x2ec] sm:$0xf]
    %v2754 = vld [vmem:[#allocation15 + $0x2f0] sm:$0xf]
    %v2755 = vld [vmem:[#allocation15 + $0x2f4] sm:$0xf]
    %v2756 = vld [vmem:[#allocation15 + $0x2f8] sm:$0xf]
    %v2757 = vld [vmem:[#allocation15 + $0x2fc] sm:$0xf]
    %v2758 = vld [vmem:[#allocation15 + $0x300] sm:$0xf]
    %v2759 = vld [vmem:[#allocation15 + $0x304] sm:$0xf]
    %v2760 = vld [vmem:[#allocation15 + $0x308] sm:$0xf]
    %v2761 = vld [vmem:[#allocation15 + $0x30c] sm:$0xf]
    %v2762 = vld [vmem:[#allocation15 + $0x310] sm:$0xf]
    %v2763 = vld [vmem:[#allocation15 + $0x314] sm:$0xf]
    %v2764 = vld [vmem:[#allocation15 + $0x318] sm:$0xf]
    %v2765 = vld [vmem:[#allocation15 + $0x31c] sm:$0xf]
    %v2766 = vld [vmem:[#allocation15 + $0x320] sm:$0xf]
    %v2767 = vld [vmem:[#allocation15 + $0x324] sm:$0xf]
    %v2768 = vld [vmem:[#allocation15 + $0x328] sm:$0xf]
    %v2769 = vld [vmem:[#allocation15 + $0x32c] sm:$0xf]
    %v2770 = vld [vmem:[#allocation15 + $0x330] sm:$0xf]
    %v2771 = vld [vmem:[#allocation15 + $0x334] sm:$0xf]
    %v2772 = vld [vmem:[#allocation15 + $0x338] sm:$0xf]
    %v2773 = vld [vmem:[#allocation15 + $0x33c] sm:$0xf]
    %v2774 = vld [vmem:[#allocation15 + $0x340] sm:$0xf]
    %v2775 = vld [vmem:[#allocation15 + $0x344] sm:$0xf]
    %v2776 = vld [vmem:[#allocation15 + $0x348] sm:$0xf]
    %v2777 = vld [vmem:[#allocation15 + $0x34c] sm:$0xf]
    %v2778 = vld [vmem:[#allocation15 + $0x350] sm:$0xf]
    %v2779 = vld [vmem:[#allocation15 + $0x354] sm:$0xf]
    %v2780 = vld [vmem:[#allocation15 + $0x358] sm:$0xf]
    %v2781 = vld [vmem:[#allocation15 + $0x35c] sm:$0xf]
    %v2782 = vld [vmem:[#allocation15 + $0x360] sm:$0xf]
    %v2783 = vld [vmem:[#allocation15 + $0x364] sm:$0xf]
    %v2784 = vld [vmem:[#allocation15 + $0x368] sm:$0xf]
    %v2785 = vld [vmem:[#allocation15 + $0x36c] sm:$0xf]
    %v2786 = vld [vmem:[#allocation15 + $0x370] sm:$0xf]
    %v2787 = vld [vmem:[#allocation15 + $0x374] sm:$0xf]
    %v2788 = vld [vmem:[#allocation15 + $0x378] sm:$0xf]
    %v2789 = vld [vmem:[#allocation15 + $0x37c] sm:$0xf]
    %v2790 = vld [vmem:[#allocation15 + $0x380] sm:$0xf]
    %v2791 = vld [vmem:[#allocation15 + $0x384] sm:$0xf]
    %v2792 = vld [vmem:[#allocation15 + $0x388] sm:$0xf]
    %v2793 = vld [vmem:[#allocation15 + $0x38c] sm:$0xf]
    %v2794 = vld [vmem:[#allocation15 + $0x390] sm:$0xf]
    %v2795 = vld [vmem:[#allocation15 + $0x394] sm:$0xf]
    %v2796 = vld [vmem:[#allocation15 + $0x398] sm:$0xf]
    %v2797 = vld [vmem:[#allocation15 + $0x39c] sm:$0xf]
    %v2798 = vld [vmem:[#allocation15 + $0x3a0] sm:$0xf]
    %v2799 = vld [vmem:[#allocation15 + $0x3a4] sm:$0xf]
    %v2800 = vld [vmem:[#allocation15 + $0x3a8] sm:$0xf]
    %v2801 = vld [vmem:[#allocation15 + $0x3ac] sm:$0xf]
    %v2802 = vld [vmem:[#allocation15 + $0x3b0] sm:$0xf]
    %v2803 = vld [vmem:[#allocation15 + $0x3b4] sm:$0xf]
    %v2804 = vld [vmem:[#allocation15 + $0x3b8] sm:$0xf]
    %v2805 = vld [vmem:[#allocation15 + $0x3bc] sm:$0xf]
    %v2806 = vld [vmem:[#allocation15 + $0x3c0] sm:$0xf]
    %v2807 = vld [vmem:[#allocation15 + $0x3c4] sm:$0xf]
    %v2808 = vld [vmem:[#allocation15 + $0x3c8] sm:$0xf]
    %v2809 = vld [vmem:[#allocation15 + $0x3cc] sm:$0xf]
    %v2810 = vld [vmem:[#allocation15 + $0x3d0] sm:$0xf]
    %v2811 = vld [vmem:[#allocation15 + $0x3d4] sm:$0xf]
    %v2812 = vld [vmem:[#allocation15 + $0x3d8] sm:$0xf]
    %v2813 = vld [vmem:[#allocation15 + $0x3dc] sm:$0xf]
    %v2814 = vld [vmem:[#allocation15 + $0x3e0] sm:$0xf]
    %v2815 = vld [vmem:[#allocation15 + $0x3e4] sm:$0xf]
    %v2816 = vld [vmem:[#allocation15 + $0x3e8] sm:$0xf]
    %v2817 = vld [vmem:[#allocation15 + $0x3ec] sm:$0xf]
    %v2818 = vld [vmem:[#allocation15 + $0x3f0] sm:$0xf]
    %v2819 = vld [vmem:[#allocation15 + $0x3f4] sm:$0xf]
    %v2820 = vld [vmem:[#allocation15 + $0x3f8] sm:$0xf]
    %v2821 = vld [vmem:[#allocation15 + $0x3fc] sm:$0xf]
    %v2822 = vld [vmem:[#allocation15 + $0x400] sm:$0xf]
    %v2823 = vld [vmem:[#allocation15 + $0x404] sm:$0xf]
    %v2824 = vld [vmem:[#allocation15 + $0x408] sm:$0xf]
    %v2825 = vld [vmem:[#allocation15 + $0x40c] sm:$0xf]
    %v2826 = vld [vmem:[#allocation15 + $0x410] sm:$0xf]
    %v2827 = vld [vmem:[#allocation15 + $0x414] sm:$0xf]
    %v2828 = vld [vmem:[#allocation15 + $0x418] sm:$0xf]
    %v2829 = vld [vmem:[#allocation15 + $0x41c] sm:$0xf]
    %v2830 = vld [vmem:[#allocation15 + $0x420] sm:$0xf]
    %v2831 = vld [vmem:[#allocation15 + $0x424] sm:$0xf]
    %v2832 = vld [vmem:[#allocation15 + $0x428] sm:$0xf]
    %v2833 = vld [vmem:[#allocation15 + $0x42c] sm:$0xf]
    %v2834 = vld [vmem:[#allocation15 + $0x430] sm:$0xf]
    %v2835 = vld [vmem:[#allocation15 + $0x434] sm:$0xf]
    %v2836 = vld [vmem:[#allocation15 + $0x438] sm:$0xf]
    %v2837 = vld [vmem:[#allocation15 + $0x43c] sm:$0xf]
    %v2838 = vld [vmem:[#allocation15 + $0x440] sm:$0xf]
    %v2839 = vld [vmem:[#allocation15 + $0x444] sm:$0xf]
    %v2840 = vld [vmem:[#allocation15 + $0x448] sm:$0xf]
    %v2841 = vld [vmem:[#allocation15 + $0x44c] sm:$0xf]
    %v2842 = vld [vmem:[#allocation15 + $0x450] sm:$0xf]
    %v2843 = vld [vmem:[#allocation15 + $0x454] sm:$0xf]
    %v2844 = vld [vmem:[#allocation15 + $0x458] sm:$0xf]
    %v2845 = vld [vmem:[#allocation15 + $0x45c] sm:$0xf]
    %v2846 = vld [vmem:[#allocation15 + $0x460] sm:$0xf]
    %v2847 = vld [vmem:[#allocation15 + $0x464] sm:$0xf]
    %v2848 = vld [vmem:[#allocation15 + $0x468] sm:$0xf]
    %v2849 = vld [vmem:[#allocation15 + $0x46c] sm:$0xf]
    %v2850 = vld [vmem:[#allocation15 + $0x470] sm:$0xf]
    %v2851 = vld [vmem:[#allocation15 + $0x474] sm:$0xf]
    %v2852 = vld [vmem:[#allocation15 + $0x478] sm:$0xf]
    %v2853 = vld [vmem:[#allocation15 + $0x47c] sm:$0xf]
    %v2854 = vld [vmem:[#allocation6] sm:$0xff]
    %v2855 = vld [vmem:[#allocation6 + $0x8] sm:$0xff]
    %v2856 = vld [vmem:[#allocation6 + $0x10] sm:$0xff]
    %v2857 = vld [vmem:[#allocation6 + $0x18] sm:$0xff]
    %v2858 = vld [vmem:[#allocation6 + $0x20] sm:$0xff]
    %v2859 = vld [vmem:[#allocation6 + $0x28] sm:$0xff]
    %v2860 = vld [vmem:[#allocation6 + $0x30] sm:$0xff]
    %v2861 = vld [vmem:[#allocation6 + $0x38] sm:$0xff]
    %v2862 = vld [vmem:[#allocation6 + $0x40] sm:$0xff]
    %v2863 = vld [vmem:[#allocation6 + $0x48] sm:$0xff]
    %v2864 = vld [vmem:[#allocation6 + $0x50] sm:$0xff]
    %v2865 = vld [vmem:[#allocation6 + $0x58] sm:$0xff]
    %v2866 = vld [vmem:[#allocation6 + $0x60] sm:$0xff]
    %v2867 = vld [vmem:[#allocation6 + $0x68] sm:$0xff]
    %v2868 = vld [vmem:[#allocation6 + $0x70] sm:$0xff]
    %v2869 = vld [vmem:[#allocation6 + $0x78] sm:$0xff]
    %v2870 = vld [vmem:[#allocation6 + $0x80] sm:$0xff]
    %v2871 = vld [vmem:[#allocation6 + $0x88] sm:$0xff]
    %v3160 = vunpack.c.l.b16 %v2566
    %v3161 = vunpack.c.l.b16 %v2567
    %v3162 = vunpack.c.l.b16 %v2568
    %v3163 = vunpack.c.l.b16 %v2569
    %v3164 = vunpack.c.l.b16 %v2570
    %v3165 = vunpack.c.l.b16 %v2571
    %v3166 = vunpack.c.l.b16 %v2572
    %v3167 = vunpack.c.l.b16 %v2573
    %v3168 = vunpack.c.l.b16 %v2574
    %v3169 = vunpack.c.l.b16 %v2575
    %v3170 = vunpack.c.l.b16 %v2576
    %v3171 = vunpack.c.l.b16 %v2577
    %v3172 = vunpack.c.l.b16 %v2578
    %v3173 = vunpack.c.l.b16 %v2579
    %v3174 = vunpack.c.l.b16 %v2580
    %v3175 = vunpack.c.l.b16 %v2581
    %v3176 = vunpack.c.l.b16 %v2582
    %v3177 = vunpack.c.l.b16 %v2583
    %v3178 = vunpack.c.l.b16 %v2584
    %v3179 = vunpack.c.l.b16 %v2585
    %v3180 = vunpack.c.l.b16 %v2586
    %v3181 = vunpack.c.l.b16 %v2587
    %v3182 = vunpack.c.l.b16 %v2588
    %v3183 = vunpack.c.l.b16 %v2589
    %v3184 = vunpack.c.l.b16 %v2590
    %v3185 = vunpack.c.l.b16 %v2591
    %v3186 = vunpack.c.l.b16 %v2592
    %v3187 = vunpack.c.l.b16 %v2593
    %v3188 = vunpack.c.l.b16 %v2594
    %v3189 = vunpack.c.l.b16 %v2595
    %v3190 = vunpack.c.l.b16 %v2596
    %v3191 = vunpack.c.l.b16 %v2597
    %v3192 = vunpack.c.l.b16 %v2598
    %v3193 = vunpack.c.l.b16 %v2599
    %v3194 = vunpack.c.l.b16 %v2600
    %v3195 = vunpack.c.l.b16 %v2601
    %v3196 = vunpack.c.l.b16 %v2602
    %v3197 = vunpack.c.l.b16 %v2603
    %v3198 = vunpack.c.l.b16 %v2604
    %v3199 = vunpack.c.l.b16 %v2605
    %v3200 = vunpack.c.l.b16 %v2606
    %v3201 = vunpack.c.l.b16 %v2607
    %v3202 = vunpack.c.l.b16 %v2608
    %v3203 = vunpack.c.l.b16 %v2609
    %v3204 = vunpack.c.l.b16 %v2610
    %v3205 = vunpack.c.l.b16 %v2611
    %v3206 = vunpack.c.l.b16 %v2612
    %v3207 = vunpack.c.l.b16 %v2613
    %v3208 = vunpack.c.l.b16 %v2614
    %v3209 = vunpack.c.l.b16 %v2615
    %v3210 = vunpack.c.l.b16 %v2616
    %v3211 = vunpack.c.l.b16 %v2617
    %v3212 = vunpack.c.l.b16 %v2618
    %v3213 = vunpack.c.l.b16 %v2619
    %v3214 = vunpack.c.l.b16 %v2620
    %v3215 = vunpack.c.l.b16 %v2621
    %v3216 = vunpack.c.l.b16 %v2622
    %v3217 = vunpack.c.l.b16 %v2623
    %v3218 = vunpack.c.l.b16 %v2624
    %v3219 = vunpack.c.l.b16 %v2625
    %v3220 = vunpack.c.l.b16 %v2626
    %v3221 = vunpack.c.l.b16 %v2627
    %v3222 = vunpack.c.l.b16 %v2628
    %v3223 = vunpack.c.l.b16 %v2629
    %v3224 = vunpack.c.l.b16 %v2630
    %v3225 = vunpack.c.l.b16 %v2631
    %v3226 = vunpack.c.l.b16 %v2632
    %v3227 = vunpack.c.l.b16 %v2633
    %v3228 = vunpack.c.l.b16 %v2634
    %v3229 = vunpack.c.l.b16 %v2635
    %v3230 = vunpack.c.l.b16 %v2636
    %v3231 = vunpack.c.l.b16 %v2637
    %v3232 = vunpack.c.l.b16 %v2638
    %v3233 = vunpack.c.l.b16 %v2639
    %v3234 = vunpack.c.l.b16 %v2640
    %v3235 = vunpack.c.l.b16 %v2641
    %v3236 = vunpack.c.l.b16 %v2642
    %v3237 = vunpack.c.l.b16 %v2643
    %v3238 = vunpack.c.l.b16 %v2644
    %v3239 = vunpack.c.l.b16 %v2645
    %v3240 = vunpack.c.l.b16 %v2646
    %v3241 = vunpack.c.l.b16 %v2647
    %v3242 = vunpack.c.l.b16 %v2648
    %v3243 = vunpack.c.l.b16 %v2649
    %v3244 = vunpack.c.l.b16 %v2650
    %v3245 = vunpack.c.l.b16 %v2651
    %v3246 = vunpack.c.l.b16 %v2652
    %v3247 = vunpack.c.l.b16 %v2653
    %v3248 = vunpack.c.l.b16 %v2654
    %v3249 = vunpack.c.l.b16 %v2655
    %v3250 = vunpack.c.l.b16 %v2656
    %v3251 = vunpack.c.l.b16 %v2657
    %v3252 = vunpack.c.l.b16 %v2658
    %v3253 = vunpack.c.l.b16 %v2659
    %v3254 = vunpack.c.l.b16 %v2660
    %v3255 = vunpack.c.l.b16 %v2661
    %v3256 = vunpack.c.l.b16 %v2662
    %v3257 = vunpack.c.l.b16 %v2663
    %v3258 = vunpack.c.l.b16 %v2664
    %v3259 = vunpack.c.l.b16 %v2665
    %v3260 = vunpack.c.l.b16 %v2666
    %v3261 = vunpack.c.l.b16 %v2667
    %v3262 = vunpack.c.l.b16 %v2668
    %v3263 = vunpack.c.l.b16 %v2669
    %v3264 = vunpack.c.l.b16 %v2670
    %v3265 = vunpack.c.l.b16 %v2671
    %v3266 = vunpack.c.l.b16 %v2672
    %v3267 = vunpack.c.l.b16 %v2673
    %v3268 = vunpack.c.l.b16 %v2674
    %v3269 = vunpack.c.l.b16 %v2675
    %v3270 = vunpack.c.l.b16 %v2676
    %v3271 = vunpack.c.l.b16 %v2677
    %v3272 = vunpack.c.l.b16 %v2678
    %v3273 = vunpack.c.l.b16 %v2679
    %v3274 = vunpack.c.l.b16 %v2680
    %v3275 = vunpack.c.l.b16 %v2681
    %v3276 = vunpack.c.l.b16 %v2682
    %v3277 = vunpack.c.l.b16 %v2683
    %v3278 = vunpack.c.l.b16 %v2684
    %v3279 = vunpack.c.l.b16 %v2685
    %v3280 = vunpack.c.l.b16 %v2686
    %v3281 = vunpack.c.l.b16 %v2687
    %v3282 = vunpack.c.l.b16 %v2688
    %v3283 = vunpack.c.l.b16 %v2689
    %v3284 = vunpack.c.l.b16 %v2690
    %v3285 = vunpack.c.l.b16 %v2691
    %v3286 = vunpack.c.l.b16 %v2692
    %v3287 = vunpack.c.l.b16 %v2693
    %v3288 = vunpack.c.l.b16 %v2694
    %v3289 = vunpack.c.l.b16 %v2695
    %v3290 = vunpack.c.l.b16 %v2696
    %v3291 = vunpack.c.l.b16 %v2697
    %v3292 = vunpack.c.l.b16 %v2698
    %v3293 = vunpack.c.l.b16 %v2699
    %v3294 = vunpack.c.l.b16 %v2700
    %v3295 = vunpack.c.l.b16 %v2701
    %v3296 = vunpack.c.l.b16 %v2702
    %v3297 = vunpack.c.l.b16 %v2703
    %v3298 = vunpack.c.l.b16 %v2704
    %v3299 = vunpack.c.l.b16 %v2705
    %v3300 = vunpack.c.l.b16 %v2706
    %v3301 = vunpack.c.l.b16 %v2707
    %v3302 = vunpack.c.l.b16 %v2708
    %v3303 = vunpack.c.l.b16 %v2709
    %v3304 = vunpack.c.l.b16 %v2710
    %v3305 = vunpack.c.l.b16 %v2711
    %v3306 = vunpack.c.l.b16 %v2712
    %v3307 = vunpack.c.l.b16 %v2713
    %v3308 = vunpack.c.l.b16 %v2714
    %v3309 = vunpack.c.l.b16 %v2715
    %v3310 = vunpack.c.l.b16 %v2716
    %v3311 = vunpack.c.l.b16 %v2717
    %v3312 = vunpack.c.l.b16 %v2718
    %v3313 = vunpack.c.l.b16 %v2719
    %v3314 = vunpack.c.l.b16 %v2720
    %v3315 = vunpack.c.l.b16 %v2721
    %v3316 = vunpack.c.l.b16 %v2722
    %v3317 = vunpack.c.l.b16 %v2723
    %v3318 = vunpack.c.l.b16 %v2724
    %v3319 = vunpack.c.l.b16 %v2725
    %v3320 = vunpack.c.l.b16 %v2726
    %v3321 = vunpack.c.l.b16 %v2727
    %v3322 = vunpack.c.l.b16 %v2728
    %v3323 = vunpack.c.l.b16 %v2729
    %v3324 = vunpack.c.l.b16 %v2730
    %v3325 = vunpack.c.l.b16 %v2731
    %v3326 = vunpack.c.l.b16 %v2732
    %v3327 = vunpack.c.l.b16 %v2733
    %v3328 = vunpack.c.l.b16 %v2734
    %v3329 = vunpack.c.l.b16 %v2735
    %v3330 = vunpack.c.l.b16 %v2736
    %v3331 = vunpack.c.l.b16 %v2737
    %v3332 = vunpack.c.l.b16 %v2738
    %v3333 = vunpack.c.l.b16 %v2739
    %v3334 = vunpack.c.l.b16 %v2740
    %v3335 = vunpack.c.l.b16 %v2741
    %v3336 = vunpack.c.l.b16 %v2742
    %v3337 = vunpack.c.l.b16 %v2743
    %v3338 = vunpack.c.l.b16 %v2744
    %v3339 = vunpack.c.l.b16 %v2745
    %v3340 = vunpack.c.l.b16 %v2746
    %v3341 = vunpack.c.l.b16 %v2747
    %v3342 = vunpack.c.l.b16 %v2748
    %v3343 = vunpack.c.l.b16 %v2749
    %v3344 = vunpack.c.l.b16 %v2750
    %v3345 = vunpack.c.l.b16 %v2751
    %v3346 = vunpack.c.l.b16 %v2752
    %v3347 = vunpack.c.l.b16 %v2753
    %v3348 = vunpack.c.l.b16 %v2754
    %v3349 = vunpack.c.l.b16 %v2755
    %v3350 = vunpack.c.l.b16 %v2756
    %v3351 = vunpack.c.l.b16 %v2757
    %v3352 = vunpack.c.l.b16 %v2758
    %v3353 = vunpack.c.l.b16 %v2759
    %v3354 = vunpack.c.l.b16 %v2760
    %v3355 = vunpack.c.l.b16 %v2761
    %v3356 = vunpack.c.l.b16 %v2762
    %v3357 = vunpack.c.l.b16 %v2763
    %v3358 = vunpack.c.l.b16 %v2764
    %v3359 = vunpack.c.l.b16 %v2765
    %v3360 = vunpack.c.l.b16 %v2766
    %v3361 = vunpack.c.l.b16 %v2767
    %v3362 = vunpack.c.l.b16 %v2768
    %v3363 = vunpack.c.l.b16 %v2769
    %v3364 = vunpack.c.l.b16 %v2770
    %v3365 = vunpack.c.l.b16 %v2771
    %v3366 = vunpack.c.l.b16 %v2772
    %v3367 = vunpack.c.l.b16 %v2773
    %v3368 = vunpack.c.l.b16 %v2774
    %v3369 = vunpack.c.l.b16 %v2775
    %v3370 = vunpack.c.l.b16 %v2776
    %v3371 = vunpack.c.l.b16 %v2777
    %v3372 = vunpack.c.l.b16 %v2778
    %v3373 = vunpack.c.l.b16 %v2779
    %v3374 = vunpack.c.l.b16 %v2780
    %v3375 = vunpack.c.l.b16 %v2781
    %v3376 = vunpack.c.l.b16 %v2782
    %v3377 = vunpack.c.l.b16 %v2783
    %v3378 = vunpack.c.l.b16 %v2784
    %v3379 = vunpack.c.l.b16 %v2785
    %v3380 = vunpack.c.l.b16 %v2786
    %v3381 = vunpack.c.l.b16 %v2787
    %v3382 = vunpack.c.l.b16 %v2788
    %v3383 = vunpack.c.l.b16 %v2789
    %v3384 = vunpack.c.l.b16 %v2790
    %v3385 = vunpack.c.l.b16 %v2791
    %v3386 = vunpack.c.l.b16 %v2792
    %v3387 = vunpack.c.l.b16 %v2793
    %v3388 = vunpack.c.l.b16 %v2794
    %v3389 = vunpack.c.l.b16 %v2795
    %v3390 = vunpack.c.l.b16 %v2796
    %v3391 = vunpack.c.l.b16 %v2797
    %v3392 = vunpack.c.l.b16 %v2798
    %v3393 = vunpack.c.l.b16 %v2799
    %v3394 = vunpack.c.l.b16 %v2800
    %v3395 = vunpack.c.l.b16 %v2801
    %v3396 = vunpack.c.l.b16 %v2802
    %v3397 = vunpack.c.l.b16 %v2803
    %v3398 = vunpack.c.l.b16 %v2804
    %v3399 = vunpack.c.l.b16 %v2805
    %v3400 = vunpack.c.l.b16 %v2806
    %v3401 = vunpack.c.l.b16 %v2807
    %v3402 = vunpack.c.l.b16 %v2808
    %v3403 = vunpack.c.l.b16 %v2809
    %v3404 = vunpack.c.l.b16 %v2810
    %v3405 = vunpack.c.l.b16 %v2811
    %v3406 = vunpack.c.l.b16 %v2812
    %v3407 = vunpack.c.l.b16 %v2813
    %v3408 = vunpack.c.l.b16 %v2814
    %v3409 = vunpack.c.l.b16 %v2815
    %v3410 = vunpack.c.l.b16 %v2816
    %v3411 = vunpack.c.l.b16 %v2817
    %v3412 = vunpack.c.l.b16 %v2818
    %v3413 = vunpack.c.l.b16 %v2819
    %v3414 = vunpack.c.l.b16 %v2820
    %v3415 = vunpack.c.l.b16 %v2821
    %v3416 = vunpack.c.l.b16 %v2822
    %v3417 = vunpack.c.l.b16 %v2823
    %v3418 = vunpack.c.l.b16 %v2824
    %v3419 = vunpack.c.l.b16 %v2825
    %v3420 = vunpack.c.l.b16 %v2826
    %v3421 = vunpack.c.l.b16 %v2827
    %v3422 = vunpack.c.l.b16 %v2828
    %v3423 = vunpack.c.l.b16 %v2829
    %v3424 = vunpack.c.l.b16 %v2830
    %v3425 = vunpack.c.l.b16 %v2831
    %v3426 = vunpack.c.l.b16 %v2832
    %v3427 = vunpack.c.l.b16 %v2833
    %v3428 = vunpack.c.l.b16 %v2834
    %v3429 = vunpack.c.l.b16 %v2835
    %v3430 = vunpack.c.l.b16 %v2836
    %v3431 = vunpack.c.l.b16 %v2837
    %v3432 = vunpack.c.l.b16 %v2838
    %v3433 = vunpack.c.l.b16 %v2839
    %v3434 = vunpack.c.l.b16 %v2840
    %v3435 = vunpack.c.l.b16 %v2841
    %v3436 = vunpack.c.l.b16 %v2842
    %v3437 = vunpack.c.l.b16 %v2843
    %v3438 = vunpack.c.l.b16 %v2844
    %v3439 = vunpack.c.l.b16 %v2845
    %v3440 = vunpack.c.l.b16 %v2846
    %v3441 = vunpack.c.l.b16 %v2847
    %v3442 = vunpack.c.l.b16 %v2848
    %v3443 = vunpack.c.l.b16 %v2849
    %v3444 = vunpack.c.l.b16 %v2850
    %v3445 = vunpack.c.l.b16 %v2851
    %v3446 = vunpack.c.l.b16 %v2852
    %v3447 = vunpack.c.l.b16 %v2853
    %v3448 = vpack.c.b16 %v3161, %v3160
    %v3449 = vpack.c.b16 %v3163, %v3162
    %v3450 = vpack.c.b16 %v3165, %v3164
    %v3451 = vpack.c.b16 %v3167, %v3166
    %v3452 = vpack.c.b16 %v3169, %v3168
    %v3453 = vpack.c.b16 %v3171, %v3170
    %v3454 = vpack.c.b16 %v3173, %v3172
    %v3455 = vpack.c.b16 %v3175, %v3174
    %v3456 = vpack.c.b16 %v3177, %v3176
    %v3457 = vpack.c.b16 %v3179, %v3178
    %v3458 = vpack.c.b16 %v3181, %v3180
    %v3459 = vpack.c.b16 %v3183, %v3182
    %v3460 = vpack.c.b16 %v3185, %v3184
    %v3461 = vpack.c.b16 %v3187, %v3186
    %v3462 = vpack.c.b16 %v3189, %v3188
    %v3463 = vpack.c.b16 %v3191, %v3190
    %v3464 = vpack.c.b16 %v3193, %v3192
    %v3465 = vpack.c.b16 %v3195, %v3194
    %v3466 = vpack.c.b16 %v3197, %v3196
    %v3467 = vpack.c.b16 %v3199, %v3198
    %v3468 = vpack.c.b16 %v3201, %v3200
    %v3469 = vpack.c.b16 %v3203, %v3202
    %v3470 = vpack.c.b16 %v3205, %v3204
    %v3471 = vpack.c.b16 %v3207, %v3206
    %v3472 = vpack.c.b16 %v3209, %v3208
    %v3473 = vpack.c.b16 %v3211, %v3210
    %v3474 = vpack.c.b16 %v3213, %v3212
    %v3475 = vpack.c.b16 %v3215, %v3214
    %v3476 = vpack.c.b16 %v3217, %v3216
    %v3477 = vpack.c.b16 %v3219, %v3218
    %v3478 = vpack.c.b16 %v3221, %v3220
    %v3479 = vpack.c.b16 %v3223, %v3222
    %v3480 = vpack.c.b16 %v3225, %v3224
    %v3481 = vpack.c.b16 %v3227, %v3226
    %v3482 = vpack.c.b16 %v3229, %v3228
    %v3483 = vpack.c.b16 %v3231, %v3230
    %v3484 = vpack.c.b16 %v3233, %v3232
    %v3485 = vpack.c.b16 %v3235, %v3234
    %v3486 = vpack.c.b16 %v3237, %v3236
    %v3487 = vpack.c.b16 %v3239, %v3238
    %v3488 = vpack.c.b16 %v3241, %v3240
    %v3489 = vpack.c.b16 %v3243, %v3242
    %v3490 = vpack.c.b16 %v3245, %v3244
    %v3491 = vpack.c.b16 %v3247, %v3246
    %v3492 = vpack.c.b16 %v3249, %v3248
    %v3493 = vpack.c.b16 %v3251, %v3250
    %v3494 = vpack.c.b16 %v3253, %v3252
    %v3495 = vpack.c.b16 %v3255, %v3254
    %v3496 = vpack.c.b16 %v3257, %v3256
    %v3497 = vpack.c.b16 %v3259, %v3258
    %v3498 = vpack.c.b16 %v3261, %v3260
    %v3499 = vpack.c.b16 %v3263, %v3262
    %v3500 = vpack.c.b16 %v3265, %v3264
    %v3501 = vpack.c.b16 %v3267, %v3266
    %v3502 = vpack.c.b16 %v3269, %v3268
    %v3503 = vpack.c.b16 %v3271, %v3270
    %v3504 = vpack.c.b16 %v3273, %v3272
    %v3505 = vpack.c.b16 %v3275, %v3274
    %v3506 = vpack.c.b16 %v3277, %v3276
    %v3507 = vpack.c.b16 %v3279, %v3278
    %v3508 = vpack.c.b16 %v3281, %v3280
    %v3509 = vpack.c.b16 %v3283, %v3282
    %v3510 = vpack.c.b16 %v3285, %v3284
    %v3511 = vpack.c.b16 %v3287, %v3286
    %v3512 = vpack.c.b16 %v3289, %v3288
    %v3513 = vpack.c.b16 %v3291, %v3290
    %v3514 = vpack.c.b16 %v3293, %v3292
    %v3515 = vpack.c.b16 %v3295, %v3294
    %v3516 = vpack.c.b16 %v3297, %v3296
    %v3517 = vpack.c.b16 %v3299, %v3298
    %v3518 = vpack.c.b16 %v3301, %v3300
    %v3519 = vpack.c.b16 %v3303, %v3302
    %v3520 = vpack.c.b16 %v3305, %v3304
    %v3521 = vpack.c.b16 %v3307, %v3306
    %v3522 = vpack.c.b16 %v3309, %v3308
    %v3523 = vpack.c.b16 %v3311, %v3310
    %v3524 = vpack.c.b16 %v3313, %v3312
    %v3525 = vpack.c.b16 %v3315, %v3314
    %v3526 = vpack.c.b16 %v3317, %v3316
    %v3527 = vpack.c.b16 %v3319, %v3318
    %v3528 = vpack.c.b16 %v3321, %v3320
    %v3529 = vpack.c.b16 %v3323, %v3322
    %v3530 = vpack.c.b16 %v3325, %v3324
    %v3531 = vpack.c.b16 %v3327, %v3326
    %v3532 = vpack.c.b16 %v3329, %v3328
    %v3533 = vpack.c.b16 %v3331, %v3330
    %v3534 = vpack.c.b16 %v3333, %v3332
    %v3535 = vpack.c.b16 %v3335, %v3334
    %v3536 = vpack.c.b16 %v3337, %v3336
    %v3537 = vpack.c.b16 %v3339, %v3338
    %v3538 = vpack.c.b16 %v3341, %v3340
    %v3539 = vpack.c.b16 %v3343, %v3342
    %v3540 = vpack.c.b16 %v3345, %v3344
    %v3541 = vpack.c.b16 %v3347, %v3346
    %v3542 = vpack.c.b16 %v3349, %v3348
    %v3543 = vpack.c.b16 %v3351, %v3350
    %v3544 = vpack.c.b16 %v3353, %v3352
    %v3545 = vpack.c.b16 %v3355, %v3354
    %v3546 = vpack.c.b16 %v3357, %v3356
    %v3547 = vpack.c.b16 %v3359, %v3358
    %v3548 = vpack.c.b16 %v3361, %v3360
    %v3549 = vpack.c.b16 %v3363, %v3362
    %v3550 = vpack.c.b16 %v3365, %v3364
    %v3551 = vpack.c.b16 %v3367, %v3366
    %v3552 = vpack.c.b16 %v3369, %v3368
    %v3553 = vpack.c.b16 %v3371, %v3370
    %v3554 = vpack.c.b16 %v3373, %v3372
    %v3555 = vpack.c.b16 %v3375, %v3374
    %v3556 = vpack.c.b16 %v3377, %v3376
    %v3557 = vpack.c.b16 %v3379, %v3378
    %v3558 = vpack.c.b16 %v3381, %v3380
    %v3559 = vpack.c.b16 %v3383, %v3382
    %v3560 = vpack.c.b16 %v3385, %v3384
    %v3561 = vpack.c.b16 %v3387, %v3386
    %v3562 = vpack.c.b16 %v3389, %v3388
    %v3563 = vpack.c.b16 %v3391, %v3390
    %v3564 = vpack.c.b16 %v3393, %v3392
    %v3565 = vpack.c.b16 %v3395, %v3394
    %v3566 = vpack.c.b16 %v3397, %v3396
    %v3567 = vpack.c.b16 %v3399, %v3398
    %v3568 = vpack.c.b16 %v3401, %v3400
    %v3569 = vpack.c.b16 %v3403, %v3402
    %v3570 = vpack.c.b16 %v3405, %v3404
    %v3571 = vpack.c.b16 %v3407, %v3406
    %v3572 = vpack.c.b16 %v3409, %v3408
    %v3573 = vpack.c.b16 %v3411, %v3410
    %v3574 = vpack.c.b16 %v3413, %v3412
    %v3575 = vpack.c.b16 %v3415, %v3414
    %v3576 = vpack.c.b16 %v3417, %v3416
    %v3577 = vpack.c.b16 %v3419, %v3418
    %v3578 = vpack.c.b16 %v3421, %v3420
    %v3579 = vpack.c.b16 %v3423, %v3422
    %v3580 = vpack.c.b16 %v3425, %v3424
    %v3581 = vpack.c.b16 %v3427, %v3426
    %v3582 = vpack.c.b16 %v3429, %v3428
    %v3583 = vpack.c.b16 %v3431, %v3430
    %v3584 = vpack.c.b16 %v3433, %v3432
    %v3585 = vpack.c.b16 %v3435, %v3434
    %v3586 = vpack.c.b16 %v3437, %v3436
    %v3587 = vpack.c.b16 %v3439, %v3438
    %v3588 = vpack.c.b16 %v3441, %v3440
    %v3589 = vpack.c.b16 %v3443, %v3442
    %v3590 = vpack.c.b16 %v3445, %v3444
    %v3591 = vpack.c.b16 %v3447, %v3446
    %3736 = vmatprep.subr.bf16.mxu0 0
    %3737 = vmatpush1.bf16.msra.mxu0 %v3448
    %3738 = vmatprep.subr.bf16.mxu0 0
    %3739 = vmatpush1.bf16.msra.mxu0 %v3449
    %3740 = vmatprep.subr.bf16.mxu0 0
    %3741 = vmatpush1.bf16.msra.mxu0 %v3450
    %3742 = vmatprep.subr.bf16.mxu0 0
    %3743 = vmatpush1.bf16.msra.mxu0 %v3451
    %3744 = vmatprep.subr.bf16.mxu0 0
    %3745 = vmatpush1.bf16.msra.mxu0 %v3452
    %3746 = vmatprep.subr.bf16.mxu0 0
    %3747 = vmatpush1.bf16.msra.mxu0 %v3453
    %3748 = vmatprep.subr.bf16.mxu0 0
    %3749 = vmatpush1.bf16.msra.mxu0 %v3454
    %3750 = vmatprep.subr.bf16.mxu0 0
    %3751 = vmatpush1.bf16.msra.mxu0 %v3455
    %3752 = vmatprep.subr.bf16.mxu0 0
    %3753 = vmatpush1.bf16.msra.mxu0 %v3456
    %3754 = vmatprep.subr.bf16.mxu0 0
    %3755 = vmatpush1.bf16.msra.mxu0 %v3457
    %3756 = vmatprep.subr.bf16.mxu0 0
    %3757 = vmatpush1.bf16.msra.mxu0 %v3458
    %3758 = vmatprep.subr.bf16.mxu0 0
    %3759 = vmatpush1.bf16.msra.mxu0 %v3459
    %3760 = vmatprep.subr.bf16.mxu0 0
    %3761 = vmatpush1.bf16.msra.mxu0 %v3460
    %3762 = vmatprep.subr.bf16.mxu0 0
    %3763 = vmatpush1.bf16.msra.mxu0 %v3461
    %3764 = vmatprep.subr.bf16.mxu0 0
    %3765 = vmatpush1.bf16.msra.mxu0 %v3462
    %3766 = vmatprep.subr.bf16.mxu0 0
    %3767 = vmatpush1.bf16.msra.mxu0 %v3463
    %3768 = vmatprep.mubr.bf16.mxu0 %v2855
    %3769 = vmatmul.mubr.bf16.gmra.mrb[0].mxu0 %v2854
    %v3770 = vpop.f32.mrb[0].mxu0
    %v3771 = vadd.f32 0.0, %v3770
    %v3772 = vpop.f32.mrb[0].mxu0
    %v3773 = vpop.f32.mrb[0].mxu0
    %v3774 = vadd.f32 0.0, %v3773
    %v3775 = vpop.f32.mrb[0].mxu0
    %3776 = vdwg.mxu0
    %3777 = vmatprep.subr.bf16.mxu0 0
    %3778 = vmatpush1.bf16.msra.mxu0 %v3464
    %3779 = vmatprep.subr.bf16.mxu0 0
    %3780 = vmatpush1.bf16.msra.mxu0 %v3465
    %3781 = vmatprep.subr.bf16.mxu0 0
    %3782 = vmatpush1.bf16.msra.mxu0 %v3466
    %3783 = vmatprep.subr.bf16.mxu0 0
    %3784 = vmatpush1.bf16.msra.mxu0 %v3467
    %3785 = vmatprep.subr.bf16.mxu0 0
    %3786 = vmatpush1.bf16.msra.mxu0 %v3468
    %3787 = vmatprep.subr.bf16.mxu0 0
    %3788 = vmatpush1.bf16.msra.mxu0 %v3469
    %3789 = vmatprep.subr.bf16.mxu0 0
    %3790 = vmatpush1.bf16.msra.mxu0 %v3470
    %3791 = vmatprep.subr.bf16.mxu0 0
    %3792 = vmatpush1.bf16.msra.mxu0 %v3471
    %3793 = vmatprep.subr.bf16.mxu0 0
    %3794 = vmatpush1.bf16.msra.mxu0 %v3472
    %3795 = vmatprep.subr.bf16.mxu0 0
    %3796 = vmatpush1.bf16.msra.mxu0 %v3473
    %3797 = vmatprep.subr.bf16.mxu0 0
    %3798 = vmatpush1.bf16.msra.mxu0 %v3474
    %3799 = vmatprep.subr.bf16.mxu0 0
    %3800 = vmatpush1.bf16.msra.mxu0 %v3475
    %3801 = vmatprep.subr.bf16.mxu0 0
    %3802 = vmatpush1.bf16.msra.mxu0 %v3476
    %3803 = vmatprep.subr.bf16.mxu0 0
    %3804 = vmatpush1.bf16.msra.mxu0 %v3477
    %3805 = vmatprep.subr.bf16.mxu0 0
    %3806 = vmatpush1.bf16.msra.mxu0 %v3478
    %3807 = vmatprep.subr.bf16.mxu0 0
    %3808 = vmatpush1.bf16.msra.mxu0 %v3479
    %3809 = vmatprep.mubr.bf16.mxu0 %v2857
    %3810 = vmatmul.mubr.bf16.gmra.mrb[0].mxu0 %v2856
    %v3811 = vpop.f32.mrb[0].mxu0
    %v3812 = vadd.f32 %v3771, %v3811
    %v3813 = vpop.f32.mrb[0].mxu0
    %v3814 = vpop.f32.mrb[0].mxu0
    %v3815 = vadd.f32 %v3774, %v3814
    %v3816 = vpop.f32.mrb[0].mxu0
    %3817 = vdwg.mxu0
    %3818 = vmatprep.subr.bf16.mxu0 0
    %3819 = vmatpush1.bf16.msra.mxu0 %v3480
    %3820 = vmatprep.subr.bf16.mxu0 0
    %3821 = vmatpush1.bf16.msra.mxu0 %v3481
    %3822 = vmatprep.subr.bf16.mxu0 0
    %3823 = vmatpush1.bf16.msra.mxu0 %v3482
    %3824 = vmatprep.subr.bf16.mxu0 0
    %3825 = vmatpush1.bf16.msra.mxu0 %v3483
    %3826 = vmatprep.subr.bf16.mxu0 0
    %3827 = vmatpush1.bf16.msra.mxu0 %v3484
    %3828 = vmatprep.subr.bf16.mxu0 0
    %3829 = vmatpush1.bf16.msra.mxu0 %v3485
    %3830 = vmatprep.subr.bf16.mxu0 0
    %3831 = vmatpush1.bf16.msra.mxu0 %v3486
    %3832 = vmatprep.subr.bf16.mxu0 0
    %3833 = vmatpush1.bf16.msra.mxu0 %v3487
    %3834 = vmatprep.subr.bf16.mxu0 0
    %3835 = vmatpush1.bf16.msra.mxu0 %v3488
    %3836 = vmatprep.subr.bf16.mxu0 0
    %3837 = vmatpush1.bf16.msra.mxu0 %v3489
    %3838 = vmatprep.subr.bf16.mxu0 0
    %3839 = vmatpush1.bf16.msra.mxu0 %v3490
    %3840 = vmatprep.subr.bf16.mxu0 0
    %3841 = vmatpush1.bf16.msra.mxu0 %v3491
    %3842 = vmatprep.subr.bf16.mxu0 0
    %3843 = vmatpush1.bf16.msra.mxu0 %v3492
    %3844 = vmatprep.subr.bf16.mxu0 0
    %3845 = vmatpush1.bf16.msra.mxu0 %v3493
    %3846 = vmatprep.subr.bf16.mxu0 0
    %3847 = vmatpush1.bf16.msra.mxu0 %v3494
    %3848 = vmatprep.subr.bf16.mxu0 0
    %3849 = vmatpush1.bf16.msra.mxu0 %v3495
    %3850 = vmatprep.mubr.bf16.mxu0 %v2859
    %3851 = vmatmul.mubr.bf16.gmra.mrb[0].mxu0 %v2858
    %v3852 = vpop.f32.mrb[0].mxu0
    %v3853 = vadd.f32 %v3812, %v3852
    %v3854 = vpop.f32.mrb[0].mxu0
    %v3855 = vpop.f32.mrb[0].mxu0
    %v3856 = vadd.f32 %v3815, %v3855
    %v3857 = vpop.f32.mrb[0].mxu0
    %3858 = vdwg.mxu0
    %3859 = vmatprep.subr.bf16.mxu0 0
    %3860 = vmatpush1.bf16.msra.mxu0 %v3496
    %3861 = vmatprep.subr.bf16.mxu0 0
    %3862 = vmatpush1.bf16.msra.mxu0 %v3497
    %3863 = vmatprep.subr.bf16.mxu0 0
    %3864 = vmatpush1.bf16.msra.mxu0 %v3498
    %3865 = vmatprep.subr.bf16.mxu0 0
    %3866 = vmatpush1.bf16.msra.mxu0 %v3499
    %3867 = vmatprep.subr.bf16.mxu0 0
    %3868 = vmatpush1.bf16.msra.mxu0 %v3500
    %3869 = vmatprep.subr.bf16.mxu0 0
    %3870 = vmatpush1.bf16.msra.mxu0 %v3501
    %3871 = vmatprep.subr.bf16.mxu0 0
    %3872 = vmatpush1.bf16.msra.mxu0 %v3502
    %3873 = vmatprep.subr.bf16.mxu0 0
    %3874 = vmatpush1.bf16.msra.mxu0 %v3503
    %3875 = vmatprep.subr.bf16.mxu0 0
    %3876 = vmatpush1.bf16.msra.mxu0 %v3504
    %3877 = vmatprep.subr.bf16.mxu0 0
    %3878 = vmatpush1.bf16.msra.mxu0 %v3505
    %3879 = vmatprep.subr.bf16.mxu0 0
    %3880 = vmatpush1.bf16.msra.mxu0 %v3506
    %3881 = vmatprep.subr.bf16.mxu0 0
    %3882 = vmatpush1.bf16.msra.mxu0 %v3507
    %3883 = vmatprep.subr.bf16.mxu0 0
    %3884 = vmatpush1.bf16.msra.mxu0 %v3508
    %3885 = vmatprep.subr.bf16.mxu0 0
    %3886 = vmatpush1.bf16.msra.mxu0 %v3509
    %3887 = vmatprep.subr.bf16.mxu0 0
    %3888 = vmatpush1.bf16.msra.mxu0 %v3510
    %3889 = vmatprep.subr.bf16.mxu0 0
    %3890 = vmatpush1.bf16.msra.mxu0 %v3511
    %3891 = vmatprep.mubr.bf16.mxu0 %v2861
    %3892 = vmatmul.mubr.bf16.gmra.mrb[0].mxu0 %v2860
    %v3893 = vpop.f32.mrb[0].mxu0
    %v3894 = vadd.f32 %v3853, %v3893
    %v3895 = vpop.f32.mrb[0].mxu0
    %v3896 = vpop.f32.mrb[0].mxu0
    %v3897 = vadd.f32 %v3856, %v3896
    %v3898 = vpop.f32.mrb[0].mxu0
    %3899 = vdwg.mxu0
    %3900 = vmatprep.subr.bf16.mxu0 0
    %3901 = vmatpush1.bf16.msra.mxu0 %v3512
    %3902 = vmatprep.subr.bf16.mxu0 0
    %3903 = vmatpush1.bf16.msra.mxu0 %v3513
    %3904 = vmatprep.subr.bf16.mxu0 0
    %3905 = vmatpush1.bf16.msra.mxu0 %v3514
    %3906 = vmatprep.subr.bf16.mxu0 0
    %3907 = vmatpush1.bf16.msra.mxu0 %v3515
    %3908 = vmatprep.subr.bf16.mxu0 0
    %3909 = vmatpush1.bf16.msra.mxu0 %v3516
    %3910 = vmatprep.subr.bf16.mxu0 0
    %3911 = vmatpush1.bf16.msra.mxu0 %v3517
    %3912 = vmatprep.subr.bf16.mxu0 0
    %3913 = vmatpush1.bf16.msra.mxu0 %v3518
    %3914 = vmatprep.subr.bf16.mxu0 0
    %3915 = vmatpush1.bf16.msra.mxu0 %v3519
    %3916 = vmatprep.subr.bf16.mxu0 0
    %3917 = vmatpush1.bf16.msra.mxu0 %v3520
    %3918 = vmatprep.subr.bf16.mxu0 0
    %3919 = vmatpush1.bf16.msra.mxu0 %v3521
    %3920 = vmatprep.subr.bf16.mxu0 0
    %3921 = vmatpush1.bf16.msra.mxu0 %v3522
    %3922 = vmatprep.subr.bf16.mxu0 0
    %3923 = vmatpush1.bf16.msra.mxu0 %v3523
    %3924 = vmatprep.subr.bf16.mxu0 0
    %3925 = vmatpush1.bf16.msra.mxu0 %v3524
    %3926 = vmatprep.subr.bf16.mxu0 0
    %3927 = vmatpush1.bf16.msra.mxu0 %v3525
    %3928 = vmatprep.subr.bf16.mxu0 0
    %3929 = vmatpush1.bf16.msra.mxu0 %v3526
    %3930 = vmatprep.subr.bf16.mxu0 0
    %3931 = vmatpush1.bf16.msra.mxu0 %v3527
    %3932 = vmatprep.mubr.bf16.mxu0 %v2863
    %3933 = vmatmul.mubr.bf16.gmra.mrb[0].mxu0 %v2862
    %v3934 = vpop.f32.mrb[0].mxu0
    %v3935 = vadd.f32 %v3894, %v3934
    %v3936 = vpop.f32.mrb[0].mxu0
    %v3937 = vpop.f32.mrb[0].mxu0
    %v3938 = vadd.f32 %v3897, %v3937
    %v3939 = vpop.f32.mrb[0].mxu0
    %3940 = vdwg.mxu0
    %3941 = vmatprep.subr.bf16.mxu0 0
    %3942 = vmatpush1.bf16.msra.mxu0 %v3528
    %3943 = vmatprep.subr.bf16.mxu0 0
    %3944 = vmatpush1.bf16.msra.mxu0 %v3529
    %3945 = vmatprep.subr.bf16.mxu0 0
    %3946 = vmatpush1.bf16.msra.mxu0 %v3530
    %3947 = vmatprep.subr.bf16.mxu0 0
    %3948 = vmatpush1.bf16.msra.mxu0 %v3531
    %3949 = vmatprep.subr.bf16.mxu0 0
    %3950 = vmatpush1.bf16.msra.mxu0 %v3532
    %3951 = vmatprep.subr.bf16.mxu0 0
    %3952 = vmatpush1.bf16.msra.mxu0 %v3533
    %3953 = vmatprep.subr.bf16.mxu0 0
    %3954 = vmatpush1.bf16.msra.mxu0 %v3534
    %3955 = vmatprep.subr.bf16.mxu0 0
    %3956 = vmatpush1.bf16.msra.mxu0 %v3535
    %3957 = vmatprep.subr.bf16.mxu0 0
    %3958 = vmatpush1.bf16.msra.mxu0 %v3536
    %3959 = vmatprep.subr.bf16.mxu0 0
    %3960 = vmatpush1.bf16.msra.mxu0 %v3537
    %3961 = vmatprep.subr.bf16.mxu0 0
    %3962 = vmatpush1.bf16.msra.mxu0 %v3538
    %3963 = vmatprep.subr.bf16.mxu0 0
    %3964 = vmatpush1.bf16.msra.mxu0 %v3539
    %3965 = vmatprep.subr.bf16.mxu0 0
    %3966 = vmatpush1.bf16.msra.mxu0 %v3540
    %3967 = vmatprep.subr.bf16.mxu0 0
    %3968 = vmatpush1.bf16.msra.mxu0 %v3541
    %3969 = vmatprep.subr.bf16.mxu0 0
    %3970 = vmatpush1.bf16.msra.mxu0 %v3542
    %3971 = vmatprep.subr.bf16.mxu0 0
    %3972 = vmatpush1.bf16.msra.mxu0 %v3543
    %3973 = vmatprep.mubr.bf16.mxu0 %v2865
    %3974 = vmatmul.mubr.bf16.gmra.mrb[0].mxu0 %v2864
    %v3975 = vpop.f32.mrb[0].mxu0
    %v3976 = vadd.f32 %v3935, %v3975
    %v3977 = vpop.f32.mrb[0].mxu0
    %v3978 = vpop.f32.mrb[0].mxu0
    %v3979 = vadd.f32 %v3938, %v3978
    %v3980 = vpop.f32.mrb[0].mxu0
    %3981 = vdwg.mxu0
    %3982 = vmatprep.subr.bf16.mxu0 0
    %3983 = vmatpush1.bf16.msra.mxu0 %v3544
    %3984 = vmatprep.subr.bf16.mxu0 0
    %3985 = vmatpush1.bf16.msra.mxu0 %v3545
    %3986 = vmatprep.subr.bf16.mxu0 0
    %3987 = vmatpush1.bf16.msra.mxu0 %v3546
    %3988 = vmatprep.subr.bf16.mxu0 0
    %3989 = vmatpush1.bf16.msra.mxu0 %v3547
    %3990 = vmatprep.subr.bf16.mxu0 0
    %3991 = vmatpush1.bf16.msra.mxu0 %v3548
    %3992 = vmatprep.subr.bf16.mxu0 0
    %3993 = vmatpush1.bf16.msra.mxu0 %v3549
    %3994 = vmatprep.subr.bf16.mxu0 0
    %3995 = vmatpush1.bf16.msra.mxu0 %v3550
    %3996 = vmatprep.subr.bf16.mxu0 0
    %3997 = vmatpush1.bf16.msra.mxu0 %v3551
    %3998 = vmatprep.subr.bf16.mxu0 0
    %3999 = vmatpush1.bf16.msra.mxu0 %v3552
    %4000 = vmatprep.subr.bf16.mxu0 0
    %4001 = vmatpush1.bf16.msra.mxu0 %v3553
    %4002 = vmatprep.subr.bf16.mxu0 0
    %4003 = vmatpush1.bf16.msra.mxu0 %v3554
    %4004 = vmatprep.subr.bf16.mxu0 0
    %4005 = vmatpush1.bf16.msra.mxu0 %v3555
    %4006 = vmatprep.subr.bf16.mxu0 0
    %4007 = vmatpush1.bf16.msra.mxu0 %v3556
    %4008 = vmatprep.subr.bf16.mxu0 0
    %4009 = vmatpush1.bf16.msra.mxu0 %v3557
    %4010 = vmatprep.subr.bf16.mxu0 0
    %4011 = vmatpush1.bf16.msra.mxu0 %v3558
    %4012 = vmatprep.subr.bf16.mxu0 0
    %4013 = vmatpush1.bf16.msra.mxu0 %v3559
    %4014 = vmatprep.mubr.bf16.mxu0 %v2867
    %4015 = vmatmul.mubr.bf16.gmra.mrb[0].mxu0 %v2866
    %v4016 = vpop.f32.mrb[0].mxu0
    %v4017 = vadd.f32 %v3976, %v4016
    %v4018 = vpop.f32.mrb[0].mxu0
    %v4019 = vpop.f32.mrb[0].mxu0
    %v4020 = vadd.f32 %v3979, %v4019
    %v4021 = vpop.f32.mrb[0].mxu0
    %4022 = vdwg.mxu0
    %4023 = vmatprep.subr.bf16.mxu0 0
    %4024 = vmatpush1.bf16.msra.mxu0 %v3560
    %4025 = vmatprep.subr.bf16.mxu0 0
    %4026 = vmatpush1.bf16.msra.mxu0 %v3561
    %4027 = vmatprep.subr.bf16.mxu0 0
    %4028 = vmatpush1.bf16.msra.mxu0 %v3562
    %4029 = vmatprep.subr.bf16.mxu0 0
    %4030 = vmatpush1.bf16.msra.mxu0 %v3563
    %4031 = vmatprep.subr.bf16.mxu0 0
    %4032 = vmatpush1.bf16.msra.mxu0 %v3564
    %4033 = vmatprep.subr.bf16.mxu0 0
    %4034 = vmatpush1.bf16.msra.mxu0 %v3565
    %4035 = vmatprep.subr.bf16.mxu0 0
    %4036 = vmatpush1.bf16.msra.mxu0 %v3566
    %4037 = vmatprep.subr.bf16.mxu0 0
    %4038 = vmatpush1.bf16.msra.mxu0 %v3567
    %4039 = vmatprep.subr.bf16.mxu0 0
    %4040 = vmatpush1.bf16.msra.mxu0 %v3568
    %4041 = vmatprep.subr.bf16.mxu0 0
    %4042 = vmatpush1.bf16.msra.mxu0 %v3569
    %4043 = vmatprep.subr.bf16.mxu0 0
    %4044 = vmatpush1.bf16.msra.mxu0 %v3570
    %4045 = vmatprep.subr.bf16.mxu0 0
    %4046 = vmatpush1.bf16.msra.mxu0 %v3571
    %4047 = vmatprep.subr.bf16.mxu0 0
    %4048 = vmatpush1.bf16.msra.mxu0 %v3572
    %4049 = vmatprep.subr.bf16.mxu0 0
    %4050 = vmatpush1.bf16.msra.mxu0 %v3573
    %4051 = vmatprep.subr.bf16.mxu0 0
    %4052 = vmatpush1.bf16.msra.mxu0 %v3574
    %4053 = vmatprep.subr.bf16.mxu0 0
    %4054 = vmatpush1.bf16.msra.mxu0 %v3575
    %4055 = vmatprep.mubr.bf16.mxu0 %v2869
    %4056 = vmatmul.mubr.bf16.gmra.mrb[0].mxu0 %v2868
    %v4057 = vpop.f32.mrb[0].mxu0
    %v4058 = vadd.f32 %v4017, %v4057
    %v4059 = vpop.f32.mrb[0].mxu0
    %v4060 = vpop.f32.mrb[0].mxu0
    %v4061 = vadd.f32 %v4020, %v4060
    %v4062 = vpop.f32.mrb[0].mxu0
    %4063 = vdwg.mxu0
    %4064 = vmatprep.subr.bf16.mxu0 0
    %4065 = vmatpush1.bf16.msra.mxu0 %v3576
    %4066 = vmatprep.subr.bf16.mxu0 0
    %4067 = vmatpush1.bf16.msra.mxu0 %v3577
    %4068 = vmatprep.subr.bf16.mxu0 0
    %4069 = vmatpush1.bf16.msra.mxu0 %v3578
    %4070 = vmatprep.subr.bf16.mxu0 0
    %4071 = vmatpush1.bf16.msra.mxu0 %v3579
    %4072 = vmatprep.subr.bf16.mxu0 0
    %4073 = vmatpush1.bf16.msra.mxu0 %v3580
    %4074 = vmatprep.subr.bf16.mxu0 0
    %4075 = vmatpush1.bf16.msra.mxu0 %v3581
    %4076 = vmatprep.subr.bf16.mxu0 0
    %4077 = vmatpush1.bf16.msra.mxu0 %v3582
    %4078 = vmatprep.subr.bf16.mxu0 0
    %4079 = vmatpush1.bf16.msra.mxu0 %v3583
    %4080 = vmatprep.subr.bf16.mxu0 0
    %4081 = vmatpush1.bf16.msra.mxu0 %v3584
    %4082 = vmatprep.subr.bf16.mxu0 0
    %4083 = vmatpush1.bf16.msra.mxu0 %v3585
    %4084 = vmatprep.subr.bf16.mxu0 0
    %4085 = vmatpush1.bf16.msra.mxu0 %v3586
    %4086 = vmatprep.subr.bf16.mxu0 0
    %4087 = vmatpush1.bf16.msra.mxu0 %v3587
    %4088 = vmatprep.subr.bf16.mxu0 0
    %4089 = vmatpush1.bf16.msra.mxu0 %v3588
    %4090 = vmatprep.subr.bf16.mxu0 0
    %4091 = vmatpush1.bf16.msra.mxu0 %v3589
    %4092 = vmatprep.subr.bf16.mxu0 0
    %4093 = vmatpush1.bf16.msra.mxu0 %v3590
    %4094 = vmatprep.subr.bf16.mxu0 0
    %4095 = vmatpush1.bf16.msra.mxu0 %v3591
    %4096 = vmatprep.mubr.bf16.mxu0 %v2871
    %4097 = vmatmul.mubr.bf16.gmra.mrb[0].mxu0 %v2870
    %v4098 = vpop.f32.mrb[0].mxu0
    %v4099 = vadd.f32 %v4058, %v4098
    %v4100 = vpop.f32.mrb[0].mxu0
    %v4101 = vpop.f32.mrb[0].mxu0
    %v4102 = vadd.f32 %v4061, %v4101
    %v4103 = vpop.f32.mrb[0].mxu0
    %4104 = vdwg.mxu0
    %4105 = vst [vmem:[#allocation4] sm:$0xff] %v4099
    %4106 = vst [vmem:[#allocation4 + $0x8] sm:$0xff] %v4102
    %v4107 = vld [vmem:[#allocation4] sm:$0xff]
    %v4108 = vld [vmem:[#allocation4 + $0x8] sm:$0xff]
    %v4109 = vld [vmem:[#allocation16] sm:$0x1]
    %v4110 = vld [vmem:[#allocation18] sm:$0x1]
    %4111 = vadd.xlane.f32.xlu0 %v4107
    %v4112 = vpop.xlane.xlu0 %4111
    %4113 = vadd.xlane.f32.xlu0 %v4108
    %v4114 = vpop.xlane.xlu0 %4113
    %v4115 = vmul.f32 %v4112, %v123
    %v4116 = vmul.f32 %v4114, %v123
    %v4117 = vsub.f32 %v4107, %v4115
    %v4118 = vsub.f32 %v4108, %v4116
    %v4119 = vmul.f32 %v4117, %v4117
    %v4120 = vmul.f32 %v4118, %v4118
    %4121 = vadd.xlane.f32.xlu0 %v4119
    %v4122 = vpop.xlane.xlu0 %4121
    %4123 = vadd.xlane.f32.xlu0 %v4120
    %v4124 = vpop.xlane.xlu0 %4123
    %v4125 = vmul.f32 %v4122, %v123
    %v4126 = vmul.f32 %v4124, %v123
    %v4127 = vadd.f32 %v4125, 1e-05
    %v4128 = vadd.f32 %v4126, 1e-05
    %v4129 = vrsqrt.pop %v4127
    %v4130 = vrsqrt.pop %v4128
    %v4131 = vmul.f32 %v4117, %v4129
    %v4132 = vmul.f32 %v4118, %v4130
    %v4134 = vlaneseq
    %v4135 = vshrl.u32 %v4134, 7
    %v4136 = vsub.s32 0, %v4135
    %v4137 = vrot.slane %v4109, %v4136
    %v4139 = vmul.f32 %v4131, %v4137
    %v4140 = vmul.f32 %v4132, %v4137
    %v4142 = vlaneseq
    %v4143 = vshrl.u32 %v4142, 7
    %v4144 = vsub.s32 0, %v4143
    %v4145 = vrot.slane %v4110, %v4144
    %v4147 = vadd.f32 %v4139, %v4145
    %v4148 = vadd.f32 %v4140, %v4145
    %4149 = vst [vmem:[#allocation19] sm:$0xff] %v4147
    %4150 = vst [vmem:[#allocation19 + $0x8] sm:$0xff] %v4148
    // Predicated region
    $region58: #{tpu_custom_call.1} parent=1 // pred_check
      _
    $region59: #{tpu_custom_call.1} parent=1 // pred_check_branch
      %4152 = sbr.rel (0) target = $region61
    $region60: #{tpu_custom_call.1} parent=1 // pred_region
      %s4154 = ssub.s32 256, 256
      %4155 = vsyncadd [#allocation9], %s4154
      %s4156 = sshll.u32 [#allocation19], 4
      %s4157 = int_to_ptr.vmem [resolvable:$true] %s4156
      %4162 = dma.vmem_to_hbm [thread:$0]  %s4157, 256, %s7, [#allocation9], 128, 128, 8
    $region61: #{tpu_custom_call.1} parent=1 // pred_fallthru
      _
    // Predicated region
    $region62: #{tpu_custom_call.1} parent=1 // pred_check
      _
    $region63: #{tpu_custom_call.1} parent=1 // pred_check_branch
      %4164 = sbr.rel (0) target = $region65
    $region64: #{tpu_custom_call.1} parent=1 // pred_region
      %4165 = dma.done [#allocation9], 256
    $region65: #{tpu_custom_call.1} parent=1 // pred_fallthru
      _
    %4166 = vsyncpa [#allocation8], 1
    %4167 = vsyncpa [#allocation11], 1
    %4168 = vsyncpa [#allocation14], 1
    %4169 = vsyncpa [#allocation17], 1
    %4170 = vsyncpa [#allocation9], 1

</llo_original>
